<compile_context>
chip_gen: v7x
topology: tpu7x:2x2x1
jax: 0.10.0
libtpu: 0.0.40
codegen_flags: <defaults>
</compile_context>

<pallas_src>
import jax
import jax.numpy as jnp
from jax.experimental import pallas as pl
from jax.experimental.pallas import tpu as pltpu


POOL_K = 5
POOL_STRIDE = 3
CONV_OC = 128      # 1x1 conv output channels
FC1_IN = 2048
FC1_OUT = 1024


# --------------------------------------------------------------------------- pool operator
def _make_pool_indicator(H, W, k=POOL_K, stride=POOL_STRIDE):
    """(S, H*W) exact 0/1 matrix; row s sums the s-th AvgPool2d(5,3) window (VALID)."""
    OH = (H - k) // stride + 1
    OW = (W - k) // stride + 1
    hw = jnp.arange(H * W)
    hh, ww = hw // W, hw % W
    oo = jnp.arange(OH * OW)
    oh, ow = oo // OW, oo % OW
    in_h = (hh[None, :] >= oh[:, None] * stride) & (hh[None, :] < oh[:, None] * stride + k)
    in_w = (ww[None, :] >= ow[:, None] * stride) & (ww[None, :] < ow[:, None] * stride + k)
    return (in_h & in_w).astype(jnp.float32), OH * OW


# --------------------------------------------------------------------------- parameters
def init_params(key, in_channels, num_classes, H=16, W=16):
    k1, k2, k3, k4, k5, k6 = jax.random.split(key, 6)
    # PyTorch shapes: conv.weight (128,C,1,1), fc1.weight (1024,2048), fc2.weight (K,1024)
    conv_w = jax.random.normal(k1, (CONV_OC, in_channels), jnp.float32) * 0.05
    conv_b = jax.random.normal(k2, (CONV_OC,), jnp.float32) * 0.05
    fc1_w = jax.random.normal(k3, (FC1_OUT, FC1_IN), jnp.float32) * 0.02
    fc1_b = jax.random.normal(k4, (FC1_OUT,), jnp.float32) * 0.02
    fc2_w = jax.random.normal(k5, (num_classes, FC1_OUT), jnp.float32) * 0.02
    fc2_b = jax.random.normal(k6, (num_classes,), jnp.float32) * 0.02

    pool_ind, S = _make_pool_indicator(H, W)          # (S, H*W), exact 0/1 values
    assert CONV_OC * S == FC1_IN, "InceptionAux expects a 4x4 pooled map (128*16 == 2048)"

    # bf16 weight storage (halves weight DMA bytes).  Keep f32 copies of the *quantized*
    # values so the pure-JAX reference uses identical weights.
    conv_w_q = conv_w.astype(jnp.bfloat16).astype(jnp.float32)
    fc1_w_q = fc1_w.astype(jnp.bfloat16).astype(jnp.float32)
    fc2_w_q = fc2_w.astype(jnp.bfloat16).astype(jnp.float32)

    # fc1 input-row permutation: torch-flatten col = o*S + s  ->  kernel row = s*128 + o,
    # so the kernel's (s, o)-ordered activation needs no transpose / lane-merging reshape.
    w1_perm = (fc1_w_q.T.reshape(CONV_OC, S, FC1_OUT)
               .transpose(1, 0, 2).reshape(S * CONV_OC, FC1_OUT))      # (2048, 1024)

    # Pad fc2's output dim to a multiple of 128 lanes (unmasked stores); sliced back later.
    n_pad = max(128, -(-num_classes // 128) * 128)
    fc2_wt_pad = jnp.zeros((FC1_OUT, n_pad), jnp.float32).at[:, :num_classes].set(fc2_w_q.T)
    fc2_b_pad = jnp.zeros((n_pad,), jnp.float32).at[:num_classes].set(fc2_b)

    return dict(
        num_classes=num_classes,
        # ---- fused-kernel operands ----
        pool_t=pool_ind.astype(jnp.bfloat16),          # (S, H*W)      bf16 (exact 0/1)
        conv_wt=conv_w_q.T.astype(jnp.bfloat16),       # (C, 128)      bf16
        conv_b=conv_b.reshape(1, -1),                  # (1, 128)      f32
        fc1_wt=w1_perm.astype(jnp.bfloat16),           # (2048, 1024)  bf16, row = s*128+o
        fc1_b=fc1_b.reshape(1, -1),                    # (1, 1024)     f32
        fc2_wt=fc2_wt_pad.astype(jnp.bfloat16),        # (1024, n_pad) bf16
        fc2_b=fc2_b_pad.reshape(1, -1),                # (1, n_pad)    f32
        # ---- f32 (quantized-value) copies for the reference ----
        conv_w_q=conv_w_q, conv_b_f32=conv_b,
        fc1_w_q=fc1_w_q, fc1_b_f32=fc1_b,
        fc2_w_q=fc2_w_q, fc2_b_f32=fc2_b,
    )


# --------------------------------------------------------------------------- fused kernel
def _inception_aux_kernel(x_ref, poolt_ref, convwt_ref, convb_ref,
                          w1_ref, b1_ref, w2_ref, b2_ref, o_ref):
    """One batch element per grid step; all intermediates stay in VMEM.
    MXU matmuls take bf16 operands and accumulate f32; bias/ReLU epilogues stay f32."""
    S = poolt_ref.shape[0]          # 16 pooled positions
    OC = convwt_ref.shape[1]        # 128 conv output channels

    x = x_ref[0]                                                        # (H*W, C) bf16
    # AvgPool2d(5,3): sum each window via the exact 0/1 indicator matmul, then scale.
    pooled = jnp.dot(poolt_ref[...], x,
                     preferred_element_type=jnp.float32) * (1.0 / (POOL_K * POOL_K))  # (S, C)
    # 1x1 conv + bias + ReLU.
    conv = jnp.dot(pooled.astype(jnp.bfloat16), convwt_ref[...],
                   preferred_element_type=jnp.float32)                  # (S, 128)
    p = jnp.maximum(conv + convb_ref[...], 0.0)                         # (S, 128) f32

    # TODO(synk): F.dropout(p=0.5) is the identity under model.eval()/inference semantics.

    # fc1 over the 2048 = S*128 flattened features, computed as S K-slices so the (s, o)
    # activation tile never needs a lane-merging reshape (weight rows pre-permuted at init).
    h_raw = jnp.zeros((1, b1_ref.shape[1]), jnp.float32)
    for s in range(S):
        a_s = p[s:s + 1, :].astype(jnp.bfloat16)                        # (1, 128)
        h_raw = h_raw + jnp.dot(a_s, w1_ref[s * OC:(s + 1) * OC, :],
                                preferred_element_type=jnp.float32)     # (1, 1024)
    h = jnp.maximum(h_raw + b1_ref[...], 0.0)

    # TODO(synk): second dropout is also the identity in eval mode.
    out = jnp.dot(h.astype(jnp.bfloat16), w2_ref[...],
                  preferred_element_type=jnp.float32)                   # (1, n_pad)
    o_ref[0] = (out + b2_ref[...]).astype(o_ref.dtype)


def inception_aux_forward(x, params):
    """Pallas implementation of InceptionAux.forward.  x: NCHW float32."""
    N, C, H, W = x.shape
    HW = H * W
    assert params["pool_t"].shape[1] == HW, "spatial size mismatch with init_params"
    n_pad = params["fc2_wt"].shape[1]

    # Wrapper-side layout plumbing (cheap vs. the weight DMA): NCHW -> (N, H*W, C), bf16.
    x_r = jnp.transpose(x, (0, 2, 3, 1)).reshape(N, HW, C).astype(jnp.bfloat16)

    const2d = lambda i: (0, 0)   # weights: constant block index -> resident across the grid
    out = pl.pallas_call(
        _inception_aux_kernel,
        out_shape=jax.ShapeDtypeStruct((N, 1, n_pad), jnp.float32),
        grid=(N,),
        in_specs=[
            pl.BlockSpec((1, HW, C), lambda i: (i, 0, 0)),       # per-sample activation tile
            pl.BlockSpec(params["pool_t"].shape, const2d),
            pl.BlockSpec(params["conv_wt"].shape, const2d),
            pl.BlockSpec(params["conv_b"].shape, const2d),
            pl.BlockSpec(params["fc1_wt"].shape, const2d),
            pl.BlockSpec(params["fc1_b"].shape, const2d),
            pl.BlockSpec(params["fc2_wt"].shape, const2d),
            pl.BlockSpec(params["fc2_b"].shape, const2d),
        ],
        out_specs=pl.BlockSpec((1, 1, n_pad), lambda i: (i, 0, 0)),
        compiler_params=pltpu.CompilerParams(
            dimension_semantics=("parallel",),          # v7x: both TensorCores split the batch
            vmem_limit_bytes=32 * 1024 * 1024,          # treat 32 MiB (v7x scoped) as ceiling
        ),
    )(x_r, params["pool_t"], params["conv_wt"], params["conv_b"],
      params["fc1_wt"], params["fc1_b"], params["fc2_wt"], params["fc2_b"])

    return out[:, 0, :params["num_classes"]]


# --------------------------------------------------------------------------- reference
def inception_aux_reference(x, params):
    """Pure-JAX reference in the original op order (pool -> conv -> ReLU -> fc1 -> fc2).
    Uses the same bf16-quantized weight values as the kernel and rounds activations to bf16
    at the same points the kernel does, so the check isolates the structural transforms
    (pool-as-matmul, fc1 row permutation, output lane padding)."""
    bf16 = lambda a: a.astype(jnp.bfloat16).astype(jnp.float32)
    N = x.shape[0]
    xq = bf16(x)
    pooled = jax.lax.reduce_window(
        xq, 0.0, jax.lax.add,
        (1, 1, POOL_K, POOL_K), (1, 1, POOL_STRIDE, POOL_STRIDE), "VALID"
    ) / float(POOL_K * POOL_K)
    pooled = bf16(pooled)
    conv = jnp.einsum("nchw,oc->nohw", pooled, params["conv_w_q"]) \
        + params["conv_b_f32"][None, :, None, None]
    conv = jnp.maximum(conv, 0.0)
    flat = bf16(conv.reshape(N, -1))                       # torch.flatten(x, 1) order
    h = jnp.maximum(flat @ params["fc1_w_q"].T + params["fc1_b_f32"], 0.0)
    h = bf16(h)
    return h @ params["fc2_w_q"].T + params["fc2_b_f32"]


if __name__ == "__main__":
    # 16x16 spatial -> AvgPool(5,3) -> 4x4, and 128 * 4 * 4 == 2048 == fc1 input.
    N, C_IN, H, W = 2, 4, 16, 16
    NUM_CLASSES = 10

    key = jax.random.PRNGKey(0)
    kx, kp = jax.random.split(key)
    x = jax.random.normal(kx, (N, C_IN, H, W), jnp.float32)
    params = init_params(kp, C_IN, NUM_CLASSES, H=H, W=W)

    out = jax.block_until_ready(inception_aux_forward(x, params))
    ref = jax.block_until_ready(inception_aux_reference(x, params))

    assert out.shape == (N, NUM_CLASSES), out.shape
    max_err = float(jnp.max(jnp.abs(out - ref)))
    assert jnp.allclose(out, ref, rtol=2e-2, atol=2e-3), max_err
    print("KERNEL_OK")
</pallas_src>

<mosaic_0001>
module attributes {stable_mosaic.version = 11 : i64} {
  func.func @_inception_aux_kernel(%arg0: i32, %arg1: memref<1x256x4xbf16, #tpu.memory_space<vmem>>, %arg2: memref<16x256xbf16, #tpu.memory_space<vmem>>, %arg3: memref<4x128xbf16, #tpu.memory_space<vmem>>, %arg4: memref<1x128xf32, #tpu.memory_space<vmem>>, %arg5: memref<2048x1024xbf16, #tpu.memory_space<vmem>>, %arg6: memref<1x1024xf32, #tpu.memory_space<vmem>>, %arg7: memref<1024x128xbf16, #tpu.memory_space<vmem>>, %arg8: memref<1x128xf32, #tpu.memory_space<vmem>>, %arg9: memref<1x1x128xf32, #tpu.memory_space<vmem>>) attributes {dimension_semantics = [#tpu.dimension_semantics<parallel>], iteration_bounds = array<i64: 2>, scalar_prefetch = 0 : i64, scratch_operands = 0 : i64, tpu.core_type = #tpu.core_type<tc>, window_params = [{transform_indices = @transform_0, window_bounds = array<i64: 1, 256, 4>}, {pipeline_mode = #tpu.pipeline_mode<synchronous>, transform_indices = @transform_1, window_bounds = array<i64: 16, 256>}, {pipeline_mode = #tpu.pipeline_mode<synchronous>, transform_indices = @transform_2, window_bounds = array<i64: 4, 128>}, {pipeline_mode = #tpu.pipeline_mode<synchronous>, transform_indices = @transform_3, window_bounds = array<i64: 1, 128>}, {pipeline_mode = #tpu.pipeline_mode<synchronous>, transform_indices = @transform_4, window_bounds = array<i64: 2048, 1024>}, {pipeline_mode = #tpu.pipeline_mode<synchronous>, transform_indices = @transform_5, window_bounds = array<i64: 1, 1024>}, {pipeline_mode = #tpu.pipeline_mode<synchronous>, transform_indices = @transform_6, window_bounds = array<i64: 1024, 128>}, {pipeline_mode = #tpu.pipeline_mode<synchronous>, transform_indices = @transform_7, window_bounds = array<i64: 1, 128>}, {transform_indices = @transform_8, window_bounds = array<i64: 1, 1, 128>}]} {
    %c0 = arith.constant 0 : index
    %c0_0 = arith.constant 0 : index
    %c0_1 = arith.constant 0 : index
    %0 = vector.load %arg1[%c0, %c0_0, %c0_1] : memref<1x256x4xbf16, #tpu.memory_space<vmem>>, vector<1x256x4xbf16>
    %1 = vector.shape_cast %0 : vector<1x256x4xbf16> to vector<256x4xbf16>
    %c0_2 = arith.constant 0 : index
    %c0_3 = arith.constant 0 : index
    %2 = vector.load %arg2[%c0_2, %c0_3] : memref<16x256xbf16, #tpu.memory_space<vmem>>, vector<16x256xbf16>
    %cst = arith.constant dense<0.000000e+00> : vector<16x4xf32>
    %3 = tpu.matmul %2, %1, %cst {dimension_numbers = #tpu.dot_dimension_numbers<[1], [0], [0], [1], [0, 0, 1, 1], [], []>} : vector<16x256xbf16>, vector<256x4xbf16>, vector<16x4xf32> -> vector<16x4xf32>
    %cst_4 = arith.constant 4.000000e-02 : f32
    %4 = vector.broadcast %cst_4 : f32 to vector<16x4xf32>
    %5 = arith.mulf %3, %4 : vector<16x4xf32>
    %6 = arith.truncf %5 : vector<16x4xf32> to vector<16x4xbf16>
    %c0_5 = arith.constant 0 : index
    %c0_6 = arith.constant 0 : index
    %7 = vector.load %arg3[%c0_5, %c0_6] : memref<4x128xbf16, #tpu.memory_space<vmem>>, vector<4x128xbf16>
    %cst_7 = arith.constant dense<0.000000e+00> : vector<16x128xf32>
    %8 = tpu.matmul %6, %7, %cst_7 {dimension_numbers = #tpu.dot_dimension_numbers<[1], [0], [0], [1], [0, 0, 1, 1], [], []>} : vector<16x4xbf16>, vector<4x128xbf16>, vector<16x128xf32> -> vector<16x128xf32>
    %c0_8 = arith.constant 0 : index
    %c0_9 = arith.constant 0 : index
    %9 = vector.load %arg4[%c0_8, %c0_9] : memref<1x128xf32, #tpu.memory_space<vmem>>, vector<1x128xf32>
    %10 = vector.broadcast %9 : vector<1x128xf32> to vector<16x128xf32>
    %11 = arith.addf %8, %10 : vector<16x128xf32>
    %cst_10 = arith.constant 0.000000e+00 : f32
    %12 = vector.broadcast %cst_10 : f32 to vector<16x128xf32>
    %13 = arith.maximumf %11, %12 : vector<16x128xf32>
    %cst_11 = arith.constant 0.000000e+00 : f32
    %14 = vector.broadcast %cst_11 : f32 to vector<1x1024xf32>
    %15 = vector.extract_strided_slice %13 {offsets = [0, 0], sizes = [1, 128], strides = [1, 1]} : vector<16x128xf32> to vector<1x128xf32>
    %16 = arith.truncf %15 : vector<1x128xf32> to vector<1x128xbf16>
    %c0_12 = arith.constant 0 : index
    %c0_13 = arith.constant 0 : index
    %17 = vector.load %arg5[%c0_12, %c0_13] : memref<2048x1024xbf16, #tpu.memory_space<vmem>>, vector<128x1024xbf16>
    %cst_14 = arith.constant dense<0.000000e+00> : vector<1x1024xf32>
    %18 = tpu.matmul %16, %17, %cst_14 {dimension_numbers = #tpu.dot_dimension_numbers<[1], [0], [0], [1], [0, 0, 1, 1], [], []>} : vector<1x128xbf16>, vector<128x1024xbf16>, vector<1x1024xf32> -> vector<1x1024xf32>
    %19 = arith.addf %14, %18 : vector<1x1024xf32>
    %20 = vector.extract_strided_slice %13 {offsets = [1, 0], sizes = [1, 128], strides = [1, 1]} : vector<16x128xf32> to vector<1x128xf32>
    %21 = arith.truncf %20 : vector<1x128xf32> to vector<1x128xbf16>
    %c128 = arith.constant 128 : index
    %c0_15 = arith.constant 0 : index
    %22 = vector.load %arg5[%c128, %c0_15] : memref<2048x1024xbf16, #tpu.memory_space<vmem>>, vector<128x1024xbf16>
    %cst_16 = arith.constant dense<0.000000e+00> : vector<1x1024xf32>
    %23 = tpu.matmul %21, %22, %cst_16 {dimension_numbers = #tpu.dot_dimension_numbers<[1], [0], [0], [1], [0, 0, 1, 1], [], []>} : vector<1x128xbf16>, vector<128x1024xbf16>, vector<1x1024xf32> -> vector<1x1024xf32>
    %24 = arith.addf %19, %23 : vector<1x1024xf32>
    %25 = vector.extract_strided_slice %13 {offsets = [2, 0], sizes = [1, 128], strides = [1, 1]} : vector<16x128xf32> to vector<1x128xf32>
    %26 = arith.truncf %25 : vector<1x128xf32> to vector<1x128xbf16>
    %c256 = arith.constant 256 : index
    %c0_17 = arith.constant 0 : index
    %27 = vector.load %arg5[%c256, %c0_17] : memref<2048x1024xbf16, #tpu.memory_space<vmem>>, vector<128x1024xbf16>
    %cst_18 = arith.constant dense<0.000000e+00> : vector<1x1024xf32>
    %28 = tpu.matmul %26, %27, %cst_18 {dimension_numbers = #tpu.dot_dimension_numbers<[1], [0], [0], [1], [0, 0, 1, 1], [], []>} : vector<1x128xbf16>, vector<128x1024xbf16>, vector<1x1024xf32> -> vector<1x1024xf32>
    %29 = arith.addf %24, %28 : vector<1x1024xf32>
    %30 = vector.extract_strided_slice %13 {offsets = [3, 0], sizes = [1, 128], strides = [1, 1]} : vector<16x128xf32> to vector<1x128xf32>
    %31 = arith.truncf %30 : vector<1x128xf32> to vector<1x128xbf16>
    %c384 = arith.constant 384 : index
    %c0_19 = arith.constant 0 : index
    %32 = vector.load %arg5[%c384, %c0_19] : memref<2048x1024xbf16, #tpu.memory_space<vmem>>, vector<128x1024xbf16>
    %cst_20 = arith.constant dense<0.000000e+00> : vector<1x1024xf32>
    %33 = tpu.matmul %31, %32, %cst_20 {dimension_numbers = #tpu.dot_dimension_numbers<[1], [0], [0], [1], [0, 0, 1, 1], [], []>} : vector<1x128xbf16>, vector<128x1024xbf16>, vector<1x1024xf32> -> vector<1x1024xf32>
    %34 = arith.addf %29, %33 : vector<1x1024xf32>
    %35 = vector.extract_strided_slice %13 {offsets = [4, 0], sizes = [1, 128], strides = [1, 1]} : vector<16x128xf32> to vector<1x128xf32>
    %36 = arith.truncf %35 : vector<1x128xf32> to vector<1x128xbf16>
    %c512 = arith.constant 512 : index
    %c0_21 = arith.constant 0 : index
    %37 = vector.load %arg5[%c512, %c0_21] : memref<2048x1024xbf16, #tpu.memory_space<vmem>>, vector<128x1024xbf16>
    %cst_22 = arith.constant dense<0.000000e+00> : vector<1x1024xf32>
    %38 = tpu.matmul %36, %37, %cst_22 {dimension_numbers = #tpu.dot_dimension_numbers<[1], [0], [0], [1], [0, 0, 1, 1], [], []>} : vector<1x128xbf16>, vector<128x1024xbf16>, vector<1x1024xf32> -> vector<1x1024xf32>
    %39 = arith.addf %34, %38 : vector<1x1024xf32>
    %40 = vector.extract_strided_slice %13 {offsets = [5, 0], sizes = [1, 128], strides = [1, 1]} : vector<16x128xf32> to vector<1x128xf32>
    %41 = arith.truncf %40 : vector<1x128xf32> to vector<1x128xbf16>
    %c640 = arith.constant 640 : index
    %c0_23 = arith.constant 0 : index
    %42 = vector.load %arg5[%c640, %c0_23] : memref<2048x1024xbf16, #tpu.memory_space<vmem>>, vector<128x1024xbf16>
    %cst_24 = arith.constant dense<0.000000e+00> : vector<1x1024xf32>
    %43 = tpu.matmul %41, %42, %cst_24 {dimension_numbers = #tpu.dot_dimension_numbers<[1], [0], [0], [1], [0, 0, 1, 1], [], []>} : vector<1x128xbf16>, vector<128x1024xbf16>, vector<1x1024xf32> -> vector<1x1024xf32>
    %44 = arith.addf %39, %43 : vector<1x1024xf32>
    %45 = vector.extract_strided_slice %13 {offsets = [6, 0], sizes = [1, 128], strides = [1, 1]} : vector<16x128xf32> to vector<1x128xf32>
    %46 = arith.truncf %45 : vector<1x128xf32> to vector<1x128xbf16>
    %c768 = arith.constant 768 : index
    %c0_25 = arith.constant 0 : index
    %47 = vector.load %arg5[%c768, %c0_25] : memref<2048x1024xbf16, #tpu.memory_space<vmem>>, vector<128x1024xbf16>
    %cst_26 = arith.constant dense<0.000000e+00> : vector<1x1024xf32>
    %48 = tpu.matmul %46, %47, %cst_26 {dimension_numbers = #tpu.dot_dimension_numbers<[1], [0], [0], [1], [0, 0, 1, 1], [], []>} : vector<1x128xbf16>, vector<128x1024xbf16>, vector<1x1024xf32> -> vector<1x1024xf32>
    %49 = arith.addf %44, %48 : vector<1x1024xf32>
    %50 = vector.extract_strided_slice %13 {offsets = [7, 0], sizes = [1, 128], strides = [1, 1]} : vector<16x128xf32> to vector<1x128xf32>
    %51 = arith.truncf %50 : vector<1x128xf32> to vector<1x128xbf16>
    %c896 = arith.constant 896 : index
    %c0_27 = arith.constant 0 : index
    %52 = vector.load %arg5[%c896, %c0_27] : memref<2048x1024xbf16, #tpu.memory_space<vmem>>, vector<128x1024xbf16>
    %cst_28 = arith.constant dense<0.000000e+00> : vector<1x1024xf32>
    %53 = tpu.matmul %51, %52, %cst_28 {dimension_numbers = #tpu.dot_dimension_numbers<[1], [0], [0], [1], [0, 0, 1, 1], [], []>} : vector<1x128xbf16>, vector<128x1024xbf16>, vector<1x1024xf32> -> vector<1x1024xf32>
    %54 = arith.addf %49, %53 : vector<1x1024xf32>
    %55 = vector.extract_strided_slice %13 {offsets = [8, 0], sizes = [1, 128], strides = [1, 1]} : vector<16x128xf32> to vector<1x128xf32>
    %56 = arith.truncf %55 : vector<1x128xf32> to vector<1x128xbf16>
    %c1024 = arith.constant 1024 : index
    %c0_29 = arith.constant 0 : index
    %57 = vector.load %arg5[%c1024, %c0_29] : memref<2048x1024xbf16, #tpu.memory_space<vmem>>, vector<128x1024xbf16>
    %cst_30 = arith.constant dense<0.000000e+00> : vector<1x1024xf32>
    %58 = tpu.matmul %56, %57, %cst_30 {dimension_numbers = #tpu.dot_dimension_numbers<[1], [0], [0], [1], [0, 0, 1, 1], [], []>} : vector<1x128xbf16>, vector<128x1024xbf16>, vector<1x1024xf32> -> vector<1x1024xf32>
    %59 = arith.addf %54, %58 : vector<1x1024xf32>
    %60 = vector.extract_strided_slice %13 {offsets = [9, 0], sizes = [1, 128], strides = [1, 1]} : vector<16x128xf32> to vector<1x128xf32>
    %61 = arith.truncf %60 : vector<1x128xf32> to vector<1x128xbf16>
    %c1152 = arith.constant 1152 : index
    %c0_31 = arith.constant 0 : index
    %62 = vector.load %arg5[%c1152, %c0_31] : memref<2048x1024xbf16, #tpu.memory_space<vmem>>, vector<128x1024xbf16>
    %cst_32 = arith.constant dense<0.000000e+00> : vector<1x1024xf32>
    %63 = tpu.matmul %61, %62, %cst_32 {dimension_numbers = #tpu.dot_dimension_numbers<[1], [0], [0], [1], [0, 0, 1, 1], [], []>} : vector<1x128xbf16>, vector<128x1024xbf16>, vector<1x1024xf32> -> vector<1x1024xf32>
    %64 = arith.addf %59, %63 : vector<1x1024xf32>
    %65 = vector.extract_strided_slice %13 {offsets = [10, 0], sizes = [1, 128], strides = [1, 1]} : vector<16x128xf32> to vector<1x128xf32>
    %66 = arith.truncf %65 : vector<1x128xf32> to vector<1x128xbf16>
    %c1280 = arith.constant 1280 : index
    %c0_33 = arith.constant 0 : index
    %67 = vector.load %arg5[%c1280, %c0_33] : memref<2048x1024xbf16, #tpu.memory_space<vmem>>, vector<128x1024xbf16>
    %cst_34 = arith.constant dense<0.000000e+00> : vector<1x1024xf32>
    %68 = tpu.matmul %66, %67, %cst_34 {dimension_numbers = #tpu.dot_dimension_numbers<[1], [0], [0], [1], [0, 0, 1, 1], [], []>} : vector<1x128xbf16>, vector<128x1024xbf16>, vector<1x1024xf32> -> vector<1x1024xf32>
    %69 = arith.addf %64, %68 : vector<1x1024xf32>
    %70 = vector.extract_strided_slice %13 {offsets = [11, 0], sizes = [1, 128], strides = [1, 1]} : vector<16x128xf32> to vector<1x128xf32>
    %71 = arith.truncf %70 : vector<1x128xf32> to vector<1x128xbf16>
    %c1408 = arith.constant 1408 : index
    %c0_35 = arith.constant 0 : index
    %72 = vector.load %arg5[%c1408, %c0_35] : memref<2048x1024xbf16, #tpu.memory_space<vmem>>, vector<128x1024xbf16>
    %cst_36 = arith.constant dense<0.000000e+00> : vector<1x1024xf32>
    %73 = tpu.matmul %71, %72, %cst_36 {dimension_numbers = #tpu.dot_dimension_numbers<[1], [0], [0], [1], [0, 0, 1, 1], [], []>} : vector<1x128xbf16>, vector<128x1024xbf16>, vector<1x1024xf32> -> vector<1x1024xf32>
    %74 = arith.addf %69, %73 : vector<1x1024xf32>
    %75 = vector.extract_strided_slice %13 {offsets = [12, 0], sizes = [1, 128], strides = [1, 1]} : vector<16x128xf32> to vector<1x128xf32>
    %76 = arith.truncf %75 : vector<1x128xf32> to vector<1x128xbf16>
    %c1536 = arith.constant 1536 : index
    %c0_37 = arith.constant 0 : index
    %77 = vector.load %arg5[%c1536, %c0_37] : memref<2048x1024xbf16, #tpu.memory_space<vmem>>, vector<128x1024xbf16>
    %cst_38 = arith.constant dense<0.000000e+00> : vector<1x1024xf32>
    %78 = tpu.matmul %76, %77, %cst_38 {dimension_numbers = #tpu.dot_dimension_numbers<[1], [0], [0], [1], [0, 0, 1, 1], [], []>} : vector<1x128xbf16>, vector<128x1024xbf16>, vector<1x1024xf32> -> vector<1x1024xf32>
    %79 = arith.addf %74, %78 : vector<1x1024xf32>
    %80 = vector.extract_strided_slice %13 {offsets = [13, 0], sizes = [1, 128], strides = [1, 1]} : vector<16x128xf32> to vector<1x128xf32>
    %81 = arith.truncf %80 : vector<1x128xf32> to vector<1x128xbf16>
    %c1664 = arith.constant 1664 : index
    %c0_39 = arith.constant 0 : index
    %82 = vector.load %arg5[%c1664, %c0_39] : memref<2048x1024xbf16, #tpu.memory_space<vmem>>, vector<128x1024xbf16>
    %cst_40 = arith.constant dense<0.000000e+00> : vector<1x1024xf32>
    %83 = tpu.matmul %81, %82, %cst_40 {dimension_numbers = #tpu.dot_dimension_numbers<[1], [0], [0], [1], [0, 0, 1, 1], [], []>} : vector<1x128xbf16>, vector<128x1024xbf16>, vector<1x1024xf32> -> vector<1x1024xf32>
    %84 = arith.addf %79, %83 : vector<1x1024xf32>
    %85 = vector.extract_strided_slice %13 {offsets = [14, 0], sizes = [1, 128], strides = [1, 1]} : vector<16x128xf32> to vector<1x128xf32>
    %86 = arith.truncf %85 : vector<1x128xf32> to vector<1x128xbf16>
    %c1792 = arith.constant 1792 : index
    %c0_41 = arith.constant 0 : index
    %87 = vector.load %arg5[%c1792, %c0_41] : memref<2048x1024xbf16, #tpu.memory_space<vmem>>, vector<128x1024xbf16>
    %cst_42 = arith.constant dense<0.000000e+00> : vector<1x1024xf32>
    %88 = tpu.matmul %86, %87, %cst_42 {dimension_numbers = #tpu.dot_dimension_numbers<[1], [0], [0], [1], [0, 0, 1, 1], [], []>} : vector<1x128xbf16>, vector<128x1024xbf16>, vector<1x1024xf32> -> vector<1x1024xf32>
    %89 = arith.addf %84, %88 : vector<1x1024xf32>
    %90 = vector.extract_strided_slice %13 {offsets = [15, 0], sizes = [1, 128], strides = [1, 1]} : vector<16x128xf32> to vector<1x128xf32>
    %91 = arith.truncf %90 : vector<1x128xf32> to vector<1x128xbf16>
    %c1920 = arith.constant 1920 : index
    %c0_43 = arith.constant 0 : index
    %92 = vector.load %arg5[%c1920, %c0_43] : memref<2048x1024xbf16, #tpu.memory_space<vmem>>, vector<128x1024xbf16>
    %cst_44 = arith.constant dense<0.000000e+00> : vector<1x1024xf32>
    %93 = tpu.matmul %91, %92, %cst_44 {dimension_numbers = #tpu.dot_dimension_numbers<[1], [0], [0], [1], [0, 0, 1, 1], [], []>} : vector<1x128xbf16>, vector<128x1024xbf16>, vector<1x1024xf32> -> vector<1x1024xf32>
    %94 = arith.addf %89, %93 : vector<1x1024xf32>
    %c0_45 = arith.constant 0 : index
    %c0_46 = arith.constant 0 : index
    %95 = vector.load %arg6[%c0_45, %c0_46] : memref<1x1024xf32, #tpu.memory_space<vmem>>, vector<1x1024xf32>
    %96 = arith.addf %94, %95 : vector<1x1024xf32>
    %cst_47 = arith.constant 0.000000e+00 : f32
    %97 = vector.broadcast %cst_47 : f32 to vector<1x1024xf32>
    %98 = arith.maximumf %96, %97 : vector<1x1024xf32>
    %99 = arith.truncf %98 : vector<1x1024xf32> to vector<1x1024xbf16>
    %c0_48 = arith.constant 0 : index
    %c0_49 = arith.constant 0 : index
    %100 = vector.load %arg7[%c0_48, %c0_49] : memref<1024x128xbf16, #tpu.memory_space<vmem>>, vector<1024x128xbf16>
    %cst_50 = arith.constant dense<0.000000e+00> : vector<1x128xf32>
    %101 = tpu.matmul %99, %100, %cst_50 {dimension_numbers = #tpu.dot_dimension_numbers<[1], [0], [0], [1], [0, 0, 1, 1], [], []>} : vector<1x1024xbf16>, vector<1024x128xbf16>, vector<1x128xf32> -> vector<1x128xf32>
    %c0_51 = arith.constant 0 : index
    %c0_52 = arith.constant 0 : index
    %102 = vector.load %arg8[%c0_51, %c0_52] : memref<1x128xf32, #tpu.memory_space<vmem>>, vector<1x128xf32>
    %103 = arith.addf %101, %102 : vector<1x128xf32>
    %c0_53 = arith.constant 0 : index
    %c0_54 = arith.constant 0 : index
    %c0_55 = arith.constant 0 : index
    %104 = vector.load %arg9[%c0_53, %c0_54, %c0_55] : memref<1x1x128xf32, #tpu.memory_space<vmem>>, vector<1x1x128xf32>
    %105 = vector.shape_cast %104 : vector<1x1x128xf32> to vector<1x128xf32>
    %106 = vector.shape_cast %103 : vector<1x128xf32> to vector<1x1x128xf32>
    tpu.vector_store %arg9[%c0_53, %c0_54, %c0_55], %106 {strides = array<i32>} : memref<1x1x128xf32, #tpu.memory_space<vmem>>, vector<1x1x128xf32>,
    return
  }
  func.func @transform_0(%arg0: i32) -> (i32, i32, i32) {
    %c0_i32 = arith.constant 0 : i32
    %c0_i32_0 = arith.constant 0 : i32
    %c0_i32_1 = arith.constant 0 : i32
    return %arg0, %c0_i32, %c0_i32_0 : i32, i32, i32
  }
  func.func @transform_1(%arg0: i32) -> (i32, i32) {
    %c0_i32 = arith.constant 0 : i32
    %c0_i32_0 = arith.constant 0 : i32
    %c0_i32_1 = arith.constant 0 : i32
    return %c0_i32, %c0_i32_0 : i32, i32
  }
  func.func @transform_2(%arg0: i32) -> (i32, i32) {
    %c0_i32 = arith.constant 0 : i32
    %c0_i32_0 = arith.constant 0 : i32
    %c0_i32_1 = arith.constant 0 : i32
    return %c0_i32, %c0_i32_0 : i32, i32
  }
  func.func @transform_3(%arg0: i32) -> (i32, i32) {
    %c0_i32 = arith.constant 0 : i32
    %c0_i32_0 = arith.constant 0 : i32
    %c0_i32_1 = arith.constant 0 : i32
    return %c0_i32, %c0_i32_0 : i32, i32
  }
  func.func @transform_4(%arg0: i32) -> (i32, i32) {
    %c0_i32 = arith.constant 0 : i32
    %c0_i32_0 = arith.constant 0 : i32
    %c0_i32_1 = arith.constant 0 : i32
    return %c0_i32, %c0_i32_0 : i32, i32
  }
  func.func @transform_5(%arg0: i32) -> (i32, i32) {
    %c0_i32 = arith.constant 0 : i32
    %c0_i32_0 = arith.constant 0 : i32
    %c0_i32_1 = arith.constant 0 : i32
    return %c0_i32, %c0_i32_0 : i32, i32
  }
  func.func @transform_6(%arg0: i32) -> (i32, i32) {
    %c0_i32 = arith.constant 0 : i32
    %c0_i32_0 = arith.constant 0 : i32
    %c0_i32_1 = arith.constant 0 : i32
    return %c0_i32, %c0_i32_0 : i32, i32
  }
  func.func @transform_7(%arg0: i32) -> (i32, i32) {
    %c0_i32 = arith.constant 0 : i32
    %c0_i32_0 = arith.constant 0 : i32
    %c0_i32_1 = arith.constant 0 : i32
    return %c0_i32, %c0_i32_0 : i32, i32
  }
  func.func @transform_8(%arg0: i32) -> (i32, i32, i32) {
    %c0_i32 = arith.constant 0 : i32
    %c0_i32_0 = arith.constant 0 : i32
    %c0_i32_1 = arith.constant 0 : i32
    return %arg0, %c0_i32, %c0_i32_0 : i32, i32, i32
  }
}

</mosaic_0001>

<llo_original>
// kernel: tpu_custom_call.1
$region0: #{tpu_custom_call.1}
  #allocation0 [shape = 'u32[]', space=smem, size = 0x4, offset = 0x4, fixed_abs, tag = 'smem constant byte address 0x4 - core index']
  #allocation1 [shape = 'u32[144,128]{1,0:T(1,128)}', space=vmem, size = 0x12000, scoped, tag = 'internal scratch']
  %s0 = inlined_call_operand.vmem [shape: bf16[2,256,4], index: 0, kind: input, shape index: {}]
  %s1 = inlined_call_operand.hbm [shape: bf16[16,256], index: 1, kind: input, shape index: {}]
  %s2 = inlined_call_operand.hbm [shape: bf16[4,128], index: 2, kind: input, shape index: {}]
  %s3 = inlined_call_operand.hbm [shape: f32[1,128], index: 3, kind: input, shape index: {}]
  %s4 = inlined_call_operand.hbm [shape: bf16[2048,1024], index: 4, kind: input, shape index: {}]
  %s5 = inlined_call_operand.hbm [shape: f32[1,1024], index: 5, kind: input, shape index: {}]
  %s6 = inlined_call_operand.hbm [shape: bf16[1024,128], index: 6, kind: input, shape index: {}]
  %s7 = inlined_call_operand.hbm [shape: f32[1,128], index: 7, kind: input, shape index: {}]
  %s8 = inlined_call_operand.hbm [shape: f32[2,1,128], index: 8, kind: output, shape index: {}]
  %s9 = sld [smem:[#allocation0]]
  $region93: #{tpu_custom_call.1} parent=0
    _
  %s11 = ssub.s32 1, %s9
  %s12 = scalar_select 0, %s11, %s9
  $region1: #{tpu_custom_call.1} parent=0
    #allocation2 [shape = 'u8[8192]{0}', space=vmem, size = 0x2000, scoped, tag = 'input window, operand 1, single buffered']
    #allocation3 [shape = 's32[2]{0}', space=sflag, size = 0x8, scoped, tag = 'scoped memory for tpu_custom_call.1']
    #allocation4 [shape = 's32[2]{0}', space=sflag, size = 0x8, scoped, tag = 'scoped memory for tpu_custom_call.1']
    #allocation5 [shape = 'u8[1024]{0}', space=vmem, size = 0x400, scoped, tag = 'input window, operand 2, single buffered']
    #allocation6 [shape = 's32[1]{0}', space=sflag, size = 0x4, scoped, tag = 'scoped memory for tpu_custom_call.1']
    #allocation7 [shape = 'u8[512]{0}', space=vmem, size = 0x400, scoped, tag = 'input window, operand 3, single buffered']
    #allocation8 [shape = 'u8[4194304]{0}', space=vmem, size = 0x400000, scoped, tag = 'input window, operand 4, single buffered']
    #allocation9 [shape = 's32[1]{0}', space=sflag, size = 0x4, scoped, tag = 'scoped memory for tpu_custom_call.1']
    #allocation10 [shape = 'u8[4096]{0}', space=vmem, size = 0x1000, scoped, tag = 'input window, operand 5, single buffered']
    #allocation11 [shape = 'u8[262144]{0}', space=vmem, size = 0x40000, scoped, tag = 'input window, operand 6, single buffered']
    #allocation12 [shape = 's32[1]{0}', space=sflag, size = 0x4, scoped, tag = 'scoped memory for tpu_custom_call.1']
    #allocation13 [shape = 'u8[512]{0}', space=vmem, size = 0x400, scoped, tag = 'input window, operand 7, single buffered']
    #allocation14 [shape = 'u8[1024]{0}', space=vmem, size = 0x400, scoped, tag = 'output window, operand 0']
    %13 = vsyncpa [#allocation3], 0
    %14 = vsyncpa [#allocation6], 0
    %15 = vsyncpa [#allocation9], 0
    %16 = vsyncpa [#allocation12], 0
    %17 = vsyncpa [#allocation4], 0
    %s18 = scalar_lea.sflag [#allocation4], 1
    %19 = vsyncpa %s18, 0
    loop: start=0, step=1, limit=4
    $region2: #{tpu_custom_call.1} parent=1 // loop_pre_header
      _
    $region3: #{tpu_custom_call.1} parent=1 // loop_header
      %s21 = sphi 0, %s25
      %p22 = scmp.ge.s32.totalorder %s21, 4
      %s31 = sphi 0, %s33
      %s34 = sphi 0, %s31
      %s35 = sphi 0, %s34
      %s51 = sphi 0, %s35
      %s55 = sphi 0, %s55
      %s57 = sphi 0, %s55
      %s58 = sphi 0, %s57
      %s72 = sphi 0, %s58
      %s76 = sphi 0, %s76
      %s78 = sphi 0, %s76
      %s79 = sphi 0, %s78
      %s93 = sphi 0, %s79
      %s97 = sphi 0, %s97
      %s99 = sphi 0, %s97
      %s100 = sphi 0, %s99
      %s114 = sphi 0, %s100
      %s118 = sphi 0, %s118
      %s120 = sphi 0, %s118
      %s121 = sphi 0, %s120
      %s135 = sphi 0, %s121
      %s139 = sphi 0, %s139
      %s141 = sphi 0, %s139
      %s142 = sphi 0, %s141
      %s156 = sphi 0, %s142
      %s160 = sphi 0, %s160
      %s162 = sphi 0, %s160
      %s163 = sphi 0, %s162
      %s177 = sphi 0, %s163
      %s181 = sphi 0, %s181
      %s183 = sphi 0, %s181
      %s184 = sphi 0, %s183
      %s198 = sphi 0, %s184
      %s204 = sphi 0, %s206
      %s207 = sphi 0, %s204
      %s208 = sphi 0, %s207
      %s224 = sphi 0, %s208
    $region4: #{tpu_custom_call.1} parent=1 // loop_header_branch
      %24 = sbr.rel (%p22) target = $region8
    $region5: #{tpu_custom_call.1} parent=1 // loop_body
      %s26 = ssub.s32 %s21, 1
      %s27 = ssub.s32 %s21, 2
      %s28 = sadd.s32 %s21, 1
      %s29 = ssub.s32 %s21, %s28
      %p30 = scmp.eq.s32.totalorder %s29, 0
      %s32 = sadd.s32 %s31, 1
      %s33 = scalar_select %p30, %s31, %s32
      %p36 = pneg %p30
      %p37 = scmp.eq.s32.totalorder %s21, 1
      %p38 = por %p36, %p37
      %p39 = scmp.ne.s32.totalorder %s31, %s34
      %p40 = scmp.eq.s32.totalorder %s21, 0
      %p41 = por %p39, %p40
      %p42 = scmp.ne.s32.totalorder %s31, %s34
      %p43 = scmp.eq.s32.totalorder %s26, 1
      %p44 = por %p42, %p43
      %p45 = scmp.ne.s32.totalorder %s34, %s35
      %p46 = scmp.eq.s32.totalorder %s26, 0
      %p47 = por %p45, %p46
      %p48 = scmp.ne.s32.totalorder %s34, %s35
      %p49 = scmp.eq.s32.totalorder %s27, 1
      %p50 = por %p48, %p49
      %p52 = scmp.ne.s32.totalorder %s35, %s51
      %p53 = scmp.eq.s32.totalorder %s27, 0
      %p54 = por %p52, %p53
      %s56 = sadd.s32 %s55, 1
      %p59 = scmp.eq.s32.totalorder %s21, 1
      %p60 = scmp.ne.s32.totalorder %s55, %s57
      %p61 = scmp.eq.s32.totalorder %s21, 0
      %p62 = por %p60, %p61
      %p63 = scmp.ne.s32.totalorder %s55, %s57
      %p64 = scmp.eq.s32.totalorder %s26, 1
      %p65 = por %p63, %p64
      %p66 = scmp.ne.s32.totalorder %s57, %s58
      %p67 = scmp.eq.s32.totalorder %s26, 0
      %p68 = por %p66, %p67
      %p69 = scmp.ne.s32.totalorder %s57, %s58
      %p70 = scmp.eq.s32.totalorder %s27, 1
      %p71 = por %p69, %p70
      %p73 = scmp.ne.s32.totalorder %s58, %s72
      %p74 = scmp.eq.s32.totalorder %s27, 0
      %p75 = por %p73, %p74
      %s77 = sadd.s32 %s76, 1
      %p80 = scmp.eq.s32.totalorder %s21, 1
      %p81 = scmp.ne.s32.totalorder %s76, %s78
      %p82 = scmp.eq.s32.totalorder %s21, 0
      %p83 = por %p81, %p82
      %p84 = scmp.ne.s32.totalorder %s76, %s78
      %p85 = scmp.eq.s32.totalorder %s26, 1
      %p86 = por %p84, %p85
      %p87 = scmp.ne.s32.totalorder %s78, %s79
      %p88 = scmp.eq.s32.totalorder %s26, 0
      %p89 = por %p87, %p88
      %p90 = scmp.ne.s32.totalorder %s78, %s79
      %p91 = scmp.eq.s32.totalorder %s27, 1
      %p92 = por %p90, %p91
      %p94 = scmp.ne.s32.totalorder %s79, %s93
      %p95 = scmp.eq.s32.totalorder %s27, 0
      %p96 = por %p94, %p95
      %s98 = sadd.s32 %s97, 1
      %p101 = scmp.eq.s32.totalorder %s21, 1
      %p102 = scmp.ne.s32.totalorder %s97, %s99
      %p103 = scmp.eq.s32.totalorder %s21, 0
      %p104 = por %p102, %p103
      %p105 = scmp.ne.s32.totalorder %s97, %s99
      %p106 = scmp.eq.s32.totalorder %s26, 1
      %p107 = por %p105, %p106
      %p108 = scmp.ne.s32.totalorder %s99, %s100
      %p109 = scmp.eq.s32.totalorder %s26, 0
      %p110 = por %p108, %p109
      %p111 = scmp.ne.s32.totalorder %s99, %s100
      %p112 = scmp.eq.s32.totalorder %s27, 1
      %p113 = por %p111, %p112
      %p115 = scmp.ne.s32.totalorder %s100, %s114
      %p116 = scmp.eq.s32.totalorder %s27, 0
      %p117 = por %p115, %p116
      %s119 = sadd.s32 %s118, 1
      %p122 = scmp.eq.s32.totalorder %s21, 1
      %p123 = scmp.ne.s32.totalorder %s118, %s120
      %p124 = scmp.eq.s32.totalorder %s21, 0
      %p125 = por %p123, %p124
      %p126 = scmp.ne.s32.totalorder %s118, %s120
      %p127 = scmp.eq.s32.totalorder %s26, 1
      %p128 = por %p126, %p127
      %p129 = scmp.ne.s32.totalorder %s120, %s121
      %p130 = scmp.eq.s32.totalorder %s26, 0
      %p131 = por %p129, %p130
      %p132 = scmp.ne.s32.totalorder %s120, %s121
      %p133 = scmp.eq.s32.totalorder %s27, 1
      %p134 = por %p132, %p133
      %p136 = scmp.ne.s32.totalorder %s121, %s135
      %p137 = scmp.eq.s32.totalorder %s27, 0
      %p138 = por %p136, %p137
      %s140 = sadd.s32 %s139, 1
      %p143 = scmp.eq.s32.totalorder %s21, 1
      %p144 = scmp.ne.s32.totalorder %s139, %s141
      %p145 = scmp.eq.s32.totalorder %s21, 0
      %p146 = por %p144, %p145
      %p147 = scmp.ne.s32.totalorder %s139, %s141
      %p148 = scmp.eq.s32.totalorder %s26, 1
      %p149 = por %p147, %p148
      %p150 = scmp.ne.s32.totalorder %s141, %s142
      %p151 = scmp.eq.s32.totalorder %s26, 0
      %p152 = por %p150, %p151
      %p153 = scmp.ne.s32.totalorder %s141, %s142
      %p154 = scmp.eq.s32.totalorder %s27, 1
      %p155 = por %p153, %p154
      %p157 = scmp.ne.s32.totalorder %s142, %s156
      %p158 = scmp.eq.s32.totalorder %s27, 0
      %p159 = por %p157, %p158
      %s161 = sadd.s32 %s160, 1
      %p164 = scmp.eq.s32.totalorder %s21, 1
      %p165 = scmp.ne.s32.totalorder %s160, %s162
      %p166 = scmp.eq.s32.totalorder %s21, 0
      %p167 = por %p165, %p166
      %p168 = scmp.ne.s32.totalorder %s160, %s162
      %p169 = scmp.eq.s32.totalorder %s26, 1
      %p170 = por %p168, %p169
      %p171 = scmp.ne.s32.totalorder %s162, %s163
      %p172 = scmp.eq.s32.totalorder %s26, 0
      %p173 = por %p171, %p172
      %p174 = scmp.ne.s32.totalorder %s162, %s163
      %p175 = scmp.eq.s32.totalorder %s27, 1
      %p176 = por %p174, %p175
      %p178 = scmp.ne.s32.totalorder %s163, %s177
      %p179 = scmp.eq.s32.totalorder %s27, 0
      %p180 = por %p178, %p179
      %s182 = sadd.s32 %s181, 1
      %p185 = scmp.eq.s32.totalorder %s21, 1
      %p186 = scmp.ne.s32.totalorder %s181, %s183
      %p187 = scmp.eq.s32.totalorder %s21, 0
      %p188 = por %p186, %p187
      %p189 = scmp.ne.s32.totalorder %s181, %s183
      %p190 = scmp.eq.s32.totalorder %s26, 1
      %p191 = por %p189, %p190
      %p192 = scmp.ne.s32.totalorder %s183, %s184
      %p193 = scmp.eq.s32.totalorder %s26, 0
      %p194 = por %p192, %p193
      %p195 = scmp.ne.s32.totalorder %s183, %s184
      %p196 = scmp.eq.s32.totalorder %s27, 1
      %p197 = por %p195, %p196
      %p199 = scmp.ne.s32.totalorder %s184, %s198
      %p200 = scmp.eq.s32.totalorder %s27, 0
      %p201 = por %p199, %p200
      %s202 = ssub.s32 %s21, %s28
      %p203 = scmp.eq.s32.totalorder %s202, 0
      %s205 = sadd.s32 %s204, 1
      %s206 = scalar_select %p203, %s204, %s205
      %p209 = pneg %p203
      %p210 = scmp.eq.s32.totalorder %s21, 1
      %p211 = por %p209, %p210
      %p212 = scmp.ne.s32.totalorder %s204, %s207
      %p213 = scmp.eq.s32.totalorder %s21, 0
      %p214 = por %p212, %p213
      %p215 = scmp.ne.s32.totalorder %s204, %s207
      %p216 = scmp.eq.s32.totalorder %s26, 1
      %p217 = por %p215, %p216
      %p218 = scmp.ne.s32.totalorder %s207, %s208
      %p219 = scmp.eq.s32.totalorder %s26, 0
      %p220 = por %p218, %p219
      %p221 = scmp.ne.s32.totalorder %s207, %s208
      %p222 = scmp.eq.s32.totalorder %s27, 1
      %p223 = por %p221, %p222
      %p225 = scmp.ne.s32.totalorder %s208, %s224
      %p226 = scmp.eq.s32.totalorder %s27, 0
      %p227 = por %p225, %p226
      %p228 = scmp.le.s32.totalorder 1, %s21
      %p229 = scmp.lt.s32.totalorder %s21, 3
      %p230 = pnand %p228, %p229
      %p231 = pneg %p230
      // Predicated region
      $region9: #{tpu_custom_call.1} parent=5 // pred_check
        _
      $region10: #{tpu_custom_call.1} parent=5 // pred_check_branch
        %233 = sbr.rel (%p230) target = $region12
      $region11: #{tpu_custom_call.1} parent=5 // pred_region
        %s234 = ssub.s32 %s21, 1
        // Predicated region
        $region13: #{tpu_custom_call.1} parent=11 // pred_check
          %p235 = pneg %p68
        $region14: #{tpu_custom_call.1} parent=11 // pred_check_branch
          %237 = sbr.rel (%p235) target = $region16
        $region15: #{tpu_custom_call.1} parent=11 // pred_region
          %s239 = ssub.s32 256, 256
          %240 = vsyncadd [#allocation3], %s239
          %s241 = sshll.u32 [#allocation2], 4
          %s242 = int_to_ptr.vmem [resolvable:$true] %s241
          %247 = dma.hbm_to_vmem [thread:$0]  %s1, 256, %s242, [#allocation3], 128, 128, 8
        $region16: #{tpu_custom_call.1} parent=11 // pred_fallthru
          _
        // Predicated region
        $region17: #{tpu_custom_call.1} parent=11 // pred_check
          %p248 = pneg %p89
        $region18: #{tpu_custom_call.1} parent=11 // pred_check_branch
          %250 = sbr.rel (%p248) target = $region20
        $region19: #{tpu_custom_call.1} parent=11 // pred_region
          %s252 = ssub.s32 32, 32
          %253 = vsyncadd [#allocation6], %s252
          %s255 = sshll.u32 [#allocation5], 4
          %s256 = int_to_ptr.vmem [resolvable:$true] %s255
          %258 = dma.hbm_to_vmem [thread:$0]  %s2, 32, %s256, [#allocation6]
        $region20: #{tpu_custom_call.1} parent=11 // pred_fallthru
          _
        // Predicated region
        $region21: #{tpu_custom_call.1} parent=11 // pred_check
          %p259 = pneg %p110
        $region22: #{tpu_custom_call.1} parent=11 // pred_check_branch
          %261 = sbr.rel (%p259) target = $region24
        $region23: #{tpu_custom_call.1} parent=11 // pred_region
          %s263 = ssub.s32 16, 16
          %264 = vsyncadd [#allocation6], %s263
          %s266 = sshll.u32 [#allocation7], 4
          %s267 = int_to_ptr.vmem [resolvable:$true] %s266
          %269 = dma.hbm_to_vmem [thread:$0]  %s3, 16, %s267, [#allocation6]
        $region24: #{tpu_custom_call.1} parent=11 // pred_fallthru
          _
        // Predicated region
        $region25: #{tpu_custom_call.1} parent=11 // pred_check
          %p270 = pneg %p131
        $region26: #{tpu_custom_call.1} parent=11 // pred_check_branch
          %272 = sbr.rel (%p270) target = $region28
        $region27: #{tpu_custom_call.1} parent=11 // pred_region
          %s274 = ssub.s32 131072, 131072
          %275 = vsyncadd [#allocation9], %s274
          %s276 = sshll.u32 [#allocation8], 4
          %s277 = int_to_ptr.vmem [resolvable:$true] %s276
          %282 = dma.hbm_to_vmem [thread:$0]  %s4, 131072, %s277, [#allocation9], 512, 512, 32
        $region28: #{tpu_custom_call.1} parent=11 // pred_fallthru
          _
        // Predicated region
        $region29: #{tpu_custom_call.1} parent=11 // pred_check
          %p283 = pneg %p152
        $region30: #{tpu_custom_call.1} parent=11 // pred_check_branch
          %285 = sbr.rel (%p283) target = $region32
        $region31: #{tpu_custom_call.1} parent=11 // pred_region
          %s287 = ssub.s32 128, 128
          %288 = vsyncadd [#allocation9], %s287
          %s290 = sshll.u32 [#allocation10], 4
          %s291 = int_to_ptr.vmem [resolvable:$true] %s290
          %293 = dma.hbm_to_vmem [thread:$0]  %s5, 128, %s291, [#allocation9]
        $region32: #{tpu_custom_call.1} parent=11 // pred_fallthru
          _
        // Predicated region
        $region33: #{tpu_custom_call.1} parent=11 // pred_check
          %p294 = pneg %p173
        $region34: #{tpu_custom_call.1} parent=11 // pred_check_branch
          %296 = sbr.rel (%p294) target = $region36
        $region35: #{tpu_custom_call.1} parent=11 // pred_region
          %s298 = ssub.s32 8192, 8192
          %299 = vsyncadd [#allocation12], %s298
          %s300 = sshll.u32 [#allocation11], 4
          %s301 = int_to_ptr.vmem [resolvable:$true] %s300
          %306 = dma.hbm_to_vmem [thread:$0]  %s6, 8192, %s301, [#allocation12], 64, 64, 4
        $region36: #{tpu_custom_call.1} parent=11 // pred_fallthru
          _
        // Predicated region
        $region37: #{tpu_custom_call.1} parent=11 // pred_check
          %p307 = pneg %p194
        $region38: #{tpu_custom_call.1} parent=11 // pred_check_branch
          %309 = sbr.rel (%p307) target = $region40
        $region39: #{tpu_custom_call.1} parent=11 // pred_region
          %s311 = ssub.s32 16, 16
          %312 = vsyncadd [#allocation12], %s311
          %s314 = sshll.u32 [#allocation13], 4
          %s315 = int_to_ptr.vmem [resolvable:$true] %s314
          %317 = dma.hbm_to_vmem [thread:$0]  %s7, 16, %s315, [#allocation12]
        $region40: #{tpu_custom_call.1} parent=11 // pred_fallthru
          _
      $region12: #{tpu_custom_call.1} parent=5 // pred_fallthru
        _
      %p318 = scmp.lt.s32.totalorder %s21, 2
      // Predicated region
      $region41: #{tpu_custom_call.1} parent=5 // pred_check
        %p319 = pneg %p318
      $region42: #{tpu_custom_call.1} parent=5 // pred_check_branch
        %321 = sbr.rel (%p319) target = $region44
      $region43: #{tpu_custom_call.1} parent=5 // pred_region
        // Predicated region
        $region45: #{tpu_custom_call.1} parent=43 // pred_check
          %p322 = pneg %p41
        $region46: #{tpu_custom_call.1} parent=43 // pred_check_branch
          %324 = sbr.rel (%p322) target = $region48
        $region47: #{tpu_custom_call.1} parent=43 // pred_region
          %p325 = scmp.lt.s32.totalorder %s21, 1
          %s326 = scalar_select %p325, %s21, 1
          %s327 = smul.addr %s326, 32
          %s328 = smul.addr %s327, 4
          %s329 = scalar_lea.vmem %s0, %s328
        $region48: #{tpu_custom_call.1} parent=43 // pred_fallthru
          _
      $region44: #{tpu_custom_call.1} parent=5 // pred_fallthru
        _
      %p330 = scmp.le.s32.totalorder 1, %s21
      %p331 = scmp.lt.s32.totalorder %s21, 3
      %p332 = pnand %p330, %p331
      %p333 = pneg %p332
      // Predicated region
      $region49: #{tpu_custom_call.1} parent=5 // pred_check
        _
      $region50: #{tpu_custom_call.1} parent=5 // pred_check_branch
        %335 = sbr.rel (%p332) target = $region52
      $region51: #{tpu_custom_call.1} parent=5 // pred_region
        %s336 = ssub.s32 %s21, 1
        // Predicated region
        $region53: #{tpu_custom_call.1} parent=51 // pred_check
          %p337 = pneg %p68
        $region54: #{tpu_custom_call.1} parent=51 // pred_check_branch
          %339 = sbr.rel (%p337) target = $region56
        $region55: #{tpu_custom_call.1} parent=51 // pred_region
          %340 = dma.done [#allocation3], 256
        $region56: #{tpu_custom_call.1} parent=51 // pred_fallthru
          _
        // Predicated region
        $region57: #{tpu_custom_call.1} parent=51 // pred_check
          %p341 = pneg %p89
        $region58: #{tpu_custom_call.1} parent=51 // pred_check_branch
          %343 = sbr.rel (%p341) target = $region60
        $region59: #{tpu_custom_call.1} parent=51 // pred_region
          %344 = dma.done [#allocation6], 32
        $region60: #{tpu_custom_call.1} parent=51 // pred_fallthru
          _
        // Predicated region
        $region61: #{tpu_custom_call.1} parent=51 // pred_check
          %p345 = pneg %p110
        $region62: #{tpu_custom_call.1} parent=51 // pred_check_branch
          %347 = sbr.rel (%p345) target = $region64
        $region63: #{tpu_custom_call.1} parent=51 // pred_region
          %348 = dma.done [#allocation6], 16
        $region64: #{tpu_custom_call.1} parent=51 // pred_fallthru
          _
        // Predicated region
        $region65: #{tpu_custom_call.1} parent=51 // pred_check
          %p349 = pneg %p131
        $region66: #{tpu_custom_call.1} parent=51 // pred_check_branch
          %351 = sbr.rel (%p349) target = $region68
        $region67: #{tpu_custom_call.1} parent=51 // pred_region
          %352 = dma.done [#allocation9], 131072
        $region68: #{tpu_custom_call.1} parent=51 // pred_fallthru
          _
        // Predicated region
        $region69: #{tpu_custom_call.1} parent=51 // pred_check
          %p353 = pneg %p152
        $region70: #{tpu_custom_call.1} parent=51 // pred_check_branch
          %355 = sbr.rel (%p353) target = $region72
        $region71: #{tpu_custom_call.1} parent=51 // pred_region
          %356 = dma.done [#allocation9], 128
        $region72: #{tpu_custom_call.1} parent=51 // pred_fallthru
          _
        // Predicated region
        $region73: #{tpu_custom_call.1} parent=51 // pred_check
          %p357 = pneg %p173
        $region74: #{tpu_custom_call.1} parent=51 // pred_check_branch
          %359 = sbr.rel (%p357) target = $region76
        $region75: #{tpu_custom_call.1} parent=51 // pred_region
          %360 = dma.done [#allocation12], 8192
        $region76: #{tpu_custom_call.1} parent=51 // pred_fallthru
          _
        // Predicated region
        $region77: #{tpu_custom_call.1} parent=51 // pred_check
          %p361 = pneg %p194
        $region78: #{tpu_custom_call.1} parent=51 // pred_check_branch
          %363 = sbr.rel (%p361) target = $region80
        $region79: #{tpu_custom_call.1} parent=51 // pred_region
          %364 = dma.done [#allocation12], 16
        $region80: #{tpu_custom_call.1} parent=51 // pred_fallthru
          _
        %p365 = scmp.lt.s32.totalorder %s26, 1
        %s366 = scalar_select %p365, %s26, 1
        %s367 = smul.addr %s366, 32
        %s368 = smul.addr %s367, 4
        %s369 = scalar_lea.vmem %s0, %s368
        %p370 = pneg %p47
        %p371 = pneg %p44
        %p372 = pneg %p68
        %p373 = pneg %p65
        %p374 = pneg %p89
        %p375 = pneg %p86
        %p376 = pneg %p110
        %p377 = pneg %p107
        %p378 = pneg %p131
        %p379 = pneg %p128
        %p380 = pneg %p152
        %p381 = pneg %p149
        %p382 = pneg %p173
        %p383 = pneg %p170
        %p384 = pneg %p194
        %p385 = pneg %p191
        %p386 = pneg %p220
        %p387 = pneg %p217
        %s388 = sand.u32 %s207, 1
        %s389 = scalar_lea.sflag [#allocation4], %s388
        %s390 = sand.u32 %s207, 1
        %s391 = scalar_lea.vmem [#allocation14], %s390
        %p392 = scmp.lt.s32.totalorder %s26, 1
        %s393 = scalar_select %p392, %s26, 1
        %s394 = smul.addr %s393, 32
        %s395 = smul.addr %s394, 4
        %s396 = scalar_lea.vmem %s0, %s395
        %v398 = vld [vmem:[%s396] sm:$0xf]
        %v399 = vld [vmem:[%s396 + $0x4] sm:$0xf]
        %v400 = vld [vmem:[%s396 + $0x8] sm:$0xf]
        %v401 = vld [vmem:[%s396 + $0xc] sm:$0xf]
        %v402 = vld [vmem:[%s396 + $0x10] sm:$0xf]
        %v403 = vld [vmem:[%s396 + $0x14] sm:$0xf]
        %v404 = vld [vmem:[%s396 + $0x18] sm:$0xf]
        %v405 = vld [vmem:[%s396 + $0x1c] sm:$0xf]
        %v406 = vld [vmem:[%s396 + $0x20] sm:$0xf]
        %v407 = vld [vmem:[%s396 + $0x24] sm:$0xf]
        %v408 = vld [vmem:[%s396 + $0x28] sm:$0xf]
        %v409 = vld [vmem:[%s396 + $0x2c] sm:$0xf]
        %v410 = vld [vmem:[%s396 + $0x30] sm:$0xf]
        %v411 = vld [vmem:[%s396 + $0x34] sm:$0xf]
        %v412 = vld [vmem:[%s396 + $0x38] sm:$0xf]
        %v413 = vld [vmem:[%s396 + $0x3c] sm:$0xf]
        %v414 = vld [vmem:[%s396 + $0x40] sm:$0xf]
        %v415 = vld [vmem:[%s396 + $0x44] sm:$0xf]
        %v416 = vld [vmem:[%s396 + $0x48] sm:$0xf]
        %v417 = vld [vmem:[%s396 + $0x4c] sm:$0xf]
        %v418 = vld [vmem:[%s396 + $0x50] sm:$0xf]
        %v419 = vld [vmem:[%s396 + $0x54] sm:$0xf]
        %v420 = vld [vmem:[%s396 + $0x58] sm:$0xf]
        %v421 = vld [vmem:[%s396 + $0x5c] sm:$0xf]
        %v422 = vld [vmem:[%s396 + $0x60] sm:$0xf]
        %v423 = vld [vmem:[%s396 + $0x64] sm:$0xf]
        %v424 = vld [vmem:[%s396 + $0x68] sm:$0xf]
        %v425 = vld [vmem:[%s396 + $0x6c] sm:$0xf]
        %v426 = vld [vmem:[%s396 + $0x70] sm:$0xf]
        %v427 = vld [vmem:[%s396 + $0x74] sm:$0xf]
        %v428 = vld [vmem:[%s396 + $0x78] sm:$0xf]
        %v429 = vld [vmem:[%s396 + $0x7c] sm:$0xf]
        %v430 = vld [vmem:[#allocation2] sm:$0xff]
        %v431 = vld [vmem:[#allocation2 + $0x8] sm:$0xff]
        %v434 = vunpack.c.l.b16 %v430
        %v435 = vunpack.c.h.b16 %v430
        %v436 = vunpack.c.l.b16 %v431
        %v437 = vunpack.c.h.b16 %v431
        %v438 = vpack.c.b16 %v436, %v434
        %v439 = vpack.c.b16 %v437, %v435
        %v474 = vunpack.c.l.b16 %v398
        %v475 = vunpack.c.l.b16 %v399
        %v476 = vunpack.c.l.b16 %v400
        %v477 = vunpack.c.l.b16 %v401
        %v478 = vunpack.c.l.b16 %v402
        %v479 = vunpack.c.l.b16 %v403
        %v480 = vunpack.c.l.b16 %v404
        %v481 = vunpack.c.l.b16 %v405
        %v482 = vunpack.c.l.b16 %v406
        %v483 = vunpack.c.l.b16 %v407
        %v484 = vunpack.c.l.b16 %v408
        %v485 = vunpack.c.l.b16 %v409
        %v486 = vunpack.c.l.b16 %v410
        %v487 = vunpack.c.l.b16 %v411
        %v488 = vunpack.c.l.b16 %v412
        %v489 = vunpack.c.l.b16 %v413
        %v490 = vunpack.c.l.b16 %v414
        %v491 = vunpack.c.l.b16 %v415
        %v492 = vunpack.c.l.b16 %v416
        %v493 = vunpack.c.l.b16 %v417
        %v494 = vunpack.c.l.b16 %v418
        %v495 = vunpack.c.l.b16 %v419
        %v496 = vunpack.c.l.b16 %v420
        %v497 = vunpack.c.l.b16 %v421
        %v498 = vunpack.c.l.b16 %v422
        %v499 = vunpack.c.l.b16 %v423
        %v500 = vunpack.c.l.b16 %v424
        %v501 = vunpack.c.l.b16 %v425
        %v502 = vunpack.c.l.b16 %v426
        %v503 = vunpack.c.l.b16 %v427
        %v504 = vunpack.c.l.b16 %v428
        %v505 = vunpack.c.l.b16 %v429
        %v506 = vpack.c.b16 %v475, %v474
        %v507 = vpack.c.b16 %v477, %v476
        %v508 = vpack.c.b16 %v479, %v478
        %v509 = vpack.c.b16 %v481, %v480
        %v510 = vpack.c.b16 %v483, %v482
        %v511 = vpack.c.b16 %v485, %v484
        %v512 = vpack.c.b16 %v487, %v486
        %v513 = vpack.c.b16 %v489, %v488
        %v514 = vpack.c.b16 %v491, %v490
        %v515 = vpack.c.b16 %v493, %v492
        %v516 = vpack.c.b16 %v495, %v494
        %v517 = vpack.c.b16 %v497, %v496
        %v518 = vpack.c.b16 %v499, %v498
        %v519 = vpack.c.b16 %v501, %v500
        %v520 = vpack.c.b16 %v503, %v502
        %v521 = vpack.c.b16 %v505, %v504
        %538 = vmatprep.subr.bf16.mxu0 0
        %539 = vmatpush1.bf16.msra.mxu0 %v506
        %540 = vmatprep.subr.bf16.mxu0 0
        %541 = vmatpush1.bf16.msra.mxu0 %v507
        %542 = vmatprep.subr.bf16.mxu0 0
        %543 = vmatpush1.bf16.msra.mxu0 %v508
        %544 = vmatprep.subr.bf16.mxu0 0
        %545 = vmatpush1.bf16.msra.mxu0 %v509
        %546 = vmatprep.subr.bf16.mxu0 0
        %547 = vmatpush1.bf16.msra.mxu0 %v510
        %548 = vmatprep.subr.bf16.mxu0 0
        %549 = vmatpush1.bf16.msra.mxu0 %v511
        %550 = vmatprep.subr.bf16.mxu0 0
        %551 = vmatpush1.bf16.msra.mxu0 %v512
        %552 = vmatprep.subr.bf16.mxu0 0
        %553 = vmatpush1.bf16.msra.mxu0 %v513
        %554 = vmatprep.subr.bf16.mxu0 0
        %555 = vmatpush1.bf16.msra.mxu0 %v514
        %556 = vmatprep.subr.bf16.mxu0 0
        %557 = vmatpush1.bf16.msra.mxu0 %v515
        %558 = vmatprep.subr.bf16.mxu0 0
        %559 = vmatpush1.bf16.msra.mxu0 %v516
        %560 = vmatprep.subr.bf16.mxu0 0
        %561 = vmatpush1.bf16.msra.mxu0 %v517
        %562 = vmatprep.subr.bf16.mxu0 0
        %563 = vmatpush1.bf16.msra.mxu0 %v518
        %564 = vmatprep.subr.bf16.mxu0 0
        %565 = vmatpush1.bf16.msra.mxu0 %v519
        %566 = vmatprep.subr.bf16.mxu0 0
        %567 = vmatpush1.bf16.msra.mxu0 %v520
        %568 = vmatprep.subr.bf16.mxu0 0
        %569 = vmatpush1.bf16.msra.mxu0 %v521
        %570 = vmatprep.mubr.bf16.mxu0 %v439
        %571 = vmatmul.mubr.bf16.gmra.mrb[0].mxu0 %v438
        %v572 = vpop.f32.mrb[0].mxu0
        %v573 = vadd.f32 0.0, %v572
        %v574 = vpop.f32.mrb[0].mxu0
        %v575 = vpop.f32.mrb[0].mxu0
        %v576 = vadd.f32 0.0, %v575
        %v577 = vpop.f32.mrb[0].mxu0
        %578 = vdwg.mxu0
        %v579 = vmul.f32 %v573, 0.04
        %v580 = vmul.f32 %v576, 0.04
        %v581 = vpack.c.bf16 %v580, %v579
        %v582 = vld [vmem:[#allocation5] sm:$0x3]
        %v583 = vld [vmem:[#allocation7] sm:$0x1]
        %v585 = vlaneseq
        %v586 = vshrl.u32 %v585, 7
        %v587 = vsub.s32 0, %v586
        %v588 = vrot.slane %v583, %v587
        %vm590 = vcmask 31744
        %v592 = vsel %vm590, %v581, 0
        %vm594 = vcmask 1041408
        %v596 = vsel %vm594, %v582, 0
        %598 = vmatprep.subr.bf16.mxu0 0
        %599 = vmatpush1.bf16.msra.mxu0 %v596
        %600 = vmatprep.subr.bf16.mxu0 0
        %601 = vmatpush1.bf16.msra.mxu0 0
        %602 = vmatprep.subr.bf16.mxu0 0
        %603 = vmatpush1.bf16.msra.mxu0 0
        %604 = vmatprep.subr.bf16.mxu0 0
        %605 = vmatpush1.bf16.msra.mxu0 0
        %606 = vmatprep.subr.bf16.mxu0 0
        %607 = vmatpush1.bf16.msra.mxu0 0
        %608 = vmatprep.subr.bf16.mxu0 0
        %609 = vmatpush1.bf16.msra.mxu0 0
        %610 = vmatprep.subr.bf16.mxu0 0
        %611 = vmatpush1.bf16.msra.mxu0 0
        %612 = vmatprep.subr.bf16.mxu0 0
        %613 = vmatpush1.bf16.msra.mxu0 0
        %614 = vmatprep.subr.bf16.mxu0 0
        %615 = vmatpush1.bf16.msra.mxu0 0
        %616 = vmatprep.subr.bf16.mxu0 0
        %617 = vmatpush1.bf16.msra.mxu0 0
        %618 = vmatprep.subr.bf16.mxu0 0
        %619 = vmatpush1.bf16.msra.mxu0 0
        %620 = vmatprep.subr.bf16.mxu0 0
        %621 = vmatpush1.bf16.msra.mxu0 0
        %622 = vmatprep.subr.bf16.mxu0 0
        %623 = vmatpush1.bf16.msra.mxu0 0
        %624 = vmatprep.subr.bf16.mxu0 0
        %625 = vmatpush1.bf16.msra.mxu0 0
        %626 = vmatprep.subr.bf16.mxu0 0
        %627 = vmatpush1.bf16.msra.mxu0 0
        %628 = vmatprep.subr.bf16.mxu0 0
        %629 = vmatpush1.bf16.msra.mxu0 0
        %630 = vmatprep.mubr.bf16.mxu0 0
        %631 = vmatmul.mubr.bf16.gmra.mrb[0].mxu0 %v592
        %v632 = vpop.f32.mrb[0].mxu0
        %v633 = vadd.f32 %v588, %v632
        %v634 = vpop.f32.mrb[0].mxu0
        %v635 = vpop.f32.mrb[0].mxu0
        %v636 = vadd.f32 %v588, %v635
        %v637 = vpop.f32.mrb[0].mxu0
        %638 = vdwg.mxu0
        %v639 = vmax.f32 %v633, 0.0
        %v640 = vmax.f32 %v636, 0.0
        %v641 = vpack.c.bf16 %v639, %v639
        %v642 = vld [vmem:[#allocation8] sm:$0xff]
        %v643 = vld [vmem:[#allocation8 + $0x8] sm:$0xff]
        %v644 = vld [vmem:[#allocation8 + $0x10] sm:$0xff]
        %v645 = vld [vmem:[#allocation8 + $0x18] sm:$0xff]
        %v646 = vld [vmem:[#allocation8 + $0x20] sm:$0xff]
        %v647 = vld [vmem:[#allocation8 + $0x28] sm:$0xff]
        %v648 = vld [vmem:[#allocation8 + $0x30] sm:$0xff]
        %v649 = vld [vmem:[#allocation8 + $0x38] sm:$0xff]
        %v650 = vld [vmem:[#allocation8 + $0x40] sm:$0xff]
        %v651 = vld [vmem:[#allocation8 + $0x48] sm:$0xff]
        %v652 = vld [vmem:[#allocation8 + $0x50] sm:$0xff]
        %v653 = vld [vmem:[#allocation8 + $0x58] sm:$0xff]
        %v654 = vld [vmem:[#allocation8 + $0x60] sm:$0xff]
        %v655 = vld [vmem:[#allocation8 + $0x68] sm:$0xff]
        %v656 = vld [vmem:[#allocation8 + $0x70] sm:$0xff]
        %v657 = vld [vmem:[#allocation8 + $0x78] sm:$0xff]
        %v658 = vld [vmem:[#allocation8 + $0x80] sm:$0xff]
        %v659 = vld [vmem:[#allocation8 + $0x88] sm:$0xff]
        %v660 = vld [vmem:[#allocation8 + $0x90] sm:$0xff]
        %v661 = vld [vmem:[#allocation8 + $0x98] sm:$0xff]
        %v662 = vld [vmem:[#allocation8 + $0xa0] sm:$0xff]
        %v663 = vld [vmem:[#allocation8 + $0xa8] sm:$0xff]
        %v664 = vld [vmem:[#allocation8 + $0xb0] sm:$0xff]
        %v665 = vld [vmem:[#allocation8 + $0xb8] sm:$0xff]
        %v666 = vld [vmem:[#allocation8 + $0xc0] sm:$0xff]
        %v667 = vld [vmem:[#allocation8 + $0xc8] sm:$0xff]
        %v668 = vld [vmem:[#allocation8 + $0xd0] sm:$0xff]
        %v669 = vld [vmem:[#allocation8 + $0xd8] sm:$0xff]
        %v670 = vld [vmem:[#allocation8 + $0xe0] sm:$0xff]
        %v671 = vld [vmem:[#allocation8 + $0xe8] sm:$0xff]
        %v672 = vld [vmem:[#allocation8 + $0xf0] sm:$0xff]
        %v673 = vld [vmem:[#allocation8 + $0xf8] sm:$0xff]
        %v674 = vld [vmem:[#allocation8 + $0x100] sm:$0xff]
        %v675 = vld [vmem:[#allocation8 + $0x108] sm:$0xff]
        %v676 = vld [vmem:[#allocation8 + $0x110] sm:$0xff]
        %v677 = vld [vmem:[#allocation8 + $0x118] sm:$0xff]
        %v678 = vld [vmem:[#allocation8 + $0x120] sm:$0xff]
        %v679 = vld [vmem:[#allocation8 + $0x128] sm:$0xff]
        %v680 = vld [vmem:[#allocation8 + $0x130] sm:$0xff]
        %v681 = vld [vmem:[#allocation8 + $0x138] sm:$0xff]
        %v682 = vld [vmem:[#allocation8 + $0x140] sm:$0xff]
        %v683 = vld [vmem:[#allocation8 + $0x148] sm:$0xff]
        %v684 = vld [vmem:[#allocation8 + $0x150] sm:$0xff]
        %v685 = vld [vmem:[#allocation8 + $0x158] sm:$0xff]
        %v686 = vld [vmem:[#allocation8 + $0x160] sm:$0xff]
        %v687 = vld [vmem:[#allocation8 + $0x168] sm:$0xff]
        %v688 = vld [vmem:[#allocation8 + $0x170] sm:$0xff]
        %v689 = vld [vmem:[#allocation8 + $0x178] sm:$0xff]
        %v690 = vld [vmem:[#allocation8 + $0x180] sm:$0xff]
        %v691 = vld [vmem:[#allocation8 + $0x188] sm:$0xff]
        %v692 = vld [vmem:[#allocation8 + $0x190] sm:$0xff]
        %v693 = vld [vmem:[#allocation8 + $0x198] sm:$0xff]
        %v694 = vld [vmem:[#allocation8 + $0x1a0] sm:$0xff]
        %v695 = vld [vmem:[#allocation8 + $0x1a8] sm:$0xff]
        %v696 = vld [vmem:[#allocation8 + $0x1b0] sm:$0xff]
        %v697 = vld [vmem:[#allocation8 + $0x1b8] sm:$0xff]
        %v698 = vld [vmem:[#allocation8 + $0x1c0] sm:$0xff]
        %v699 = vld [vmem:[#allocation8 + $0x1c8] sm:$0xff]
        %v700 = vld [vmem:[#allocation8 + $0x1d0] sm:$0xff]
        %v701 = vld [vmem:[#allocation8 + $0x1d8] sm:$0xff]
        %v702 = vld [vmem:[#allocation8 + $0x1e0] sm:$0xff]
        %v703 = vld [vmem:[#allocation8 + $0x1e8] sm:$0xff]
        %v704 = vld [vmem:[#allocation8 + $0x1f0] sm:$0xff]
        %v705 = vld [vmem:[#allocation8 + $0x1f8] sm:$0xff]
        %v706 = vld [vmem:[#allocation8 + $0x200] sm:$0xff]
        %v707 = vld [vmem:[#allocation8 + $0x208] sm:$0xff]
        %v708 = vld [vmem:[#allocation8 + $0x210] sm:$0xff]
        %v709 = vld [vmem:[#allocation8 + $0x218] sm:$0xff]
        %v710 = vld [vmem:[#allocation8 + $0x220] sm:$0xff]
        %v711 = vld [vmem:[#allocation8 + $0x228] sm:$0xff]
        %v712 = vld [vmem:[#allocation8 + $0x230] sm:$0xff]
        %v713 = vld [vmem:[#allocation8 + $0x238] sm:$0xff]
        %v714 = vld [vmem:[#allocation8 + $0x240] sm:$0xff]
        %v715 = vld [vmem:[#allocation8 + $0x248] sm:$0xff]
        %v716 = vld [vmem:[#allocation8 + $0x250] sm:$0xff]
        %v717 = vld [vmem:[#allocation8 + $0x258] sm:$0xff]
        %v718 = vld [vmem:[#allocation8 + $0x260] sm:$0xff]
        %v719 = vld [vmem:[#allocation8 + $0x268] sm:$0xff]
        %v720 = vld [vmem:[#allocation8 + $0x270] sm:$0xff]
        %v721 = vld [vmem:[#allocation8 + $0x278] sm:$0xff]
        %v722 = vld [vmem:[#allocation8 + $0x280] sm:$0xff]
        %v723 = vld [vmem:[#allocation8 + $0x288] sm:$0xff]
        %v724 = vld [vmem:[#allocation8 + $0x290] sm:$0xff]
        %v725 = vld [vmem:[#allocation8 + $0x298] sm:$0xff]
        %v726 = vld [vmem:[#allocation8 + $0x2a0] sm:$0xff]
        %v727 = vld [vmem:[#allocation8 + $0x2a8] sm:$0xff]
        %v728 = vld [vmem:[#allocation8 + $0x2b0] sm:$0xff]
        %v729 = vld [vmem:[#allocation8 + $0x2b8] sm:$0xff]
        %v730 = vld [vmem:[#allocation8 + $0x2c0] sm:$0xff]
        %v731 = vld [vmem:[#allocation8 + $0x2c8] sm:$0xff]
        %v732 = vld [vmem:[#allocation8 + $0x2d0] sm:$0xff]
        %v733 = vld [vmem:[#allocation8 + $0x2d8] sm:$0xff]
        %v734 = vld [vmem:[#allocation8 + $0x2e0] sm:$0xff]
        %v735 = vld [vmem:[#allocation8 + $0x2e8] sm:$0xff]
        %v736 = vld [vmem:[#allocation8 + $0x2f0] sm:$0xff]
        %v737 = vld [vmem:[#allocation8 + $0x2f8] sm:$0xff]
        %v738 = vld [vmem:[#allocation8 + $0x300] sm:$0xff]
        %v739 = vld [vmem:[#allocation8 + $0x308] sm:$0xff]
        %v740 = vld [vmem:[#allocation8 + $0x310] sm:$0xff]
        %v741 = vld [vmem:[#allocation8 + $0x318] sm:$0xff]
        %v742 = vld [vmem:[#allocation8 + $0x320] sm:$0xff]
        %v743 = vld [vmem:[#allocation8 + $0x328] sm:$0xff]
        %v744 = vld [vmem:[#allocation8 + $0x330] sm:$0xff]
        %v745 = vld [vmem:[#allocation8 + $0x338] sm:$0xff]
        %v746 = vld [vmem:[#allocation8 + $0x340] sm:$0xff]
        %v747 = vld [vmem:[#allocation8 + $0x348] sm:$0xff]
        %v748 = vld [vmem:[#allocation8 + $0x350] sm:$0xff]
        %v749 = vld [vmem:[#allocation8 + $0x358] sm:$0xff]
        %v750 = vld [vmem:[#allocation8 + $0x360] sm:$0xff]
        %v751 = vld [vmem:[#allocation8 + $0x368] sm:$0xff]
        %v752 = vld [vmem:[#allocation8 + $0x370] sm:$0xff]
        %v753 = vld [vmem:[#allocation8 + $0x378] sm:$0xff]
        %v754 = vld [vmem:[#allocation8 + $0x380] sm:$0xff]
        %v755 = vld [vmem:[#allocation8 + $0x388] sm:$0xff]
        %v756 = vld [vmem:[#allocation8 + $0x390] sm:$0xff]
        %v757 = vld [vmem:[#allocation8 + $0x398] sm:$0xff]
        %v758 = vld [vmem:[#allocation8 + $0x3a0] sm:$0xff]
        %v759 = vld [vmem:[#allocation8 + $0x3a8] sm:$0xff]
        %v760 = vld [vmem:[#allocation8 + $0x3b0] sm:$0xff]
        %v761 = vld [vmem:[#allocation8 + $0x3b8] sm:$0xff]
        %v762 = vld [vmem:[#allocation8 + $0x3c0] sm:$0xff]
        %v763 = vld [vmem:[#allocation8 + $0x3c8] sm:$0xff]
        %v764 = vld [vmem:[#allocation8 + $0x3d0] sm:$0xff]
        %v765 = vld [vmem:[#allocation8 + $0x3d8] sm:$0xff]
        %v766 = vld [vmem:[#allocation8 + $0x3e0] sm:$0xff]
        %v767 = vld [vmem:[#allocation8 + $0x3e8] sm:$0xff]
        %v768 = vld [vmem:[#allocation8 + $0x3f0] sm:$0xff]
        %v769 = vld [vmem:[#allocation8 + $0x3f8] sm:$0xff]
        %v771 = vshrl.u32 %v641, 16
        %v838 = vunpack.c.l.b16 %v706
        %v839 = vunpack.c.h.b16 %v706
        %v840 = vunpack.c.l.b16 %v707
        %v841 = vunpack.c.h.b16 %v707
        %v842 = vunpack.c.l.b16 %v708
        %v843 = vunpack.c.h.b16 %v708
        %v844 = vunpack.c.l.b16 %v709
        %v845 = vunpack.c.h.b16 %v709
        %v846 = vunpack.c.l.b16 %v710
        %v847 = vunpack.c.h.b16 %v710
        %v848 = vunpack.c.l.b16 %v711
        %v849 = vunpack.c.h.b16 %v711
        %v850 = vunpack.c.l.b16 %v712
        %v851 = vunpack.c.h.b16 %v712
        %v852 = vunpack.c.l.b16 %v713
        %v853 = vunpack.c.h.b16 %v713
        %v854 = vunpack.c.l.b16 %v714
        %v855 = vunpack.c.h.b16 %v714
        %v856 = vunpack.c.l.b16 %v715
        %v857 = vunpack.c.h.b16 %v715
        %v858 = vunpack.c.l.b16 %v716
        %v859 = vunpack.c.h.b16 %v716
        %v860 = vunpack.c.l.b16 %v717
        %v861 = vunpack.c.h.b16 %v717
        %v862 = vunpack.c.l.b16 %v718
        %v863 = vunpack.c.h.b16 %v718
        %v864 = vunpack.c.l.b16 %v719
        %v865 = vunpack.c.h.b16 %v719
        %v866 = vunpack.c.l.b16 %v720
        %v867 = vunpack.c.h.b16 %v720
        %v868 = vunpack.c.l.b16 %v721
        %v869 = vunpack.c.h.b16 %v721
        %v870 = vunpack.c.l.b16 %v722
        %v871 = vunpack.c.h.b16 %v722
        %v872 = vunpack.c.l.b16 %v723
        %v873 = vunpack.c.h.b16 %v723
        %v874 = vunpack.c.l.b16 %v724
        %v875 = vunpack.c.h.b16 %v724
        %v876 = vunpack.c.l.b16 %v725
        %v877 = vunpack.c.h.b16 %v725
        %v878 = vunpack.c.l.b16 %v726
        %v879 = vunpack.c.h.b16 %v726
        %v880 = vunpack.c.l.b16 %v727
        %v881 = vunpack.c.h.b16 %v727
        %v882 = vunpack.c.l.b16 %v728
        %v883 = vunpack.c.h.b16 %v728
        %v884 = vunpack.c.l.b16 %v729
        %v885 = vunpack.c.h.b16 %v729
        %v886 = vunpack.c.l.b16 %v730
        %v887 = vunpack.c.h.b16 %v730
        %v888 = vunpack.c.l.b16 %v731
        %v889 = vunpack.c.h.b16 %v731
        %v890 = vunpack.c.l.b16 %v732
        %v891 = vunpack.c.h.b16 %v732
        %v892 = vunpack.c.l.b16 %v733
        %v893 = vunpack.c.h.b16 %v733
        %v894 = vunpack.c.l.b16 %v734
        %v895 = vunpack.c.h.b16 %v734
        %v896 = vunpack.c.l.b16 %v735
        %v897 = vunpack.c.h.b16 %v735
        %v898 = vunpack.c.l.b16 %v736
        %v899 = vunpack.c.h.b16 %v736
        %v900 = vunpack.c.l.b16 %v737
        %v901 = vunpack.c.h.b16 %v737
        %v902 = vunpack.c.l.b16 %v738
        %v903 = vunpack.c.h.b16 %v738
        %v904 = vunpack.c.l.b16 %v739
        %v905 = vunpack.c.h.b16 %v739
        %v906 = vunpack.c.l.b16 %v740
        %v907 = vunpack.c.h.b16 %v740
        %v908 = vunpack.c.l.b16 %v741
        %v909 = vunpack.c.h.b16 %v741
        %v910 = vunpack.c.l.b16 %v742
        %v911 = vunpack.c.h.b16 %v742
        %v912 = vunpack.c.l.b16 %v743
        %v913 = vunpack.c.h.b16 %v743
        %v914 = vunpack.c.l.b16 %v744
        %v915 = vunpack.c.h.b16 %v744
        %v916 = vunpack.c.l.b16 %v745
        %v917 = vunpack.c.h.b16 %v745
        %v918 = vunpack.c.l.b16 %v746
        %v919 = vunpack.c.h.b16 %v746
        %v920 = vunpack.c.l.b16 %v747
        %v921 = vunpack.c.h.b16 %v747
        %v922 = vunpack.c.l.b16 %v748
        %v923 = vunpack.c.h.b16 %v748
        %v924 = vunpack.c.l.b16 %v749
        %v925 = vunpack.c.h.b16 %v749
        %v926 = vunpack.c.l.b16 %v750
        %v927 = vunpack.c.h.b16 %v750
        %v928 = vunpack.c.l.b16 %v751
        %v929 = vunpack.c.h.b16 %v751
        %v930 = vunpack.c.l.b16 %v752
        %v931 = vunpack.c.h.b16 %v752
        %v932 = vunpack.c.l.b16 %v753
        %v933 = vunpack.c.h.b16 %v753
        %v934 = vunpack.c.l.b16 %v754
        %v935 = vunpack.c.h.b16 %v754
        %v936 = vunpack.c.l.b16 %v755
        %v937 = vunpack.c.h.b16 %v755
        %v938 = vunpack.c.l.b16 %v756
        %v939 = vunpack.c.h.b16 %v756
        %v940 = vunpack.c.l.b16 %v757
        %v941 = vunpack.c.h.b16 %v757
        %v942 = vunpack.c.l.b16 %v758
        %v943 = vunpack.c.h.b16 %v758
        %v944 = vunpack.c.l.b16 %v759
        %v945 = vunpack.c.h.b16 %v759
        %v946 = vunpack.c.l.b16 %v760
        %v947 = vunpack.c.h.b16 %v760
        %v948 = vunpack.c.l.b16 %v761
        %v949 = vunpack.c.h.b16 %v761
        %v950 = vunpack.c.l.b16 %v762
        %v951 = vunpack.c.h.b16 %v762
        %v952 = vunpack.c.l.b16 %v763
        %v953 = vunpack.c.h.b16 %v763
        %v954 = vunpack.c.l.b16 %v764
        %v955 = vunpack.c.h.b16 %v764
        %v956 = vunpack.c.l.b16 %v765
        %v957 = vunpack.c.h.b16 %v765
        %v958 = vunpack.c.l.b16 %v766
        %v959 = vunpack.c.h.b16 %v766
        %v960 = vunpack.c.l.b16 %v767
        %v961 = vunpack.c.h.b16 %v767
        %v962 = vunpack.c.l.b16 %v768
        %v963 = vunpack.c.h.b16 %v768
        %v964 = vunpack.c.l.b16 %v769
        %v965 = vunpack.c.h.b16 %v769
        %v966 = vpack.c.b16 %v846, %v838
        %v967 = vpack.c.b16 %v847, %v839
        %v968 = vpack.c.b16 %v848, %v840
        %v969 = vpack.c.b16 %v849, %v841
        %v970 = vpack.c.b16 %v850, %v842
        %v971 = vpack.c.b16 %v851, %v843
        %v972 = vpack.c.b16 %v852, %v844
        %v973 = vpack.c.b16 %v853, %v845
        %v974 = vpack.c.b16 %v862, %v854
        %v975 = vpack.c.b16 %v863, %v855
        %v976 = vpack.c.b16 %v864, %v856
        %v977 = vpack.c.b16 %v865, %v857
        %v978 = vpack.c.b16 %v866, %v858
        %v979 = vpack.c.b16 %v867, %v859
        %v980 = vpack.c.b16 %v868, %v860
        %v981 = vpack.c.b16 %v869, %v861
        %v982 = vpack.c.b16 %v878, %v870
        %v983 = vpack.c.b16 %v879, %v871
        %v984 = vpack.c.b16 %v880, %v872
        %v985 = vpack.c.b16 %v881, %v873
        %v986 = vpack.c.b16 %v882, %v874
        %v987 = vpack.c.b16 %v883, %v875
        %v988 = vpack.c.b16 %v884, %v876
        %v989 = vpack.c.b16 %v885, %v877
        %v990 = vpack.c.b16 %v894, %v886
        %v991 = vpack.c.b16 %v895, %v887
        %v992 = vpack.c.b16 %v896, %v888
        %v993 = vpack.c.b16 %v897, %v889
        %v994 = vpack.c.b16 %v898, %v890
        %v995 = vpack.c.b16 %v899, %v891
        %v996 = vpack.c.b16 %v900, %v892
        %v997 = vpack.c.b16 %v901, %v893
        %v998 = vpack.c.b16 %v910, %v902
        %v999 = vpack.c.b16 %v911, %v903
        %v1000 = vpack.c.b16 %v912, %v904
        %v1001 = vpack.c.b16 %v913, %v905
        %v1002 = vpack.c.b16 %v914, %v906
        %v1003 = vpack.c.b16 %v915, %v907
        %v1004 = vpack.c.b16 %v916, %v908
        %v1005 = vpack.c.b16 %v917, %v909
        %v1006 = vpack.c.b16 %v926, %v918
        %v1007 = vpack.c.b16 %v927, %v919
        %v1008 = vpack.c.b16 %v928, %v920
        %v1009 = vpack.c.b16 %v929, %v921
        %v1010 = vpack.c.b16 %v930, %v922
        %v1011 = vpack.c.b16 %v931, %v923
        %v1012 = vpack.c.b16 %v932, %v924
        %v1013 = vpack.c.b16 %v933, %v925
        %v1014 = vpack.c.b16 %v942, %v934
        %v1015 = vpack.c.b16 %v943, %v935
        %v1016 = vpack.c.b16 %v944, %v936
        %v1017 = vpack.c.b16 %v945, %v937
        %v1018 = vpack.c.b16 %v946, %v938
        %v1019 = vpack.c.b16 %v947, %v939
        %v1020 = vpack.c.b16 %v948, %v940
        %v1021 = vpack.c.b16 %v949, %v941
        %v1022 = vpack.c.b16 %v958, %v950
        %v1023 = vpack.c.b16 %v959, %v951
        %v1024 = vpack.c.b16 %v960, %v952
        %v1025 = vpack.c.b16 %v961, %v953
        %v1026 = vpack.c.b16 %v962, %v954
        %v1027 = vpack.c.b16 %v963, %v955
        %v1028 = vpack.c.b16 %v964, %v956
        %v1029 = vpack.c.b16 %v965, %v957
        %1094 = vmatprep.subr.bf16.mxu0 %v967
        %1095 = vmatpush1.bf16.msra.mxu0 %v966
        %1096 = vmatprep.subr.bf16.mxu0 %v975
        %1097 = vmatpush1.bf16.msra.mxu0 %v974
        %1098 = vmatprep.subr.bf16.mxu0 %v983
        %1099 = vmatpush1.bf16.msra.mxu0 %v982
        %1100 = vmatprep.subr.bf16.mxu0 %v991
        %1101 = vmatpush1.bf16.msra.mxu0 %v990
        %1102 = vmatprep.subr.bf16.mxu0 %v999
        %1103 = vmatpush1.bf16.msra.mxu0 %v998
        %1104 = vmatprep.subr.bf16.mxu0 %v1007
        %1105 = vmatpush1.bf16.msra.mxu0 %v1006
        %1106 = vmatprep.subr.bf16.mxu0 %v1015
        %1107 = vmatpush1.bf16.msra.mxu0 %v1014
        %1108 = vmatprep.subr.bf16.mxu0 %v1023
        %1109 = vmatpush1.bf16.msra.mxu0 %v1022
        %1110 = vmatprep.subr.bf16.mxu0 0
        %1111 = vmatpush1.bf16.msra.mxu0 0
        %1112 = vmatprep.subr.bf16.mxu0 0
        %1113 = vmatpush1.bf16.msra.mxu0 0
        %1114 = vmatprep.subr.bf16.mxu0 0
        %1115 = vmatpush1.bf16.msra.mxu0 0
        %1116 = vmatprep.subr.bf16.mxu0 0
        %1117 = vmatpush1.bf16.msra.mxu0 0
        %1118 = vmatprep.subr.bf16.mxu0 0
        %1119 = vmatpush1.bf16.msra.mxu0 0
        %1120 = vmatprep.subr.bf16.mxu0 0
        %1121 = vmatpush1.bf16.msra.mxu0 0
        %1122 = vmatprep.subr.bf16.mxu0 0
        %1123 = vmatpush1.bf16.msra.mxu0 0
        %1124 = vmatprep.subr.bf16.mxu0 0
        %1125 = vmatpush1.bf16.msra.mxu0 0
        %1126 = vmatprep.mubr.bf16.mxu0 0
        %1127 = vmatmul.mubr.bf16.gmra.mrb[0].mxu0 %v771
        %v1128 = vpop.f32.mrb[0].mxu0
        %v1129 = vadd.f32 0.0, %v1128
        %v1130 = vpop.f32.mrb[0].mxu0
        %v1131 = vadd.f32 0.0, %v1130
        %v1132 = vpop.f32.mrb[0].mxu0
        %v1133 = vpop.f32.mrb[0].mxu0
        %1134 = vdwg.mxu0
        %1135 = vmatprep.subr.bf16.mxu0 %v969
        %1136 = vmatpush1.bf16.msra.mxu0 %v968
        %1137 = vmatprep.subr.bf16.mxu0 %v977
        %1138 = vmatpush1.bf16.msra.mxu0 %v976
        %1139 = vmatprep.subr.bf16.mxu0 %v985
        %1140 = vmatpush1.bf16.msra.mxu0 %v984
        %1141 = vmatprep.subr.bf16.mxu0 %v993
        %1142 = vmatpush1.bf16.msra.mxu0 %v992
        %1143 = vmatprep.subr.bf16.mxu0 %v1001
        %1144 = vmatpush1.bf16.msra.mxu0 %v1000
        %1145 = vmatprep.subr.bf16.mxu0 %v1009
        %1146 = vmatpush1.bf16.msra.mxu0 %v1008
        %1147 = vmatprep.subr.bf16.mxu0 %v1017
        %1148 = vmatpush1.bf16.msra.mxu0 %v1016
        %1149 = vmatprep.subr.bf16.mxu0 %v1025
        %1150 = vmatpush1.bf16.msra.mxu0 %v1024
        %1151 = vmatprep.subr.bf16.mxu0 0
        %1152 = vmatpush1.bf16.msra.mxu0 0
        %1153 = vmatprep.subr.bf16.mxu0 0
        %1154 = vmatpush1.bf16.msra.mxu0 0
        %1155 = vmatprep.subr.bf16.mxu0 0
        %1156 = vmatpush1.bf16.msra.mxu0 0
        %1157 = vmatprep.subr.bf16.mxu0 0
        %1158 = vmatpush1.bf16.msra.mxu0 0
        %1159 = vmatprep.subr.bf16.mxu0 0
        %1160 = vmatpush1.bf16.msra.mxu0 0
        %1161 = vmatprep.subr.bf16.mxu0 0
        %1162 = vmatpush1.bf16.msra.mxu0 0
        %1163 = vmatprep.subr.bf16.mxu0 0
        %1164 = vmatpush1.bf16.msra.mxu0 0
        %1165 = vmatprep.subr.bf16.mxu0 0
        %1166 = vmatpush1.bf16.msra.mxu0 0
        %1167 = vmatprep.mubr.bf16.mxu0 0
        %1168 = vmatmul.mubr.bf16.gmra.mrb[0].mxu0 %v771
        %v1169 = vpop.f32.mrb[0].mxu0
        %v1170 = vadd.f32 0.0, %v1169
        %v1171 = vpop.f32.mrb[0].mxu0
        %v1172 = vadd.f32 0.0, %v1171
        %v1173 = vpop.f32.mrb[0].mxu0
        %v1174 = vpop.f32.mrb[0].mxu0
        %1175 = vdwg.mxu0
        %1176 = vmatprep.subr.bf16.mxu0 %v971
        %1177 = vmatpush1.bf16.msra.mxu0 %v970
        %1178 = vmatprep.subr.bf16.mxu0 %v979
        %1179 = vmatpush1.bf16.msra.mxu0 %v978
        %1180 = vmatprep.subr.bf16.mxu0 %v987
        %1181 = vmatpush1.bf16.msra.mxu0 %v986
        %1182 = vmatprep.subr.bf16.mxu0 %v995
        %1183 = vmatpush1.bf16.msra.mxu0 %v994
        %1184 = vmatprep.subr.bf16.mxu0 %v1003
        %1185 = vmatpush1.bf16.msra.mxu0 %v1002
        %1186 = vmatprep.subr.bf16.mxu0 %v1011
        %1187 = vmatpush1.bf16.msra.mxu0 %v1010
        %1188 = vmatprep.subr.bf16.mxu0 %v1019
        %1189 = vmatpush1.bf16.msra.mxu0 %v1018
        %1190 = vmatprep.subr.bf16.mxu0 %v1027
        %1191 = vmatpush1.bf16.msra.mxu0 %v1026
        %1192 = vmatprep.subr.bf16.mxu0 0
        %1193 = vmatpush1.bf16.msra.mxu0 0
        %1194 = vmatprep.subr.bf16.mxu0 0
        %1195 = vmatpush1.bf16.msra.mxu0 0
        %1196 = vmatprep.subr.bf16.mxu0 0
        %1197 = vmatpush1.bf16.msra.mxu0 0
        %1198 = vmatprep.subr.bf16.mxu0 0
        %1199 = vmatpush1.bf16.msra.mxu0 0
        %1200 = vmatprep.subr.bf16.mxu0 0
        %1201 = vmatpush1.bf16.msra.mxu0 0
        %1202 = vmatprep.subr.bf16.mxu0 0
        %1203 = vmatpush1.bf16.msra.mxu0 0
        %1204 = vmatprep.subr.bf16.mxu0 0
        %1205 = vmatpush1.bf16.msra.mxu0 0
        %1206 = vmatprep.subr.bf16.mxu0 0
        %1207 = vmatpush1.bf16.msra.mxu0 0
        %1208 = vmatprep.mubr.bf16.mxu0 0
        %1209 = vmatmul.mubr.bf16.gmra.mrb[0].mxu0 %v771
        %v1210 = vpop.f32.mrb[0].mxu0
        %v1211 = vadd.f32 0.0, %v1210
        %v1212 = vpop.f32.mrb[0].mxu0
        %v1213 = vadd.f32 0.0, %v1212
        %v1214 = vpop.f32.mrb[0].mxu0
        %v1215 = vpop.f32.mrb[0].mxu0
        %1216 = vdwg.mxu0
        %1217 = vmatprep.subr.bf16.mxu0 %v973
        %1218 = vmatpush1.bf16.msra.mxu0 %v972
        %1219 = vmatprep.subr.bf16.mxu0 %v981
        %1220 = vmatpush1.bf16.msra.mxu0 %v980
        %1221 = vmatprep.subr.bf16.mxu0 %v989
        %1222 = vmatpush1.bf16.msra.mxu0 %v988
        %1223 = vmatprep.subr.bf16.mxu0 %v997
        %1224 = vmatpush1.bf16.msra.mxu0 %v996
        %1225 = vmatprep.subr.bf16.mxu0 %v1005
        %1226 = vmatpush1.bf16.msra.mxu0 %v1004
        %1227 = vmatprep.subr.bf16.mxu0 %v1013
        %1228 = vmatpush1.bf16.msra.mxu0 %v1012
        %1229 = vmatprep.subr.bf16.mxu0 %v1021
        %1230 = vmatpush1.bf16.msra.mxu0 %v1020
        %1231 = vmatprep.subr.bf16.mxu0 %v1029
        %1232 = vmatpush1.bf16.msra.mxu0 %v1028
        %1233 = vmatprep.subr.bf16.mxu0 0
        %1234 = vmatpush1.bf16.msra.mxu0 0
        %1235 = vmatprep.subr.bf16.mxu0 0
        %1236 = vmatpush1.bf16.msra.mxu0 0
        %1237 = vmatprep.subr.bf16.mxu0 0
        %1238 = vmatpush1.bf16.msra.mxu0 0
        %1239 = vmatprep.subr.bf16.mxu0 0
        %1240 = vmatpush1.bf16.msra.mxu0 0
        %1241 = vmatprep.subr.bf16.mxu0 0
        %1242 = vmatpush1.bf16.msra.mxu0 0
        %1243 = vmatprep.subr.bf16.mxu0 0
        %1244 = vmatpush1.bf16.msra.mxu0 0
        %1245 = vmatprep.subr.bf16.mxu0 0
        %1246 = vmatpush1.bf16.msra.mxu0 0
        %1247 = vmatprep.subr.bf16.mxu0 0
        %1248 = vmatpush1.bf16.msra.mxu0 0
        %1249 = vmatprep.mubr.bf16.mxu0 0
        %1250 = vmatmul.mubr.bf16.gmra.mrb[0].mxu0 %v771
        %v1251 = vpop.f32.mrb[0].mxu0
        %v1252 = vadd.f32 0.0, %v1251
        %v1253 = vpop.f32.mrb[0].mxu0
        %v1254 = vadd.f32 0.0, %v1253
        %v1255 = vpop.f32.mrb[0].mxu0
        %v1256 = vpop.f32.mrb[0].mxu0
        %1257 = vdwg.mxu0
        %v1322 = vunpack.c.l.b16 %v642
        %v1323 = vunpack.c.h.b16 %v642
        %v1324 = vunpack.c.l.b16 %v643
        %v1325 = vunpack.c.h.b16 %v643
        %v1326 = vunpack.c.l.b16 %v644
        %v1327 = vunpack.c.h.b16 %v644
        %v1328 = vunpack.c.l.b16 %v645
        %v1329 = vunpack.c.h.b16 %v645
        %v1330 = vunpack.c.l.b16 %v646
        %v1331 = vunpack.c.h.b16 %v646
        %v1332 = vunpack.c.l.b16 %v647
        %v1333 = vunpack.c.h.b16 %v647
        %v1334 = vunpack.c.l.b16 %v648
        %v1335 = vunpack.c.h.b16 %v648
        %v1336 = vunpack.c.l.b16 %v649
        %v1337 = vunpack.c.h.b16 %v649
        %v1338 = vunpack.c.l.b16 %v650
        %v1339 = vunpack.c.h.b16 %v650
        %v1340 = vunpack.c.l.b16 %v651
        %v1341 = vunpack.c.h.b16 %v651
        %v1342 = vunpack.c.l.b16 %v652
        %v1343 = vunpack.c.h.b16 %v652
        %v1344 = vunpack.c.l.b16 %v653
        %v1345 = vunpack.c.h.b16 %v653
        %v1346 = vunpack.c.l.b16 %v654
        %v1347 = vunpack.c.h.b16 %v654
        %v1348 = vunpack.c.l.b16 %v655
        %v1349 = vunpack.c.h.b16 %v655
        %v1350 = vunpack.c.l.b16 %v656
        %v1351 = vunpack.c.h.b16 %v656
        %v1352 = vunpack.c.l.b16 %v657
        %v1353 = vunpack.c.h.b16 %v657
        %v1354 = vunpack.c.l.b16 %v658
        %v1355 = vunpack.c.h.b16 %v658
        %v1356 = vunpack.c.l.b16 %v659
        %v1357 = vunpack.c.h.b16 %v659
        %v1358 = vunpack.c.l.b16 %v660
        %v1359 = vunpack.c.h.b16 %v660
        %v1360 = vunpack.c.l.b16 %v661
        %v1361 = vunpack.c.h.b16 %v661
        %v1362 = vunpack.c.l.b16 %v662
        %v1363 = vunpack.c.h.b16 %v662
        %v1364 = vunpack.c.l.b16 %v663
        %v1365 = vunpack.c.h.b16 %v663
        %v1366 = vunpack.c.l.b16 %v664
        %v1367 = vunpack.c.h.b16 %v664
        %v1368 = vunpack.c.l.b16 %v665
        %v1369 = vunpack.c.h.b16 %v665
        %v1370 = vunpack.c.l.b16 %v666
        %v1371 = vunpack.c.h.b16 %v666
        %v1372 = vunpack.c.l.b16 %v667
        %v1373 = vunpack.c.h.b16 %v667
        %v1374 = vunpack.c.l.b16 %v668
        %v1375 = vunpack.c.h.b16 %v668
        %v1376 = vunpack.c.l.b16 %v669
        %v1377 = vunpack.c.h.b16 %v669
        %v1378 = vunpack.c.l.b16 %v670
        %v1379 = vunpack.c.h.b16 %v670
        %v1380 = vunpack.c.l.b16 %v671
        %v1381 = vunpack.c.h.b16 %v671
        %v1382 = vunpack.c.l.b16 %v672
        %v1383 = vunpack.c.h.b16 %v672
        %v1384 = vunpack.c.l.b16 %v673
        %v1385 = vunpack.c.h.b16 %v673
        %v1386 = vunpack.c.l.b16 %v674
        %v1387 = vunpack.c.h.b16 %v674
        %v1388 = vunpack.c.l.b16 %v675
        %v1389 = vunpack.c.h.b16 %v675
        %v1390 = vunpack.c.l.b16 %v676
        %v1391 = vunpack.c.h.b16 %v676
        %v1392 = vunpack.c.l.b16 %v677
        %v1393 = vunpack.c.h.b16 %v677
        %v1394 = vunpack.c.l.b16 %v678
        %v1395 = vunpack.c.h.b16 %v678
        %v1396 = vunpack.c.l.b16 %v679
        %v1397 = vunpack.c.h.b16 %v679
        %v1398 = vunpack.c.l.b16 %v680
        %v1399 = vunpack.c.h.b16 %v680
        %v1400 = vunpack.c.l.b16 %v681
        %v1401 = vunpack.c.h.b16 %v681
        %v1402 = vunpack.c.l.b16 %v682
        %v1403 = vunpack.c.h.b16 %v682
        %v1404 = vunpack.c.l.b16 %v683
        %v1405 = vunpack.c.h.b16 %v683
        %v1406 = vunpack.c.l.b16 %v684
        %v1407 = vunpack.c.h.b16 %v684
        %v1408 = vunpack.c.l.b16 %v685
        %v1409 = vunpack.c.h.b16 %v685
        %v1410 = vunpack.c.l.b16 %v686
        %v1411 = vunpack.c.h.b16 %v686
        %v1412 = vunpack.c.l.b16 %v687
        %v1413 = vunpack.c.h.b16 %v687
        %v1414 = vunpack.c.l.b16 %v688
        %v1415 = vunpack.c.h.b16 %v688
        %v1416 = vunpack.c.l.b16 %v689
        %v1417 = vunpack.c.h.b16 %v689
        %v1418 = vunpack.c.l.b16 %v690
        %v1419 = vunpack.c.h.b16 %v690
        %v1420 = vunpack.c.l.b16 %v691
        %v1421 = vunpack.c.h.b16 %v691
        %v1422 = vunpack.c.l.b16 %v692
        %v1423 = vunpack.c.h.b16 %v692
        %v1424 = vunpack.c.l.b16 %v693
        %v1425 = vunpack.c.h.b16 %v693
        %v1426 = vunpack.c.l.b16 %v694
        %v1427 = vunpack.c.h.b16 %v694
        %v1428 = vunpack.c.l.b16 %v695
        %v1429 = vunpack.c.h.b16 %v695
        %v1430 = vunpack.c.l.b16 %v696
        %v1431 = vunpack.c.h.b16 %v696
        %v1432 = vunpack.c.l.b16 %v697
        %v1433 = vunpack.c.h.b16 %v697
        %v1434 = vunpack.c.l.b16 %v698
        %v1435 = vunpack.c.h.b16 %v698
        %v1436 = vunpack.c.l.b16 %v699
        %v1437 = vunpack.c.h.b16 %v699
        %v1438 = vunpack.c.l.b16 %v700
        %v1439 = vunpack.c.h.b16 %v700
        %v1440 = vunpack.c.l.b16 %v701
        %v1441 = vunpack.c.h.b16 %v701
        %v1442 = vunpack.c.l.b16 %v702
        %v1443 = vunpack.c.h.b16 %v702
        %v1444 = vunpack.c.l.b16 %v703
        %v1445 = vunpack.c.h.b16 %v703
        %v1446 = vunpack.c.l.b16 %v704
        %v1447 = vunpack.c.h.b16 %v704
        %v1448 = vunpack.c.l.b16 %v705
        %v1449 = vunpack.c.h.b16 %v705
        %v1450 = vpack.c.b16 %v1330, %v1322
        %v1451 = vpack.c.b16 %v1331, %v1323
        %v1452 = vpack.c.b16 %v1332, %v1324
        %v1453 = vpack.c.b16 %v1333, %v1325
        %v1454 = vpack.c.b16 %v1334, %v1326
        %v1455 = vpack.c.b16 %v1335, %v1327
        %v1456 = vpack.c.b16 %v1336, %v1328
        %v1457 = vpack.c.b16 %v1337, %v1329
        %v1458 = vpack.c.b16 %v1346, %v1338
        %v1459 = vpack.c.b16 %v1347, %v1339
        %v1460 = vpack.c.b16 %v1348, %v1340
        %v1461 = vpack.c.b16 %v1349, %v1341
        %v1462 = vpack.c.b16 %v1350, %v1342
        %v1463 = vpack.c.b16 %v1351, %v1343
        %v1464 = vpack.c.b16 %v1352, %v1344
        %v1465 = vpack.c.b16 %v1353, %v1345
        %v1466 = vpack.c.b16 %v1362, %v1354
        %v1467 = vpack.c.b16 %v1363, %v1355
        %v1468 = vpack.c.b16 %v1364, %v1356
        %v1469 = vpack.c.b16 %v1365, %v1357
        %v1470 = vpack.c.b16 %v1366, %v1358
        %v1471 = vpack.c.b16 %v1367, %v1359
        %v1472 = vpack.c.b16 %v1368, %v1360
        %v1473 = vpack.c.b16 %v1369, %v1361
        %v1474 = vpack.c.b16 %v1378, %v1370
        %v1475 = vpack.c.b16 %v1379, %v1371
        %v1476 = vpack.c.b16 %v1380, %v1372
        %v1477 = vpack.c.b16 %v1381, %v1373
        %v1478 = vpack.c.b16 %v1382, %v1374
        %v1479 = vpack.c.b16 %v1383, %v1375
        %v1480 = vpack.c.b16 %v1384, %v1376
        %v1481 = vpack.c.b16 %v1385, %v1377
        %v1482 = vpack.c.b16 %v1394, %v1386
        %v1483 = vpack.c.b16 %v1395, %v1387
        %v1484 = vpack.c.b16 %v1396, %v1388
        %v1485 = vpack.c.b16 %v1397, %v1389
        %v1486 = vpack.c.b16 %v1398, %v1390
        %v1487 = vpack.c.b16 %v1399, %v1391
        %v1488 = vpack.c.b16 %v1400, %v1392
        %v1489 = vpack.c.b16 %v1401, %v1393
        %v1490 = vpack.c.b16 %v1410, %v1402
        %v1491 = vpack.c.b16 %v1411, %v1403
        %v1492 = vpack.c.b16 %v1412, %v1404
        %v1493 = vpack.c.b16 %v1413, %v1405
        %v1494 = vpack.c.b16 %v1414, %v1406
        %v1495 = vpack.c.b16 %v1415, %v1407
        %v1496 = vpack.c.b16 %v1416, %v1408
        %v1497 = vpack.c.b16 %v1417, %v1409
        %v1498 = vpack.c.b16 %v1426, %v1418
        %v1499 = vpack.c.b16 %v1427, %v1419
        %v1500 = vpack.c.b16 %v1428, %v1420
        %v1501 = vpack.c.b16 %v1429, %v1421
        %v1502 = vpack.c.b16 %v1430, %v1422
        %v1503 = vpack.c.b16 %v1431, %v1423
        %v1504 = vpack.c.b16 %v1432, %v1424
        %v1505 = vpack.c.b16 %v1433, %v1425
        %v1506 = vpack.c.b16 %v1442, %v1434
        %v1507 = vpack.c.b16 %v1443, %v1435
        %v1508 = vpack.c.b16 %v1444, %v1436
        %v1509 = vpack.c.b16 %v1445, %v1437
        %v1510 = vpack.c.b16 %v1446, %v1438
        %v1511 = vpack.c.b16 %v1447, %v1439
        %v1512 = vpack.c.b16 %v1448, %v1440
        %v1513 = vpack.c.b16 %v1449, %v1441
        %1578 = vmatprep.subr.bf16.mxu0 %v1451
        %1579 = vmatpush1.bf16.msra.mxu0 %v1450
        %1580 = vmatprep.subr.bf16.mxu0 %v1459
        %1581 = vmatpush1.bf16.msra.mxu0 %v1458
        %1582 = vmatprep.subr.bf16.mxu0 %v1467
        %1583 = vmatpush1.bf16.msra.mxu0 %v1466
        %1584 = vmatprep.subr.bf16.mxu0 %v1475
        %1585 = vmatpush1.bf16.msra.mxu0 %v1474
        %1586 = vmatprep.subr.bf16.mxu0 %v1483
        %1587 = vmatpush1.bf16.msra.mxu0 %v1482
        %1588 = vmatprep.subr.bf16.mxu0 %v1491
        %1589 = vmatpush1.bf16.msra.mxu0 %v1490
        %1590 = vmatprep.subr.bf16.mxu0 %v1499
        %1591 = vmatpush1.bf16.msra.mxu0 %v1498
        %1592 = vmatprep.subr.bf16.mxu0 %v1507
        %1593 = vmatpush1.bf16.msra.mxu0 %v1506
        %1594 = vmatprep.subr.bf16.mxu0 0
        %1595 = vmatpush1.bf16.msra.mxu0 0
        %1596 = vmatprep.subr.bf16.mxu0 0
        %1597 = vmatpush1.bf16.msra.mxu0 0
        %1598 = vmatprep.subr.bf16.mxu0 0
        %1599 = vmatpush1.bf16.msra.mxu0 0
        %1600 = vmatprep.subr.bf16.mxu0 0
        %1601 = vmatpush1.bf16.msra.mxu0 0
        %1602 = vmatprep.subr.bf16.mxu0 0
        %1603 = vmatpush1.bf16.msra.mxu0 0
        %1604 = vmatprep.subr.bf16.mxu0 0
        %1605 = vmatpush1.bf16.msra.mxu0 0
        %1606 = vmatprep.subr.bf16.mxu0 0
        %1607 = vmatpush1.bf16.msra.mxu0 0
        %1608 = vmatprep.subr.bf16.mxu0 0
        %1609 = vmatpush1.bf16.msra.mxu0 0
        %1610 = vmatprep.mubr.bf16.mxu0 0
        %1611 = vmatmul.mubr.bf16.gmra.mrb[0].mxu0 %v641
        %v1612 = vpop.f32.mrb[0].mxu0
        %v1613 = vadd.f32 %v1129, %v1612
        %v1614 = vpop.f32.mrb[0].mxu0
        %v1615 = vadd.f32 %v1131, %v1614
        %v1616 = vpop.f32.mrb[0].mxu0
        %v1617 = vpop.f32.mrb[0].mxu0
        %1618 = vdwg.mxu0
        %1619 = vmatprep.subr.bf16.mxu0 %v1453
        %1620 = vmatpush1.bf16.msra.mxu0 %v1452
        %1621 = vmatprep.subr.bf16.mxu0 %v1461
        %1622 = vmatpush1.bf16.msra.mxu0 %v1460
        %1623 = vmatprep.subr.bf16.mxu0 %v1469
        %1624 = vmatpush1.bf16.msra.mxu0 %v1468
        %1625 = vmatprep.subr.bf16.mxu0 %v1477
        %1626 = vmatpush1.bf16.msra.mxu0 %v1476
        %1627 = vmatprep.subr.bf16.mxu0 %v1485
        %1628 = vmatpush1.bf16.msra.mxu0 %v1484
        %1629 = vmatprep.subr.bf16.mxu0 %v1493
        %1630 = vmatpush1.bf16.msra.mxu0 %v1492
        %1631 = vmatprep.subr.bf16.mxu0 %v1501
        %1632 = vmatpush1.bf16.msra.mxu0 %v1500
        %1633 = vmatprep.subr.bf16.mxu0 %v1509
        %1634 = vmatpush1.bf16.msra.mxu0 %v1508
        %1635 = vmatprep.subr.bf16.mxu0 0
        %1636 = vmatpush1.bf16.msra.mxu0 0
        %1637 = vmatprep.subr.bf16.mxu0 0
        %1638 = vmatpush1.bf16.msra.mxu0 0
        %1639 = vmatprep.subr.bf16.mxu0 0
        %1640 = vmatpush1.bf16.msra.mxu0 0
        %1641 = vmatprep.subr.bf16.mxu0 0
        %1642 = vmatpush1.bf16.msra.mxu0 0
        %1643 = vmatprep.subr.bf16.mxu0 0
        %1644 = vmatpush1.bf16.msra.mxu0 0
        %1645 = vmatprep.subr.bf16.mxu0 0
        %1646 = vmatpush1.bf16.msra.mxu0 0
        %1647 = vmatprep.subr.bf16.mxu0 0
        %1648 = vmatpush1.bf16.msra.mxu0 0
        %1649 = vmatprep.subr.bf16.mxu0 0
        %1650 = vmatpush1.bf16.msra.mxu0 0
        %1651 = vmatprep.mubr.bf16.mxu0 0
        %1652 = vmatmul.mubr.bf16.gmra.mrb[0].mxu0 %v641
        %v1653 = vpop.f32.mrb[0].mxu0
        %v1654 = vadd.f32 %v1170, %v1653
        %v1655 = vpop.f32.mrb[0].mxu0
        %v1656 = vadd.f32 %v1172, %v1655
        %v1657 = vpop.f32.mrb[0].mxu0
        %v1658 = vpop.f32.mrb[0].mxu0
        %1659 = vdwg.mxu0
        %1660 = vmatprep.subr.bf16.mxu0 %v1455
        %1661 = vmatpush1.bf16.msra.mxu0 %v1454
        %1662 = vmatprep.subr.bf16.mxu0 %v1463
        %1663 = vmatpush1.bf16.msra.mxu0 %v1462
        %1664 = vmatprep.subr.bf16.mxu0 %v1471
        %1665 = vmatpush1.bf16.msra.mxu0 %v1470
        %1666 = vmatprep.subr.bf16.mxu0 %v1479
        %1667 = vmatpush1.bf16.msra.mxu0 %v1478
        %1668 = vmatprep.subr.bf16.mxu0 %v1487
        %1669 = vmatpush1.bf16.msra.mxu0 %v1486
        %1670 = vmatprep.subr.bf16.mxu0 %v1495
        %1671 = vmatpush1.bf16.msra.mxu0 %v1494
        %1672 = vmatprep.subr.bf16.mxu0 %v1503
        %1673 = vmatpush1.bf16.msra.mxu0 %v1502
        %1674 = vmatprep.subr.bf16.mxu0 %v1511
        %1675 = vmatpush1.bf16.msra.mxu0 %v1510
        %1676 = vmatprep.subr.bf16.mxu0 0
        %1677 = vmatpush1.bf16.msra.mxu0 0
        %1678 = vmatprep.subr.bf16.mxu0 0
        %1679 = vmatpush1.bf16.msra.mxu0 0
        %1680 = vmatprep.subr.bf16.mxu0 0
        %1681 = vmatpush1.bf16.msra.mxu0 0
        %1682 = vmatprep.subr.bf16.mxu0 0
        %1683 = vmatpush1.bf16.msra.mxu0 0
        %1684 = vmatprep.subr.bf16.mxu0 0
        %1685 = vmatpush1.bf16.msra.mxu0 0
        %1686 = vmatprep.subr.bf16.mxu0 0
        %1687 = vmatpush1.bf16.msra.mxu0 0
        %1688 = vmatprep.subr.bf16.mxu0 0
        %1689 = vmatpush1.bf16.msra.mxu0 0
        %1690 = vmatprep.subr.bf16.mxu0 0
        %1691 = vmatpush1.bf16.msra.mxu0 0
        %1692 = vmatprep.mubr.bf16.mxu0 0
        %1693 = vmatmul.mubr.bf16.gmra.mrb[0].mxu0 %v641
        %v1694 = vpop.f32.mrb[0].mxu0
        %v1695 = vadd.f32 %v1211, %v1694
        %v1696 = vpop.f32.mrb[0].mxu0
        %v1697 = vadd.f32 %v1213, %v1696
        %v1698 = vpop.f32.mrb[0].mxu0
        %v1699 = vpop.f32.mrb[0].mxu0
        %1700 = vdwg.mxu0
        %1701 = vmatprep.subr.bf16.mxu0 %v1457
        %1702 = vmatpush1.bf16.msra.mxu0 %v1456
        %1703 = vmatprep.subr.bf16.mxu0 %v1465
        %1704 = vmatpush1.bf16.msra.mxu0 %v1464
        %1705 = vmatprep.subr.bf16.mxu0 %v1473
        %1706 = vmatpush1.bf16.msra.mxu0 %v1472
        %1707 = vmatprep.subr.bf16.mxu0 %v1481
        %1708 = vmatpush1.bf16.msra.mxu0 %v1480
        %1709 = vmatprep.subr.bf16.mxu0 %v1489
        %1710 = vmatpush1.bf16.msra.mxu0 %v1488
        %1711 = vmatprep.subr.bf16.mxu0 %v1497
        %1712 = vmatpush1.bf16.msra.mxu0 %v1496
        %1713 = vmatprep.subr.bf16.mxu0 %v1505
        %1714 = vmatpush1.bf16.msra.mxu0 %v1504
        %1715 = vmatprep.subr.bf16.mxu0 %v1513
        %1716 = vmatpush1.bf16.msra.mxu0 %v1512
        %1717 = vmatprep.subr.bf16.mxu0 0
        %1718 = vmatpush1.bf16.msra.mxu0 0
        %1719 = vmatprep.subr.bf16.mxu0 0
        %1720 = vmatpush1.bf16.msra.mxu0 0
        %1721 = vmatprep.subr.bf16.mxu0 0
        %1722 = vmatpush1.bf16.msra.mxu0 0
        %1723 = vmatprep.subr.bf16.mxu0 0
        %1724 = vmatpush1.bf16.msra.mxu0 0
        %1725 = vmatprep.subr.bf16.mxu0 0
        %1726 = vmatpush1.bf16.msra.mxu0 0
        %1727 = vmatprep.subr.bf16.mxu0 0
        %1728 = vmatpush1.bf16.msra.mxu0 0
        %1729 = vmatprep.subr.bf16.mxu0 0
        %1730 = vmatpush1.bf16.msra.mxu0 0
        %1731 = vmatprep.subr.bf16.mxu0 0
        %1732 = vmatpush1.bf16.msra.mxu0 0
        %1733 = vmatprep.mubr.bf16.mxu0 0
        %1734 = vmatmul.mubr.bf16.gmra.mrb[0].mxu0 %v641
        %v1735 = vpop.f32.mrb[0].mxu0
        %v1736 = vadd.f32 %v1252, %v1735
        %v1737 = vpop.f32.mrb[0].mxu0
        %v1738 = vadd.f32 %v1254, %v1737
        %v1739 = vpop.f32.mrb[0].mxu0
        %v1740 = vpop.f32.mrb[0].mxu0
        %1741 = vdwg.mxu0
        %v1742 = vld [vmem:[#allocation8 + $0x400] sm:$0xff]
        %v1743 = vld [vmem:[#allocation8 + $0x408] sm:$0xff]
        %v1744 = vld [vmem:[#allocation8 + $0x410] sm:$0xff]
        %v1745 = vld [vmem:[#allocation8 + $0x418] sm:$0xff]
        %v1746 = vld [vmem:[#allocation8 + $0x420] sm:$0xff]
        %v1747 = vld [vmem:[#allocation8 + $0x428] sm:$0xff]
        %v1748 = vld [vmem:[#allocation8 + $0x430] sm:$0xff]
        %v1749 = vld [vmem:[#allocation8 + $0x438] sm:$0xff]
        %v1750 = vld [vmem:[#allocation8 + $0x440] sm:$0xff]
        %v1751 = vld [vmem:[#allocation8 + $0x448] sm:$0xff]
        %v1752 = vld [vmem:[#allocation8 + $0x450] sm:$0xff]
        %v1753 = vld [vmem:[#allocation8 + $0x458] sm:$0xff]
        %v1754 = vld [vmem:[#allocation8 + $0x460] sm:$0xff]
        %v1755 = vld [vmem:[#allocation8 + $0x468] sm:$0xff]
        %v1756 = vld [vmem:[#allocation8 + $0x470] sm:$0xff]
        %v1757 = vld [vmem:[#allocation8 + $0x478] sm:$0xff]
        %v1758 = vld [vmem:[#allocation8 + $0x480] sm:$0xff]
        %v1759 = vld [vmem:[#allocation8 + $0x488] sm:$0xff]
        %v1760 = vld [vmem:[#allocation8 + $0x490] sm:$0xff]
        %v1761 = vld [vmem:[#allocation8 + $0x498] sm:$0xff]
        %v1762 = vld [vmem:[#allocation8 + $0x4a0] sm:$0xff]
        %v1763 = vld [vmem:[#allocation8 + $0x4a8] sm:$0xff]
        %v1764 = vld [vmem:[#allocation8 + $0x4b0] sm:$0xff]
        %v1765 = vld [vmem:[#allocation8 + $0x4b8] sm:$0xff]
        %v1766 = vld [vmem:[#allocation8 + $0x4c0] sm:$0xff]
        %v1767 = vld [vmem:[#allocation8 + $0x4c8] sm:$0xff]
        %v1768 = vld [vmem:[#allocation8 + $0x4d0] sm:$0xff]
        %v1769 = vld [vmem:[#allocation8 + $0x4d8] sm:$0xff]
        %v1770 = vld [vmem:[#allocation8 + $0x4e0] sm:$0xff]
        %v1771 = vld [vmem:[#allocation8 + $0x4e8] sm:$0xff]
        %v1772 = vld [vmem:[#allocation8 + $0x4f0] sm:$0xff]
        %v1773 = vld [vmem:[#allocation8 + $0x4f8] sm:$0xff]
        %v1774 = vld [vmem:[#allocation8 + $0x500] sm:$0xff]
        %v1775 = vld [vmem:[#allocation8 + $0x508] sm:$0xff]
        %v1776 = vld [vmem:[#allocation8 + $0x510] sm:$0xff]
        %v1777 = vld [vmem:[#allocation8 + $0x518] sm:$0xff]
        %v1778 = vld [vmem:[#allocation8 + $0x520] sm:$0xff]
        %v1779 = vld [vmem:[#allocation8 + $0x528] sm:$0xff]
        %v1780 = vld [vmem:[#allocation8 + $0x530] sm:$0xff]
        %v1781 = vld [vmem:[#allocation8 + $0x538] sm:$0xff]
        %v1782 = vld [vmem:[#allocation8 + $0x540] sm:$0xff]
        %v1783 = vld [vmem:[#allocation8 + $0x548] sm:$0xff]
        %v1784 = vld [vmem:[#allocation8 + $0x550] sm:$0xff]
        %v1785 = vld [vmem:[#allocation8 + $0x558] sm:$0xff]
        %v1786 = vld [vmem:[#allocation8 + $0x560] sm:$0xff]
        %v1787 = vld [vmem:[#allocation8 + $0x568] sm:$0xff]
        %v1788 = vld [vmem:[#allocation8 + $0x570] sm:$0xff]
        %v1789 = vld [vmem:[#allocation8 + $0x578] sm:$0xff]
        %v1790 = vld [vmem:[#allocation8 + $0x580] sm:$0xff]
        %v1791 = vld [vmem:[#allocation8 + $0x588] sm:$0xff]
        %v1792 = vld [vmem:[#allocation8 + $0x590] sm:$0xff]
        %v1793 = vld [vmem:[#allocation8 + $0x598] sm:$0xff]
        %v1794 = vld [vmem:[#allocation8 + $0x5a0] sm:$0xff]
        %v1795 = vld [vmem:[#allocation8 + $0x5a8] sm:$0xff]
        %v1796 = vld [vmem:[#allocation8 + $0x5b0] sm:$0xff]
        %v1797 = vld [vmem:[#allocation8 + $0x5b8] sm:$0xff]
        %v1798 = vld [vmem:[#allocation8 + $0x5c0] sm:$0xff]
        %v1799 = vld [vmem:[#allocation8 + $0x5c8] sm:$0xff]
        %v1800 = vld [vmem:[#allocation8 + $0x5d0] sm:$0xff]
        %v1801 = vld [vmem:[#allocation8 + $0x5d8] sm:$0xff]
        %v1802 = vld [vmem:[#allocation8 + $0x5e0] sm:$0xff]
        %v1803 = vld [vmem:[#allocation8 + $0x5e8] sm:$0xff]
        %v1804 = vld [vmem:[#allocation8 + $0x5f0] sm:$0xff]
        %v1805 = vld [vmem:[#allocation8 + $0x5f8] sm:$0xff]
        %v1807 = vrot.slane %v641, 1
        %v1873 = vunpack.c.l.b16 %v1742
        %v1874 = vunpack.c.h.b16 %v1742
        %v1875 = vunpack.c.l.b16 %v1743
        %v1876 = vunpack.c.h.b16 %v1743
        %v1877 = vunpack.c.l.b16 %v1744
        %v1878 = vunpack.c.h.b16 %v1744
        %v1879 = vunpack.c.l.b16 %v1745
        %v1880 = vunpack.c.h.b16 %v1745
        %v1881 = vunpack.c.l.b16 %v1746
        %v1882 = vunpack.c.h.b16 %v1746
        %v1883 = vunpack.c.l.b16 %v1747
        %v1884 = vunpack.c.h.b16 %v1747
        %v1885 = vunpack.c.l.b16 %v1748
        %v1886 = vunpack.c.h.b16 %v1748
        %v1887 = vunpack.c.l.b16 %v1749
        %v1888 = vunpack.c.h.b16 %v1749
        %v1889 = vunpack.c.l.b16 %v1750
        %v1890 = vunpack.c.h.b16 %v1750
        %v1891 = vunpack.c.l.b16 %v1751
        %v1892 = vunpack.c.h.b16 %v1751
        %v1893 = vunpack.c.l.b16 %v1752
        %v1894 = vunpack.c.h.b16 %v1752
        %v1895 = vunpack.c.l.b16 %v1753
        %v1896 = vunpack.c.h.b16 %v1753
        %v1897 = vunpack.c.l.b16 %v1754
        %v1898 = vunpack.c.h.b16 %v1754
        %v1899 = vunpack.c.l.b16 %v1755
        %v1900 = vunpack.c.h.b16 %v1755
        %v1901 = vunpack.c.l.b16 %v1756
        %v1902 = vunpack.c.h.b16 %v1756
        %v1903 = vunpack.c.l.b16 %v1757
        %v1904 = vunpack.c.h.b16 %v1757
        %v1905 = vunpack.c.l.b16 %v1758
        %v1906 = vunpack.c.h.b16 %v1758
        %v1907 = vunpack.c.l.b16 %v1759
        %v1908 = vunpack.c.h.b16 %v1759
        %v1909 = vunpack.c.l.b16 %v1760
        %v1910 = vunpack.c.h.b16 %v1760
        %v1911 = vunpack.c.l.b16 %v1761
        %v1912 = vunpack.c.h.b16 %v1761
        %v1913 = vunpack.c.l.b16 %v1762
        %v1914 = vunpack.c.h.b16 %v1762
        %v1915 = vunpack.c.l.b16 %v1763
        %v1916 = vunpack.c.h.b16 %v1763
        %v1917 = vunpack.c.l.b16 %v1764
        %v1918 = vunpack.c.h.b16 %v1764
        %v1919 = vunpack.c.l.b16 %v1765
        %v1920 = vunpack.c.h.b16 %v1765
        %v1921 = vunpack.c.l.b16 %v1766
        %v1922 = vunpack.c.h.b16 %v1766
        %v1923 = vunpack.c.l.b16 %v1767
        %v1924 = vunpack.c.h.b16 %v1767
        %v1925 = vunpack.c.l.b16 %v1768
        %v1926 = vunpack.c.h.b16 %v1768
        %v1927 = vunpack.c.l.b16 %v1769
        %v1928 = vunpack.c.h.b16 %v1769
        %v1929 = vunpack.c.l.b16 %v1770
        %v1930 = vunpack.c.h.b16 %v1770
        %v1931 = vunpack.c.l.b16 %v1771
        %v1932 = vunpack.c.h.b16 %v1771
        %v1933 = vunpack.c.l.b16 %v1772
        %v1934 = vunpack.c.h.b16 %v1772
        %v1935 = vunpack.c.l.b16 %v1773
        %v1936 = vunpack.c.h.b16 %v1773
        %v1937 = vunpack.c.l.b16 %v1774
        %v1938 = vunpack.c.h.b16 %v1774
        %v1939 = vunpack.c.l.b16 %v1775
        %v1940 = vunpack.c.h.b16 %v1775
        %v1941 = vunpack.c.l.b16 %v1776
        %v1942 = vunpack.c.h.b16 %v1776
        %v1943 = vunpack.c.l.b16 %v1777
        %v1944 = vunpack.c.h.b16 %v1777
        %v1945 = vunpack.c.l.b16 %v1778
        %v1946 = vunpack.c.h.b16 %v1778
        %v1947 = vunpack.c.l.b16 %v1779
        %v1948 = vunpack.c.h.b16 %v1779
        %v1949 = vunpack.c.l.b16 %v1780
        %v1950 = vunpack.c.h.b16 %v1780
        %v1951 = vunpack.c.l.b16 %v1781
        %v1952 = vunpack.c.h.b16 %v1781
        %v1953 = vunpack.c.l.b16 %v1782
        %v1954 = vunpack.c.h.b16 %v1782
        %v1955 = vunpack.c.l.b16 %v1783
        %v1956 = vunpack.c.h.b16 %v1783
        %v1957 = vunpack.c.l.b16 %v1784
        %v1958 = vunpack.c.h.b16 %v1784
        %v1959 = vunpack.c.l.b16 %v1785
        %v1960 = vunpack.c.h.b16 %v1785
        %v1961 = vunpack.c.l.b16 %v1786
        %v1962 = vunpack.c.h.b16 %v1786
        %v1963 = vunpack.c.l.b16 %v1787
        %v1964 = vunpack.c.h.b16 %v1787
        %v1965 = vunpack.c.l.b16 %v1788
        %v1966 = vunpack.c.h.b16 %v1788
        %v1967 = vunpack.c.l.b16 %v1789
        %v1968 = vunpack.c.h.b16 %v1789
        %v1969 = vunpack.c.l.b16 %v1790
        %v1970 = vunpack.c.h.b16 %v1790
        %v1971 = vunpack.c.l.b16 %v1791
        %v1972 = vunpack.c.h.b16 %v1791
        %v1973 = vunpack.c.l.b16 %v1792
        %v1974 = vunpack.c.h.b16 %v1792
        %v1975 = vunpack.c.l.b16 %v1793
        %v1976 = vunpack.c.h.b16 %v1793
        %v1977 = vunpack.c.l.b16 %v1794
        %v1978 = vunpack.c.h.b16 %v1794
        %v1979 = vunpack.c.l.b16 %v1795
        %v1980 = vunpack.c.h.b16 %v1795
        %v1981 = vunpack.c.l.b16 %v1796
        %v1982 = vunpack.c.h.b16 %v1796
        %v1983 = vunpack.c.l.b16 %v1797
        %v1984 = vunpack.c.h.b16 %v1797
        %v1985 = vunpack.c.l.b16 %v1798
        %v1986 = vunpack.c.h.b16 %v1798
        %v1987 = vunpack.c.l.b16 %v1799
        %v1988 = vunpack.c.h.b16 %v1799
        %v1989 = vunpack.c.l.b16 %v1800
        %v1990 = vunpack.c.h.b16 %v1800
        %v1991 = vunpack.c.l.b16 %v1801
        %v1992 = vunpack.c.h.b16 %v1801
        %v1993 = vunpack.c.l.b16 %v1802
        %v1994 = vunpack.c.h.b16 %v1802
        %v1995 = vunpack.c.l.b16 %v1803
        %v1996 = vunpack.c.h.b16 %v1803
        %v1997 = vunpack.c.l.b16 %v1804
        %v1998 = vunpack.c.h.b16 %v1804
        %v1999 = vunpack.c.l.b16 %v1805
        %v2000 = vunpack.c.h.b16 %v1805
        %v2001 = vpack.c.b16 %v1881, %v1873
        %v2002 = vpack.c.b16 %v1882, %v1874
        %v2003 = vpack.c.b16 %v1883, %v1875
        %v2004 = vpack.c.b16 %v1884, %v1876
        %v2005 = vpack.c.b16 %v1885, %v1877
        %v2006 = vpack.c.b16 %v1886, %v1878
        %v2007 = vpack.c.b16 %v1887, %v1879
        %v2008 = vpack.c.b16 %v1888, %v1880
        %v2009 = vpack.c.b16 %v1897, %v1889
        %v2010 = vpack.c.b16 %v1898, %v1890
        %v2011 = vpack.c.b16 %v1899, %v1891
        %v2012 = vpack.c.b16 %v1900, %v1892
        %v2013 = vpack.c.b16 %v1901, %v1893
        %v2014 = vpack.c.b16 %v1902, %v1894
        %v2015 = vpack.c.b16 %v1903, %v1895
        %v2016 = vpack.c.b16 %v1904, %v1896
        %v2017 = vpack.c.b16 %v1913, %v1905
        %v2018 = vpack.c.b16 %v1914, %v1906
        %v2019 = vpack.c.b16 %v1915, %v1907
        %v2020 = vpack.c.b16 %v1916, %v1908
        %v2021 = vpack.c.b16 %v1917, %v1909
        %v2022 = vpack.c.b16 %v1918, %v1910
        %v2023 = vpack.c.b16 %v1919, %v1911
        %v2024 = vpack.c.b16 %v1920, %v1912
        %v2025 = vpack.c.b16 %v1929, %v1921
        %v2026 = vpack.c.b16 %v1930, %v1922
        %v2027 = vpack.c.b16 %v1931, %v1923
        %v2028 = vpack.c.b16 %v1932, %v1924
        %v2029 = vpack.c.b16 %v1933, %v1925
        %v2030 = vpack.c.b16 %v1934, %v1926
        %v2031 = vpack.c.b16 %v1935, %v1927
        %v2032 = vpack.c.b16 %v1936, %v1928
        %v2033 = vpack.c.b16 %v1945, %v1937
        %v2034 = vpack.c.b16 %v1946, %v1938
        %v2035 = vpack.c.b16 %v1947, %v1939
        %v2036 = vpack.c.b16 %v1948, %v1940
        %v2037 = vpack.c.b16 %v1949, %v1941
        %v2038 = vpack.c.b16 %v1950, %v1942
        %v2039 = vpack.c.b16 %v1951, %v1943
        %v2040 = vpack.c.b16 %v1952, %v1944
        %v2041 = vpack.c.b16 %v1961, %v1953
        %v2042 = vpack.c.b16 %v1962, %v1954
        %v2043 = vpack.c.b16 %v1963, %v1955
        %v2044 = vpack.c.b16 %v1964, %v1956
        %v2045 = vpack.c.b16 %v1965, %v1957
        %v2046 = vpack.c.b16 %v1966, %v1958
        %v2047 = vpack.c.b16 %v1967, %v1959
        %v2048 = vpack.c.b16 %v1968, %v1960
        %v2049 = vpack.c.b16 %v1977, %v1969
        %v2050 = vpack.c.b16 %v1978, %v1970
        %v2051 = vpack.c.b16 %v1979, %v1971
        %v2052 = vpack.c.b16 %v1980, %v1972
        %v2053 = vpack.c.b16 %v1981, %v1973
        %v2054 = vpack.c.b16 %v1982, %v1974
        %v2055 = vpack.c.b16 %v1983, %v1975
        %v2056 = vpack.c.b16 %v1984, %v1976
        %v2057 = vpack.c.b16 %v1993, %v1985
        %v2058 = vpack.c.b16 %v1994, %v1986
        %v2059 = vpack.c.b16 %v1995, %v1987
        %v2060 = vpack.c.b16 %v1996, %v1988
        %v2061 = vpack.c.b16 %v1997, %v1989
        %v2062 = vpack.c.b16 %v1998, %v1990
        %v2063 = vpack.c.b16 %v1999, %v1991
        %v2064 = vpack.c.b16 %v2000, %v1992
        %2129 = vmatprep.subr.bf16.mxu0 %v2002
        %2130 = vmatpush1.bf16.msra.mxu0 %v2001
        %2131 = vmatprep.subr.bf16.mxu0 %v2010
        %2132 = vmatpush1.bf16.msra.mxu0 %v2009
        %2133 = vmatprep.subr.bf16.mxu0 %v2018
        %2134 = vmatpush1.bf16.msra.mxu0 %v2017
        %2135 = vmatprep.subr.bf16.mxu0 %v2026
        %2136 = vmatpush1.bf16.msra.mxu0 %v2025
        %2137 = vmatprep.subr.bf16.mxu0 %v2034
        %2138 = vmatpush1.bf16.msra.mxu0 %v2033
        %2139 = vmatprep.subr.bf16.mxu0 %v2042
        %2140 = vmatpush1.bf16.msra.mxu0 %v2041
        %2141 = vmatprep.subr.bf16.mxu0 %v2050
        %2142 = vmatpush1.bf16.msra.mxu0 %v2049
        %2143 = vmatprep.subr.bf16.mxu0 %v2058
        %2144 = vmatpush1.bf16.msra.mxu0 %v2057
        %2145 = vmatprep.subr.bf16.mxu0 0
        %2146 = vmatpush1.bf16.msra.mxu0 0
        %2147 = vmatprep.subr.bf16.mxu0 0
        %2148 = vmatpush1.bf16.msra.mxu0 0
        %2149 = vmatprep.subr.bf16.mxu0 0
        %2150 = vmatpush1.bf16.msra.mxu0 0
        %2151 = vmatprep.subr.bf16.mxu0 0
        %2152 = vmatpush1.bf16.msra.mxu0 0
        %2153 = vmatprep.subr.bf16.mxu0 0
        %2154 = vmatpush1.bf16.msra.mxu0 0
        %2155 = vmatprep.subr.bf16.mxu0 0
        %2156 = vmatpush1.bf16.msra.mxu0 0
        %2157 = vmatprep.subr.bf16.mxu0 0
        %2158 = vmatpush1.bf16.msra.mxu0 0
        %2159 = vmatprep.subr.bf16.mxu0 0
        %2160 = vmatpush1.bf16.msra.mxu0 0
        %2161 = vmatprep.mubr.bf16.mxu0 0
        %2162 = vmatmul.mubr.bf16.gmra.mrb[0].mxu0 %v1807
        %v2163 = vpop.f32.mrb[0].mxu0
        %v2164 = vadd.f32 0.0, %v2163
        %v2165 = vpop.f32.mrb[0].mxu0
        %v2166 = vadd.f32 0.0, %v2165
        %v2167 = vpop.f32.mrb[0].mxu0
        %v2168 = vpop.f32.mrb[0].mxu0
        %2169 = vdwg.mxu0
        %2170 = vmatprep.subr.bf16.mxu0 %v2004
        %2171 = vmatpush1.bf16.msra.mxu0 %v2003
        %2172 = vmatprep.subr.bf16.mxu0 %v2012
        %2173 = vmatpush1.bf16.msra.mxu0 %v2011
        %2174 = vmatprep.subr.bf16.mxu0 %v2020
        %2175 = vmatpush1.bf16.msra.mxu0 %v2019
        %2176 = vmatprep.subr.bf16.mxu0 %v2028
        %2177 = vmatpush1.bf16.msra.mxu0 %v2027
        %2178 = vmatprep.subr.bf16.mxu0 %v2036
        %2179 = vmatpush1.bf16.msra.mxu0 %v2035
        %2180 = vmatprep.subr.bf16.mxu0 %v2044
        %2181 = vmatpush1.bf16.msra.mxu0 %v2043
        %2182 = vmatprep.subr.bf16.mxu0 %v2052
        %2183 = vmatpush1.bf16.msra.mxu0 %v2051
        %2184 = vmatprep.subr.bf16.mxu0 %v2060
        %2185 = vmatpush1.bf16.msra.mxu0 %v2059
        %2186 = vmatprep.subr.bf16.mxu0 0
        %2187 = vmatpush1.bf16.msra.mxu0 0
        %2188 = vmatprep.subr.bf16.mxu0 0
        %2189 = vmatpush1.bf16.msra.mxu0 0
        %2190 = vmatprep.subr.bf16.mxu0 0
        %2191 = vmatpush1.bf16.msra.mxu0 0
        %2192 = vmatprep.subr.bf16.mxu0 0
        %2193 = vmatpush1.bf16.msra.mxu0 0
        %2194 = vmatprep.subr.bf16.mxu0 0
        %2195 = vmatpush1.bf16.msra.mxu0 0
        %2196 = vmatprep.subr.bf16.mxu0 0
        %2197 = vmatpush1.bf16.msra.mxu0 0
        %2198 = vmatprep.subr.bf16.mxu0 0
        %2199 = vmatpush1.bf16.msra.mxu0 0
        %2200 = vmatprep.subr.bf16.mxu0 0
        %2201 = vmatpush1.bf16.msra.mxu0 0
        %2202 = vmatprep.mubr.bf16.mxu0 0
        %2203 = vmatmul.mubr.bf16.gmra.mrb[0].mxu0 %v1807
        %v2204 = vpop.f32.mrb[0].mxu0
        %v2205 = vadd.f32 0.0, %v2204
        %v2206 = vpop.f32.mrb[0].mxu0
        %v2207 = vadd.f32 0.0, %v2206
        %v2208 = vpop.f32.mrb[0].mxu0
        %v2209 = vpop.f32.mrb[0].mxu0
        %2210 = vdwg.mxu0
        %2211 = vmatprep.subr.bf16.mxu0 %v2006
        %2212 = vmatpush1.bf16.msra.mxu0 %v2005
        %2213 = vmatprep.subr.bf16.mxu0 %v2014
        %2214 = vmatpush1.bf16.msra.mxu0 %v2013
        %2215 = vmatprep.subr.bf16.mxu0 %v2022
        %2216 = vmatpush1.bf16.msra.mxu0 %v2021
        %2217 = vmatprep.subr.bf16.mxu0 %v2030
        %2218 = vmatpush1.bf16.msra.mxu0 %v2029
        %2219 = vmatprep.subr.bf16.mxu0 %v2038
        %2220 = vmatpush1.bf16.msra.mxu0 %v2037
        %2221 = vmatprep.subr.bf16.mxu0 %v2046
        %2222 = vmatpush1.bf16.msra.mxu0 %v2045
        %2223 = vmatprep.subr.bf16.mxu0 %v2054
        %2224 = vmatpush1.bf16.msra.mxu0 %v2053
        %2225 = vmatprep.subr.bf16.mxu0 %v2062
        %2226 = vmatpush1.bf16.msra.mxu0 %v2061
        %2227 = vmatprep.subr.bf16.mxu0 0
        %2228 = vmatpush1.bf16.msra.mxu0 0
        %2229 = vmatprep.subr.bf16.mxu0 0
        %2230 = vmatpush1.bf16.msra.mxu0 0
        %2231 = vmatprep.subr.bf16.mxu0 0
        %2232 = vmatpush1.bf16.msra.mxu0 0
        %2233 = vmatprep.subr.bf16.mxu0 0
        %2234 = vmatpush1.bf16.msra.mxu0 0
        %2235 = vmatprep.subr.bf16.mxu0 0
        %2236 = vmatpush1.bf16.msra.mxu0 0
        %2237 = vmatprep.subr.bf16.mxu0 0
        %2238 = vmatpush1.bf16.msra.mxu0 0
        %2239 = vmatprep.subr.bf16.mxu0 0
        %2240 = vmatpush1.bf16.msra.mxu0 0
        %2241 = vmatprep.subr.bf16.mxu0 0
        %2242 = vmatpush1.bf16.msra.mxu0 0
        %2243 = vmatprep.mubr.bf16.mxu0 0
        %2244 = vmatmul.mubr.bf16.gmra.mrb[0].mxu0 %v1807
        %v2245 = vpop.f32.mrb[0].mxu0
        %v2246 = vadd.f32 0.0, %v2245
        %v2247 = vpop.f32.mrb[0].mxu0
        %v2248 = vadd.f32 0.0, %v2247
        %v2249 = vpop.f32.mrb[0].mxu0
        %v2250 = vpop.f32.mrb[0].mxu0
        %2251 = vdwg.mxu0
        %2252 = vmatprep.subr.bf16.mxu0 %v2008
        %2253 = vmatpush1.bf16.msra.mxu0 %v2007
        %2254 = vmatprep.subr.bf16.mxu0 %v2016
        %2255 = vmatpush1.bf16.msra.mxu0 %v2015
        %2256 = vmatprep.subr.bf16.mxu0 %v2024
        %2257 = vmatpush1.bf16.msra.mxu0 %v2023
        %2258 = vmatprep.subr.bf16.mxu0 %v2032
        %2259 = vmatpush1.bf16.msra.mxu0 %v2031
        %2260 = vmatprep.subr.bf16.mxu0 %v2040
        %2261 = vmatpush1.bf16.msra.mxu0 %v2039
        %2262 = vmatprep.subr.bf16.mxu0 %v2048
        %2263 = vmatpush1.bf16.msra.mxu0 %v2047
        %2264 = vmatprep.subr.bf16.mxu0 %v2056
        %2265 = vmatpush1.bf16.msra.mxu0 %v2055
        %2266 = vmatprep.subr.bf16.mxu0 %v2064
        %2267 = vmatpush1.bf16.msra.mxu0 %v2063
        %2268 = vmatprep.subr.bf16.mxu0 0
        %2269 = vmatpush1.bf16.msra.mxu0 0
        %2270 = vmatprep.subr.bf16.mxu0 0
        %2271 = vmatpush1.bf16.msra.mxu0 0
        %2272 = vmatprep.subr.bf16.mxu0 0
        %2273 = vmatpush1.bf16.msra.mxu0 0
        %2274 = vmatprep.subr.bf16.mxu0 0
        %2275 = vmatpush1.bf16.msra.mxu0 0
        %2276 = vmatprep.subr.bf16.mxu0 0
        %2277 = vmatpush1.bf16.msra.mxu0 0
        %2278 = vmatprep.subr.bf16.mxu0 0
        %2279 = vmatpush1.bf16.msra.mxu0 0
        %2280 = vmatprep.subr.bf16.mxu0 0
        %2281 = vmatpush1.bf16.msra.mxu0 0
        %2282 = vmatprep.subr.bf16.mxu0 0
        %2283 = vmatpush1.bf16.msra.mxu0 0
        %2284 = vmatprep.mubr.bf16.mxu0 0
        %2285 = vmatmul.mubr.bf16.gmra.mrb[0].mxu0 %v1807
        %v2286 = vpop.f32.mrb[0].mxu0
        %v2287 = vadd.f32 0.0, %v2286
        %v2288 = vpop.f32.mrb[0].mxu0
        %v2289 = vadd.f32 0.0, %v2288
        %v2290 = vpop.f32.mrb[0].mxu0
        %v2291 = vpop.f32.mrb[0].mxu0
        %2292 = vdwg.mxu0
        %v2293 = vadd.f32 %v1613, %v2164
        %v2294 = vadd.f32 %v1615, %v2166
        %v2295 = vadd.f32 %v1654, %v2205
        %v2296 = vadd.f32 %v1656, %v2207
        %v2297 = vadd.f32 %v1695, %v2246
        %v2298 = vadd.f32 %v1697, %v2248
        %v2299 = vadd.f32 %v1736, %v2287
        %v2300 = vadd.f32 %v1738, %v2289
        %v2301 = vld [vmem:[#allocation8 + $0x600] sm:$0xff]
        %v2302 = vld [vmem:[#allocation8 + $0x608] sm:$0xff]
        %v2303 = vld [vmem:[#allocation8 + $0x610] sm:$0xff]
        %v2304 = vld [vmem:[#allocation8 + $0x618] sm:$0xff]
        %v2305 = vld [vmem:[#allocation8 + $0x620] sm:$0xff]
        %v2306 = vld [vmem:[#allocation8 + $0x628] sm:$0xff]
        %v2307 = vld [vmem:[#allocation8 + $0x630] sm:$0xff]
        %v2308 = vld [vmem:[#allocation8 + $0x638] sm:$0xff]
        %v2309 = vld [vmem:[#allocation8 + $0x640] sm:$0xff]
        %v2310 = vld [vmem:[#allocation8 + $0x648] sm:$0xff]
        %v2311 = vld [vmem:[#allocation8 + $0x650] sm:$0xff]
        %v2312 = vld [vmem:[#allocation8 + $0x658] sm:$0xff]
        %v2313 = vld [vmem:[#allocation8 + $0x660] sm:$0xff]
        %v2314 = vld [vmem:[#allocation8 + $0x668] sm:$0xff]
        %v2315 = vld [vmem:[#allocation8 + $0x670] sm:$0xff]
        %v2316 = vld [vmem:[#allocation8 + $0x678] sm:$0xff]
        %v2317 = vld [vmem:[#allocation8 + $0x680] sm:$0xff]
        %v2318 = vld [vmem:[#allocation8 + $0x688] sm:$0xff]
        %v2319 = vld [vmem:[#allocation8 + $0x690] sm:$0xff]
        %v2320 = vld [vmem:[#allocation8 + $0x698] sm:$0xff]
        %v2321 = vld [vmem:[#allocation8 + $0x6a0] sm:$0xff]
        %v2322 = vld [vmem:[#allocation8 + $0x6a8] sm:$0xff]
        %v2323 = vld [vmem:[#allocation8 + $0x6b0] sm:$0xff]
        %v2324 = vld [vmem:[#allocation8 + $0x6b8] sm:$0xff]
        %v2325 = vld [vmem:[#allocation8 + $0x6c0] sm:$0xff]
        %v2326 = vld [vmem:[#allocation8 + $0x6c8] sm:$0xff]
        %v2327 = vld [vmem:[#allocation8 + $0x6d0] sm:$0xff]
        %v2328 = vld [vmem:[#allocation8 + $0x6d8] sm:$0xff]
        %v2329 = vld [vmem:[#allocation8 + $0x6e0] sm:$0xff]
        %v2330 = vld [vmem:[#allocation8 + $0x6e8] sm:$0xff]
        %v2331 = vld [vmem:[#allocation8 + $0x6f0] sm:$0xff]
        %v2332 = vld [vmem:[#allocation8 + $0x6f8] sm:$0xff]
        %v2333 = vld [vmem:[#allocation8 + $0x700] sm:$0xff]
        %v2334 = vld [vmem:[#allocation8 + $0x708] sm:$0xff]
        %v2335 = vld [vmem:[#allocation8 + $0x710] sm:$0xff]
        %v2336 = vld [vmem:[#allocation8 + $0x718] sm:$0xff]
        %v2337 = vld [vmem:[#allocation8 + $0x720] sm:$0xff]
        %v2338 = vld [vmem:[#allocation8 + $0x728] sm:$0xff]
        %v2339 = vld [vmem:[#allocation8 + $0x730] sm:$0xff]
        %v2340 = vld [vmem:[#allocation8 + $0x738] sm:$0xff]
        %v2341 = vld [vmem:[#allocation8 + $0x740] sm:$0xff]
        %v2342 = vld [vmem:[#allocation8 + $0x748] sm:$0xff]
        %v2343 = vld [vmem:[#allocation8 + $0x750] sm:$0xff]
        %v2344 = vld [vmem:[#allocation8 + $0x758] sm:$0xff]
        %v2345 = vld [vmem:[#allocation8 + $0x760] sm:$0xff]
        %v2346 = vld [vmem:[#allocation8 + $0x768] sm:$0xff]
        %v2347 = vld [vmem:[#allocation8 + $0x770] sm:$0xff]
        %v2348 = vld [vmem:[#allocation8 + $0x778] sm:$0xff]
        %v2349 = vld [vmem:[#allocation8 + $0x780] sm:$0xff]
        %v2350 = vld [vmem:[#allocation8 + $0x788] sm:$0xff]
        %v2351 = vld [vmem:[#allocation8 + $0x790] sm:$0xff]
        %v2352 = vld [vmem:[#allocation8 + $0x798] sm:$0xff]
        %v2353 = vld [vmem:[#allocation8 + $0x7a0] sm:$0xff]
        %v2354 = vld [vmem:[#allocation8 + $0x7a8] sm:$0xff]
        %v2355 = vld [vmem:[#allocation8 + $0x7b0] sm:$0xff]
        %v2356 = vld [vmem:[#allocation8 + $0x7b8] sm:$0xff]
        %v2357 = vld [vmem:[#allocation8 + $0x7c0] sm:$0xff]
        %v2358 = vld [vmem:[#allocation8 + $0x7c8] sm:$0xff]
        %v2359 = vld [vmem:[#allocation8 + $0x7d0] sm:$0xff]
        %v2360 = vld [vmem:[#allocation8 + $0x7d8] sm:$0xff]
        %v2361 = vld [vmem:[#allocation8 + $0x7e0] sm:$0xff]
        %v2362 = vld [vmem:[#allocation8 + $0x7e8] sm:$0xff]
        %v2363 = vld [vmem:[#allocation8 + $0x7f0] sm:$0xff]
        %v2364 = vld [vmem:[#allocation8 + $0x7f8] sm:$0xff]
        %v2365 = vrot.slane %v771, 1
        %v2431 = vunpack.c.l.b16 %v2301
        %v2432 = vunpack.c.h.b16 %v2301
        %v2433 = vunpack.c.l.b16 %v2302
        %v2434 = vunpack.c.h.b16 %v2302
        %v2435 = vunpack.c.l.b16 %v2303
        %v2436 = vunpack.c.h.b16 %v2303
        %v2437 = vunpack.c.l.b16 %v2304
        %v2438 = vunpack.c.h.b16 %v2304
        %v2439 = vunpack.c.l.b16 %v2305
        %v2440 = vunpack.c.h.b16 %v2305
        %v2441 = vunpack.c.l.b16 %v2306
        %v2442 = vunpack.c.h.b16 %v2306
        %v2443 = vunpack.c.l.b16 %v2307
        %v2444 = vunpack.c.h.b16 %v2307
        %v2445 = vunpack.c.l.b16 %v2308
        %v2446 = vunpack.c.h.b16 %v2308
        %v2447 = vunpack.c.l.b16 %v2309
        %v2448 = vunpack.c.h.b16 %v2309
        %v2449 = vunpack.c.l.b16 %v2310
        %v2450 = vunpack.c.h.b16 %v2310
        %v2451 = vunpack.c.l.b16 %v2311
        %v2452 = vunpack.c.h.b16 %v2311
        %v2453 = vunpack.c.l.b16 %v2312
        %v2454 = vunpack.c.h.b16 %v2312
        %v2455 = vunpack.c.l.b16 %v2313
        %v2456 = vunpack.c.h.b16 %v2313
        %v2457 = vunpack.c.l.b16 %v2314
        %v2458 = vunpack.c.h.b16 %v2314
        %v2459 = vunpack.c.l.b16 %v2315
        %v2460 = vunpack.c.h.b16 %v2315
        %v2461 = vunpack.c.l.b16 %v2316
        %v2462 = vunpack.c.h.b16 %v2316
        %v2463 = vunpack.c.l.b16 %v2317
        %v2464 = vunpack.c.h.b16 %v2317
        %v2465 = vunpack.c.l.b16 %v2318
        %v2466 = vunpack.c.h.b16 %v2318
        %v2467 = vunpack.c.l.b16 %v2319
        %v2468 = vunpack.c.h.b16 %v2319
        %v2469 = vunpack.c.l.b16 %v2320
        %v2470 = vunpack.c.h.b16 %v2320
        %v2471 = vunpack.c.l.b16 %v2321
        %v2472 = vunpack.c.h.b16 %v2321
        %v2473 = vunpack.c.l.b16 %v2322
        %v2474 = vunpack.c.h.b16 %v2322
        %v2475 = vunpack.c.l.b16 %v2323
        %v2476 = vunpack.c.h.b16 %v2323
        %v2477 = vunpack.c.l.b16 %v2324
        %v2478 = vunpack.c.h.b16 %v2324
        %v2479 = vunpack.c.l.b16 %v2325
        %v2480 = vunpack.c.h.b16 %v2325
        %v2481 = vunpack.c.l.b16 %v2326
        %v2482 = vunpack.c.h.b16 %v2326
        %v2483 = vunpack.c.l.b16 %v2327
        %v2484 = vunpack.c.h.b16 %v2327
        %v2485 = vunpack.c.l.b16 %v2328
        %v2486 = vunpack.c.h.b16 %v2328
        %v2487 = vunpack.c.l.b16 %v2329
        %v2488 = vunpack.c.h.b16 %v2329
        %v2489 = vunpack.c.l.b16 %v2330
        %v2490 = vunpack.c.h.b16 %v2330
        %v2491 = vunpack.c.l.b16 %v2331
        %v2492 = vunpack.c.h.b16 %v2331
        %v2493 = vunpack.c.l.b16 %v2332
        %v2494 = vunpack.c.h.b16 %v2332
        %v2495 = vunpack.c.l.b16 %v2333
        %v2496 = vunpack.c.h.b16 %v2333
        %v2497 = vunpack.c.l.b16 %v2334
        %v2498 = vunpack.c.h.b16 %v2334
        %v2499 = vunpack.c.l.b16 %v2335
        %v2500 = vunpack.c.h.b16 %v2335
        %v2501 = vunpack.c.l.b16 %v2336
        %v2502 = vunpack.c.h.b16 %v2336
        %v2503 = vunpack.c.l.b16 %v2337
        %v2504 = vunpack.c.h.b16 %v2337
        %v2505 = vunpack.c.l.b16 %v2338
        %v2506 = vunpack.c.h.b16 %v2338
        %v2507 = vunpack.c.l.b16 %v2339
        %v2508 = vunpack.c.h.b16 %v2339
        %v2509 = vunpack.c.l.b16 %v2340
        %v2510 = vunpack.c.h.b16 %v2340
        %v2511 = vunpack.c.l.b16 %v2341
        %v2512 = vunpack.c.h.b16 %v2341
        %v2513 = vunpack.c.l.b16 %v2342
        %v2514 = vunpack.c.h.b16 %v2342
        %v2515 = vunpack.c.l.b16 %v2343
        %v2516 = vunpack.c.h.b16 %v2343
        %v2517 = vunpack.c.l.b16 %v2344
        %v2518 = vunpack.c.h.b16 %v2344
        %v2519 = vunpack.c.l.b16 %v2345
        %v2520 = vunpack.c.h.b16 %v2345
        %v2521 = vunpack.c.l.b16 %v2346
        %v2522 = vunpack.c.h.b16 %v2346
        %v2523 = vunpack.c.l.b16 %v2347
        %v2524 = vunpack.c.h.b16 %v2347
        %v2525 = vunpack.c.l.b16 %v2348
        %v2526 = vunpack.c.h.b16 %v2348
        %v2527 = vunpack.c.l.b16 %v2349
        %v2528 = vunpack.c.h.b16 %v2349
        %v2529 = vunpack.c.l.b16 %v2350
        %v2530 = vunpack.c.h.b16 %v2350
        %v2531 = vunpack.c.l.b16 %v2351
        %v2532 = vunpack.c.h.b16 %v2351
        %v2533 = vunpack.c.l.b16 %v2352
        %v2534 = vunpack.c.h.b16 %v2352
        %v2535 = vunpack.c.l.b16 %v2353
        %v2536 = vunpack.c.h.b16 %v2353
        %v2537 = vunpack.c.l.b16 %v2354
        %v2538 = vunpack.c.h.b16 %v2354
        %v2539 = vunpack.c.l.b16 %v2355
        %v2540 = vunpack.c.h.b16 %v2355
        %v2541 = vunpack.c.l.b16 %v2356
        %v2542 = vunpack.c.h.b16 %v2356
        %v2543 = vunpack.c.l.b16 %v2357
        %v2544 = vunpack.c.h.b16 %v2357
        %v2545 = vunpack.c.l.b16 %v2358
        %v2546 = vunpack.c.h.b16 %v2358
        %v2547 = vunpack.c.l.b16 %v2359
        %v2548 = vunpack.c.h.b16 %v2359
        %v2549 = vunpack.c.l.b16 %v2360
        %v2550 = vunpack.c.h.b16 %v2360
        %v2551 = vunpack.c.l.b16 %v2361
        %v2552 = vunpack.c.h.b16 %v2361
        %v2553 = vunpack.c.l.b16 %v2362
        %v2554 = vunpack.c.h.b16 %v2362
        %v2555 = vunpack.c.l.b16 %v2363
        %v2556 = vunpack.c.h.b16 %v2363
        %v2557 = vunpack.c.l.b16 %v2364
        %v2558 = vunpack.c.h.b16 %v2364
        %v2559 = vpack.c.b16 %v2439, %v2431
        %v2560 = vpack.c.b16 %v2440, %v2432
        %v2561 = vpack.c.b16 %v2441, %v2433
        %v2562 = vpack.c.b16 %v2442, %v2434
        %v2563 = vpack.c.b16 %v2443, %v2435
        %v2564 = vpack.c.b16 %v2444, %v2436
        %v2565 = vpack.c.b16 %v2445, %v2437
        %v2566 = vpack.c.b16 %v2446, %v2438
        %v2567 = vpack.c.b16 %v2455, %v2447
        %v2568 = vpack.c.b16 %v2456, %v2448
        %v2569 = vpack.c.b16 %v2457, %v2449
        %v2570 = vpack.c.b16 %v2458, %v2450
        %v2571 = vpack.c.b16 %v2459, %v2451
        %v2572 = vpack.c.b16 %v2460, %v2452
        %v2573 = vpack.c.b16 %v2461, %v2453
        %v2574 = vpack.c.b16 %v2462, %v2454
        %v2575 = vpack.c.b16 %v2471, %v2463
        %v2576 = vpack.c.b16 %v2472, %v2464
        %v2577 = vpack.c.b16 %v2473, %v2465
        %v2578 = vpack.c.b16 %v2474, %v2466
        %v2579 = vpack.c.b16 %v2475, %v2467
        %v2580 = vpack.c.b16 %v2476, %v2468
        %v2581 = vpack.c.b16 %v2477, %v2469
        %v2582 = vpack.c.b16 %v2478, %v2470
        %v2583 = vpack.c.b16 %v2487, %v2479
        %v2584 = vpack.c.b16 %v2488, %v2480
        %v2585 = vpack.c.b16 %v2489, %v2481
        %v2586 = vpack.c.b16 %v2490, %v2482
        %v2587 = vpack.c.b16 %v2491, %v2483
        %v2588 = vpack.c.b16 %v2492, %v2484
        %v2589 = vpack.c.b16 %v2493, %v2485
        %v2590 = vpack.c.b16 %v2494, %v2486
        %v2591 = vpack.c.b16 %v2503, %v2495
        %v2592 = vpack.c.b16 %v2504, %v2496
        %v2593 = vpack.c.b16 %v2505, %v2497
        %v2594 = vpack.c.b16 %v2506, %v2498
        %v2595 = vpack.c.b16 %v2507, %v2499
        %v2596 = vpack.c.b16 %v2508, %v2500
        %v2597 = vpack.c.b16 %v2509, %v2501
        %v2598 = vpack.c.b16 %v2510, %v2502
        %v2599 = vpack.c.b16 %v2519, %v2511
        %v2600 = vpack.c.b16 %v2520, %v2512
        %v2601 = vpack.c.b16 %v2521, %v2513
        %v2602 = vpack.c.b16 %v2522, %v2514
        %v2603 = vpack.c.b16 %v2523, %v2515
        %v2604 = vpack.c.b16 %v2524, %v2516
        %v2605 = vpack.c.b16 %v2525, %v2517
        %v2606 = vpack.c.b16 %v2526, %v2518
        %v2607 = vpack.c.b16 %v2535, %v2527
        %v2608 = vpack.c.b16 %v2536, %v2528
        %v2609 = vpack.c.b16 %v2537, %v2529
        %v2610 = vpack.c.b16 %v2538, %v2530
        %v2611 = vpack.c.b16 %v2539, %v2531
        %v2612 = vpack.c.b16 %v2540, %v2532
        %v2613 = vpack.c.b16 %v2541, %v2533
        %v2614 = vpack.c.b16 %v2542, %v2534
        %v2615 = vpack.c.b16 %v2551, %v2543
        %v2616 = vpack.c.b16 %v2552, %v2544
        %v2617 = vpack.c.b16 %v2553, %v2545
        %v2618 = vpack.c.b16 %v2554, %v2546
        %v2619 = vpack.c.b16 %v2555, %v2547
        %v2620 = vpack.c.b16 %v2556, %v2548
        %v2621 = vpack.c.b16 %v2557, %v2549
        %v2622 = vpack.c.b16 %v2558, %v2550
        %2687 = vmatprep.subr.bf16.mxu0 %v2560
        %2688 = vmatpush1.bf16.msra.mxu0 %v2559
        %2689 = vmatprep.subr.bf16.mxu0 %v2568
        %2690 = vmatpush1.bf16.msra.mxu0 %v2567
        %2691 = vmatprep.subr.bf16.mxu0 %v2576
        %2692 = vmatpush1.bf16.msra.mxu0 %v2575
        %2693 = vmatprep.subr.bf16.mxu0 %v2584
        %2694 = vmatpush1.bf16.msra.mxu0 %v2583
        %2695 = vmatprep.subr.bf16.mxu0 %v2592
        %2696 = vmatpush1.bf16.msra.mxu0 %v2591
        %2697 = vmatprep.subr.bf16.mxu0 %v2600
        %2698 = vmatpush1.bf16.msra.mxu0 %v2599
        %2699 = vmatprep.subr.bf16.mxu0 %v2608
        %2700 = vmatpush1.bf16.msra.mxu0 %v2607
        %2701 = vmatprep.subr.bf16.mxu0 %v2616
        %2702 = vmatpush1.bf16.msra.mxu0 %v2615
        %2703 = vmatprep.subr.bf16.mxu0 0
        %2704 = vmatpush1.bf16.msra.mxu0 0
        %2705 = vmatprep.subr.bf16.mxu0 0
        %2706 = vmatpush1.bf16.msra.mxu0 0
        %2707 = vmatprep.subr.bf16.mxu0 0
        %2708 = vmatpush1.bf16.msra.mxu0 0
        %2709 = vmatprep.subr.bf16.mxu0 0
        %2710 = vmatpush1.bf16.msra.mxu0 0
        %2711 = vmatprep.subr.bf16.mxu0 0
        %2712 = vmatpush1.bf16.msra.mxu0 0
        %2713 = vmatprep.subr.bf16.mxu0 0
        %2714 = vmatpush1.bf16.msra.mxu0 0
        %2715 = vmatprep.subr.bf16.mxu0 0
        %2716 = vmatpush1.bf16.msra.mxu0 0
        %2717 = vmatprep.subr.bf16.mxu0 0
        %2718 = vmatpush1.bf16.msra.mxu0 0
        %2719 = vmatprep.mubr.bf16.mxu0 0
        %2720 = vmatmul.mubr.bf16.gmra.mrb[0].mxu0 %v2365
        %v2721 = vpop.f32.mrb[0].mxu0
        %v2722 = vadd.f32 0.0, %v2721
        %v2723 = vpop.f32.mrb[0].mxu0
        %v2724 = vadd.f32 0.0, %v2723
        %v2725 = vpop.f32.mrb[0].mxu0
        %v2726 = vpop.f32.mrb[0].mxu0
        %2727 = vdwg.mxu0
        %2728 = vmatprep.subr.bf16.mxu0 %v2562
        %2729 = vmatpush1.bf16.msra.mxu0 %v2561
        %2730 = vmatprep.subr.bf16.mxu0 %v2570
        %2731 = vmatpush1.bf16.msra.mxu0 %v2569
        %2732 = vmatprep.subr.bf16.mxu0 %v2578
        %2733 = vmatpush1.bf16.msra.mxu0 %v2577
        %2734 = vmatprep.subr.bf16.mxu0 %v2586
        %2735 = vmatpush1.bf16.msra.mxu0 %v2585
        %2736 = vmatprep.subr.bf16.mxu0 %v2594
        %2737 = vmatpush1.bf16.msra.mxu0 %v2593
        %2738 = vmatprep.subr.bf16.mxu0 %v2602
        %2739 = vmatpush1.bf16.msra.mxu0 %v2601
        %2740 = vmatprep.subr.bf16.mxu0 %v2610
        %2741 = vmatpush1.bf16.msra.mxu0 %v2609
        %2742 = vmatprep.subr.bf16.mxu0 %v2618
        %2743 = vmatpush1.bf16.msra.mxu0 %v2617
        %2744 = vmatprep.subr.bf16.mxu0 0
        %2745 = vmatpush1.bf16.msra.mxu0 0
        %2746 = vmatprep.subr.bf16.mxu0 0
        %2747 = vmatpush1.bf16.msra.mxu0 0
        %2748 = vmatprep.subr.bf16.mxu0 0
        %2749 = vmatpush1.bf16.msra.mxu0 0
        %2750 = vmatprep.subr.bf16.mxu0 0
        %2751 = vmatpush1.bf16.msra.mxu0 0
        %2752 = vmatprep.subr.bf16.mxu0 0
        %2753 = vmatpush1.bf16.msra.mxu0 0
        %2754 = vmatprep.subr.bf16.mxu0 0
        %2755 = vmatpush1.bf16.msra.mxu0 0
        %2756 = vmatprep.subr.bf16.mxu0 0
        %2757 = vmatpush1.bf16.msra.mxu0 0
        %2758 = vmatprep.subr.bf16.mxu0 0
        %2759 = vmatpush1.bf16.msra.mxu0 0
        %2760 = vmatprep.mubr.bf16.mxu0 0
        %2761 = vmatmul.mubr.bf16.gmra.mrb[0].mxu0 %v2365
        %v2762 = vpop.f32.mrb[0].mxu0
        %v2763 = vadd.f32 0.0, %v2762
        %v2764 = vpop.f32.mrb[0].mxu0
        %v2765 = vadd.f32 0.0, %v2764
        %v2766 = vpop.f32.mrb[0].mxu0
        %v2767 = vpop.f32.mrb[0].mxu0
        %2768 = vdwg.mxu0
        %2769 = vmatprep.subr.bf16.mxu0 %v2564
        %2770 = vmatpush1.bf16.msra.mxu0 %v2563
        %2771 = vmatprep.subr.bf16.mxu0 %v2572
        %2772 = vmatpush1.bf16.msra.mxu0 %v2571
        %2773 = vmatprep.subr.bf16.mxu0 %v2580
        %2774 = vmatpush1.bf16.msra.mxu0 %v2579
        %2775 = vmatprep.subr.bf16.mxu0 %v2588
        %2776 = vmatpush1.bf16.msra.mxu0 %v2587
        %2777 = vmatprep.subr.bf16.mxu0 %v2596
        %2778 = vmatpush1.bf16.msra.mxu0 %v2595
        %2779 = vmatprep.subr.bf16.mxu0 %v2604
        %2780 = vmatpush1.bf16.msra.mxu0 %v2603
        %2781 = vmatprep.subr.bf16.mxu0 %v2612
        %2782 = vmatpush1.bf16.msra.mxu0 %v2611
        %2783 = vmatprep.subr.bf16.mxu0 %v2620
        %2784 = vmatpush1.bf16.msra.mxu0 %v2619
        %2785 = vmatprep.subr.bf16.mxu0 0
        %2786 = vmatpush1.bf16.msra.mxu0 0
        %2787 = vmatprep.subr.bf16.mxu0 0
        %2788 = vmatpush1.bf16.msra.mxu0 0
        %2789 = vmatprep.subr.bf16.mxu0 0
        %2790 = vmatpush1.bf16.msra.mxu0 0
        %2791 = vmatprep.subr.bf16.mxu0 0
        %2792 = vmatpush1.bf16.msra.mxu0 0
        %2793 = vmatprep.subr.bf16.mxu0 0
        %2794 = vmatpush1.bf16.msra.mxu0 0
        %2795 = vmatprep.subr.bf16.mxu0 0
        %2796 = vmatpush1.bf16.msra.mxu0 0
        %2797 = vmatprep.subr.bf16.mxu0 0
        %2798 = vmatpush1.bf16.msra.mxu0 0
        %2799 = vmatprep.subr.bf16.mxu0 0
        %2800 = vmatpush1.bf16.msra.mxu0 0
        %2801 = vmatprep.mubr.bf16.mxu0 0
        %2802 = vmatmul.mubr.bf16.gmra.mrb[0].mxu0 %v2365
        %v2803 = vpop.f32.mrb[0].mxu0
        %v2804 = vadd.f32 0.0, %v2803
        %v2805 = vpop.f32.mrb[0].mxu0
        %v2806 = vadd.f32 0.0, %v2805
        %v2807 = vpop.f32.mrb[0].mxu0
        %v2808 = vpop.f32.mrb[0].mxu0
        %2809 = vdwg.mxu0
        %2810 = vmatprep.subr.bf16.mxu0 %v2566
        %2811 = vmatpush1.bf16.msra.mxu0 %v2565
        %2812 = vmatprep.subr.bf16.mxu0 %v2574
        %2813 = vmatpush1.bf16.msra.mxu0 %v2573
        %2814 = vmatprep.subr.bf16.mxu0 %v2582
        %2815 = vmatpush1.bf16.msra.mxu0 %v2581
        %2816 = vmatprep.subr.bf16.mxu0 %v2590
        %2817 = vmatpush1.bf16.msra.mxu0 %v2589
        %2818 = vmatprep.subr.bf16.mxu0 %v2598
        %2819 = vmatpush1.bf16.msra.mxu0 %v2597
        %2820 = vmatprep.subr.bf16.mxu0 %v2606
        %2821 = vmatpush1.bf16.msra.mxu0 %v2605
        %2822 = vmatprep.subr.bf16.mxu0 %v2614
        %2823 = vmatpush1.bf16.msra.mxu0 %v2613
        %2824 = vmatprep.subr.bf16.mxu0 %v2622
        %2825 = vmatpush1.bf16.msra.mxu0 %v2621
        %2826 = vmatprep.subr.bf16.mxu0 0
        %2827 = vmatpush1.bf16.msra.mxu0 0
        %2828 = vmatprep.subr.bf16.mxu0 0
        %2829 = vmatpush1.bf16.msra.mxu0 0
        %2830 = vmatprep.subr.bf16.mxu0 0
        %2831 = vmatpush1.bf16.msra.mxu0 0
        %2832 = vmatprep.subr.bf16.mxu0 0
        %2833 = vmatpush1.bf16.msra.mxu0 0
        %2834 = vmatprep.subr.bf16.mxu0 0
        %2835 = vmatpush1.bf16.msra.mxu0 0
        %2836 = vmatprep.subr.bf16.mxu0 0
        %2837 = vmatpush1.bf16.msra.mxu0 0
        %2838 = vmatprep.subr.bf16.mxu0 0
        %2839 = vmatpush1.bf16.msra.mxu0 0
        %2840 = vmatprep.subr.bf16.mxu0 0
        %2841 = vmatpush1.bf16.msra.mxu0 0
        %2842 = vmatprep.mubr.bf16.mxu0 0
        %2843 = vmatmul.mubr.bf16.gmra.mrb[0].mxu0 %v2365
        %v2844 = vpop.f32.mrb[0].mxu0
        %v2845 = vadd.f32 0.0, %v2844
        %v2846 = vpop.f32.mrb[0].mxu0
        %v2847 = vadd.f32 0.0, %v2846
        %v2848 = vpop.f32.mrb[0].mxu0
        %v2849 = vpop.f32.mrb[0].mxu0
        %2850 = vdwg.mxu0
        %v2851 = vadd.f32 %v2293, %v2722
        %v2852 = vadd.f32 %v2294, %v2724
        %v2853 = vadd.f32 %v2295, %v2763
        %v2854 = vadd.f32 %v2296, %v2765
        %v2855 = vadd.f32 %v2297, %v2804
        %v2856 = vadd.f32 %v2298, %v2806
        %v2857 = vadd.f32 %v2299, %v2845
        %v2858 = vadd.f32 %v2300, %v2847
        %v2859 = vld [vmem:[#allocation8 + $0x800] sm:$0xff]
        %v2860 = vld [vmem:[#allocation8 + $0x808] sm:$0xff]
        %v2861 = vld [vmem:[#allocation8 + $0x810] sm:$0xff]
        %v2862 = vld [vmem:[#allocation8 + $0x818] sm:$0xff]
        %v2863 = vld [vmem:[#allocation8 + $0x820] sm:$0xff]
        %v2864 = vld [vmem:[#allocation8 + $0x828] sm:$0xff]
        %v2865 = vld [vmem:[#allocation8 + $0x830] sm:$0xff]
        %v2866 = vld [vmem:[#allocation8 + $0x838] sm:$0xff]
        %v2867 = vld [vmem:[#allocation8 + $0x840] sm:$0xff]
        %v2868 = vld [vmem:[#allocation8 + $0x848] sm:$0xff]
        %v2869 = vld [vmem:[#allocation8 + $0x850] sm:$0xff]
        %v2870 = vld [vmem:[#allocation8 + $0x858] sm:$0xff]
        %v2871 = vld [vmem:[#allocation8 + $0x860] sm:$0xff]
        %v2872 = vld [vmem:[#allocation8 + $0x868] sm:$0xff]
        %v2873 = vld [vmem:[#allocation8 + $0x870] sm:$0xff]
        %v2874 = vld [vmem:[#allocation8 + $0x878] sm:$0xff]
        %v2875 = vld [vmem:[#allocation8 + $0x880] sm:$0xff]
        %v2876 = vld [vmem:[#allocation8 + $0x888] sm:$0xff]
        %v2877 = vld [vmem:[#allocation8 + $0x890] sm:$0xff]
        %v2878 = vld [vmem:[#allocation8 + $0x898] sm:$0xff]
        %v2879 = vld [vmem:[#allocation8 + $0x8a0] sm:$0xff]
        %v2880 = vld [vmem:[#allocation8 + $0x8a8] sm:$0xff]
        %v2881 = vld [vmem:[#allocation8 + $0x8b0] sm:$0xff]
        %v2882 = vld [vmem:[#allocation8 + $0x8b8] sm:$0xff]
        %v2883 = vld [vmem:[#allocation8 + $0x8c0] sm:$0xff]
        %v2884 = vld [vmem:[#allocation8 + $0x8c8] sm:$0xff]
        %v2885 = vld [vmem:[#allocation8 + $0x8d0] sm:$0xff]
        %v2886 = vld [vmem:[#allocation8 + $0x8d8] sm:$0xff]
        %v2887 = vld [vmem:[#allocation8 + $0x8e0] sm:$0xff]
        %v2888 = vld [vmem:[#allocation8 + $0x8e8] sm:$0xff]
        %v2889 = vld [vmem:[#allocation8 + $0x8f0] sm:$0xff]
        %v2890 = vld [vmem:[#allocation8 + $0x8f8] sm:$0xff]
        %v2891 = vld [vmem:[#allocation8 + $0x900] sm:$0xff]
        %v2892 = vld [vmem:[#allocation8 + $0x908] sm:$0xff]
        %v2893 = vld [vmem:[#allocation8 + $0x910] sm:$0xff]
        %v2894 = vld [vmem:[#allocation8 + $0x918] sm:$0xff]
        %v2895 = vld [vmem:[#allocation8 + $0x920] sm:$0xff]
        %v2896 = vld [vmem:[#allocation8 + $0x928] sm:$0xff]
        %v2897 = vld [vmem:[#allocation8 + $0x930] sm:$0xff]
        %v2898 = vld [vmem:[#allocation8 + $0x938] sm:$0xff]
        %v2899 = vld [vmem:[#allocation8 + $0x940] sm:$0xff]
        %v2900 = vld [vmem:[#allocation8 + $0x948] sm:$0xff]
        %v2901 = vld [vmem:[#allocation8 + $0x950] sm:$0xff]
        %v2902 = vld [vmem:[#allocation8 + $0x958] sm:$0xff]
        %v2903 = vld [vmem:[#allocation8 + $0x960] sm:$0xff]
        %v2904 = vld [vmem:[#allocation8 + $0x968] sm:$0xff]
        %v2905 = vld [vmem:[#allocation8 + $0x970] sm:$0xff]
        %v2906 = vld [vmem:[#allocation8 + $0x978] sm:$0xff]
        %v2907 = vld [vmem:[#allocation8 + $0x980] sm:$0xff]
        %v2908 = vld [vmem:[#allocation8 + $0x988] sm:$0xff]
        %v2909 = vld [vmem:[#allocation8 + $0x990] sm:$0xff]
        %v2910 = vld [vmem:[#allocation8 + $0x998] sm:$0xff]
        %v2911 = vld [vmem:[#allocation8 + $0x9a0] sm:$0xff]
        %v2912 = vld [vmem:[#allocation8 + $0x9a8] sm:$0xff]
        %v2913 = vld [vmem:[#allocation8 + $0x9b0] sm:$0xff]
        %v2914 = vld [vmem:[#allocation8 + $0x9b8] sm:$0xff]
        %v2915 = vld [vmem:[#allocation8 + $0x9c0] sm:$0xff]
        %v2916 = vld [vmem:[#allocation8 + $0x9c8] sm:$0xff]
        %v2917 = vld [vmem:[#allocation8 + $0x9d0] sm:$0xff]
        %v2918 = vld [vmem:[#allocation8 + $0x9d8] sm:$0xff]
        %v2919 = vld [vmem:[#allocation8 + $0x9e0] sm:$0xff]
        %v2920 = vld [vmem:[#allocation8 + $0x9e8] sm:$0xff]
        %v2921 = vld [vmem:[#allocation8 + $0x9f0] sm:$0xff]
        %v2922 = vld [vmem:[#allocation8 + $0x9f8] sm:$0xff]
        %v2923 = vrot.slane %v641, 2
        %v2989 = vunpack.c.l.b16 %v2859
        %v2990 = vunpack.c.h.b16 %v2859
        %v2991 = vunpack.c.l.b16 %v2860
        %v2992 = vunpack.c.h.b16 %v2860
        %v2993 = vunpack.c.l.b16 %v2861
        %v2994 = vunpack.c.h.b16 %v2861
        %v2995 = vunpack.c.l.b16 %v2862
        %v2996 = vunpack.c.h.b16 %v2862
        %v2997 = vunpack.c.l.b16 %v2863
        %v2998 = vunpack.c.h.b16 %v2863
        %v2999 = vunpack.c.l.b16 %v2864
        %v3000 = vunpack.c.h.b16 %v2864
        %v3001 = vunpack.c.l.b16 %v2865
        %v3002 = vunpack.c.h.b16 %v2865
        %v3003 = vunpack.c.l.b16 %v2866
        %v3004 = vunpack.c.h.b16 %v2866
        %v3005 = vunpack.c.l.b16 %v2867
        %v3006 = vunpack.c.h.b16 %v2867
        %v3007 = vunpack.c.l.b16 %v2868
        %v3008 = vunpack.c.h.b16 %v2868
        %v3009 = vunpack.c.l.b16 %v2869
        %v3010 = vunpack.c.h.b16 %v2869
        %v3011 = vunpack.c.l.b16 %v2870
        %v3012 = vunpack.c.h.b16 %v2870
        %v3013 = vunpack.c.l.b16 %v2871
        %v3014 = vunpack.c.h.b16 %v2871
        %v3015 = vunpack.c.l.b16 %v2872
        %v3016 = vunpack.c.h.b16 %v2872
        %v3017 = vunpack.c.l.b16 %v2873
        %v3018 = vunpack.c.h.b16 %v2873
        %v3019 = vunpack.c.l.b16 %v2874
        %v3020 = vunpack.c.h.b16 %v2874
        %v3021 = vunpack.c.l.b16 %v2875
        %v3022 = vunpack.c.h.b16 %v2875
        %v3023 = vunpack.c.l.b16 %v2876
        %v3024 = vunpack.c.h.b16 %v2876
        %v3025 = vunpack.c.l.b16 %v2877
        %v3026 = vunpack.c.h.b16 %v2877
        %v3027 = vunpack.c.l.b16 %v2878
        %v3028 = vunpack.c.h.b16 %v2878
        %v3029 = vunpack.c.l.b16 %v2879
        %v3030 = vunpack.c.h.b16 %v2879
        %v3031 = vunpack.c.l.b16 %v2880
        %v3032 = vunpack.c.h.b16 %v2880
        %v3033 = vunpack.c.l.b16 %v2881
        %v3034 = vunpack.c.h.b16 %v2881
        %v3035 = vunpack.c.l.b16 %v2882
        %v3036 = vunpack.c.h.b16 %v2882
        %v3037 = vunpack.c.l.b16 %v2883
        %v3038 = vunpack.c.h.b16 %v2883
        %v3039 = vunpack.c.l.b16 %v2884
        %v3040 = vunpack.c.h.b16 %v2884
        %v3041 = vunpack.c.l.b16 %v2885
        %v3042 = vunpack.c.h.b16 %v2885
        %v3043 = vunpack.c.l.b16 %v2886
        %v3044 = vunpack.c.h.b16 %v2886
        %v3045 = vunpack.c.l.b16 %v2887
        %v3046 = vunpack.c.h.b16 %v2887
        %v3047 = vunpack.c.l.b16 %v2888
        %v3048 = vunpack.c.h.b16 %v2888
        %v3049 = vunpack.c.l.b16 %v2889
        %v3050 = vunpack.c.h.b16 %v2889
        %v3051 = vunpack.c.l.b16 %v2890
        %v3052 = vunpack.c.h.b16 %v2890
        %v3053 = vunpack.c.l.b16 %v2891
        %v3054 = vunpack.c.h.b16 %v2891
        %v3055 = vunpack.c.l.b16 %v2892
        %v3056 = vunpack.c.h.b16 %v2892
        %v3057 = vunpack.c.l.b16 %v2893
        %v3058 = vunpack.c.h.b16 %v2893
        %v3059 = vunpack.c.l.b16 %v2894
        %v3060 = vunpack.c.h.b16 %v2894
        %v3061 = vunpack.c.l.b16 %v2895
        %v3062 = vunpack.c.h.b16 %v2895
        %v3063 = vunpack.c.l.b16 %v2896
        %v3064 = vunpack.c.h.b16 %v2896
        %v3065 = vunpack.c.l.b16 %v2897
        %v3066 = vunpack.c.h.b16 %v2897
        %v3067 = vunpack.c.l.b16 %v2898
        %v3068 = vunpack.c.h.b16 %v2898
        %v3069 = vunpack.c.l.b16 %v2899
        %v3070 = vunpack.c.h.b16 %v2899
        %v3071 = vunpack.c.l.b16 %v2900
        %v3072 = vunpack.c.h.b16 %v2900
        %v3073 = vunpack.c.l.b16 %v2901
        %v3074 = vunpack.c.h.b16 %v2901
        %v3075 = vunpack.c.l.b16 %v2902
        %v3076 = vunpack.c.h.b16 %v2902
        %v3077 = vunpack.c.l.b16 %v2903
        %v3078 = vunpack.c.h.b16 %v2903
        %v3079 = vunpack.c.l.b16 %v2904
        %v3080 = vunpack.c.h.b16 %v2904
        %v3081 = vunpack.c.l.b16 %v2905
        %v3082 = vunpack.c.h.b16 %v2905
        %v3083 = vunpack.c.l.b16 %v2906
        %v3084 = vunpack.c.h.b16 %v2906
        %v3085 = vunpack.c.l.b16 %v2907
        %v3086 = vunpack.c.h.b16 %v2907
        %v3087 = vunpack.c.l.b16 %v2908
        %v3088 = vunpack.c.h.b16 %v2908
        %v3089 = vunpack.c.l.b16 %v2909
        %v3090 = vunpack.c.h.b16 %v2909
        %v3091 = vunpack.c.l.b16 %v2910
        %v3092 = vunpack.c.h.b16 %v2910
        %v3093 = vunpack.c.l.b16 %v2911
        %v3094 = vunpack.c.h.b16 %v2911
        %v3095 = vunpack.c.l.b16 %v2912
        %v3096 = vunpack.c.h.b16 %v2912
        %v3097 = vunpack.c.l.b16 %v2913
        %v3098 = vunpack.c.h.b16 %v2913
        %v3099 = vunpack.c.l.b16 %v2914
        %v3100 = vunpack.c.h.b16 %v2914
        %v3101 = vunpack.c.l.b16 %v2915
        %v3102 = vunpack.c.h.b16 %v2915
        %v3103 = vunpack.c.l.b16 %v2916
        %v3104 = vunpack.c.h.b16 %v2916
        %v3105 = vunpack.c.l.b16 %v2917
        %v3106 = vunpack.c.h.b16 %v2917
        %v3107 = vunpack.c.l.b16 %v2918
        %v3108 = vunpack.c.h.b16 %v2918
        %v3109 = vunpack.c.l.b16 %v2919
        %v3110 = vunpack.c.h.b16 %v2919
        %v3111 = vunpack.c.l.b16 %v2920
        %v3112 = vunpack.c.h.b16 %v2920
        %v3113 = vunpack.c.l.b16 %v2921
        %v3114 = vunpack.c.h.b16 %v2921
        %v3115 = vunpack.c.l.b16 %v2922
        %v3116 = vunpack.c.h.b16 %v2922
        %v3117 = vpack.c.b16 %v2997, %v2989
        %v3118 = vpack.c.b16 %v2998, %v2990
        %v3119 = vpack.c.b16 %v2999, %v2991
        %v3120 = vpack.c.b16 %v3000, %v2992
        %v3121 = vpack.c.b16 %v3001, %v2993
        %v3122 = vpack.c.b16 %v3002, %v2994
        %v3123 = vpack.c.b16 %v3003, %v2995
        %v3124 = vpack.c.b16 %v3004, %v2996
        %v3125 = vpack.c.b16 %v3013, %v3005
        %v3126 = vpack.c.b16 %v3014, %v3006
        %v3127 = vpack.c.b16 %v3015, %v3007
        %v3128 = vpack.c.b16 %v3016, %v3008
        %v3129 = vpack.c.b16 %v3017, %v3009
        %v3130 = vpack.c.b16 %v3018, %v3010
        %v3131 = vpack.c.b16 %v3019, %v3011
        %v3132 = vpack.c.b16 %v3020, %v3012
        %v3133 = vpack.c.b16 %v3029, %v3021
        %v3134 = vpack.c.b16 %v3030, %v3022
        %v3135 = vpack.c.b16 %v3031, %v3023
        %v3136 = vpack.c.b16 %v3032, %v3024
        %v3137 = vpack.c.b16 %v3033, %v3025
        %v3138 = vpack.c.b16 %v3034, %v3026
        %v3139 = vpack.c.b16 %v3035, %v3027
        %v3140 = vpack.c.b16 %v3036, %v3028
        %v3141 = vpack.c.b16 %v3045, %v3037
        %v3142 = vpack.c.b16 %v3046, %v3038
        %v3143 = vpack.c.b16 %v3047, %v3039
        %v3144 = vpack.c.b16 %v3048, %v3040
        %v3145 = vpack.c.b16 %v3049, %v3041
        %v3146 = vpack.c.b16 %v3050, %v3042
        %v3147 = vpack.c.b16 %v3051, %v3043
        %v3148 = vpack.c.b16 %v3052, %v3044
        %v3149 = vpack.c.b16 %v3061, %v3053
        %v3150 = vpack.c.b16 %v3062, %v3054
        %v3151 = vpack.c.b16 %v3063, %v3055
        %v3152 = vpack.c.b16 %v3064, %v3056
        %v3153 = vpack.c.b16 %v3065, %v3057
        %v3154 = vpack.c.b16 %v3066, %v3058
        %v3155 = vpack.c.b16 %v3067, %v3059
        %v3156 = vpack.c.b16 %v3068, %v3060
        %v3157 = vpack.c.b16 %v3077, %v3069
        %v3158 = vpack.c.b16 %v3078, %v3070
        %v3159 = vpack.c.b16 %v3079, %v3071
        %v3160 = vpack.c.b16 %v3080, %v3072
        %v3161 = vpack.c.b16 %v3081, %v3073
        %v3162 = vpack.c.b16 %v3082, %v3074
        %v3163 = vpack.c.b16 %v3083, %v3075
        %v3164 = vpack.c.b16 %v3084, %v3076
        %v3165 = vpack.c.b16 %v3093, %v3085
        %v3166 = vpack.c.b16 %v3094, %v3086
        %v3167 = vpack.c.b16 %v3095, %v3087
        %v3168 = vpack.c.b16 %v3096, %v3088
        %v3169 = vpack.c.b16 %v3097, %v3089
        %v3170 = vpack.c.b16 %v3098, %v3090
        %v3171 = vpack.c.b16 %v3099, %v3091
        %v3172 = vpack.c.b16 %v3100, %v3092
        %v3173 = vpack.c.b16 %v3109, %v3101
        %v3174 = vpack.c.b16 %v3110, %v3102
        %v3175 = vpack.c.b16 %v3111, %v3103
        %v3176 = vpack.c.b16 %v3112, %v3104
        %v3177 = vpack.c.b16 %v3113, %v3105
        %v3178 = vpack.c.b16 %v3114, %v3106
        %v3179 = vpack.c.b16 %v3115, %v3107
        %v3180 = vpack.c.b16 %v3116, %v3108
        %3245 = vmatprep.subr.bf16.mxu0 %v3118
        %3246 = vmatpush1.bf16.msra.mxu0 %v3117
        %3247 = vmatprep.subr.bf16.mxu0 %v3126
        %3248 = vmatpush1.bf16.msra.mxu0 %v3125
        %3249 = vmatprep.subr.bf16.mxu0 %v3134
        %3250 = vmatpush1.bf16.msra.mxu0 %v3133
        %3251 = vmatprep.subr.bf16.mxu0 %v3142
        %3252 = vmatpush1.bf16.msra.mxu0 %v3141
        %3253 = vmatprep.subr.bf16.mxu0 %v3150
        %3254 = vmatpush1.bf16.msra.mxu0 %v3149
        %3255 = vmatprep.subr.bf16.mxu0 %v3158
        %3256 = vmatpush1.bf16.msra.mxu0 %v3157
        %3257 = vmatprep.subr.bf16.mxu0 %v3166
        %3258 = vmatpush1.bf16.msra.mxu0 %v3165
        %3259 = vmatprep.subr.bf16.mxu0 %v3174
        %3260 = vmatpush1.bf16.msra.mxu0 %v3173
        %3261 = vmatprep.subr.bf16.mxu0 0
        %3262 = vmatpush1.bf16.msra.mxu0 0
        %3263 = vmatprep.subr.bf16.mxu0 0
        %3264 = vmatpush1.bf16.msra.mxu0 0
        %3265 = vmatprep.subr.bf16.mxu0 0
        %3266 = vmatpush1.bf16.msra.mxu0 0
        %3267 = vmatprep.subr.bf16.mxu0 0
        %3268 = vmatpush1.bf16.msra.mxu0 0
        %3269 = vmatprep.subr.bf16.mxu0 0
        %3270 = vmatpush1.bf16.msra.mxu0 0
        %3271 = vmatprep.subr.bf16.mxu0 0
        %3272 = vmatpush1.bf16.msra.mxu0 0
        %3273 = vmatprep.subr.bf16.mxu0 0
        %3274 = vmatpush1.bf16.msra.mxu0 0
        %3275 = vmatprep.subr.bf16.mxu0 0
        %3276 = vmatpush1.bf16.msra.mxu0 0
        %3277 = vmatprep.mubr.bf16.mxu0 0
        %3278 = vmatmul.mubr.bf16.gmra.mrb[0].mxu0 %v2923
        %v3279 = vpop.f32.mrb[0].mxu0
        %v3280 = vadd.f32 0.0, %v3279
        %v3281 = vpop.f32.mrb[0].mxu0
        %v3282 = vadd.f32 0.0, %v3281
        %v3283 = vpop.f32.mrb[0].mxu0
        %v3284 = vpop.f32.mrb[0].mxu0
        %3285 = vdwg.mxu0
        %3286 = vmatprep.subr.bf16.mxu0 %v3120
        %3287 = vmatpush1.bf16.msra.mxu0 %v3119
        %3288 = vmatprep.subr.bf16.mxu0 %v3128
        %3289 = vmatpush1.bf16.msra.mxu0 %v3127
        %3290 = vmatprep.subr.bf16.mxu0 %v3136
        %3291 = vmatpush1.bf16.msra.mxu0 %v3135
        %3292 = vmatprep.subr.bf16.mxu0 %v3144
        %3293 = vmatpush1.bf16.msra.mxu0 %v3143
        %3294 = vmatprep.subr.bf16.mxu0 %v3152
        %3295 = vmatpush1.bf16.msra.mxu0 %v3151
        %3296 = vmatprep.subr.bf16.mxu0 %v3160
        %3297 = vmatpush1.bf16.msra.mxu0 %v3159
        %3298 = vmatprep.subr.bf16.mxu0 %v3168
        %3299 = vmatpush1.bf16.msra.mxu0 %v3167
        %3300 = vmatprep.subr.bf16.mxu0 %v3176
        %3301 = vmatpush1.bf16.msra.mxu0 %v3175
        %3302 = vmatprep.subr.bf16.mxu0 0
        %3303 = vmatpush1.bf16.msra.mxu0 0
        %3304 = vmatprep.subr.bf16.mxu0 0
        %3305 = vmatpush1.bf16.msra.mxu0 0
        %3306 = vmatprep.subr.bf16.mxu0 0
        %3307 = vmatpush1.bf16.msra.mxu0 0
        %3308 = vmatprep.subr.bf16.mxu0 0
        %3309 = vmatpush1.bf16.msra.mxu0 0
        %3310 = vmatprep.subr.bf16.mxu0 0
        %3311 = vmatpush1.bf16.msra.mxu0 0
        %3312 = vmatprep.subr.bf16.mxu0 0
        %3313 = vmatpush1.bf16.msra.mxu0 0
        %3314 = vmatprep.subr.bf16.mxu0 0
        %3315 = vmatpush1.bf16.msra.mxu0 0
        %3316 = vmatprep.subr.bf16.mxu0 0
        %3317 = vmatpush1.bf16.msra.mxu0 0
        %3318 = vmatprep.mubr.bf16.mxu0 0
        %3319 = vmatmul.mubr.bf16.gmra.mrb[0].mxu0 %v2923
        %v3320 = vpop.f32.mrb[0].mxu0
        %v3321 = vadd.f32 0.0, %v3320
        %v3322 = vpop.f32.mrb[0].mxu0
        %v3323 = vadd.f32 0.0, %v3322
        %v3324 = vpop.f32.mrb[0].mxu0
        %v3325 = vpop.f32.mrb[0].mxu0
        %3326 = vdwg.mxu0
        %3327 = vmatprep.subr.bf16.mxu0 %v3122
        %3328 = vmatpush1.bf16.msra.mxu0 %v3121
        %3329 = vmatprep.subr.bf16.mxu0 %v3130
        %3330 = vmatpush1.bf16.msra.mxu0 %v3129
        %3331 = vmatprep.subr.bf16.mxu0 %v3138
        %3332 = vmatpush1.bf16.msra.mxu0 %v3137
        %3333 = vmatprep.subr.bf16.mxu0 %v3146
        %3334 = vmatpush1.bf16.msra.mxu0 %v3145
        %3335 = vmatprep.subr.bf16.mxu0 %v3154
        %3336 = vmatpush1.bf16.msra.mxu0 %v3153
        %3337 = vmatprep.subr.bf16.mxu0 %v3162
        %3338 = vmatpush1.bf16.msra.mxu0 %v3161
        %3339 = vmatprep.subr.bf16.mxu0 %v3170
        %3340 = vmatpush1.bf16.msra.mxu0 %v3169
        %3341 = vmatprep.subr.bf16.mxu0 %v3178
        %3342 = vmatpush1.bf16.msra.mxu0 %v3177
        %3343 = vmatprep.subr.bf16.mxu0 0
        %3344 = vmatpush1.bf16.msra.mxu0 0
        %3345 = vmatprep.subr.bf16.mxu0 0
        %3346 = vmatpush1.bf16.msra.mxu0 0
        %3347 = vmatprep.subr.bf16.mxu0 0
        %3348 = vmatpush1.bf16.msra.mxu0 0
        %3349 = vmatprep.subr.bf16.mxu0 0
        %3350 = vmatpush1.bf16.msra.mxu0 0
        %3351 = vmatprep.subr.bf16.mxu0 0
        %3352 = vmatpush1.bf16.msra.mxu0 0
        %3353 = vmatprep.subr.bf16.mxu0 0
        %3354 = vmatpush1.bf16.msra.mxu0 0
        %3355 = vmatprep.subr.bf16.mxu0 0
        %3356 = vmatpush1.bf16.msra.mxu0 0
        %3357 = vmatprep.subr.bf16.mxu0 0
        %3358 = vmatpush1.bf16.msra.mxu0 0
        %3359 = vmatprep.mubr.bf16.mxu0 0
        %3360 = vmatmul.mubr.bf16.gmra.mrb[0].mxu0 %v2923
        %v3361 = vpop.f32.mrb[0].mxu0
        %v3362 = vadd.f32 0.0, %v3361
        %v3363 = vpop.f32.mrb[0].mxu0
        %v3364 = vadd.f32 0.0, %v3363
        %v3365 = vpop.f32.mrb[0].mxu0
        %v3366 = vpop.f32.mrb[0].mxu0
        %3367 = vdwg.mxu0
        %3368 = vmatprep.subr.bf16.mxu0 %v3124
        %3369 = vmatpush1.bf16.msra.mxu0 %v3123
        %3370 = vmatprep.subr.bf16.mxu0 %v3132
        %3371 = vmatpush1.bf16.msra.mxu0 %v3131
        %3372 = vmatprep.subr.bf16.mxu0 %v3140
        %3373 = vmatpush1.bf16.msra.mxu0 %v3139
        %3374 = vmatprep.subr.bf16.mxu0 %v3148
        %3375 = vmatpush1.bf16.msra.mxu0 %v3147
        %3376 = vmatprep.subr.bf16.mxu0 %v3156
        %3377 = vmatpush1.bf16.msra.mxu0 %v3155
        %3378 = vmatprep.subr.bf16.mxu0 %v3164
        %3379 = vmatpush1.bf16.msra.mxu0 %v3163
        %3380 = vmatprep.subr.bf16.mxu0 %v3172
        %3381 = vmatpush1.bf16.msra.mxu0 %v3171
        %3382 = vmatprep.subr.bf16.mxu0 %v3180
        %3383 = vmatpush1.bf16.msra.mxu0 %v3179
        %3384 = vmatprep.subr.bf16.mxu0 0
        %3385 = vmatpush1.bf16.msra.mxu0 0
        %3386 = vmatprep.subr.bf16.mxu0 0
        %3387 = vmatpush1.bf16.msra.mxu0 0
        %3388 = vmatprep.subr.bf16.mxu0 0
        %3389 = vmatpush1.bf16.msra.mxu0 0
        %3390 = vmatprep.subr.bf16.mxu0 0
        %3391 = vmatpush1.bf16.msra.mxu0 0
        %3392 = vmatprep.subr.bf16.mxu0 0
        %3393 = vmatpush1.bf16.msra.mxu0 0
        %3394 = vmatprep.subr.bf16.mxu0 0
        %3395 = vmatpush1.bf16.msra.mxu0 0
        %3396 = vmatprep.subr.bf16.mxu0 0
        %3397 = vmatpush1.bf16.msra.mxu0 0
        %3398 = vmatprep.subr.bf16.mxu0 0
        %3399 = vmatpush1.bf16.msra.mxu0 0
        %3400 = vmatprep.mubr.bf16.mxu0 0
        %3401 = vmatmul.mubr.bf16.gmra.mrb[0].mxu0 %v2923
        %v3402 = vpop.f32.mrb[0].mxu0
        %v3403 = vadd.f32 0.0, %v3402
        %v3404 = vpop.f32.mrb[0].mxu0
        %v3405 = vadd.f32 0.0, %v3404
        %v3406 = vpop.f32.mrb[0].mxu0
        %v3407 = vpop.f32.mrb[0].mxu0
        %3408 = vdwg.mxu0
        %v3409 = vadd.f32 %v2851, %v3280
        %v3410 = vadd.f32 %v2852, %v3282
        %v3411 = vadd.f32 %v2853, %v3321
        %v3412 = vadd.f32 %v2854, %v3323
        %v3413 = vadd.f32 %v2855, %v3362
        %v3414 = vadd.f32 %v2856, %v3364
        %v3415 = vadd.f32 %v2857, %v3403
        %v3416 = vadd.f32 %v2858, %v3405
        %v3417 = vld [vmem:[#allocation8 + $0xa00] sm:$0xff]
        %v3418 = vld [vmem:[#allocation8 + $0xa08] sm:$0xff]
        %v3419 = vld [vmem:[#allocation8 + $0xa10] sm:$0xff]
        %v3420 = vld [vmem:[#allocation8 + $0xa18] sm:$0xff]
        %v3421 = vld [vmem:[#allocation8 + $0xa20] sm:$0xff]
        %v3422 = vld [vmem:[#allocation8 + $0xa28] sm:$0xff]
        %v3423 = vld [vmem:[#allocation8 + $0xa30] sm:$0xff]
        %v3424 = vld [vmem:[#allocation8 + $0xa38] sm:$0xff]
        %v3425 = vld [vmem:[#allocation8 + $0xa40] sm:$0xff]
        %v3426 = vld [vmem:[#allocation8 + $0xa48] sm:$0xff]
        %v3427 = vld [vmem:[#allocation8 + $0xa50] sm:$0xff]
        %v3428 = vld [vmem:[#allocation8 + $0xa58] sm:$0xff]
        %v3429 = vld [vmem:[#allocation8 + $0xa60] sm:$0xff]
        %v3430 = vld [vmem:[#allocation8 + $0xa68] sm:$0xff]
        %v3431 = vld [vmem:[#allocation8 + $0xa70] sm:$0xff]
        %v3432 = vld [vmem:[#allocation8 + $0xa78] sm:$0xff]
        %v3433 = vld [vmem:[#allocation8 + $0xa80] sm:$0xff]
        %v3434 = vld [vmem:[#allocation8 + $0xa88] sm:$0xff]
        %v3435 = vld [vmem:[#allocation8 + $0xa90] sm:$0xff]
        %v3436 = vld [vmem:[#allocation8 + $0xa98] sm:$0xff]
        %v3437 = vld [vmem:[#allocation8 + $0xaa0] sm:$0xff]
        %v3438 = vld [vmem:[#allocation8 + $0xaa8] sm:$0xff]
        %v3439 = vld [vmem:[#allocation8 + $0xab0] sm:$0xff]
        %v3440 = vld [vmem:[#allocation8 + $0xab8] sm:$0xff]
        %v3441 = vld [vmem:[#allocation8 + $0xac0] sm:$0xff]
        %v3442 = vld [vmem:[#allocation8 + $0xac8] sm:$0xff]
        %v3443 = vld [vmem:[#allocation8 + $0xad0] sm:$0xff]
        %v3444 = vld [vmem:[#allocation8 + $0xad8] sm:$0xff]
        %v3445 = vld [vmem:[#allocation8 + $0xae0] sm:$0xff]
        %v3446 = vld [vmem:[#allocation8 + $0xae8] sm:$0xff]
        %v3447 = vld [vmem:[#allocation8 + $0xaf0] sm:$0xff]
        %v3448 = vld [vmem:[#allocation8 + $0xaf8] sm:$0xff]
        %v3449 = vld [vmem:[#allocation8 + $0xb00] sm:$0xff]
        %v3450 = vld [vmem:[#allocation8 + $0xb08] sm:$0xff]
        %v3451 = vld [vmem:[#allocation8 + $0xb10] sm:$0xff]
        %v3452 = vld [vmem:[#allocation8 + $0xb18] sm:$0xff]
        %v3453 = vld [vmem:[#allocation8 + $0xb20] sm:$0xff]
        %v3454 = vld [vmem:[#allocation8 + $0xb28] sm:$0xff]
        %v3455 = vld [vmem:[#allocation8 + $0xb30] sm:$0xff]
        %v3456 = vld [vmem:[#allocation8 + $0xb38] sm:$0xff]
        %v3457 = vld [vmem:[#allocation8 + $0xb40] sm:$0xff]
        %v3458 = vld [vmem:[#allocation8 + $0xb48] sm:$0xff]
        %v3459 = vld [vmem:[#allocation8 + $0xb50] sm:$0xff]
        %v3460 = vld [vmem:[#allocation8 + $0xb58] sm:$0xff]
        %v3461 = vld [vmem:[#allocation8 + $0xb60] sm:$0xff]
        %v3462 = vld [vmem:[#allocation8 + $0xb68] sm:$0xff]
        %v3463 = vld [vmem:[#allocation8 + $0xb70] sm:$0xff]
        %v3464 = vld [vmem:[#allocation8 + $0xb78] sm:$0xff]
        %v3465 = vld [vmem:[#allocation8 + $0xb80] sm:$0xff]
        %v3466 = vld [vmem:[#allocation8 + $0xb88] sm:$0xff]
        %v3467 = vld [vmem:[#allocation8 + $0xb90] sm:$0xff]
        %v3468 = vld [vmem:[#allocation8 + $0xb98] sm:$0xff]
        %v3469 = vld [vmem:[#allocation8 + $0xba0] sm:$0xff]
        %v3470 = vld [vmem:[#allocation8 + $0xba8] sm:$0xff]
        %v3471 = vld [vmem:[#allocation8 + $0xbb0] sm:$0xff]
        %v3472 = vld [vmem:[#allocation8 + $0xbb8] sm:$0xff]
        %v3473 = vld [vmem:[#allocation8 + $0xbc0] sm:$0xff]
        %v3474 = vld [vmem:[#allocation8 + $0xbc8] sm:$0xff]
        %v3475 = vld [vmem:[#allocation8 + $0xbd0] sm:$0xff]
        %v3476 = vld [vmem:[#allocation8 + $0xbd8] sm:$0xff]
        %v3477 = vld [vmem:[#allocation8 + $0xbe0] sm:$0xff]
        %v3478 = vld [vmem:[#allocation8 + $0xbe8] sm:$0xff]
        %v3479 = vld [vmem:[#allocation8 + $0xbf0] sm:$0xff]
        %v3480 = vld [vmem:[#allocation8 + $0xbf8] sm:$0xff]
        %v3481 = vrot.slane %v771, 2
        %v3547 = vunpack.c.l.b16 %v3417
        %v3548 = vunpack.c.h.b16 %v3417
        %v3549 = vunpack.c.l.b16 %v3418
        %v3550 = vunpack.c.h.b16 %v3418
        %v3551 = vunpack.c.l.b16 %v3419
        %v3552 = vunpack.c.h.b16 %v3419
        %v3553 = vunpack.c.l.b16 %v3420
        %v3554 = vunpack.c.h.b16 %v3420
        %v3555 = vunpack.c.l.b16 %v3421
        %v3556 = vunpack.c.h.b16 %v3421
        %v3557 = vunpack.c.l.b16 %v3422
        %v3558 = vunpack.c.h.b16 %v3422
        %v3559 = vunpack.c.l.b16 %v3423
        %v3560 = vunpack.c.h.b16 %v3423
        %v3561 = vunpack.c.l.b16 %v3424
        %v3562 = vunpack.c.h.b16 %v3424
        %v3563 = vunpack.c.l.b16 %v3425
        %v3564 = vunpack.c.h.b16 %v3425
        %v3565 = vunpack.c.l.b16 %v3426
        %v3566 = vunpack.c.h.b16 %v3426
        %v3567 = vunpack.c.l.b16 %v3427
        %v3568 = vunpack.c.h.b16 %v3427
        %v3569 = vunpack.c.l.b16 %v3428
        %v3570 = vunpack.c.h.b16 %v3428
        %v3571 = vunpack.c.l.b16 %v3429
        %v3572 = vunpack.c.h.b16 %v3429
        %v3573 = vunpack.c.l.b16 %v3430
        %v3574 = vunpack.c.h.b16 %v3430
        %v3575 = vunpack.c.l.b16 %v3431
        %v3576 = vunpack.c.h.b16 %v3431
        %v3577 = vunpack.c.l.b16 %v3432
        %v3578 = vunpack.c.h.b16 %v3432
        %v3579 = vunpack.c.l.b16 %v3433
        %v3580 = vunpack.c.h.b16 %v3433
        %v3581 = vunpack.c.l.b16 %v3434
        %v3582 = vunpack.c.h.b16 %v3434
        %v3583 = vunpack.c.l.b16 %v3435
        %v3584 = vunpack.c.h.b16 %v3435
        %v3585 = vunpack.c.l.b16 %v3436
        %v3586 = vunpack.c.h.b16 %v3436
        %v3587 = vunpack.c.l.b16 %v3437
        %v3588 = vunpack.c.h.b16 %v3437
        %v3589 = vunpack.c.l.b16 %v3438
        %v3590 = vunpack.c.h.b16 %v3438
        %v3591 = vunpack.c.l.b16 %v3439
        %v3592 = vunpack.c.h.b16 %v3439
        %v3593 = vunpack.c.l.b16 %v3440
        %v3594 = vunpack.c.h.b16 %v3440
        %v3595 = vunpack.c.l.b16 %v3441
        %v3596 = vunpack.c.h.b16 %v3441
        %v3597 = vunpack.c.l.b16 %v3442
        %v3598 = vunpack.c.h.b16 %v3442
        %v3599 = vunpack.c.l.b16 %v3443
        %v3600 = vunpack.c.h.b16 %v3443
        %v3601 = vunpack.c.l.b16 %v3444
        %v3602 = vunpack.c.h.b16 %v3444
        %v3603 = vunpack.c.l.b16 %v3445
        %v3604 = vunpack.c.h.b16 %v3445
        %v3605 = vunpack.c.l.b16 %v3446
        %v3606 = vunpack.c.h.b16 %v3446
        %v3607 = vunpack.c.l.b16 %v3447
        %v3608 = vunpack.c.h.b16 %v3447
        %v3609 = vunpack.c.l.b16 %v3448
        %v3610 = vunpack.c.h.b16 %v3448
        %v3611 = vunpack.c.l.b16 %v3449
        %v3612 = vunpack.c.h.b16 %v3449
        %v3613 = vunpack.c.l.b16 %v3450
        %v3614 = vunpack.c.h.b16 %v3450
        %v3615 = vunpack.c.l.b16 %v3451
        %v3616 = vunpack.c.h.b16 %v3451
        %v3617 = vunpack.c.l.b16 %v3452
        %v3618 = vunpack.c.h.b16 %v3452
        %v3619 = vunpack.c.l.b16 %v3453
        %v3620 = vunpack.c.h.b16 %v3453
        %v3621 = vunpack.c.l.b16 %v3454
        %v3622 = vunpack.c.h.b16 %v3454
        %v3623 = vunpack.c.l.b16 %v3455
        %v3624 = vunpack.c.h.b16 %v3455
        %v3625 = vunpack.c.l.b16 %v3456
        %v3626 = vunpack.c.h.b16 %v3456
        %v3627 = vunpack.c.l.b16 %v3457
        %v3628 = vunpack.c.h.b16 %v3457
        %v3629 = vunpack.c.l.b16 %v3458
        %v3630 = vunpack.c.h.b16 %v3458
        %v3631 = vunpack.c.l.b16 %v3459
        %v3632 = vunpack.c.h.b16 %v3459
        %v3633 = vunpack.c.l.b16 %v3460
        %v3634 = vunpack.c.h.b16 %v3460
        %v3635 = vunpack.c.l.b16 %v3461
        %v3636 = vunpack.c.h.b16 %v3461
        %v3637 = vunpack.c.l.b16 %v3462
        %v3638 = vunpack.c.h.b16 %v3462
        %v3639 = vunpack.c.l.b16 %v3463
        %v3640 = vunpack.c.h.b16 %v3463
        %v3641 = vunpack.c.l.b16 %v3464
        %v3642 = vunpack.c.h.b16 %v3464
        %v3643 = vunpack.c.l.b16 %v3465
        %v3644 = vunpack.c.h.b16 %v3465
        %v3645 = vunpack.c.l.b16 %v3466
        %v3646 = vunpack.c.h.b16 %v3466
        %v3647 = vunpack.c.l.b16 %v3467
        %v3648 = vunpack.c.h.b16 %v3467
        %v3649 = vunpack.c.l.b16 %v3468
        %v3650 = vunpack.c.h.b16 %v3468
        %v3651 = vunpack.c.l.b16 %v3469
        %v3652 = vunpack.c.h.b16 %v3469
        %v3653 = vunpack.c.l.b16 %v3470
        %v3654 = vunpack.c.h.b16 %v3470
        %v3655 = vunpack.c.l.b16 %v3471
        %v3656 = vunpack.c.h.b16 %v3471
        %v3657 = vunpack.c.l.b16 %v3472
        %v3658 = vunpack.c.h.b16 %v3472
        %v3659 = vunpack.c.l.b16 %v3473
        %v3660 = vunpack.c.h.b16 %v3473
        %v3661 = vunpack.c.l.b16 %v3474
        %v3662 = vunpack.c.h.b16 %v3474
        %v3663 = vunpack.c.l.b16 %v3475
        %v3664 = vunpack.c.h.b16 %v3475
        %v3665 = vunpack.c.l.b16 %v3476
        %v3666 = vunpack.c.h.b16 %v3476
        %v3667 = vunpack.c.l.b16 %v3477
        %v3668 = vunpack.c.h.b16 %v3477
        %v3669 = vunpack.c.l.b16 %v3478
        %v3670 = vunpack.c.h.b16 %v3478
        %v3671 = vunpack.c.l.b16 %v3479
        %v3672 = vunpack.c.h.b16 %v3479
        %v3673 = vunpack.c.l.b16 %v3480
        %v3674 = vunpack.c.h.b16 %v3480
        %v3675 = vpack.c.b16 %v3555, %v3547
        %v3676 = vpack.c.b16 %v3556, %v3548
        %v3677 = vpack.c.b16 %v3557, %v3549
        %v3678 = vpack.c.b16 %v3558, %v3550
        %v3679 = vpack.c.b16 %v3559, %v3551
        %v3680 = vpack.c.b16 %v3560, %v3552
        %v3681 = vpack.c.b16 %v3561, %v3553
        %v3682 = vpack.c.b16 %v3562, %v3554
        %v3683 = vpack.c.b16 %v3571, %v3563
        %v3684 = vpack.c.b16 %v3572, %v3564
        %v3685 = vpack.c.b16 %v3573, %v3565
        %v3686 = vpack.c.b16 %v3574, %v3566
        %v3687 = vpack.c.b16 %v3575, %v3567
        %v3688 = vpack.c.b16 %v3576, %v3568
        %v3689 = vpack.c.b16 %v3577, %v3569
        %v3690 = vpack.c.b16 %v3578, %v3570
        %v3691 = vpack.c.b16 %v3587, %v3579
        %v3692 = vpack.c.b16 %v3588, %v3580
        %v3693 = vpack.c.b16 %v3589, %v3581
        %v3694 = vpack.c.b16 %v3590, %v3582
        %v3695 = vpack.c.b16 %v3591, %v3583
        %v3696 = vpack.c.b16 %v3592, %v3584
        %v3697 = vpack.c.b16 %v3593, %v3585
        %v3698 = vpack.c.b16 %v3594, %v3586
        %v3699 = vpack.c.b16 %v3603, %v3595
        %v3700 = vpack.c.b16 %v3604, %v3596
        %v3701 = vpack.c.b16 %v3605, %v3597
        %v3702 = vpack.c.b16 %v3606, %v3598
        %v3703 = vpack.c.b16 %v3607, %v3599
        %v3704 = vpack.c.b16 %v3608, %v3600
        %v3705 = vpack.c.b16 %v3609, %v3601
        %v3706 = vpack.c.b16 %v3610, %v3602
        %v3707 = vpack.c.b16 %v3619, %v3611
        %v3708 = vpack.c.b16 %v3620, %v3612
        %v3709 = vpack.c.b16 %v3621, %v3613
        %v3710 = vpack.c.b16 %v3622, %v3614
        %v3711 = vpack.c.b16 %v3623, %v3615
        %v3712 = vpack.c.b16 %v3624, %v3616
        %v3713 = vpack.c.b16 %v3625, %v3617
        %v3714 = vpack.c.b16 %v3626, %v3618
        %v3715 = vpack.c.b16 %v3635, %v3627
        %v3716 = vpack.c.b16 %v3636, %v3628
        %v3717 = vpack.c.b16 %v3637, %v3629
        %v3718 = vpack.c.b16 %v3638, %v3630
        %v3719 = vpack.c.b16 %v3639, %v3631
        %v3720 = vpack.c.b16 %v3640, %v3632
        %v3721 = vpack.c.b16 %v3641, %v3633
        %v3722 = vpack.c.b16 %v3642, %v3634
        %v3723 = vpack.c.b16 %v3651, %v3643
        %v3724 = vpack.c.b16 %v3652, %v3644
        %v3725 = vpack.c.b16 %v3653, %v3645
        %v3726 = vpack.c.b16 %v3654, %v3646
        %v3727 = vpack.c.b16 %v3655, %v3647
        %v3728 = vpack.c.b16 %v3656, %v3648
        %v3729 = vpack.c.b16 %v3657, %v3649
        %v3730 = vpack.c.b16 %v3658, %v3650
        %v3731 = vpack.c.b16 %v3667, %v3659
        %v3732 = vpack.c.b16 %v3668, %v3660
        %v3733 = vpack.c.b16 %v3669, %v3661
        %v3734 = vpack.c.b16 %v3670, %v3662
        %v3735 = vpack.c.b16 %v3671, %v3663
        %v3736 = vpack.c.b16 %v3672, %v3664
        %v3737 = vpack.c.b16 %v3673, %v3665
        %v3738 = vpack.c.b16 %v3674, %v3666
        %3803 = vmatprep.subr.bf16.mxu0 %v3676
        %3804 = vmatpush1.bf16.msra.mxu0 %v3675
        %3805 = vmatprep.subr.bf16.mxu0 %v3684
        %3806 = vmatpush1.bf16.msra.mxu0 %v3683
        %3807 = vmatprep.subr.bf16.mxu0 %v3692
        %3808 = vmatpush1.bf16.msra.mxu0 %v3691
        %3809 = vmatprep.subr.bf16.mxu0 %v3700
        %3810 = vmatpush1.bf16.msra.mxu0 %v3699
        %3811 = vmatprep.subr.bf16.mxu0 %v3708
        %3812 = vmatpush1.bf16.msra.mxu0 %v3707
        %3813 = vmatprep.subr.bf16.mxu0 %v3716
        %3814 = vmatpush1.bf16.msra.mxu0 %v3715
        %3815 = vmatprep.subr.bf16.mxu0 %v3724
        %3816 = vmatpush1.bf16.msra.mxu0 %v3723
        %3817 = vmatprep.subr.bf16.mxu0 %v3732
        %3818 = vmatpush1.bf16.msra.mxu0 %v3731
        %3819 = vmatprep.subr.bf16.mxu0 0
        %3820 = vmatpush1.bf16.msra.mxu0 0
        %3821 = vmatprep.subr.bf16.mxu0 0
        %3822 = vmatpush1.bf16.msra.mxu0 0
        %3823 = vmatprep.subr.bf16.mxu0 0
        %3824 = vmatpush1.bf16.msra.mxu0 0
        %3825 = vmatprep.subr.bf16.mxu0 0
        %3826 = vmatpush1.bf16.msra.mxu0 0
        %3827 = vmatprep.subr.bf16.mxu0 0
        %3828 = vmatpush1.bf16.msra.mxu0 0
        %3829 = vmatprep.subr.bf16.mxu0 0
        %3830 = vmatpush1.bf16.msra.mxu0 0
        %3831 = vmatprep.subr.bf16.mxu0 0
        %3832 = vmatpush1.bf16.msra.mxu0 0
        %3833 = vmatprep.subr.bf16.mxu0 0
        %3834 = vmatpush1.bf16.msra.mxu0 0
        %3835 = vmatprep.mubr.bf16.mxu0 0
        %3836 = vmatmul.mubr.bf16.gmra.mrb[0].mxu0 %v3481
        %v3837 = vpop.f32.mrb[0].mxu0
        %v3838 = vadd.f32 0.0, %v3837
        %v3839 = vpop.f32.mrb[0].mxu0
        %v3840 = vadd.f32 0.0, %v3839
        %v3841 = vpop.f32.mrb[0].mxu0
        %v3842 = vpop.f32.mrb[0].mxu0
        %3843 = vdwg.mxu0
        %3844 = vmatprep.subr.bf16.mxu0 %v3678
        %3845 = vmatpush1.bf16.msra.mxu0 %v3677
        %3846 = vmatprep.subr.bf16.mxu0 %v3686
        %3847 = vmatpush1.bf16.msra.mxu0 %v3685
        %3848 = vmatprep.subr.bf16.mxu0 %v3694
        %3849 = vmatpush1.bf16.msra.mxu0 %v3693
        %3850 = vmatprep.subr.bf16.mxu0 %v3702
        %3851 = vmatpush1.bf16.msra.mxu0 %v3701
        %3852 = vmatprep.subr.bf16.mxu0 %v3710
        %3853 = vmatpush1.bf16.msra.mxu0 %v3709
        %3854 = vmatprep.subr.bf16.mxu0 %v3718
        %3855 = vmatpush1.bf16.msra.mxu0 %v3717
        %3856 = vmatprep.subr.bf16.mxu0 %v3726
        %3857 = vmatpush1.bf16.msra.mxu0 %v3725
        %3858 = vmatprep.subr.bf16.mxu0 %v3734
        %3859 = vmatpush1.bf16.msra.mxu0 %v3733
        %3860 = vmatprep.subr.bf16.mxu0 0
        %3861 = vmatpush1.bf16.msra.mxu0 0
        %3862 = vmatprep.subr.bf16.mxu0 0
        %3863 = vmatpush1.bf16.msra.mxu0 0
        %3864 = vmatprep.subr.bf16.mxu0 0
        %3865 = vmatpush1.bf16.msra.mxu0 0
        %3866 = vmatprep.subr.bf16.mxu0 0
        %3867 = vmatpush1.bf16.msra.mxu0 0
        %3868 = vmatprep.subr.bf16.mxu0 0
        %3869 = vmatpush1.bf16.msra.mxu0 0
        %3870 = vmatprep.subr.bf16.mxu0 0
        %3871 = vmatpush1.bf16.msra.mxu0 0
        %3872 = vmatprep.subr.bf16.mxu0 0
        %3873 = vmatpush1.bf16.msra.mxu0 0
        %3874 = vmatprep.subr.bf16.mxu0 0
        %3875 = vmatpush1.bf16.msra.mxu0 0
        %3876 = vmatprep.mubr.bf16.mxu0 0
        %3877 = vmatmul.mubr.bf16.gmra.mrb[0].mxu0 %v3481
        %v3878 = vpop.f32.mrb[0].mxu0
        %v3879 = vadd.f32 0.0, %v3878
        %v3880 = vpop.f32.mrb[0].mxu0
        %v3881 = vadd.f32 0.0, %v3880
        %v3882 = vpop.f32.mrb[0].mxu0
        %v3883 = vpop.f32.mrb[0].mxu0
        %3884 = vdwg.mxu0
        %3885 = vmatprep.subr.bf16.mxu0 %v3680
        %3886 = vmatpush1.bf16.msra.mxu0 %v3679
        %3887 = vmatprep.subr.bf16.mxu0 %v3688
        %3888 = vmatpush1.bf16.msra.mxu0 %v3687
        %3889 = vmatprep.subr.bf16.mxu0 %v3696
        %3890 = vmatpush1.bf16.msra.mxu0 %v3695
        %3891 = vmatprep.subr.bf16.mxu0 %v3704
        %3892 = vmatpush1.bf16.msra.mxu0 %v3703
        %3893 = vmatprep.subr.bf16.mxu0 %v3712
        %3894 = vmatpush1.bf16.msra.mxu0 %v3711
        %3895 = vmatprep.subr.bf16.mxu0 %v3720
        %3896 = vmatpush1.bf16.msra.mxu0 %v3719
        %3897 = vmatprep.subr.bf16.mxu0 %v3728
        %3898 = vmatpush1.bf16.msra.mxu0 %v3727
        %3899 = vmatprep.subr.bf16.mxu0 %v3736
        %3900 = vmatpush1.bf16.msra.mxu0 %v3735
        %3901 = vmatprep.subr.bf16.mxu0 0
        %3902 = vmatpush1.bf16.msra.mxu0 0
        %3903 = vmatprep.subr.bf16.mxu0 0
        %3904 = vmatpush1.bf16.msra.mxu0 0
        %3905 = vmatprep.subr.bf16.mxu0 0
        %3906 = vmatpush1.bf16.msra.mxu0 0
        %3907 = vmatprep.subr.bf16.mxu0 0
        %3908 = vmatpush1.bf16.msra.mxu0 0
        %3909 = vmatprep.subr.bf16.mxu0 0
        %3910 = vmatpush1.bf16.msra.mxu0 0
        %3911 = vmatprep.subr.bf16.mxu0 0
        %3912 = vmatpush1.bf16.msra.mxu0 0
        %3913 = vmatprep.subr.bf16.mxu0 0
        %3914 = vmatpush1.bf16.msra.mxu0 0
        %3915 = vmatprep.subr.bf16.mxu0 0
        %3916 = vmatpush1.bf16.msra.mxu0 0
        %3917 = vmatprep.mubr.bf16.mxu0 0
        %3918 = vmatmul.mubr.bf16.gmra.mrb[0].mxu0 %v3481
        %v3919 = vpop.f32.mrb[0].mxu0
        %v3920 = vadd.f32 0.0, %v3919
        %v3921 = vpop.f32.mrb[0].mxu0
        %v3922 = vadd.f32 0.0, %v3921
        %v3923 = vpop.f32.mrb[0].mxu0
        %v3924 = vpop.f32.mrb[0].mxu0
        %3925 = vdwg.mxu0
        %3926 = vmatprep.subr.bf16.mxu0 %v3682
        %3927 = vmatpush1.bf16.msra.mxu0 %v3681
        %3928 = vmatprep.subr.bf16.mxu0 %v3690
        %3929 = vmatpush1.bf16.msra.mxu0 %v3689
        %3930 = vmatprep.subr.bf16.mxu0 %v3698
        %3931 = vmatpush1.bf16.msra.mxu0 %v3697
        %3932 = vmatprep.subr.bf16.mxu0 %v3706
        %3933 = vmatpush1.bf16.msra.mxu0 %v3705
        %3934 = vmatprep.subr.bf16.mxu0 %v3714
        %3935 = vmatpush1.bf16.msra.mxu0 %v3713
        %3936 = vmatprep.subr.bf16.mxu0 %v3722
        %3937 = vmatpush1.bf16.msra.mxu0 %v3721
        %3938 = vmatprep.subr.bf16.mxu0 %v3730
        %3939 = vmatpush1.bf16.msra.mxu0 %v3729
        %3940 = vmatprep.subr.bf16.mxu0 %v3738
        %3941 = vmatpush1.bf16.msra.mxu0 %v3737
        %3942 = vmatprep.subr.bf16.mxu0 0
        %3943 = vmatpush1.bf16.msra.mxu0 0
        %3944 = vmatprep.subr.bf16.mxu0 0
        %3945 = vmatpush1.bf16.msra.mxu0 0
        %3946 = vmatprep.subr.bf16.mxu0 0
        %3947 = vmatpush1.bf16.msra.mxu0 0
        %3948 = vmatprep.subr.bf16.mxu0 0
        %3949 = vmatpush1.bf16.msra.mxu0 0
        %3950 = vmatprep.subr.bf16.mxu0 0
        %3951 = vmatpush1.bf16.msra.mxu0 0
        %3952 = vmatprep.subr.bf16.mxu0 0
        %3953 = vmatpush1.bf16.msra.mxu0 0
        %3954 = vmatprep.subr.bf16.mxu0 0
        %3955 = vmatpush1.bf16.msra.mxu0 0
        %3956 = vmatprep.subr.bf16.mxu0 0
        %3957 = vmatpush1.bf16.msra.mxu0 0
        %3958 = vmatprep.mubr.bf16.mxu0 0
        %3959 = vmatmul.mubr.bf16.gmra.mrb[0].mxu0 %v3481
        %v3960 = vpop.f32.mrb[0].mxu0
        %v3961 = vadd.f32 0.0, %v3960
        %v3962 = vpop.f32.mrb[0].mxu0
        %v3963 = vadd.f32 0.0, %v3962
        %v3964 = vpop.f32.mrb[0].mxu0
        %v3965 = vpop.f32.mrb[0].mxu0
        %3966 = vdwg.mxu0
        %v3967 = vadd.f32 %v3409, %v3838
        %v3968 = vadd.f32 %v3410, %v3840
        %v3969 = vadd.f32 %v3411, %v3879
        %v3970 = vadd.f32 %v3412, %v3881
        %v3971 = vadd.f32 %v3413, %v3920
        %v3972 = vadd.f32 %v3414, %v3922
        %v3973 = vadd.f32 %v3415, %v3961
        %v3974 = vadd.f32 %v3416, %v3963
        %v3975 = vld [vmem:[#allocation8 + $0xc00] sm:$0xff]
        %v3976 = vld [vmem:[#allocation8 + $0xc08] sm:$0xff]
        %v3977 = vld [vmem:[#allocation8 + $0xc10] sm:$0xff]
        %v3978 = vld [vmem:[#allocation8 + $0xc18] sm:$0xff]
        %v3979 = vld [vmem:[#allocation8 + $0xc20] sm:$0xff]
        %v3980 = vld [vmem:[#allocation8 + $0xc28] sm:$0xff]
        %v3981 = vld [vmem:[#allocation8 + $0xc30] sm:$0xff]
        %v3982 = vld [vmem:[#allocation8 + $0xc38] sm:$0xff]
        %v3983 = vld [vmem:[#allocation8 + $0xc40] sm:$0xff]
        %v3984 = vld [vmem:[#allocation8 + $0xc48] sm:$0xff]
        %v3985 = vld [vmem:[#allocation8 + $0xc50] sm:$0xff]
        %v3986 = vld [vmem:[#allocation8 + $0xc58] sm:$0xff]
        %v3987 = vld [vmem:[#allocation8 + $0xc60] sm:$0xff]
        %v3988 = vld [vmem:[#allocation8 + $0xc68] sm:$0xff]
        %v3989 = vld [vmem:[#allocation8 + $0xc70] sm:$0xff]
        %v3990 = vld [vmem:[#allocation8 + $0xc78] sm:$0xff]
        %v3991 = vld [vmem:[#allocation8 + $0xc80] sm:$0xff]
        %v3992 = vld [vmem:[#allocation8 + $0xc88] sm:$0xff]
        %v3993 = vld [vmem:[#allocation8 + $0xc90] sm:$0xff]
        %v3994 = vld [vmem:[#allocation8 + $0xc98] sm:$0xff]
        %v3995 = vld [vmem:[#allocation8 + $0xca0] sm:$0xff]
        %v3996 = vld [vmem:[#allocation8 + $0xca8] sm:$0xff]
        %v3997 = vld [vmem:[#allocation8 + $0xcb0] sm:$0xff]
        %v3998 = vld [vmem:[#allocation8 + $0xcb8] sm:$0xff]
        %v3999 = vld [vmem:[#allocation8 + $0xcc0] sm:$0xff]
        %v4000 = vld [vmem:[#allocation8 + $0xcc8] sm:$0xff]
        %v4001 = vld [vmem:[#allocation8 + $0xcd0] sm:$0xff]
        %v4002 = vld [vmem:[#allocation8 + $0xcd8] sm:$0xff]
        %v4003 = vld [vmem:[#allocation8 + $0xce0] sm:$0xff]
        %v4004 = vld [vmem:[#allocation8 + $0xce8] sm:$0xff]
        %v4005 = vld [vmem:[#allocation8 + $0xcf0] sm:$0xff]
        %v4006 = vld [vmem:[#allocation8 + $0xcf8] sm:$0xff]
        %v4007 = vld [vmem:[#allocation8 + $0xd00] sm:$0xff]
        %v4008 = vld [vmem:[#allocation8 + $0xd08] sm:$0xff]
        %v4009 = vld [vmem:[#allocation8 + $0xd10] sm:$0xff]
        %v4010 = vld [vmem:[#allocation8 + $0xd18] sm:$0xff]
        %v4011 = vld [vmem:[#allocation8 + $0xd20] sm:$0xff]
        %v4012 = vld [vmem:[#allocation8 + $0xd28] sm:$0xff]
        %v4013 = vld [vmem:[#allocation8 + $0xd30] sm:$0xff]
        %v4014 = vld [vmem:[#allocation8 + $0xd38] sm:$0xff]
        %v4015 = vld [vmem:[#allocation8 + $0xd40] sm:$0xff]
        %v4016 = vld [vmem:[#allocation8 + $0xd48] sm:$0xff]
        %v4017 = vld [vmem:[#allocation8 + $0xd50] sm:$0xff]
        %v4018 = vld [vmem:[#allocation8 + $0xd58] sm:$0xff]
        %v4019 = vld [vmem:[#allocation8 + $0xd60] sm:$0xff]
        %v4020 = vld [vmem:[#allocation8 + $0xd68] sm:$0xff]
        %v4021 = vld [vmem:[#allocation8 + $0xd70] sm:$0xff]
        %v4022 = vld [vmem:[#allocation8 + $0xd78] sm:$0xff]
        %v4023 = vld [vmem:[#allocation8 + $0xd80] sm:$0xff]
        %v4024 = vld [vmem:[#allocation8 + $0xd88] sm:$0xff]
        %v4025 = vld [vmem:[#allocation8 + $0xd90] sm:$0xff]
        %v4026 = vld [vmem:[#allocation8 + $0xd98] sm:$0xff]
        %v4027 = vld [vmem:[#allocation8 + $0xda0] sm:$0xff]
        %v4028 = vld [vmem:[#allocation8 + $0xda8] sm:$0xff]
        %v4029 = vld [vmem:[#allocation8 + $0xdb0] sm:$0xff]
        %v4030 = vld [vmem:[#allocation8 + $0xdb8] sm:$0xff]
        %v4031 = vld [vmem:[#allocation8 + $0xdc0] sm:$0xff]
        %v4032 = vld [vmem:[#allocation8 + $0xdc8] sm:$0xff]
        %v4033 = vld [vmem:[#allocation8 + $0xdd0] sm:$0xff]
        %v4034 = vld [vmem:[#allocation8 + $0xdd8] sm:$0xff]
        %v4035 = vld [vmem:[#allocation8 + $0xde0] sm:$0xff]
        %v4036 = vld [vmem:[#allocation8 + $0xde8] sm:$0xff]
        %v4037 = vld [vmem:[#allocation8 + $0xdf0] sm:$0xff]
        %v4038 = vld [vmem:[#allocation8 + $0xdf8] sm:$0xff]
        %v4039 = vrot.slane %v641, 3
        %v4105 = vunpack.c.l.b16 %v3975
        %v4106 = vunpack.c.h.b16 %v3975
        %v4107 = vunpack.c.l.b16 %v3976
        %v4108 = vunpack.c.h.b16 %v3976
        %v4109 = vunpack.c.l.b16 %v3977
        %v4110 = vunpack.c.h.b16 %v3977
        %v4111 = vunpack.c.l.b16 %v3978
        %v4112 = vunpack.c.h.b16 %v3978
        %v4113 = vunpack.c.l.b16 %v3979
        %v4114 = vunpack.c.h.b16 %v3979
        %v4115 = vunpack.c.l.b16 %v3980
        %v4116 = vunpack.c.h.b16 %v3980
        %v4117 = vunpack.c.l.b16 %v3981
        %v4118 = vunpack.c.h.b16 %v3981
        %v4119 = vunpack.c.l.b16 %v3982
        %v4120 = vunpack.c.h.b16 %v3982
        %v4121 = vunpack.c.l.b16 %v3983
        %v4122 = vunpack.c.h.b16 %v3983
        %v4123 = vunpack.c.l.b16 %v3984
        %v4124 = vunpack.c.h.b16 %v3984
        %v4125 = vunpack.c.l.b16 %v3985
        %v4126 = vunpack.c.h.b16 %v3985
        %v4127 = vunpack.c.l.b16 %v3986
        %v4128 = vunpack.c.h.b16 %v3986
        %v4129 = vunpack.c.l.b16 %v3987
        %v4130 = vunpack.c.h.b16 %v3987
        %v4131 = vunpack.c.l.b16 %v3988
        %v4132 = vunpack.c.h.b16 %v3988
        %v4133 = vunpack.c.l.b16 %v3989
        %v4134 = vunpack.c.h.b16 %v3989
        %v4135 = vunpack.c.l.b16 %v3990
        %v4136 = vunpack.c.h.b16 %v3990
        %v4137 = vunpack.c.l.b16 %v3991
        %v4138 = vunpack.c.h.b16 %v3991
        %v4139 = vunpack.c.l.b16 %v3992
        %v4140 = vunpack.c.h.b16 %v3992
        %v4141 = vunpack.c.l.b16 %v3993
        %v4142 = vunpack.c.h.b16 %v3993
        %v4143 = vunpack.c.l.b16 %v3994
        %v4144 = vunpack.c.h.b16 %v3994
        %v4145 = vunpack.c.l.b16 %v3995
        %v4146 = vunpack.c.h.b16 %v3995
        %v4147 = vunpack.c.l.b16 %v3996
        %v4148 = vunpack.c.h.b16 %v3996
        %v4149 = vunpack.c.l.b16 %v3997
        %v4150 = vunpack.c.h.b16 %v3997
        %v4151 = vunpack.c.l.b16 %v3998
        %v4152 = vunpack.c.h.b16 %v3998
        %v4153 = vunpack.c.l.b16 %v3999
        %v4154 = vunpack.c.h.b16 %v3999
        %v4155 = vunpack.c.l.b16 %v4000
        %v4156 = vunpack.c.h.b16 %v4000
        %v4157 = vunpack.c.l.b16 %v4001
        %v4158 = vunpack.c.h.b16 %v4001
        %v4159 = vunpack.c.l.b16 %v4002
        %v4160 = vunpack.c.h.b16 %v4002
        %v4161 = vunpack.c.l.b16 %v4003
        %v4162 = vunpack.c.h.b16 %v4003
        %v4163 = vunpack.c.l.b16 %v4004
        %v4164 = vunpack.c.h.b16 %v4004
        %v4165 = vunpack.c.l.b16 %v4005
        %v4166 = vunpack.c.h.b16 %v4005
        %v4167 = vunpack.c.l.b16 %v4006
        %v4168 = vunpack.c.h.b16 %v4006
        %v4169 = vunpack.c.l.b16 %v4007
        %v4170 = vunpack.c.h.b16 %v4007
        %v4171 = vunpack.c.l.b16 %v4008
        %v4172 = vunpack.c.h.b16 %v4008
        %v4173 = vunpack.c.l.b16 %v4009
        %v4174 = vunpack.c.h.b16 %v4009
        %v4175 = vunpack.c.l.b16 %v4010
        %v4176 = vunpack.c.h.b16 %v4010
        %v4177 = vunpack.c.l.b16 %v4011
        %v4178 = vunpack.c.h.b16 %v4011
        %v4179 = vunpack.c.l.b16 %v4012
        %v4180 = vunpack.c.h.b16 %v4012
        %v4181 = vunpack.c.l.b16 %v4013
        %v4182 = vunpack.c.h.b16 %v4013
        %v4183 = vunpack.c.l.b16 %v4014
        %v4184 = vunpack.c.h.b16 %v4014
        %v4185 = vunpack.c.l.b16 %v4015
        %v4186 = vunpack.c.h.b16 %v4015
        %v4187 = vunpack.c.l.b16 %v4016
        %v4188 = vunpack.c.h.b16 %v4016
        %v4189 = vunpack.c.l.b16 %v4017
        %v4190 = vunpack.c.h.b16 %v4017
        %v4191 = vunpack.c.l.b16 %v4018
        %v4192 = vunpack.c.h.b16 %v4018
        %v4193 = vunpack.c.l.b16 %v4019
        %v4194 = vunpack.c.h.b16 %v4019
        %v4195 = vunpack.c.l.b16 %v4020
        %v4196 = vunpack.c.h.b16 %v4020
        %v4197 = vunpack.c.l.b16 %v4021
        %v4198 = vunpack.c.h.b16 %v4021
        %v4199 = vunpack.c.l.b16 %v4022
        %v4200 = vunpack.c.h.b16 %v4022
        %v4201 = vunpack.c.l.b16 %v4023
        %v4202 = vunpack.c.h.b16 %v4023
        %v4203 = vunpack.c.l.b16 %v4024
        %v4204 = vunpack.c.h.b16 %v4024
        %v4205 = vunpack.c.l.b16 %v4025
        %v4206 = vunpack.c.h.b16 %v4025
        %v4207 = vunpack.c.l.b16 %v4026
        %v4208 = vunpack.c.h.b16 %v4026
        %v4209 = vunpack.c.l.b16 %v4027
        %v4210 = vunpack.c.h.b16 %v4027
        %v4211 = vunpack.c.l.b16 %v4028
        %v4212 = vunpack.c.h.b16 %v4028
        %v4213 = vunpack.c.l.b16 %v4029
        %v4214 = vunpack.c.h.b16 %v4029
        %v4215 = vunpack.c.l.b16 %v4030
        %v4216 = vunpack.c.h.b16 %v4030
        %v4217 = vunpack.c.l.b16 %v4031
        %v4218 = vunpack.c.h.b16 %v4031
        %v4219 = vunpack.c.l.b16 %v4032
        %v4220 = vunpack.c.h.b16 %v4032
        %v4221 = vunpack.c.l.b16 %v4033
        %v4222 = vunpack.c.h.b16 %v4033
        %v4223 = vunpack.c.l.b16 %v4034
        %v4224 = vunpack.c.h.b16 %v4034
        %v4225 = vunpack.c.l.b16 %v4035
        %v4226 = vunpack.c.h.b16 %v4035
        %v4227 = vunpack.c.l.b16 %v4036
        %v4228 = vunpack.c.h.b16 %v4036
        %v4229 = vunpack.c.l.b16 %v4037
        %v4230 = vunpack.c.h.b16 %v4037
        %v4231 = vunpack.c.l.b16 %v4038
        %v4232 = vunpack.c.h.b16 %v4038
        %v4233 = vpack.c.b16 %v4113, %v4105
        %v4234 = vpack.c.b16 %v4114, %v4106
        %v4235 = vpack.c.b16 %v4115, %v4107
        %v4236 = vpack.c.b16 %v4116, %v4108
        %v4237 = vpack.c.b16 %v4117, %v4109
        %v4238 = vpack.c.b16 %v4118, %v4110
        %v4239 = vpack.c.b16 %v4119, %v4111
        %v4240 = vpack.c.b16 %v4120, %v4112
        %v4241 = vpack.c.b16 %v4129, %v4121
        %v4242 = vpack.c.b16 %v4130, %v4122
        %v4243 = vpack.c.b16 %v4131, %v4123
        %v4244 = vpack.c.b16 %v4132, %v4124
        %v4245 = vpack.c.b16 %v4133, %v4125
        %v4246 = vpack.c.b16 %v4134, %v4126
        %v4247 = vpack.c.b16 %v4135, %v4127
        %v4248 = vpack.c.b16 %v4136, %v4128
        %v4249 = vpack.c.b16 %v4145, %v4137
        %v4250 = vpack.c.b16 %v4146, %v4138
        %v4251 = vpack.c.b16 %v4147, %v4139
        %v4252 = vpack.c.b16 %v4148, %v4140
        %v4253 = vpack.c.b16 %v4149, %v4141
        %v4254 = vpack.c.b16 %v4150, %v4142
        %v4255 = vpack.c.b16 %v4151, %v4143
        %v4256 = vpack.c.b16 %v4152, %v4144
        %v4257 = vpack.c.b16 %v4161, %v4153
        %v4258 = vpack.c.b16 %v4162, %v4154
        %v4259 = vpack.c.b16 %v4163, %v4155
        %v4260 = vpack.c.b16 %v4164, %v4156
        %v4261 = vpack.c.b16 %v4165, %v4157
        %v4262 = vpack.c.b16 %v4166, %v4158
        %v4263 = vpack.c.b16 %v4167, %v4159
        %v4264 = vpack.c.b16 %v4168, %v4160
        %v4265 = vpack.c.b16 %v4177, %v4169
        %v4266 = vpack.c.b16 %v4178, %v4170
        %v4267 = vpack.c.b16 %v4179, %v4171
        %v4268 = vpack.c.b16 %v4180, %v4172
        %v4269 = vpack.c.b16 %v4181, %v4173
        %v4270 = vpack.c.b16 %v4182, %v4174
        %v4271 = vpack.c.b16 %v4183, %v4175
        %v4272 = vpack.c.b16 %v4184, %v4176
        %v4273 = vpack.c.b16 %v4193, %v4185
        %v4274 = vpack.c.b16 %v4194, %v4186
        %v4275 = vpack.c.b16 %v4195, %v4187
        %v4276 = vpack.c.b16 %v4196, %v4188
        %v4277 = vpack.c.b16 %v4197, %v4189
        %v4278 = vpack.c.b16 %v4198, %v4190
        %v4279 = vpack.c.b16 %v4199, %v4191
        %v4280 = vpack.c.b16 %v4200, %v4192
        %v4281 = vpack.c.b16 %v4209, %v4201
        %v4282 = vpack.c.b16 %v4210, %v4202
        %v4283 = vpack.c.b16 %v4211, %v4203
        %v4284 = vpack.c.b16 %v4212, %v4204
        %v4285 = vpack.c.b16 %v4213, %v4205
        %v4286 = vpack.c.b16 %v4214, %v4206
        %v4287 = vpack.c.b16 %v4215, %v4207
        %v4288 = vpack.c.b16 %v4216, %v4208
        %v4289 = vpack.c.b16 %v4225, %v4217
        %v4290 = vpack.c.b16 %v4226, %v4218
        %v4291 = vpack.c.b16 %v4227, %v4219
        %v4292 = vpack.c.b16 %v4228, %v4220
        %v4293 = vpack.c.b16 %v4229, %v4221
        %v4294 = vpack.c.b16 %v4230, %v4222
        %v4295 = vpack.c.b16 %v4231, %v4223
        %v4296 = vpack.c.b16 %v4232, %v4224
        %4361 = vmatprep.subr.bf16.mxu0 %v4234
        %4362 = vmatpush1.bf16.msra.mxu0 %v4233
        %4363 = vmatprep.subr.bf16.mxu0 %v4242
        %4364 = vmatpush1.bf16.msra.mxu0 %v4241
        %4365 = vmatprep.subr.bf16.mxu0 %v4250
        %4366 = vmatpush1.bf16.msra.mxu0 %v4249
        %4367 = vmatprep.subr.bf16.mxu0 %v4258
        %4368 = vmatpush1.bf16.msra.mxu0 %v4257
        %4369 = vmatprep.subr.bf16.mxu0 %v4266
        %4370 = vmatpush1.bf16.msra.mxu0 %v4265
        %4371 = vmatprep.subr.bf16.mxu0 %v4274
        %4372 = vmatpush1.bf16.msra.mxu0 %v4273
        %4373 = vmatprep.subr.bf16.mxu0 %v4282
        %4374 = vmatpush1.bf16.msra.mxu0 %v4281
        %4375 = vmatprep.subr.bf16.mxu0 %v4290
        %4376 = vmatpush1.bf16.msra.mxu0 %v4289
        %4377 = vmatprep.subr.bf16.mxu0 0
        %4378 = vmatpush1.bf16.msra.mxu0 0
        %4379 = vmatprep.subr.bf16.mxu0 0
        %4380 = vmatpush1.bf16.msra.mxu0 0
        %4381 = vmatprep.subr.bf16.mxu0 0
        %4382 = vmatpush1.bf16.msra.mxu0 0
        %4383 = vmatprep.subr.bf16.mxu0 0
        %4384 = vmatpush1.bf16.msra.mxu0 0
        %4385 = vmatprep.subr.bf16.mxu0 0
        %4386 = vmatpush1.bf16.msra.mxu0 0
        %4387 = vmatprep.subr.bf16.mxu0 0
        %4388 = vmatpush1.bf16.msra.mxu0 0
        %4389 = vmatprep.subr.bf16.mxu0 0
        %4390 = vmatpush1.bf16.msra.mxu0 0
        %4391 = vmatprep.subr.bf16.mxu0 0
        %4392 = vmatpush1.bf16.msra.mxu0 0
        %4393 = vmatprep.mubr.bf16.mxu0 0
        %4394 = vmatmul.mubr.bf16.gmra.mrb[0].mxu0 %v4039
        %v4395 = vpop.f32.mrb[0].mxu0
        %v4396 = vadd.f32 0.0, %v4395
        %v4397 = vpop.f32.mrb[0].mxu0
        %v4398 = vadd.f32 0.0, %v4397
        %v4399 = vpop.f32.mrb[0].mxu0
        %v4400 = vpop.f32.mrb[0].mxu0
        %4401 = vdwg.mxu0
        %4402 = vmatprep.subr.bf16.mxu0 %v4236
        %4403 = vmatpush1.bf16.msra.mxu0 %v4235
        %4404 = vmatprep.subr.bf16.mxu0 %v4244
        %4405 = vmatpush1.bf16.msra.mxu0 %v4243
        %4406 = vmatprep.subr.bf16.mxu0 %v4252
        %4407 = vmatpush1.bf16.msra.mxu0 %v4251
        %4408 = vmatprep.subr.bf16.mxu0 %v4260
        %4409 = vmatpush1.bf16.msra.mxu0 %v4259
        %4410 = vmatprep.subr.bf16.mxu0 %v4268
        %4411 = vmatpush1.bf16.msra.mxu0 %v4267
        %4412 = vmatprep.subr.bf16.mxu0 %v4276
        %4413 = vmatpush1.bf16.msra.mxu0 %v4275
        %4414 = vmatprep.subr.bf16.mxu0 %v4284
        %4415 = vmatpush1.bf16.msra.mxu0 %v4283
        %4416 = vmatprep.subr.bf16.mxu0 %v4292
        %4417 = vmatpush1.bf16.msra.mxu0 %v4291
        %4418 = vmatprep.subr.bf16.mxu0 0
        %4419 = vmatpush1.bf16.msra.mxu0 0
        %4420 = vmatprep.subr.bf16.mxu0 0
        %4421 = vmatpush1.bf16.msra.mxu0 0
        %4422 = vmatprep.subr.bf16.mxu0 0
        %4423 = vmatpush1.bf16.msra.mxu0 0
        %4424 = vmatprep.subr.bf16.mxu0 0
        %4425 = vmatpush1.bf16.msra.mxu0 0
        %4426 = vmatprep.subr.bf16.mxu0 0
        %4427 = vmatpush1.bf16.msra.mxu0 0
        %4428 = vmatprep.subr.bf16.mxu0 0
        %4429 = vmatpush1.bf16.msra.mxu0 0
        %4430 = vmatprep.subr.bf16.mxu0 0
        %4431 = vmatpush1.bf16.msra.mxu0 0
        %4432 = vmatprep.subr.bf16.mxu0 0
        %4433 = vmatpush1.bf16.msra.mxu0 0
        %4434 = vmatprep.mubr.bf16.mxu0 0
        %4435 = vmatmul.mubr.bf16.gmra.mrb[0].mxu0 %v4039
        %v4436 = vpop.f32.mrb[0].mxu0
        %v4437 = vadd.f32 0.0, %v4436
        %v4438 = vpop.f32.mrb[0].mxu0
        %v4439 = vadd.f32 0.0, %v4438
        %v4440 = vpop.f32.mrb[0].mxu0
        %v4441 = vpop.f32.mrb[0].mxu0
        %4442 = vdwg.mxu0
        %4443 = vmatprep.subr.bf16.mxu0 %v4238
        %4444 = vmatpush1.bf16.msra.mxu0 %v4237
        %4445 = vmatprep.subr.bf16.mxu0 %v4246
        %4446 = vmatpush1.bf16.msra.mxu0 %v4245
        %4447 = vmatprep.subr.bf16.mxu0 %v4254
        %4448 = vmatpush1.bf16.msra.mxu0 %v4253
        %4449 = vmatprep.subr.bf16.mxu0 %v4262
        %4450 = vmatpush1.bf16.msra.mxu0 %v4261
        %4451 = vmatprep.subr.bf16.mxu0 %v4270
        %4452 = vmatpush1.bf16.msra.mxu0 %v4269
        %4453 = vmatprep.subr.bf16.mxu0 %v4278
        %4454 = vmatpush1.bf16.msra.mxu0 %v4277
        %4455 = vmatprep.subr.bf16.mxu0 %v4286
        %4456 = vmatpush1.bf16.msra.mxu0 %v4285
        %4457 = vmatprep.subr.bf16.mxu0 %v4294
        %4458 = vmatpush1.bf16.msra.mxu0 %v4293
        %4459 = vmatprep.subr.bf16.mxu0 0
        %4460 = vmatpush1.bf16.msra.mxu0 0
        %4461 = vmatprep.subr.bf16.mxu0 0
        %4462 = vmatpush1.bf16.msra.mxu0 0
        %4463 = vmatprep.subr.bf16.mxu0 0
        %4464 = vmatpush1.bf16.msra.mxu0 0
        %4465 = vmatprep.subr.bf16.mxu0 0
        %4466 = vmatpush1.bf16.msra.mxu0 0
        %4467 = vmatprep.subr.bf16.mxu0 0
        %4468 = vmatpush1.bf16.msra.mxu0 0
        %4469 = vmatprep.subr.bf16.mxu0 0
        %4470 = vmatpush1.bf16.msra.mxu0 0
        %4471 = vmatprep.subr.bf16.mxu0 0
        %4472 = vmatpush1.bf16.msra.mxu0 0
        %4473 = vmatprep.subr.bf16.mxu0 0
        %4474 = vmatpush1.bf16.msra.mxu0 0
        %4475 = vmatprep.mubr.bf16.mxu0 0
        %4476 = vmatmul.mubr.bf16.gmra.mrb[0].mxu0 %v4039
        %v4477 = vpop.f32.mrb[0].mxu0
        %v4478 = vadd.f32 0.0, %v4477
        %v4479 = vpop.f32.mrb[0].mxu0
        %v4480 = vadd.f32 0.0, %v4479
        %v4481 = vpop.f32.mrb[0].mxu0
        %v4482 = vpop.f32.mrb[0].mxu0
        %4483 = vdwg.mxu0
        %4484 = vmatprep.subr.bf16.mxu0 %v4240
        %4485 = vmatpush1.bf16.msra.mxu0 %v4239
        %4486 = vmatprep.subr.bf16.mxu0 %v4248
        %4487 = vmatpush1.bf16.msra.mxu0 %v4247
        %4488 = vmatprep.subr.bf16.mxu0 %v4256
        %4489 = vmatpush1.bf16.msra.mxu0 %v4255
        %4490 = vmatprep.subr.bf16.mxu0 %v4264
        %4491 = vmatpush1.bf16.msra.mxu0 %v4263
        %4492 = vmatprep.subr.bf16.mxu0 %v4272
        %4493 = vmatpush1.bf16.msra.mxu0 %v4271
        %4494 = vmatprep.subr.bf16.mxu0 %v4280
        %4495 = vmatpush1.bf16.msra.mxu0 %v4279
        %4496 = vmatprep.subr.bf16.mxu0 %v4288
        %4497 = vmatpush1.bf16.msra.mxu0 %v4287
        %4498 = vmatprep.subr.bf16.mxu0 %v4296
        %4499 = vmatpush1.bf16.msra.mxu0 %v4295
        %4500 = vmatprep.subr.bf16.mxu0 0
        %4501 = vmatpush1.bf16.msra.mxu0 0
        %4502 = vmatprep.subr.bf16.mxu0 0
        %4503 = vmatpush1.bf16.msra.mxu0 0
        %4504 = vmatprep.subr.bf16.mxu0 0
        %4505 = vmatpush1.bf16.msra.mxu0 0
        %4506 = vmatprep.subr.bf16.mxu0 0
        %4507 = vmatpush1.bf16.msra.mxu0 0
        %4508 = vmatprep.subr.bf16.mxu0 0
        %4509 = vmatpush1.bf16.msra.mxu0 0
        %4510 = vmatprep.subr.bf16.mxu0 0
        %4511 = vmatpush1.bf16.msra.mxu0 0
        %4512 = vmatprep.subr.bf16.mxu0 0
        %4513 = vmatpush1.bf16.msra.mxu0 0
        %4514 = vmatprep.subr.bf16.mxu0 0
        %4515 = vmatpush1.bf16.msra.mxu0 0
        %4516 = vmatprep.mubr.bf16.mxu0 0
        %4517 = vmatmul.mubr.bf16.gmra.mrb[0].mxu0 %v4039
        %v4518 = vpop.f32.mrb[0].mxu0
        %v4519 = vadd.f32 0.0, %v4518
        %v4520 = vpop.f32.mrb[0].mxu0
        %v4521 = vadd.f32 0.0, %v4520
        %v4522 = vpop.f32.mrb[0].mxu0
        %v4523 = vpop.f32.mrb[0].mxu0
        %4524 = vdwg.mxu0
        %v4525 = vadd.f32 %v3967, %v4396
        %v4526 = vadd.f32 %v3968, %v4398
        %v4527 = vadd.f32 %v3969, %v4437
        %v4528 = vadd.f32 %v3970, %v4439
        %v4529 = vadd.f32 %v3971, %v4478
        %v4530 = vadd.f32 %v3972, %v4480
        %v4531 = vadd.f32 %v3973, %v4519
        %v4532 = vadd.f32 %v3974, %v4521
        %v4533 = vld [vmem:[#allocation8 + $0xe00] sm:$0xff]
        %v4534 = vld [vmem:[#allocation8 + $0xe08] sm:$0xff]
        %v4535 = vld [vmem:[#allocation8 + $0xe10] sm:$0xff]
        %v4536 = vld [vmem:[#allocation8 + $0xe18] sm:$0xff]
        %v4537 = vld [vmem:[#allocation8 + $0xe20] sm:$0xff]
        %v4538 = vld [vmem:[#allocation8 + $0xe28] sm:$0xff]
        %v4539 = vld [vmem:[#allocation8 + $0xe30] sm:$0xff]
        %v4540 = vld [vmem:[#allocation8 + $0xe38] sm:$0xff]
        %v4541 = vld [vmem:[#allocation8 + $0xe40] sm:$0xff]
        %v4542 = vld [vmem:[#allocation8 + $0xe48] sm:$0xff]
        %v4543 = vld [vmem:[#allocation8 + $0xe50] sm:$0xff]
        %v4544 = vld [vmem:[#allocation8 + $0xe58] sm:$0xff]
        %v4545 = vld [vmem:[#allocation8 + $0xe60] sm:$0xff]
        %v4546 = vld [vmem:[#allocation8 + $0xe68] sm:$0xff]
        %v4547 = vld [vmem:[#allocation8 + $0xe70] sm:$0xff]
        %v4548 = vld [vmem:[#allocation8 + $0xe78] sm:$0xff]
        %v4549 = vld [vmem:[#allocation8 + $0xe80] sm:$0xff]
        %v4550 = vld [vmem:[#allocation8 + $0xe88] sm:$0xff]
        %v4551 = vld [vmem:[#allocation8 + $0xe90] sm:$0xff]
        %v4552 = vld [vmem:[#allocation8 + $0xe98] sm:$0xff]
        %v4553 = vld [vmem:[#allocation8 + $0xea0] sm:$0xff]
        %v4554 = vld [vmem:[#allocation8 + $0xea8] sm:$0xff]
        %v4555 = vld [vmem:[#allocation8 + $0xeb0] sm:$0xff]
        %v4556 = vld [vmem:[#allocation8 + $0xeb8] sm:$0xff]
        %v4557 = vld [vmem:[#allocation8 + $0xec0] sm:$0xff]
        %v4558 = vld [vmem:[#allocation8 + $0xec8] sm:$0xff]
        %v4559 = vld [vmem:[#allocation8 + $0xed0] sm:$0xff]
        %v4560 = vld [vmem:[#allocation8 + $0xed8] sm:$0xff]
        %v4561 = vld [vmem:[#allocation8 + $0xee0] sm:$0xff]
        %v4562 = vld [vmem:[#allocation8 + $0xee8] sm:$0xff]
        %v4563 = vld [vmem:[#allocation8 + $0xef0] sm:$0xff]
        %v4564 = vld [vmem:[#allocation8 + $0xef8] sm:$0xff]
        %v4565 = vld [vmem:[#allocation8 + $0xf00] sm:$0xff]
        %v4566 = vld [vmem:[#allocation8 + $0xf08] sm:$0xff]
        %v4567 = vld [vmem:[#allocation8 + $0xf10] sm:$0xff]
        %v4568 = vld [vmem:[#allocation8 + $0xf18] sm:$0xff]
        %v4569 = vld [vmem:[#allocation8 + $0xf20] sm:$0xff]
        %v4570 = vld [vmem:[#allocation8 + $0xf28] sm:$0xff]
        %v4571 = vld [vmem:[#allocation8 + $0xf30] sm:$0xff]
        %v4572 = vld [vmem:[#allocation8 + $0xf38] sm:$0xff]
        %v4573 = vld [vmem:[#allocation8 + $0xf40] sm:$0xff]
        %v4574 = vld [vmem:[#allocation8 + $0xf48] sm:$0xff]
        %v4575 = vld [vmem:[#allocation8 + $0xf50] sm:$0xff]
        %v4576 = vld [vmem:[#allocation8 + $0xf58] sm:$0xff]
        %v4577 = vld [vmem:[#allocation8 + $0xf60] sm:$0xff]
        %v4578 = vld [vmem:[#allocation8 + $0xf68] sm:$0xff]
        %v4579 = vld [vmem:[#allocation8 + $0xf70] sm:$0xff]
        %v4580 = vld [vmem:[#allocation8 + $0xf78] sm:$0xff]
        %v4581 = vld [vmem:[#allocation8 + $0xf80] sm:$0xff]
        %v4582 = vld [vmem:[#allocation8 + $0xf88] sm:$0xff]
        %v4583 = vld [vmem:[#allocation8 + $0xf90] sm:$0xff]
        %v4584 = vld [vmem:[#allocation8 + $0xf98] sm:$0xff]
        %v4585 = vld [vmem:[#allocation8 + $0xfa0] sm:$0xff]
        %v4586 = vld [vmem:[#allocation8 + $0xfa8] sm:$0xff]
        %v4587 = vld [vmem:[#allocation8 + $0xfb0] sm:$0xff]
        %v4588 = vld [vmem:[#allocation8 + $0xfb8] sm:$0xff]
        %v4589 = vld [vmem:[#allocation8 + $0xfc0] sm:$0xff]
        %v4590 = vld [vmem:[#allocation8 + $0xfc8] sm:$0xff]
        %v4591 = vld [vmem:[#allocation8 + $0xfd0] sm:$0xff]
        %v4592 = vld [vmem:[#allocation8 + $0xfd8] sm:$0xff]
        %v4593 = vld [vmem:[#allocation8 + $0xfe0] sm:$0xff]
        %v4594 = vld [vmem:[#allocation8 + $0xfe8] sm:$0xff]
        %v4595 = vld [vmem:[#allocation8 + $0xff0] sm:$0xff]
        %v4596 = vld [vmem:[#allocation8 + $0xff8] sm:$0xff]
        %v4597 = vrot.slane %v771, 3
        %v4663 = vunpack.c.l.b16 %v4533
        %v4664 = vunpack.c.h.b16 %v4533
        %v4665 = vunpack.c.l.b16 %v4534
        %v4666 = vunpack.c.h.b16 %v4534
        %v4667 = vunpack.c.l.b16 %v4535
        %v4668 = vunpack.c.h.b16 %v4535
        %v4669 = vunpack.c.l.b16 %v4536
        %v4670 = vunpack.c.h.b16 %v4536
        %v4671 = vunpack.c.l.b16 %v4537
        %v4672 = vunpack.c.h.b16 %v4537
        %v4673 = vunpack.c.l.b16 %v4538
        %v4674 = vunpack.c.h.b16 %v4538
        %v4675 = vunpack.c.l.b16 %v4539
        %v4676 = vunpack.c.h.b16 %v4539
        %v4677 = vunpack.c.l.b16 %v4540
        %v4678 = vunpack.c.h.b16 %v4540
        %v4679 = vunpack.c.l.b16 %v4541
        %v4680 = vunpack.c.h.b16 %v4541
        %v4681 = vunpack.c.l.b16 %v4542
        %v4682 = vunpack.c.h.b16 %v4542
        %v4683 = vunpack.c.l.b16 %v4543
        %v4684 = vunpack.c.h.b16 %v4543
        %v4685 = vunpack.c.l.b16 %v4544
        %v4686 = vunpack.c.h.b16 %v4544
        %v4687 = vunpack.c.l.b16 %v4545
        %v4688 = vunpack.c.h.b16 %v4545
        %v4689 = vunpack.c.l.b16 %v4546
        %v4690 = vunpack.c.h.b16 %v4546
        %v4691 = vunpack.c.l.b16 %v4547
        %v4692 = vunpack.c.h.b16 %v4547
        %v4693 = vunpack.c.l.b16 %v4548
        %v4694 = vunpack.c.h.b16 %v4548
        %v4695 = vunpack.c.l.b16 %v4549
        %v4696 = vunpack.c.h.b16 %v4549
        %v4697 = vunpack.c.l.b16 %v4550
        %v4698 = vunpack.c.h.b16 %v4550
        %v4699 = vunpack.c.l.b16 %v4551
        %v4700 = vunpack.c.h.b16 %v4551
        %v4701 = vunpack.c.l.b16 %v4552
        %v4702 = vunpack.c.h.b16 %v4552
        %v4703 = vunpack.c.l.b16 %v4553
        %v4704 = vunpack.c.h.b16 %v4553
        %v4705 = vunpack.c.l.b16 %v4554
        %v4706 = vunpack.c.h.b16 %v4554
        %v4707 = vunpack.c.l.b16 %v4555
        %v4708 = vunpack.c.h.b16 %v4555
        %v4709 = vunpack.c.l.b16 %v4556
        %v4710 = vunpack.c.h.b16 %v4556
        %v4711 = vunpack.c.l.b16 %v4557
        %v4712 = vunpack.c.h.b16 %v4557
        %v4713 = vunpack.c.l.b16 %v4558
        %v4714 = vunpack.c.h.b16 %v4558
        %v4715 = vunpack.c.l.b16 %v4559
        %v4716 = vunpack.c.h.b16 %v4559
        %v4717 = vunpack.c.l.b16 %v4560
        %v4718 = vunpack.c.h.b16 %v4560
        %v4719 = vunpack.c.l.b16 %v4561
        %v4720 = vunpack.c.h.b16 %v4561
        %v4721 = vunpack.c.l.b16 %v4562
        %v4722 = vunpack.c.h.b16 %v4562
        %v4723 = vunpack.c.l.b16 %v4563
        %v4724 = vunpack.c.h.b16 %v4563
        %v4725 = vunpack.c.l.b16 %v4564
        %v4726 = vunpack.c.h.b16 %v4564
        %v4727 = vunpack.c.l.b16 %v4565
        %v4728 = vunpack.c.h.b16 %v4565
        %v4729 = vunpack.c.l.b16 %v4566
        %v4730 = vunpack.c.h.b16 %v4566
        %v4731 = vunpack.c.l.b16 %v4567
        %v4732 = vunpack.c.h.b16 %v4567
        %v4733 = vunpack.c.l.b16 %v4568
        %v4734 = vunpack.c.h.b16 %v4568
        %v4735 = vunpack.c.l.b16 %v4569
        %v4736 = vunpack.c.h.b16 %v4569
        %v4737 = vunpack.c.l.b16 %v4570
        %v4738 = vunpack.c.h.b16 %v4570
        %v4739 = vunpack.c.l.b16 %v4571
        %v4740 = vunpack.c.h.b16 %v4571
        %v4741 = vunpack.c.l.b16 %v4572
        %v4742 = vunpack.c.h.b16 %v4572
        %v4743 = vunpack.c.l.b16 %v4573
        %v4744 = vunpack.c.h.b16 %v4573
        %v4745 = vunpack.c.l.b16 %v4574
        %v4746 = vunpack.c.h.b16 %v4574
        %v4747 = vunpack.c.l.b16 %v4575
        %v4748 = vunpack.c.h.b16 %v4575
        %v4749 = vunpack.c.l.b16 %v4576
        %v4750 = vunpack.c.h.b16 %v4576
        %v4751 = vunpack.c.l.b16 %v4577
        %v4752 = vunpack.c.h.b16 %v4577
        %v4753 = vunpack.c.l.b16 %v4578
        %v4754 = vunpack.c.h.b16 %v4578
        %v4755 = vunpack.c.l.b16 %v4579
        %v4756 = vunpack.c.h.b16 %v4579
        %v4757 = vunpack.c.l.b16 %v4580
        %v4758 = vunpack.c.h.b16 %v4580
        %v4759 = vunpack.c.l.b16 %v4581
        %v4760 = vunpack.c.h.b16 %v4581
        %v4761 = vunpack.c.l.b16 %v4582
        %v4762 = vunpack.c.h.b16 %v4582
        %v4763 = vunpack.c.l.b16 %v4583
        %v4764 = vunpack.c.h.b16 %v4583
        %v4765 = vunpack.c.l.b16 %v4584
        %v4766 = vunpack.c.h.b16 %v4584
        %v4767 = vunpack.c.l.b16 %v4585
        %v4768 = vunpack.c.h.b16 %v4585
        %v4769 = vunpack.c.l.b16 %v4586
        %v4770 = vunpack.c.h.b16 %v4586
        %v4771 = vunpack.c.l.b16 %v4587
        %v4772 = vunpack.c.h.b16 %v4587
        %v4773 = vunpack.c.l.b16 %v4588
        %v4774 = vunpack.c.h.b16 %v4588
        %v4775 = vunpack.c.l.b16 %v4589
        %v4776 = vunpack.c.h.b16 %v4589
        %v4777 = vunpack.c.l.b16 %v4590
        %v4778 = vunpack.c.h.b16 %v4590
        %v4779 = vunpack.c.l.b16 %v4591
        %v4780 = vunpack.c.h.b16 %v4591
        %v4781 = vunpack.c.l.b16 %v4592
        %v4782 = vunpack.c.h.b16 %v4592
        %v4783 = vunpack.c.l.b16 %v4593
        %v4784 = vunpack.c.h.b16 %v4593
        %v4785 = vunpack.c.l.b16 %v4594
        %v4786 = vunpack.c.h.b16 %v4594
        %v4787 = vunpack.c.l.b16 %v4595
        %v4788 = vunpack.c.h.b16 %v4595
        %v4789 = vunpack.c.l.b16 %v4596
        %v4790 = vunpack.c.h.b16 %v4596
        %v4791 = vpack.c.b16 %v4671, %v4663
        %v4792 = vpack.c.b16 %v4672, %v4664
        %v4793 = vpack.c.b16 %v4673, %v4665
        %v4794 = vpack.c.b16 %v4674, %v4666
        %v4795 = vpack.c.b16 %v4675, %v4667
        %v4796 = vpack.c.b16 %v4676, %v4668
        %v4797 = vpack.c.b16 %v4677, %v4669
        %v4798 = vpack.c.b16 %v4678, %v4670
        %v4799 = vpack.c.b16 %v4687, %v4679
        %v4800 = vpack.c.b16 %v4688, %v4680
        %v4801 = vpack.c.b16 %v4689, %v4681
        %v4802 = vpack.c.b16 %v4690, %v4682
        %v4803 = vpack.c.b16 %v4691, %v4683
        %v4804 = vpack.c.b16 %v4692, %v4684
        %v4805 = vpack.c.b16 %v4693, %v4685
        %v4806 = vpack.c.b16 %v4694, %v4686
        %v4807 = vpack.c.b16 %v4703, %v4695
        %v4808 = vpack.c.b16 %v4704, %v4696
        %v4809 = vpack.c.b16 %v4705, %v4697
        %v4810 = vpack.c.b16 %v4706, %v4698
        %v4811 = vpack.c.b16 %v4707, %v4699
        %v4812 = vpack.c.b16 %v4708, %v4700
        %v4813 = vpack.c.b16 %v4709, %v4701
        %v4814 = vpack.c.b16 %v4710, %v4702
        %v4815 = vpack.c.b16 %v4719, %v4711
        %v4816 = vpack.c.b16 %v4720, %v4712
        %v4817 = vpack.c.b16 %v4721, %v4713
        %v4818 = vpack.c.b16 %v4722, %v4714
        %v4819 = vpack.c.b16 %v4723, %v4715
        %v4820 = vpack.c.b16 %v4724, %v4716
        %v4821 = vpack.c.b16 %v4725, %v4717
        %v4822 = vpack.c.b16 %v4726, %v4718
        %v4823 = vpack.c.b16 %v4735, %v4727
        %v4824 = vpack.c.b16 %v4736, %v4728
        %v4825 = vpack.c.b16 %v4737, %v4729
        %v4826 = vpack.c.b16 %v4738, %v4730
        %v4827 = vpack.c.b16 %v4739, %v4731
        %v4828 = vpack.c.b16 %v4740, %v4732
        %v4829 = vpack.c.b16 %v4741, %v4733
        %v4830 = vpack.c.b16 %v4742, %v4734
        %v4831 = vpack.c.b16 %v4751, %v4743
        %v4832 = vpack.c.b16 %v4752, %v4744
        %v4833 = vpack.c.b16 %v4753, %v4745
        %v4834 = vpack.c.b16 %v4754, %v4746
        %v4835 = vpack.c.b16 %v4755, %v4747
        %v4836 = vpack.c.b16 %v4756, %v4748
        %v4837 = vpack.c.b16 %v4757, %v4749
        %v4838 = vpack.c.b16 %v4758, %v4750
        %v4839 = vpack.c.b16 %v4767, %v4759
        %v4840 = vpack.c.b16 %v4768, %v4760
        %v4841 = vpack.c.b16 %v4769, %v4761
        %v4842 = vpack.c.b16 %v4770, %v4762
        %v4843 = vpack.c.b16 %v4771, %v4763
        %v4844 = vpack.c.b16 %v4772, %v4764
        %v4845 = vpack.c.b16 %v4773, %v4765
        %v4846 = vpack.c.b16 %v4774, %v4766
        %v4847 = vpack.c.b16 %v4783, %v4775
        %v4848 = vpack.c.b16 %v4784, %v4776
        %v4849 = vpack.c.b16 %v4785, %v4777
        %v4850 = vpack.c.b16 %v4786, %v4778
        %v4851 = vpack.c.b16 %v4787, %v4779
        %v4852 = vpack.c.b16 %v4788, %v4780
        %v4853 = vpack.c.b16 %v4789, %v4781
        %v4854 = vpack.c.b16 %v4790, %v4782
        %4919 = vmatprep.subr.bf16.mxu0 %v4792
        %4920 = vmatpush1.bf16.msra.mxu0 %v4791
        %4921 = vmatprep.subr.bf16.mxu0 %v4800
        %4922 = vmatpush1.bf16.msra.mxu0 %v4799
        %4923 = vmatprep.subr.bf16.mxu0 %v4808
        %4924 = vmatpush1.bf16.msra.mxu0 %v4807
        %4925 = vmatprep.subr.bf16.mxu0 %v4816
        %4926 = vmatpush1.bf16.msra.mxu0 %v4815
        %4927 = vmatprep.subr.bf16.mxu0 %v4824
        %4928 = vmatpush1.bf16.msra.mxu0 %v4823
        %4929 = vmatprep.subr.bf16.mxu0 %v4832
        %4930 = vmatpush1.bf16.msra.mxu0 %v4831
        %4931 = vmatprep.subr.bf16.mxu0 %v4840
        %4932 = vmatpush1.bf16.msra.mxu0 %v4839
        %4933 = vmatprep.subr.bf16.mxu0 %v4848
        %4934 = vmatpush1.bf16.msra.mxu0 %v4847
        %4935 = vmatprep.subr.bf16.mxu0 0
        %4936 = vmatpush1.bf16.msra.mxu0 0
        %4937 = vmatprep.subr.bf16.mxu0 0
        %4938 = vmatpush1.bf16.msra.mxu0 0
        %4939 = vmatprep.subr.bf16.mxu0 0
        %4940 = vmatpush1.bf16.msra.mxu0 0
        %4941 = vmatprep.subr.bf16.mxu0 0
        %4942 = vmatpush1.bf16.msra.mxu0 0
        %4943 = vmatprep.subr.bf16.mxu0 0
        %4944 = vmatpush1.bf16.msra.mxu0 0
        %4945 = vmatprep.subr.bf16.mxu0 0
        %4946 = vmatpush1.bf16.msra.mxu0 0
        %4947 = vmatprep.subr.bf16.mxu0 0
        %4948 = vmatpush1.bf16.msra.mxu0 0
        %4949 = vmatprep.subr.bf16.mxu0 0
        %4950 = vmatpush1.bf16.msra.mxu0 0
        %4951 = vmatprep.mubr.bf16.mxu0 0
        %4952 = vmatmul.mubr.bf16.gmra.mrb[0].mxu0 %v4597
        %v4953 = vpop.f32.mrb[0].mxu0
        %v4954 = vadd.f32 0.0, %v4953
        %v4955 = vpop.f32.mrb[0].mxu0
        %v4956 = vadd.f32 0.0, %v4955
        %v4957 = vpop.f32.mrb[0].mxu0
        %v4958 = vpop.f32.mrb[0].mxu0
        %4959 = vdwg.mxu0
        %4960 = vmatprep.subr.bf16.mxu0 %v4794
        %4961 = vmatpush1.bf16.msra.mxu0 %v4793
        %4962 = vmatprep.subr.bf16.mxu0 %v4802
        %4963 = vmatpush1.bf16.msra.mxu0 %v4801
        %4964 = vmatprep.subr.bf16.mxu0 %v4810
        %4965 = vmatpush1.bf16.msra.mxu0 %v4809
        %4966 = vmatprep.subr.bf16.mxu0 %v4818
        %4967 = vmatpush1.bf16.msra.mxu0 %v4817
        %4968 = vmatprep.subr.bf16.mxu0 %v4826
        %4969 = vmatpush1.bf16.msra.mxu0 %v4825
        %4970 = vmatprep.subr.bf16.mxu0 %v4834
        %4971 = vmatpush1.bf16.msra.mxu0 %v4833
        %4972 = vmatprep.subr.bf16.mxu0 %v4842
        %4973 = vmatpush1.bf16.msra.mxu0 %v4841
        %4974 = vmatprep.subr.bf16.mxu0 %v4850
        %4975 = vmatpush1.bf16.msra.mxu0 %v4849
        %4976 = vmatprep.subr.bf16.mxu0 0
        %4977 = vmatpush1.bf16.msra.mxu0 0
        %4978 = vmatprep.subr.bf16.mxu0 0
        %4979 = vmatpush1.bf16.msra.mxu0 0
        %4980 = vmatprep.subr.bf16.mxu0 0
        %4981 = vmatpush1.bf16.msra.mxu0 0
        %4982 = vmatprep.subr.bf16.mxu0 0
        %4983 = vmatpush1.bf16.msra.mxu0 0
        %4984 = vmatprep.subr.bf16.mxu0 0
        %4985 = vmatpush1.bf16.msra.mxu0 0
        %4986 = vmatprep.subr.bf16.mxu0 0
        %4987 = vmatpush1.bf16.msra.mxu0 0
        %4988 = vmatprep.subr.bf16.mxu0 0
        %4989 = vmatpush1.bf16.msra.mxu0 0
        %4990 = vmatprep.subr.bf16.mxu0 0
        %4991 = vmatpush1.bf16.msra.mxu0 0
        %4992 = vmatprep.mubr.bf16.mxu0 0
        %4993 = vmatmul.mubr.bf16.gmra.mrb[0].mxu0 %v4597
        %v4994 = vpop.f32.mrb[0].mxu0
        %v4995 = vadd.f32 0.0, %v4994
        %v4996 = vpop.f32.mrb[0].mxu0
        %v4997 = vadd.f32 0.0, %v4996
        %v4998 = vpop.f32.mrb[0].mxu0
        %v4999 = vpop.f32.mrb[0].mxu0
        %5000 = vdwg.mxu0
        %5001 = vmatprep.subr.bf16.mxu0 %v4796
        %5002 = vmatpush1.bf16.msra.mxu0 %v4795
        %5003 = vmatprep.subr.bf16.mxu0 %v4804
        %5004 = vmatpush1.bf16.msra.mxu0 %v4803
        %5005 = vmatprep.subr.bf16.mxu0 %v4812
        %5006 = vmatpush1.bf16.msra.mxu0 %v4811
        %5007 = vmatprep.subr.bf16.mxu0 %v4820
        %5008 = vmatpush1.bf16.msra.mxu0 %v4819
        %5009 = vmatprep.subr.bf16.mxu0 %v4828
        %5010 = vmatpush1.bf16.msra.mxu0 %v4827
        %5011 = vmatprep.subr.bf16.mxu0 %v4836
        %5012 = vmatpush1.bf16.msra.mxu0 %v4835
        %5013 = vmatprep.subr.bf16.mxu0 %v4844
        %5014 = vmatpush1.bf16.msra.mxu0 %v4843
        %5015 = vmatprep.subr.bf16.mxu0 %v4852
        %5016 = vmatpush1.bf16.msra.mxu0 %v4851
        %5017 = vmatprep.subr.bf16.mxu0 0
        %5018 = vmatpush1.bf16.msra.mxu0 0
        %5019 = vmatprep.subr.bf16.mxu0 0
        %5020 = vmatpush1.bf16.msra.mxu0 0
        %5021 = vmatprep.subr.bf16.mxu0 0
        %5022 = vmatpush1.bf16.msra.mxu0 0
        %5023 = vmatprep.subr.bf16.mxu0 0
        %5024 = vmatpush1.bf16.msra.mxu0 0
        %5025 = vmatprep.subr.bf16.mxu0 0
        %5026 = vmatpush1.bf16.msra.mxu0 0
        %5027 = vmatprep.subr.bf16.mxu0 0
        %5028 = vmatpush1.bf16.msra.mxu0 0
        %5029 = vmatprep.subr.bf16.mxu0 0
        %5030 = vmatpush1.bf16.msra.mxu0 0
        %5031 = vmatprep.subr.bf16.mxu0 0
        %5032 = vmatpush1.bf16.msra.mxu0 0
        %5033 = vmatprep.mubr.bf16.mxu0 0
        %5034 = vmatmul.mubr.bf16.gmra.mrb[0].mxu0 %v4597
        %v5035 = vpop.f32.mrb[0].mxu0
        %v5036 = vadd.f32 0.0, %v5035
        %v5037 = vpop.f32.mrb[0].mxu0
        %v5038 = vadd.f32 0.0, %v5037
        %v5039 = vpop.f32.mrb[0].mxu0
        %v5040 = vpop.f32.mrb[0].mxu0
        %5041 = vdwg.mxu0
        %5042 = vmatprep.subr.bf16.mxu0 %v4798
        %5043 = vmatpush1.bf16.msra.mxu0 %v4797
        %5044 = vmatprep.subr.bf16.mxu0 %v4806
        %5045 = vmatpush1.bf16.msra.mxu0 %v4805
        %5046 = vmatprep.subr.bf16.mxu0 %v4814
        %5047 = vmatpush1.bf16.msra.mxu0 %v4813
        %5048 = vmatprep.subr.bf16.mxu0 %v4822
        %5049 = vmatpush1.bf16.msra.mxu0 %v4821
        %5050 = vmatprep.subr.bf16.mxu0 %v4830
        %5051 = vmatpush1.bf16.msra.mxu0 %v4829
        %5052 = vmatprep.subr.bf16.mxu0 %v4838
        %5053 = vmatpush1.bf16.msra.mxu0 %v4837
        %5054 = vmatprep.subr.bf16.mxu0 %v4846
        %5055 = vmatpush1.bf16.msra.mxu0 %v4845
        %5056 = vmatprep.subr.bf16.mxu0 %v4854
        %5057 = vmatpush1.bf16.msra.mxu0 %v4853
        %5058 = vmatprep.subr.bf16.mxu0 0
        %5059 = vmatpush1.bf16.msra.mxu0 0
        %5060 = vmatprep.subr.bf16.mxu0 0
        %5061 = vmatpush1.bf16.msra.mxu0 0
        %5062 = vmatprep.subr.bf16.mxu0 0
        %5063 = vmatpush1.bf16.msra.mxu0 0
        %5064 = vmatprep.subr.bf16.mxu0 0
        %5065 = vmatpush1.bf16.msra.mxu0 0
        %5066 = vmatprep.subr.bf16.mxu0 0
        %5067 = vmatpush1.bf16.msra.mxu0 0
        %5068 = vmatprep.subr.bf16.mxu0 0
        %5069 = vmatpush1.bf16.msra.mxu0 0
        %5070 = vmatprep.subr.bf16.mxu0 0
        %5071 = vmatpush1.bf16.msra.mxu0 0
        %5072 = vmatprep.subr.bf16.mxu0 0
        %5073 = vmatpush1.bf16.msra.mxu0 0
        %5074 = vmatprep.mubr.bf16.mxu0 0
        %5075 = vmatmul.mubr.bf16.gmra.mrb[0].mxu0 %v4597
        %v5076 = vpop.f32.mrb[0].mxu0
        %v5077 = vadd.f32 0.0, %v5076
        %v5078 = vpop.f32.mrb[0].mxu0
        %v5079 = vadd.f32 0.0, %v5078
        %v5080 = vpop.f32.mrb[0].mxu0
        %v5081 = vpop.f32.mrb[0].mxu0
        %5082 = vdwg.mxu0
        %v5083 = vadd.f32 %v4525, %v4954
        %v5084 = vadd.f32 %v4526, %v4956
        %v5085 = vadd.f32 %v4527, %v4995
        %v5086 = vadd.f32 %v4528, %v4997
        %v5087 = vadd.f32 %v4529, %v5036
        %v5088 = vadd.f32 %v4530, %v5038
        %v5089 = vadd.f32 %v4531, %v5077
        %v5090 = vadd.f32 %v4532, %v5079
        %v5091 = vpack.c.bf16 %v640, %v640
        %v5092 = vld [vmem:[#allocation8 + $0x1000] sm:$0xff]
        %v5093 = vld [vmem:[#allocation8 + $0x1008] sm:$0xff]
        %v5094 = vld [vmem:[#allocation8 + $0x1010] sm:$0xff]
        %v5095 = vld [vmem:[#allocation8 + $0x1018] sm:$0xff]
        %v5096 = vld [vmem:[#allocation8 + $0x1020] sm:$0xff]
        %v5097 = vld [vmem:[#allocation8 + $0x1028] sm:$0xff]
        %v5098 = vld [vmem:[#allocation8 + $0x1030] sm:$0xff]
        %v5099 = vld [vmem:[#allocation8 + $0x1038] sm:$0xff]
        %v5100 = vld [vmem:[#allocation8 + $0x1040] sm:$0xff]
        %v5101 = vld [vmem:[#allocation8 + $0x1048] sm:$0xff]
        %v5102 = vld [vmem:[#allocation8 + $0x1050] sm:$0xff]
        %v5103 = vld [vmem:[#allocation8 + $0x1058] sm:$0xff]
        %v5104 = vld [vmem:[#allocation8 + $0x1060] sm:$0xff]
        %v5105 = vld [vmem:[#allocation8 + $0x1068] sm:$0xff]
        %v5106 = vld [vmem:[#allocation8 + $0x1070] sm:$0xff]
        %v5107 = vld [vmem:[#allocation8 + $0x1078] sm:$0xff]
        %v5108 = vld [vmem:[#allocation8 + $0x1080] sm:$0xff]
        %v5109 = vld [vmem:[#allocation8 + $0x1088] sm:$0xff]
        %v5110 = vld [vmem:[#allocation8 + $0x1090] sm:$0xff]
        %v5111 = vld [vmem:[#allocation8 + $0x1098] sm:$0xff]
        %v5112 = vld [vmem:[#allocation8 + $0x10a0] sm:$0xff]
        %v5113 = vld [vmem:[#allocation8 + $0x10a8] sm:$0xff]
        %v5114 = vld [vmem:[#allocation8 + $0x10b0] sm:$0xff]
        %v5115 = vld [vmem:[#allocation8 + $0x10b8] sm:$0xff]
        %v5116 = vld [vmem:[#allocation8 + $0x10c0] sm:$0xff]
        %v5117 = vld [vmem:[#allocation8 + $0x10c8] sm:$0xff]
        %v5118 = vld [vmem:[#allocation8 + $0x10d0] sm:$0xff]
        %v5119 = vld [vmem:[#allocation8 + $0x10d8] sm:$0xff]
        %v5120 = vld [vmem:[#allocation8 + $0x10e0] sm:$0xff]
        %v5121 = vld [vmem:[#allocation8 + $0x10e8] sm:$0xff]
        %v5122 = vld [vmem:[#allocation8 + $0x10f0] sm:$0xff]
        %v5123 = vld [vmem:[#allocation8 + $0x10f8] sm:$0xff]
        %v5124 = vld [vmem:[#allocation8 + $0x1100] sm:$0xff]
        %v5125 = vld [vmem:[#allocation8 + $0x1108] sm:$0xff]
        %v5126 = vld [vmem:[#allocation8 + $0x1110] sm:$0xff]
        %v5127 = vld [vmem:[#allocation8 + $0x1118] sm:$0xff]
        %v5128 = vld [vmem:[#allocation8 + $0x1120] sm:$0xff]
        %v5129 = vld [vmem:[#allocation8 + $0x1128] sm:$0xff]
        %v5130 = vld [vmem:[#allocation8 + $0x1130] sm:$0xff]
        %v5131 = vld [vmem:[#allocation8 + $0x1138] sm:$0xff]
        %v5132 = vld [vmem:[#allocation8 + $0x1140] sm:$0xff]
        %v5133 = vld [vmem:[#allocation8 + $0x1148] sm:$0xff]
        %v5134 = vld [vmem:[#allocation8 + $0x1150] sm:$0xff]
        %v5135 = vld [vmem:[#allocation8 + $0x1158] sm:$0xff]
        %v5136 = vld [vmem:[#allocation8 + $0x1160] sm:$0xff]
        %v5137 = vld [vmem:[#allocation8 + $0x1168] sm:$0xff]
        %v5138 = vld [vmem:[#allocation8 + $0x1170] sm:$0xff]
        %v5139 = vld [vmem:[#allocation8 + $0x1178] sm:$0xff]
        %v5140 = vld [vmem:[#allocation8 + $0x1180] sm:$0xff]
        %v5141 = vld [vmem:[#allocation8 + $0x1188] sm:$0xff]
        %v5142 = vld [vmem:[#allocation8 + $0x1190] sm:$0xff]
        %v5143 = vld [vmem:[#allocation8 + $0x1198] sm:$0xff]
        %v5144 = vld [vmem:[#allocation8 + $0x11a0] sm:$0xff]
        %v5145 = vld [vmem:[#allocation8 + $0x11a8] sm:$0xff]
        %v5146 = vld [vmem:[#allocation8 + $0x11b0] sm:$0xff]
        %v5147 = vld [vmem:[#allocation8 + $0x11b8] sm:$0xff]
        %v5148 = vld [vmem:[#allocation8 + $0x11c0] sm:$0xff]
        %v5149 = vld [vmem:[#allocation8 + $0x11c8] sm:$0xff]
        %v5150 = vld [vmem:[#allocation8 + $0x11d0] sm:$0xff]
        %v5151 = vld [vmem:[#allocation8 + $0x11d8] sm:$0xff]
        %v5152 = vld [vmem:[#allocation8 + $0x11e0] sm:$0xff]
        %v5153 = vld [vmem:[#allocation8 + $0x11e8] sm:$0xff]
        %v5154 = vld [vmem:[#allocation8 + $0x11f0] sm:$0xff]
        %v5155 = vld [vmem:[#allocation8 + $0x11f8] sm:$0xff]
        %v5220 = vunpack.c.l.b16 %v5092
        %v5221 = vunpack.c.h.b16 %v5092
        %v5222 = vunpack.c.l.b16 %v5093
        %v5223 = vunpack.c.h.b16 %v5093
        %v5224 = vunpack.c.l.b16 %v5094
        %v5225 = vunpack.c.h.b16 %v5094
        %v5226 = vunpack.c.l.b16 %v5095
        %v5227 = vunpack.c.h.b16 %v5095
        %v5228 = vunpack.c.l.b16 %v5096
        %v5229 = vunpack.c.h.b16 %v5096
        %v5230 = vunpack.c.l.b16 %v5097
        %v5231 = vunpack.c.h.b16 %v5097
        %v5232 = vunpack.c.l.b16 %v5098
        %v5233 = vunpack.c.h.b16 %v5098
        %v5234 = vunpack.c.l.b16 %v5099
        %v5235 = vunpack.c.h.b16 %v5099
        %v5236 = vunpack.c.l.b16 %v5100
        %v5237 = vunpack.c.h.b16 %v5100
        %v5238 = vunpack.c.l.b16 %v5101
        %v5239 = vunpack.c.h.b16 %v5101
        %v5240 = vunpack.c.l.b16 %v5102
        %v5241 = vunpack.c.h.b16 %v5102
        %v5242 = vunpack.c.l.b16 %v5103
        %v5243 = vunpack.c.h.b16 %v5103
        %v5244 = vunpack.c.l.b16 %v5104
        %v5245 = vunpack.c.h.b16 %v5104
        %v5246 = vunpack.c.l.b16 %v5105
        %v5247 = vunpack.c.h.b16 %v5105
        %v5248 = vunpack.c.l.b16 %v5106
        %v5249 = vunpack.c.h.b16 %v5106
        %v5250 = vunpack.c.l.b16 %v5107
        %v5251 = vunpack.c.h.b16 %v5107
        %v5252 = vunpack.c.l.b16 %v5108
        %v5253 = vunpack.c.h.b16 %v5108
        %v5254 = vunpack.c.l.b16 %v5109
        %v5255 = vunpack.c.h.b16 %v5109
        %v5256 = vunpack.c.l.b16 %v5110
        %v5257 = vunpack.c.h.b16 %v5110
        %v5258 = vunpack.c.l.b16 %v5111
        %v5259 = vunpack.c.h.b16 %v5111
        %v5260 = vunpack.c.l.b16 %v5112
        %v5261 = vunpack.c.h.b16 %v5112
        %v5262 = vunpack.c.l.b16 %v5113
        %v5263 = vunpack.c.h.b16 %v5113
        %v5264 = vunpack.c.l.b16 %v5114
        %v5265 = vunpack.c.h.b16 %v5114
        %v5266 = vunpack.c.l.b16 %v5115
        %v5267 = vunpack.c.h.b16 %v5115
        %v5268 = vunpack.c.l.b16 %v5116
        %v5269 = vunpack.c.h.b16 %v5116
        %v5270 = vunpack.c.l.b16 %v5117
        %v5271 = vunpack.c.h.b16 %v5117
        %v5272 = vunpack.c.l.b16 %v5118
        %v5273 = vunpack.c.h.b16 %v5118
        %v5274 = vunpack.c.l.b16 %v5119
        %v5275 = vunpack.c.h.b16 %v5119
        %v5276 = vunpack.c.l.b16 %v5120
        %v5277 = vunpack.c.h.b16 %v5120
        %v5278 = vunpack.c.l.b16 %v5121
        %v5279 = vunpack.c.h.b16 %v5121
        %v5280 = vunpack.c.l.b16 %v5122
        %v5281 = vunpack.c.h.b16 %v5122
        %v5282 = vunpack.c.l.b16 %v5123
        %v5283 = vunpack.c.h.b16 %v5123
        %v5284 = vunpack.c.l.b16 %v5124
        %v5285 = vunpack.c.h.b16 %v5124
        %v5286 = vunpack.c.l.b16 %v5125
        %v5287 = vunpack.c.h.b16 %v5125
        %v5288 = vunpack.c.l.b16 %v5126
        %v5289 = vunpack.c.h.b16 %v5126
        %v5290 = vunpack.c.l.b16 %v5127
        %v5291 = vunpack.c.h.b16 %v5127
        %v5292 = vunpack.c.l.b16 %v5128
        %v5293 = vunpack.c.h.b16 %v5128
        %v5294 = vunpack.c.l.b16 %v5129
        %v5295 = vunpack.c.h.b16 %v5129
        %v5296 = vunpack.c.l.b16 %v5130
        %v5297 = vunpack.c.h.b16 %v5130
        %v5298 = vunpack.c.l.b16 %v5131
        %v5299 = vunpack.c.h.b16 %v5131
        %v5300 = vunpack.c.l.b16 %v5132
        %v5301 = vunpack.c.h.b16 %v5132
        %v5302 = vunpack.c.l.b16 %v5133
        %v5303 = vunpack.c.h.b16 %v5133
        %v5304 = vunpack.c.l.b16 %v5134
        %v5305 = vunpack.c.h.b16 %v5134
        %v5306 = vunpack.c.l.b16 %v5135
        %v5307 = vunpack.c.h.b16 %v5135
        %v5308 = vunpack.c.l.b16 %v5136
        %v5309 = vunpack.c.h.b16 %v5136
        %v5310 = vunpack.c.l.b16 %v5137
        %v5311 = vunpack.c.h.b16 %v5137
        %v5312 = vunpack.c.l.b16 %v5138
        %v5313 = vunpack.c.h.b16 %v5138
        %v5314 = vunpack.c.l.b16 %v5139
        %v5315 = vunpack.c.h.b16 %v5139
        %v5316 = vunpack.c.l.b16 %v5140
        %v5317 = vunpack.c.h.b16 %v5140
        %v5318 = vunpack.c.l.b16 %v5141
        %v5319 = vunpack.c.h.b16 %v5141
        %v5320 = vunpack.c.l.b16 %v5142
        %v5321 = vunpack.c.h.b16 %v5142
        %v5322 = vunpack.c.l.b16 %v5143
        %v5323 = vunpack.c.h.b16 %v5143
        %v5324 = vunpack.c.l.b16 %v5144
        %v5325 = vunpack.c.h.b16 %v5144
        %v5326 = vunpack.c.l.b16 %v5145
        %v5327 = vunpack.c.h.b16 %v5145
        %v5328 = vunpack.c.l.b16 %v5146
        %v5329 = vunpack.c.h.b16 %v5146
        %v5330 = vunpack.c.l.b16 %v5147
        %v5331 = vunpack.c.h.b16 %v5147
        %v5332 = vunpack.c.l.b16 %v5148
        %v5333 = vunpack.c.h.b16 %v5148
        %v5334 = vunpack.c.l.b16 %v5149
        %v5335 = vunpack.c.h.b16 %v5149
        %v5336 = vunpack.c.l.b16 %v5150
        %v5337 = vunpack.c.h.b16 %v5150
        %v5338 = vunpack.c.l.b16 %v5151
        %v5339 = vunpack.c.h.b16 %v5151
        %v5340 = vunpack.c.l.b16 %v5152
        %v5341 = vunpack.c.h.b16 %v5152
        %v5342 = vunpack.c.l.b16 %v5153
        %v5343 = vunpack.c.h.b16 %v5153
        %v5344 = vunpack.c.l.b16 %v5154
        %v5345 = vunpack.c.h.b16 %v5154
        %v5346 = vunpack.c.l.b16 %v5155
        %v5347 = vunpack.c.h.b16 %v5155
        %v5348 = vpack.c.b16 %v5228, %v5220
        %v5349 = vpack.c.b16 %v5229, %v5221
        %v5350 = vpack.c.b16 %v5230, %v5222
        %v5351 = vpack.c.b16 %v5231, %v5223
        %v5352 = vpack.c.b16 %v5232, %v5224
        %v5353 = vpack.c.b16 %v5233, %v5225
        %v5354 = vpack.c.b16 %v5234, %v5226
        %v5355 = vpack.c.b16 %v5235, %v5227
        %v5356 = vpack.c.b16 %v5244, %v5236
        %v5357 = vpack.c.b16 %v5245, %v5237
        %v5358 = vpack.c.b16 %v5246, %v5238
        %v5359 = vpack.c.b16 %v5247, %v5239
        %v5360 = vpack.c.b16 %v5248, %v5240
        %v5361 = vpack.c.b16 %v5249, %v5241
        %v5362 = vpack.c.b16 %v5250, %v5242
        %v5363 = vpack.c.b16 %v5251, %v5243
        %v5364 = vpack.c.b16 %v5260, %v5252
        %v5365 = vpack.c.b16 %v5261, %v5253
        %v5366 = vpack.c.b16 %v5262, %v5254
        %v5367 = vpack.c.b16 %v5263, %v5255
        %v5368 = vpack.c.b16 %v5264, %v5256
        %v5369 = vpack.c.b16 %v5265, %v5257
        %v5370 = vpack.c.b16 %v5266, %v5258
        %v5371 = vpack.c.b16 %v5267, %v5259
        %v5372 = vpack.c.b16 %v5276, %v5268
        %v5373 = vpack.c.b16 %v5277, %v5269
        %v5374 = vpack.c.b16 %v5278, %v5270
        %v5375 = vpack.c.b16 %v5279, %v5271
        %v5376 = vpack.c.b16 %v5280, %v5272
        %v5377 = vpack.c.b16 %v5281, %v5273
        %v5378 = vpack.c.b16 %v5282, %v5274
        %v5379 = vpack.c.b16 %v5283, %v5275
        %v5380 = vpack.c.b16 %v5292, %v5284
        %v5381 = vpack.c.b16 %v5293, %v5285
        %v5382 = vpack.c.b16 %v5294, %v5286
        %v5383 = vpack.c.b16 %v5295, %v5287
        %v5384 = vpack.c.b16 %v5296, %v5288
        %v5385 = vpack.c.b16 %v5297, %v5289
        %v5386 = vpack.c.b16 %v5298, %v5290
        %v5387 = vpack.c.b16 %v5299, %v5291
        %v5388 = vpack.c.b16 %v5308, %v5300
        %v5389 = vpack.c.b16 %v5309, %v5301
        %v5390 = vpack.c.b16 %v5310, %v5302
        %v5391 = vpack.c.b16 %v5311, %v5303
        %v5392 = vpack.c.b16 %v5312, %v5304
        %v5393 = vpack.c.b16 %v5313, %v5305
        %v5394 = vpack.c.b16 %v5314, %v5306
        %v5395 = vpack.c.b16 %v5315, %v5307
        %v5396 = vpack.c.b16 %v5324, %v5316
        %v5397 = vpack.c.b16 %v5325, %v5317
        %v5398 = vpack.c.b16 %v5326, %v5318
        %v5399 = vpack.c.b16 %v5327, %v5319
        %v5400 = vpack.c.b16 %v5328, %v5320
        %v5401 = vpack.c.b16 %v5329, %v5321
        %v5402 = vpack.c.b16 %v5330, %v5322
        %v5403 = vpack.c.b16 %v5331, %v5323
        %v5404 = vpack.c.b16 %v5340, %v5332
        %v5405 = vpack.c.b16 %v5341, %v5333
        %v5406 = vpack.c.b16 %v5342, %v5334
        %v5407 = vpack.c.b16 %v5343, %v5335
        %v5408 = vpack.c.b16 %v5344, %v5336
        %v5409 = vpack.c.b16 %v5345, %v5337
        %v5410 = vpack.c.b16 %v5346, %v5338
        %v5411 = vpack.c.b16 %v5347, %v5339
        %5476 = vmatprep.subr.bf16.mxu0 %v5349
        %5477 = vmatpush1.bf16.msra.mxu0 %v5348
        %5478 = vmatprep.subr.bf16.mxu0 %v5357
        %5479 = vmatpush1.bf16.msra.mxu0 %v5356
        %5480 = vmatprep.subr.bf16.mxu0 %v5365
        %5481 = vmatpush1.bf16.msra.mxu0 %v5364
        %5482 = vmatprep.subr.bf16.mxu0 %v5373
        %5483 = vmatpush1.bf16.msra.mxu0 %v5372
        %5484 = vmatprep.subr.bf16.mxu0 %v5381
        %5485 = vmatpush1.bf16.msra.mxu0 %v5380
        %5486 = vmatprep.subr.bf16.mxu0 %v5389
        %5487 = vmatpush1.bf16.msra.mxu0 %v5388
        %5488 = vmatprep.subr.bf16.mxu0 %v5397
        %5489 = vmatpush1.bf16.msra.mxu0 %v5396
        %5490 = vmatprep.subr.bf16.mxu0 %v5405
        %5491 = vmatpush1.bf16.msra.mxu0 %v5404
        %5492 = vmatprep.subr.bf16.mxu0 0
        %5493 = vmatpush1.bf16.msra.mxu0 0
        %5494 = vmatprep.subr.bf16.mxu0 0
        %5495 = vmatpush1.bf16.msra.mxu0 0
        %5496 = vmatprep.subr.bf16.mxu0 0
        %5497 = vmatpush1.bf16.msra.mxu0 0
        %5498 = vmatprep.subr.bf16.mxu0 0
        %5499 = vmatpush1.bf16.msra.mxu0 0
        %5500 = vmatprep.subr.bf16.mxu0 0
        %5501 = vmatpush1.bf16.msra.mxu0 0
        %5502 = vmatprep.subr.bf16.mxu0 0
        %5503 = vmatpush1.bf16.msra.mxu0 0
        %5504 = vmatprep.subr.bf16.mxu0 0
        %5505 = vmatpush1.bf16.msra.mxu0 0
        %5506 = vmatprep.subr.bf16.mxu0 0
        %5507 = vmatpush1.bf16.msra.mxu0 0
        %5508 = vmatprep.mubr.bf16.mxu0 0
        %5509 = vmatmul.mubr.bf16.gmra.mrb[0].mxu0 %v5091
        %v5510 = vpop.f32.mrb[0].mxu0
        %v5511 = vadd.f32 0.0, %v5510
        %v5512 = vpop.f32.mrb[0].mxu0
        %v5513 = vadd.f32 0.0, %v5512
        %v5514 = vpop.f32.mrb[0].mxu0
        %v5515 = vpop.f32.mrb[0].mxu0
        %5516 = vdwg.mxu0
        %5517 = vmatprep.subr.bf16.mxu0 %v5351
        %5518 = vmatpush1.bf16.msra.mxu0 %v5350
        %5519 = vmatprep.subr.bf16.mxu0 %v5359
        %5520 = vmatpush1.bf16.msra.mxu0 %v5358
        %5521 = vmatprep.subr.bf16.mxu0 %v5367
        %5522 = vmatpush1.bf16.msra.mxu0 %v5366
        %5523 = vmatprep.subr.bf16.mxu0 %v5375
        %5524 = vmatpush1.bf16.msra.mxu0 %v5374
        %5525 = vmatprep.subr.bf16.mxu0 %v5383
        %5526 = vmatpush1.bf16.msra.mxu0 %v5382
        %5527 = vmatprep.subr.bf16.mxu0 %v5391
        %5528 = vmatpush1.bf16.msra.mxu0 %v5390
        %5529 = vmatprep.subr.bf16.mxu0 %v5399
        %5530 = vmatpush1.bf16.msra.mxu0 %v5398
        %5531 = vmatprep.subr.bf16.mxu0 %v5407
        %5532 = vmatpush1.bf16.msra.mxu0 %v5406
        %5533 = vmatprep.subr.bf16.mxu0 0
        %5534 = vmatpush1.bf16.msra.mxu0 0
        %5535 = vmatprep.subr.bf16.mxu0 0
        %5536 = vmatpush1.bf16.msra.mxu0 0
        %5537 = vmatprep.subr.bf16.mxu0 0
        %5538 = vmatpush1.bf16.msra.mxu0 0
        %5539 = vmatprep.subr.bf16.mxu0 0
        %5540 = vmatpush1.bf16.msra.mxu0 0
        %5541 = vmatprep.subr.bf16.mxu0 0
        %5542 = vmatpush1.bf16.msra.mxu0 0
        %5543 = vmatprep.subr.bf16.mxu0 0
        %5544 = vmatpush1.bf16.msra.mxu0 0
        %5545 = vmatprep.subr.bf16.mxu0 0
        %5546 = vmatpush1.bf16.msra.mxu0 0
        %5547 = vmatprep.subr.bf16.mxu0 0
        %5548 = vmatpush1.bf16.msra.mxu0 0
        %5549 = vmatprep.mubr.bf16.mxu0 0
        %5550 = vmatmul.mubr.bf16.gmra.mrb[0].mxu0 %v5091
        %v5551 = vpop.f32.mrb[0].mxu0
        %v5552 = vadd.f32 0.0, %v5551
        %v5553 = vpop.f32.mrb[0].mxu0
        %v5554 = vadd.f32 0.0, %v5553
        %v5555 = vpop.f32.mrb[0].mxu0
        %v5556 = vpop.f32.mrb[0].mxu0
        %5557 = vdwg.mxu0
        %5558 = vmatprep.subr.bf16.mxu0 %v5353
        %5559 = vmatpush1.bf16.msra.mxu0 %v5352
        %5560 = vmatprep.subr.bf16.mxu0 %v5361
        %5561 = vmatpush1.bf16.msra.mxu0 %v5360
        %5562 = vmatprep.subr.bf16.mxu0 %v5369
        %5563 = vmatpush1.bf16.msra.mxu0 %v5368
        %5564 = vmatprep.subr.bf16.mxu0 %v5377
        %5565 = vmatpush1.bf16.msra.mxu0 %v5376
        %5566 = vmatprep.subr.bf16.mxu0 %v5385
        %5567 = vmatpush1.bf16.msra.mxu0 %v5384
        %5568 = vmatprep.subr.bf16.mxu0 %v5393
        %5569 = vmatpush1.bf16.msra.mxu0 %v5392
        %5570 = vmatprep.subr.bf16.mxu0 %v5401
        %5571 = vmatpush1.bf16.msra.mxu0 %v5400
        %5572 = vmatprep.subr.bf16.mxu0 %v5409
        %5573 = vmatpush1.bf16.msra.mxu0 %v5408
        %5574 = vmatprep.subr.bf16.mxu0 0
        %5575 = vmatpush1.bf16.msra.mxu0 0
        %5576 = vmatprep.subr.bf16.mxu0 0
        %5577 = vmatpush1.bf16.msra.mxu0 0
        %5578 = vmatprep.subr.bf16.mxu0 0
        %5579 = vmatpush1.bf16.msra.mxu0 0
        %5580 = vmatprep.subr.bf16.mxu0 0
        %5581 = vmatpush1.bf16.msra.mxu0 0
        %5582 = vmatprep.subr.bf16.mxu0 0
        %5583 = vmatpush1.bf16.msra.mxu0 0
        %5584 = vmatprep.subr.bf16.mxu0 0
        %5585 = vmatpush1.bf16.msra.mxu0 0
        %5586 = vmatprep.subr.bf16.mxu0 0
        %5587 = vmatpush1.bf16.msra.mxu0 0
        %5588 = vmatprep.subr.bf16.mxu0 0
        %5589 = vmatpush1.bf16.msra.mxu0 0
        %5590 = vmatprep.mubr.bf16.mxu0 0
        %5591 = vmatmul.mubr.bf16.gmra.mrb[0].mxu0 %v5091
        %v5592 = vpop.f32.mrb[0].mxu0
        %v5593 = vadd.f32 0.0, %v5592
        %v5594 = vpop.f32.mrb[0].mxu0
        %v5595 = vadd.f32 0.0, %v5594
        %v5596 = vpop.f32.mrb[0].mxu0
        %v5597 = vpop.f32.mrb[0].mxu0
        %5598 = vdwg.mxu0
        %5599 = vmatprep.subr.bf16.mxu0 %v5355
        %5600 = vmatpush1.bf16.msra.mxu0 %v5354
        %5601 = vmatprep.subr.bf16.mxu0 %v5363
        %5602 = vmatpush1.bf16.msra.mxu0 %v5362
        %5603 = vmatprep.subr.bf16.mxu0 %v5371
        %5604 = vmatpush1.bf16.msra.mxu0 %v5370
        %5605 = vmatprep.subr.bf16.mxu0 %v5379
        %5606 = vmatpush1.bf16.msra.mxu0 %v5378
        %5607 = vmatprep.subr.bf16.mxu0 %v5387
        %5608 = vmatpush1.bf16.msra.mxu0 %v5386
        %5609 = vmatprep.subr.bf16.mxu0 %v5395
        %5610 = vmatpush1.bf16.msra.mxu0 %v5394
        %5611 = vmatprep.subr.bf16.mxu0 %v5403
        %5612 = vmatpush1.bf16.msra.mxu0 %v5402
        %5613 = vmatprep.subr.bf16.mxu0 %v5411
        %5614 = vmatpush1.bf16.msra.mxu0 %v5410
        %5615 = vmatprep.subr.bf16.mxu0 0
        %5616 = vmatpush1.bf16.msra.mxu0 0
        %5617 = vmatprep.subr.bf16.mxu0 0
        %5618 = vmatpush1.bf16.msra.mxu0 0
        %5619 = vmatprep.subr.bf16.mxu0 0
        %5620 = vmatpush1.bf16.msra.mxu0 0
        %5621 = vmatprep.subr.bf16.mxu0 0
        %5622 = vmatpush1.bf16.msra.mxu0 0
        %5623 = vmatprep.subr.bf16.mxu0 0
        %5624 = vmatpush1.bf16.msra.mxu0 0
        %5625 = vmatprep.subr.bf16.mxu0 0
        %5626 = vmatpush1.bf16.msra.mxu0 0
        %5627 = vmatprep.subr.bf16.mxu0 0
        %5628 = vmatpush1.bf16.msra.mxu0 0
        %5629 = vmatprep.subr.bf16.mxu0 0
        %5630 = vmatpush1.bf16.msra.mxu0 0
        %5631 = vmatprep.mubr.bf16.mxu0 0
        %5632 = vmatmul.mubr.bf16.gmra.mrb[0].mxu0 %v5091
        %v5633 = vpop.f32.mrb[0].mxu0
        %v5634 = vadd.f32 0.0, %v5633
        %v5635 = vpop.f32.mrb[0].mxu0
        %v5636 = vadd.f32 0.0, %v5635
        %v5637 = vpop.f32.mrb[0].mxu0
        %v5638 = vpop.f32.mrb[0].mxu0
        %5639 = vdwg.mxu0
        %v5640 = vadd.f32 %v5083, %v5511
        %v5641 = vadd.f32 %v5084, %v5513
        %v5642 = vadd.f32 %v5085, %v5552
        %v5643 = vadd.f32 %v5086, %v5554
        %v5644 = vadd.f32 %v5087, %v5593
        %v5645 = vadd.f32 %v5088, %v5595
        %v5646 = vadd.f32 %v5089, %v5634
        %v5647 = vadd.f32 %v5090, %v5636
        %v5648 = vld [vmem:[#allocation8 + $0x1200] sm:$0xff]
        %v5649 = vld [vmem:[#allocation8 + $0x1208] sm:$0xff]
        %v5650 = vld [vmem:[#allocation8 + $0x1210] sm:$0xff]
        %v5651 = vld [vmem:[#allocation8 + $0x1218] sm:$0xff]
        %v5652 = vld [vmem:[#allocation8 + $0x1220] sm:$0xff]
        %v5653 = vld [vmem:[#allocation8 + $0x1228] sm:$0xff]
        %v5654 = vld [vmem:[#allocation8 + $0x1230] sm:$0xff]
        %v5655 = vld [vmem:[#allocation8 + $0x1238] sm:$0xff]
        %v5656 = vld [vmem:[#allocation8 + $0x1240] sm:$0xff]
        %v5657 = vld [vmem:[#allocation8 + $0x1248] sm:$0xff]
        %v5658 = vld [vmem:[#allocation8 + $0x1250] sm:$0xff]
        %v5659 = vld [vmem:[#allocation8 + $0x1258] sm:$0xff]
        %v5660 = vld [vmem:[#allocation8 + $0x1260] sm:$0xff]
        %v5661 = vld [vmem:[#allocation8 + $0x1268] sm:$0xff]
        %v5662 = vld [vmem:[#allocation8 + $0x1270] sm:$0xff]
        %v5663 = vld [vmem:[#allocation8 + $0x1278] sm:$0xff]
        %v5664 = vld [vmem:[#allocation8 + $0x1280] sm:$0xff]
        %v5665 = vld [vmem:[#allocation8 + $0x1288] sm:$0xff]
        %v5666 = vld [vmem:[#allocation8 + $0x1290] sm:$0xff]
        %v5667 = vld [vmem:[#allocation8 + $0x1298] sm:$0xff]
        %v5668 = vld [vmem:[#allocation8 + $0x12a0] sm:$0xff]
        %v5669 = vld [vmem:[#allocation8 + $0x12a8] sm:$0xff]
        %v5670 = vld [vmem:[#allocation8 + $0x12b0] sm:$0xff]
        %v5671 = vld [vmem:[#allocation8 + $0x12b8] sm:$0xff]
        %v5672 = vld [vmem:[#allocation8 + $0x12c0] sm:$0xff]
        %v5673 = vld [vmem:[#allocation8 + $0x12c8] sm:$0xff]
        %v5674 = vld [vmem:[#allocation8 + $0x12d0] sm:$0xff]
        %v5675 = vld [vmem:[#allocation8 + $0x12d8] sm:$0xff]
        %v5676 = vld [vmem:[#allocation8 + $0x12e0] sm:$0xff]
        %v5677 = vld [vmem:[#allocation8 + $0x12e8] sm:$0xff]
        %v5678 = vld [vmem:[#allocation8 + $0x12f0] sm:$0xff]
        %v5679 = vld [vmem:[#allocation8 + $0x12f8] sm:$0xff]
        %v5680 = vld [vmem:[#allocation8 + $0x1300] sm:$0xff]
        %v5681 = vld [vmem:[#allocation8 + $0x1308] sm:$0xff]
        %v5682 = vld [vmem:[#allocation8 + $0x1310] sm:$0xff]
        %v5683 = vld [vmem:[#allocation8 + $0x1318] sm:$0xff]
        %v5684 = vld [vmem:[#allocation8 + $0x1320] sm:$0xff]
        %v5685 = vld [vmem:[#allocation8 + $0x1328] sm:$0xff]
        %v5686 = vld [vmem:[#allocation8 + $0x1330] sm:$0xff]
        %v5687 = vld [vmem:[#allocation8 + $0x1338] sm:$0xff]
        %v5688 = vld [vmem:[#allocation8 + $0x1340] sm:$0xff]
        %v5689 = vld [vmem:[#allocation8 + $0x1348] sm:$0xff]
        %v5690 = vld [vmem:[#allocation8 + $0x1350] sm:$0xff]
        %v5691 = vld [vmem:[#allocation8 + $0x1358] sm:$0xff]
        %v5692 = vld [vmem:[#allocation8 + $0x1360] sm:$0xff]
        %v5693 = vld [vmem:[#allocation8 + $0x1368] sm:$0xff]
        %v5694 = vld [vmem:[#allocation8 + $0x1370] sm:$0xff]
        %v5695 = vld [vmem:[#allocation8 + $0x1378] sm:$0xff]
        %v5696 = vld [vmem:[#allocation8 + $0x1380] sm:$0xff]
        %v5697 = vld [vmem:[#allocation8 + $0x1388] sm:$0xff]
        %v5698 = vld [vmem:[#allocation8 + $0x1390] sm:$0xff]
        %v5699 = vld [vmem:[#allocation8 + $0x1398] sm:$0xff]
        %v5700 = vld [vmem:[#allocation8 + $0x13a0] sm:$0xff]
        %v5701 = vld [vmem:[#allocation8 + $0x13a8] sm:$0xff]
        %v5702 = vld [vmem:[#allocation8 + $0x13b0] sm:$0xff]
        %v5703 = vld [vmem:[#allocation8 + $0x13b8] sm:$0xff]
        %v5704 = vld [vmem:[#allocation8 + $0x13c0] sm:$0xff]
        %v5705 = vld [vmem:[#allocation8 + $0x13c8] sm:$0xff]
        %v5706 = vld [vmem:[#allocation8 + $0x13d0] sm:$0xff]
        %v5707 = vld [vmem:[#allocation8 + $0x13d8] sm:$0xff]
        %v5708 = vld [vmem:[#allocation8 + $0x13e0] sm:$0xff]
        %v5709 = vld [vmem:[#allocation8 + $0x13e8] sm:$0xff]
        %v5710 = vld [vmem:[#allocation8 + $0x13f0] sm:$0xff]
        %v5711 = vld [vmem:[#allocation8 + $0x13f8] sm:$0xff]
        %v5713 = vshrl.u32 %v5091, 16
        %v5780 = vunpack.c.l.b16 %v5648
        %v5781 = vunpack.c.h.b16 %v5648
        %v5782 = vunpack.c.l.b16 %v5649
        %v5783 = vunpack.c.h.b16 %v5649
        %v5784 = vunpack.c.l.b16 %v5650
        %v5785 = vunpack.c.h.b16 %v5650
        %v5786 = vunpack.c.l.b16 %v5651
        %v5787 = vunpack.c.h.b16 %v5651
        %v5788 = vunpack.c.l.b16 %v5652
        %v5789 = vunpack.c.h.b16 %v5652
        %v5790 = vunpack.c.l.b16 %v5653
        %v5791 = vunpack.c.h.b16 %v5653
        %v5792 = vunpack.c.l.b16 %v5654
        %v5793 = vunpack.c.h.b16 %v5654
        %v5794 = vunpack.c.l.b16 %v5655
        %v5795 = vunpack.c.h.b16 %v5655
        %v5796 = vunpack.c.l.b16 %v5656
        %v5797 = vunpack.c.h.b16 %v5656
        %v5798 = vunpack.c.l.b16 %v5657
        %v5799 = vunpack.c.h.b16 %v5657
        %v5800 = vunpack.c.l.b16 %v5658
        %v5801 = vunpack.c.h.b16 %v5658
        %v5802 = vunpack.c.l.b16 %v5659
        %v5803 = vunpack.c.h.b16 %v5659
        %v5804 = vunpack.c.l.b16 %v5660
        %v5805 = vunpack.c.h.b16 %v5660
        %v5806 = vunpack.c.l.b16 %v5661
        %v5807 = vunpack.c.h.b16 %v5661
        %v5808 = vunpack.c.l.b16 %v5662
        %v5809 = vunpack.c.h.b16 %v5662
        %v5810 = vunpack.c.l.b16 %v5663
        %v5811 = vunpack.c.h.b16 %v5663
        %v5812 = vunpack.c.l.b16 %v5664
        %v5813 = vunpack.c.h.b16 %v5664
        %v5814 = vunpack.c.l.b16 %v5665
        %v5815 = vunpack.c.h.b16 %v5665
        %v5816 = vunpack.c.l.b16 %v5666
        %v5817 = vunpack.c.h.b16 %v5666
        %v5818 = vunpack.c.l.b16 %v5667
        %v5819 = vunpack.c.h.b16 %v5667
        %v5820 = vunpack.c.l.b16 %v5668
        %v5821 = vunpack.c.h.b16 %v5668
        %v5822 = vunpack.c.l.b16 %v5669
        %v5823 = vunpack.c.h.b16 %v5669
        %v5824 = vunpack.c.l.b16 %v5670
        %v5825 = vunpack.c.h.b16 %v5670
        %v5826 = vunpack.c.l.b16 %v5671
        %v5827 = vunpack.c.h.b16 %v5671
        %v5828 = vunpack.c.l.b16 %v5672
        %v5829 = vunpack.c.h.b16 %v5672
        %v5830 = vunpack.c.l.b16 %v5673
        %v5831 = vunpack.c.h.b16 %v5673
        %v5832 = vunpack.c.l.b16 %v5674
        %v5833 = vunpack.c.h.b16 %v5674
        %v5834 = vunpack.c.l.b16 %v5675
        %v5835 = vunpack.c.h.b16 %v5675
        %v5836 = vunpack.c.l.b16 %v5676
        %v5837 = vunpack.c.h.b16 %v5676
        %v5838 = vunpack.c.l.b16 %v5677
        %v5839 = vunpack.c.h.b16 %v5677
        %v5840 = vunpack.c.l.b16 %v5678
        %v5841 = vunpack.c.h.b16 %v5678
        %v5842 = vunpack.c.l.b16 %v5679
        %v5843 = vunpack.c.h.b16 %v5679
        %v5844 = vunpack.c.l.b16 %v5680
        %v5845 = vunpack.c.h.b16 %v5680
        %v5846 = vunpack.c.l.b16 %v5681
        %v5847 = vunpack.c.h.b16 %v5681
        %v5848 = vunpack.c.l.b16 %v5682
        %v5849 = vunpack.c.h.b16 %v5682
        %v5850 = vunpack.c.l.b16 %v5683
        %v5851 = vunpack.c.h.b16 %v5683
        %v5852 = vunpack.c.l.b16 %v5684
        %v5853 = vunpack.c.h.b16 %v5684
        %v5854 = vunpack.c.l.b16 %v5685
        %v5855 = vunpack.c.h.b16 %v5685
        %v5856 = vunpack.c.l.b16 %v5686
        %v5857 = vunpack.c.h.b16 %v5686
        %v5858 = vunpack.c.l.b16 %v5687
        %v5859 = vunpack.c.h.b16 %v5687
        %v5860 = vunpack.c.l.b16 %v5688
        %v5861 = vunpack.c.h.b16 %v5688
        %v5862 = vunpack.c.l.b16 %v5689
        %v5863 = vunpack.c.h.b16 %v5689
        %v5864 = vunpack.c.l.b16 %v5690
        %v5865 = vunpack.c.h.b16 %v5690
        %v5866 = vunpack.c.l.b16 %v5691
        %v5867 = vunpack.c.h.b16 %v5691
        %v5868 = vunpack.c.l.b16 %v5692
        %v5869 = vunpack.c.h.b16 %v5692
        %v5870 = vunpack.c.l.b16 %v5693
        %v5871 = vunpack.c.h.b16 %v5693
        %v5872 = vunpack.c.l.b16 %v5694
        %v5873 = vunpack.c.h.b16 %v5694
        %v5874 = vunpack.c.l.b16 %v5695
        %v5875 = vunpack.c.h.b16 %v5695
        %v5876 = vunpack.c.l.b16 %v5696
        %v5877 = vunpack.c.h.b16 %v5696
        %v5878 = vunpack.c.l.b16 %v5697
        %v5879 = vunpack.c.h.b16 %v5697
        %v5880 = vunpack.c.l.b16 %v5698
        %v5881 = vunpack.c.h.b16 %v5698
        %v5882 = vunpack.c.l.b16 %v5699
        %v5883 = vunpack.c.h.b16 %v5699
        %v5884 = vunpack.c.l.b16 %v5700
        %v5885 = vunpack.c.h.b16 %v5700
        %v5886 = vunpack.c.l.b16 %v5701
        %v5887 = vunpack.c.h.b16 %v5701
        %v5888 = vunpack.c.l.b16 %v5702
        %v5889 = vunpack.c.h.b16 %v5702
        %v5890 = vunpack.c.l.b16 %v5703
        %v5891 = vunpack.c.h.b16 %v5703
        %v5892 = vunpack.c.l.b16 %v5704
        %v5893 = vunpack.c.h.b16 %v5704
        %v5894 = vunpack.c.l.b16 %v5705
        %v5895 = vunpack.c.h.b16 %v5705
        %v5896 = vunpack.c.l.b16 %v5706
        %v5897 = vunpack.c.h.b16 %v5706
        %v5898 = vunpack.c.l.b16 %v5707
        %v5899 = vunpack.c.h.b16 %v5707
        %v5900 = vunpack.c.l.b16 %v5708
        %v5901 = vunpack.c.h.b16 %v5708
        %v5902 = vunpack.c.l.b16 %v5709
        %v5903 = vunpack.c.h.b16 %v5709
        %v5904 = vunpack.c.l.b16 %v5710
        %v5905 = vunpack.c.h.b16 %v5710
        %v5906 = vunpack.c.l.b16 %v5711
        %v5907 = vunpack.c.h.b16 %v5711
        %v5908 = vpack.c.b16 %v5788, %v5780
        %v5909 = vpack.c.b16 %v5789, %v5781
        %v5910 = vpack.c.b16 %v5790, %v5782
        %v5911 = vpack.c.b16 %v5791, %v5783
        %v5912 = vpack.c.b16 %v5792, %v5784
        %v5913 = vpack.c.b16 %v5793, %v5785
        %v5914 = vpack.c.b16 %v5794, %v5786
        %v5915 = vpack.c.b16 %v5795, %v5787
        %v5916 = vpack.c.b16 %v5804, %v5796
        %v5917 = vpack.c.b16 %v5805, %v5797
        %v5918 = vpack.c.b16 %v5806, %v5798
        %v5919 = vpack.c.b16 %v5807, %v5799
        %v5920 = vpack.c.b16 %v5808, %v5800
        %v5921 = vpack.c.b16 %v5809, %v5801
        %v5922 = vpack.c.b16 %v5810, %v5802
        %v5923 = vpack.c.b16 %v5811, %v5803
        %v5924 = vpack.c.b16 %v5820, %v5812
        %v5925 = vpack.c.b16 %v5821, %v5813
        %v5926 = vpack.c.b16 %v5822, %v5814
        %v5927 = vpack.c.b16 %v5823, %v5815
        %v5928 = vpack.c.b16 %v5824, %v5816
        %v5929 = vpack.c.b16 %v5825, %v5817
        %v5930 = vpack.c.b16 %v5826, %v5818
        %v5931 = vpack.c.b16 %v5827, %v5819
        %v5932 = vpack.c.b16 %v5836, %v5828
        %v5933 = vpack.c.b16 %v5837, %v5829
        %v5934 = vpack.c.b16 %v5838, %v5830
        %v5935 = vpack.c.b16 %v5839, %v5831
        %v5936 = vpack.c.b16 %v5840, %v5832
        %v5937 = vpack.c.b16 %v5841, %v5833
        %v5938 = vpack.c.b16 %v5842, %v5834
        %v5939 = vpack.c.b16 %v5843, %v5835
        %v5940 = vpack.c.b16 %v5852, %v5844
        %v5941 = vpack.c.b16 %v5853, %v5845
        %v5942 = vpack.c.b16 %v5854, %v5846
        %v5943 = vpack.c.b16 %v5855, %v5847
        %v5944 = vpack.c.b16 %v5856, %v5848
        %v5945 = vpack.c.b16 %v5857, %v5849
        %v5946 = vpack.c.b16 %v5858, %v5850
        %v5947 = vpack.c.b16 %v5859, %v5851
        %v5948 = vpack.c.b16 %v5868, %v5860
        %v5949 = vpack.c.b16 %v5869, %v5861
        %v5950 = vpack.c.b16 %v5870, %v5862
        %v5951 = vpack.c.b16 %v5871, %v5863
        %v5952 = vpack.c.b16 %v5872, %v5864
        %v5953 = vpack.c.b16 %v5873, %v5865
        %v5954 = vpack.c.b16 %v5874, %v5866
        %v5955 = vpack.c.b16 %v5875, %v5867
        %v5956 = vpack.c.b16 %v5884, %v5876
        %v5957 = vpack.c.b16 %v5885, %v5877
        %v5958 = vpack.c.b16 %v5886, %v5878
        %v5959 = vpack.c.b16 %v5887, %v5879
        %v5960 = vpack.c.b16 %v5888, %v5880
        %v5961 = vpack.c.b16 %v5889, %v5881
        %v5962 = vpack.c.b16 %v5890, %v5882
        %v5963 = vpack.c.b16 %v5891, %v5883
        %v5964 = vpack.c.b16 %v5900, %v5892
        %v5965 = vpack.c.b16 %v5901, %v5893
        %v5966 = vpack.c.b16 %v5902, %v5894
        %v5967 = vpack.c.b16 %v5903, %v5895
        %v5968 = vpack.c.b16 %v5904, %v5896
        %v5969 = vpack.c.b16 %v5905, %v5897
        %v5970 = vpack.c.b16 %v5906, %v5898
        %v5971 = vpack.c.b16 %v5907, %v5899
        %6036 = vmatprep.subr.bf16.mxu0 %v5909
        %6037 = vmatpush1.bf16.msra.mxu0 %v5908
        %6038 = vmatprep.subr.bf16.mxu0 %v5917
        %6039 = vmatpush1.bf16.msra.mxu0 %v5916
        %6040 = vmatprep.subr.bf16.mxu0 %v5925
        %6041 = vmatpush1.bf16.msra.mxu0 %v5924
        %6042 = vmatprep.subr.bf16.mxu0 %v5933
        %6043 = vmatpush1.bf16.msra.mxu0 %v5932
        %6044 = vmatprep.subr.bf16.mxu0 %v5941
        %6045 = vmatpush1.bf16.msra.mxu0 %v5940
        %6046 = vmatprep.subr.bf16.mxu0 %v5949
        %6047 = vmatpush1.bf16.msra.mxu0 %v5948
        %6048 = vmatprep.subr.bf16.mxu0 %v5957
        %6049 = vmatpush1.bf16.msra.mxu0 %v5956
        %6050 = vmatprep.subr.bf16.mxu0 %v5965
        %6051 = vmatpush1.bf16.msra.mxu0 %v5964
        %6052 = vmatprep.subr.bf16.mxu0 0
        %6053 = vmatpush1.bf16.msra.mxu0 0
        %6054 = vmatprep.subr.bf16.mxu0 0
        %6055 = vmatpush1.bf16.msra.mxu0 0
        %6056 = vmatprep.subr.bf16.mxu0 0
        %6057 = vmatpush1.bf16.msra.mxu0 0
        %6058 = vmatprep.subr.bf16.mxu0 0
        %6059 = vmatpush1.bf16.msra.mxu0 0
        %6060 = vmatprep.subr.bf16.mxu0 0
        %6061 = vmatpush1.bf16.msra.mxu0 0
        %6062 = vmatprep.subr.bf16.mxu0 0
        %6063 = vmatpush1.bf16.msra.mxu0 0
        %6064 = vmatprep.subr.bf16.mxu0 0
        %6065 = vmatpush1.bf16.msra.mxu0 0
        %6066 = vmatprep.subr.bf16.mxu0 0
        %6067 = vmatpush1.bf16.msra.mxu0 0
        %6068 = vmatprep.mubr.bf16.mxu0 0
        %6069 = vmatmul.mubr.bf16.gmra.mrb[0].mxu0 %v5713
        %v6070 = vpop.f32.mrb[0].mxu0
        %v6071 = vadd.f32 0.0, %v6070
        %v6072 = vpop.f32.mrb[0].mxu0
        %v6073 = vadd.f32 0.0, %v6072
        %v6074 = vpop.f32.mrb[0].mxu0
        %v6075 = vpop.f32.mrb[0].mxu0
        %6076 = vdwg.mxu0
        %6077 = vmatprep.subr.bf16.mxu0 %v5911
        %6078 = vmatpush1.bf16.msra.mxu0 %v5910
        %6079 = vmatprep.subr.bf16.mxu0 %v5919
        %6080 = vmatpush1.bf16.msra.mxu0 %v5918
        %6081 = vmatprep.subr.bf16.mxu0 %v5927
        %6082 = vmatpush1.bf16.msra.mxu0 %v5926
        %6083 = vmatprep.subr.bf16.mxu0 %v5935
        %6084 = vmatpush1.bf16.msra.mxu0 %v5934
        %6085 = vmatprep.subr.bf16.mxu0 %v5943
        %6086 = vmatpush1.bf16.msra.mxu0 %v5942
        %6087 = vmatprep.subr.bf16.mxu0 %v5951
        %6088 = vmatpush1.bf16.msra.mxu0 %v5950
        %6089 = vmatprep.subr.bf16.mxu0 %v5959
        %6090 = vmatpush1.bf16.msra.mxu0 %v5958
        %6091 = vmatprep.subr.bf16.mxu0 %v5967
        %6092 = vmatpush1.bf16.msra.mxu0 %v5966
        %6093 = vmatprep.subr.bf16.mxu0 0
        %6094 = vmatpush1.bf16.msra.mxu0 0
        %6095 = vmatprep.subr.bf16.mxu0 0
        %6096 = vmatpush1.bf16.msra.mxu0 0
        %6097 = vmatprep.subr.bf16.mxu0 0
        %6098 = vmatpush1.bf16.msra.mxu0 0
        %6099 = vmatprep.subr.bf16.mxu0 0
        %6100 = vmatpush1.bf16.msra.mxu0 0
        %6101 = vmatprep.subr.bf16.mxu0 0
        %6102 = vmatpush1.bf16.msra.mxu0 0
        %6103 = vmatprep.subr.bf16.mxu0 0
        %6104 = vmatpush1.bf16.msra.mxu0 0
        %6105 = vmatprep.subr.bf16.mxu0 0
        %6106 = vmatpush1.bf16.msra.mxu0 0
        %6107 = vmatprep.subr.bf16.mxu0 0
        %6108 = vmatpush1.bf16.msra.mxu0 0
        %6109 = vmatprep.mubr.bf16.mxu0 0
        %6110 = vmatmul.mubr.bf16.gmra.mrb[0].mxu0 %v5713
        %v6111 = vpop.f32.mrb[0].mxu0
        %v6112 = vadd.f32 0.0, %v6111
        %v6113 = vpop.f32.mrb[0].mxu0
        %v6114 = vadd.f32 0.0, %v6113
        %v6115 = vpop.f32.mrb[0].mxu0
        %v6116 = vpop.f32.mrb[0].mxu0
        %6117 = vdwg.mxu0
        %6118 = vmatprep.subr.bf16.mxu0 %v5913
        %6119 = vmatpush1.bf16.msra.mxu0 %v5912
        %6120 = vmatprep.subr.bf16.mxu0 %v5921
        %6121 = vmatpush1.bf16.msra.mxu0 %v5920
        %6122 = vmatprep.subr.bf16.mxu0 %v5929
        %6123 = vmatpush1.bf16.msra.mxu0 %v5928
        %6124 = vmatprep.subr.bf16.mxu0 %v5937
        %6125 = vmatpush1.bf16.msra.mxu0 %v5936
        %6126 = vmatprep.subr.bf16.mxu0 %v5945
        %6127 = vmatpush1.bf16.msra.mxu0 %v5944
        %6128 = vmatprep.subr.bf16.mxu0 %v5953
        %6129 = vmatpush1.bf16.msra.mxu0 %v5952
        %6130 = vmatprep.subr.bf16.mxu0 %v5961
        %6131 = vmatpush1.bf16.msra.mxu0 %v5960
        %6132 = vmatprep.subr.bf16.mxu0 %v5969
        %6133 = vmatpush1.bf16.msra.mxu0 %v5968
        %6134 = vmatprep.subr.bf16.mxu0 0
        %6135 = vmatpush1.bf16.msra.mxu0 0
        %6136 = vmatprep.subr.bf16.mxu0 0
        %6137 = vmatpush1.bf16.msra.mxu0 0
        %6138 = vmatprep.subr.bf16.mxu0 0
        %6139 = vmatpush1.bf16.msra.mxu0 0
        %6140 = vmatprep.subr.bf16.mxu0 0
        %6141 = vmatpush1.bf16.msra.mxu0 0
        %6142 = vmatprep.subr.bf16.mxu0 0
        %6143 = vmatpush1.bf16.msra.mxu0 0
        %6144 = vmatprep.subr.bf16.mxu0 0
        %6145 = vmatpush1.bf16.msra.mxu0 0
        %6146 = vmatprep.subr.bf16.mxu0 0
        %6147 = vmatpush1.bf16.msra.mxu0 0
        %6148 = vmatprep.subr.bf16.mxu0 0
        %6149 = vmatpush1.bf16.msra.mxu0 0
        %6150 = vmatprep.mubr.bf16.mxu0 0
        %6151 = vmatmul.mubr.bf16.gmra.mrb[0].mxu0 %v5713
        %v6152 = vpop.f32.mrb[0].mxu0
        %v6153 = vadd.f32 0.0, %v6152
        %v6154 = vpop.f32.mrb[0].mxu0
        %v6155 = vadd.f32 0.0, %v6154
        %v6156 = vpop.f32.mrb[0].mxu0
        %v6157 = vpop.f32.mrb[0].mxu0
        %6158 = vdwg.mxu0
        %6159 = vmatprep.subr.bf16.mxu0 %v5915
        %6160 = vmatpush1.bf16.msra.mxu0 %v5914
        %6161 = vmatprep.subr.bf16.mxu0 %v5923
        %6162 = vmatpush1.bf16.msra.mxu0 %v5922
        %6163 = vmatprep.subr.bf16.mxu0 %v5931
        %6164 = vmatpush1.bf16.msra.mxu0 %v5930
        %6165 = vmatprep.subr.bf16.mxu0 %v5939
        %6166 = vmatpush1.bf16.msra.mxu0 %v5938
        %6167 = vmatprep.subr.bf16.mxu0 %v5947
        %6168 = vmatpush1.bf16.msra.mxu0 %v5946
        %6169 = vmatprep.subr.bf16.mxu0 %v5955
        %6170 = vmatpush1.bf16.msra.mxu0 %v5954
        %6171 = vmatprep.subr.bf16.mxu0 %v5963
        %6172 = vmatpush1.bf16.msra.mxu0 %v5962
        %6173 = vmatprep.subr.bf16.mxu0 %v5971
        %6174 = vmatpush1.bf16.msra.mxu0 %v5970
        %6175 = vmatprep.subr.bf16.mxu0 0
        %6176 = vmatpush1.bf16.msra.mxu0 0
        %6177 = vmatprep.subr.bf16.mxu0 0
        %6178 = vmatpush1.bf16.msra.mxu0 0
        %6179 = vmatprep.subr.bf16.mxu0 0
        %6180 = vmatpush1.bf16.msra.mxu0 0
        %6181 = vmatprep.subr.bf16.mxu0 0
        %6182 = vmatpush1.bf16.msra.mxu0 0
        %6183 = vmatprep.subr.bf16.mxu0 0
        %6184 = vmatpush1.bf16.msra.mxu0 0
        %6185 = vmatprep.subr.bf16.mxu0 0
        %6186 = vmatpush1.bf16.msra.mxu0 0
        %6187 = vmatprep.subr.bf16.mxu0 0
        %6188 = vmatpush1.bf16.msra.mxu0 0
        %6189 = vmatprep.subr.bf16.mxu0 0
        %6190 = vmatpush1.bf16.msra.mxu0 0
        %6191 = vmatprep.mubr.bf16.mxu0 0
        %6192 = vmatmul.mubr.bf16.gmra.mrb[0].mxu0 %v5713
        %v6193 = vpop.f32.mrb[0].mxu0
        %v6194 = vadd.f32 0.0, %v6193
        %v6195 = vpop.f32.mrb[0].mxu0
        %v6196 = vadd.f32 0.0, %v6195
        %v6197 = vpop.f32.mrb[0].mxu0
        %v6198 = vpop.f32.mrb[0].mxu0
        %6199 = vdwg.mxu0
        %v6200 = vadd.f32 %v5640, %v6071
        %v6201 = vadd.f32 %v5641, %v6073
        %v6202 = vadd.f32 %v5642, %v6112
        %v6203 = vadd.f32 %v5643, %v6114
        %v6204 = vadd.f32 %v5644, %v6153
        %v6205 = vadd.f32 %v5645, %v6155
        %v6206 = vadd.f32 %v5646, %v6194
        %v6207 = vadd.f32 %v5647, %v6196
        %v6208 = vld [vmem:[#allocation8 + $0x1400] sm:$0xff]
        %v6209 = vld [vmem:[#allocation8 + $0x1408] sm:$0xff]
        %v6210 = vld [vmem:[#allocation8 + $0x1410] sm:$0xff]
        %v6211 = vld [vmem:[#allocation8 + $0x1418] sm:$0xff]
        %v6212 = vld [vmem:[#allocation8 + $0x1420] sm:$0xff]
        %v6213 = vld [vmem:[#allocation8 + $0x1428] sm:$0xff]
        %v6214 = vld [vmem:[#allocation8 + $0x1430] sm:$0xff]
        %v6215 = vld [vmem:[#allocation8 + $0x1438] sm:$0xff]
        %v6216 = vld [vmem:[#allocation8 + $0x1440] sm:$0xff]
        %v6217 = vld [vmem:[#allocation8 + $0x1448] sm:$0xff]
        %v6218 = vld [vmem:[#allocation8 + $0x1450] sm:$0xff]
        %v6219 = vld [vmem:[#allocation8 + $0x1458] sm:$0xff]
        %v6220 = vld [vmem:[#allocation8 + $0x1460] sm:$0xff]
        %v6221 = vld [vmem:[#allocation8 + $0x1468] sm:$0xff]
        %v6222 = vld [vmem:[#allocation8 + $0x1470] sm:$0xff]
        %v6223 = vld [vmem:[#allocation8 + $0x1478] sm:$0xff]
        %v6224 = vld [vmem:[#allocation8 + $0x1480] sm:$0xff]
        %v6225 = vld [vmem:[#allocation8 + $0x1488] sm:$0xff]
        %v6226 = vld [vmem:[#allocation8 + $0x1490] sm:$0xff]
        %v6227 = vld [vmem:[#allocation8 + $0x1498] sm:$0xff]
        %v6228 = vld [vmem:[#allocation8 + $0x14a0] sm:$0xff]
        %v6229 = vld [vmem:[#allocation8 + $0x14a8] sm:$0xff]
        %v6230 = vld [vmem:[#allocation8 + $0x14b0] sm:$0xff]
        %v6231 = vld [vmem:[#allocation8 + $0x14b8] sm:$0xff]
        %v6232 = vld [vmem:[#allocation8 + $0x14c0] sm:$0xff]
        %v6233 = vld [vmem:[#allocation8 + $0x14c8] sm:$0xff]
        %v6234 = vld [vmem:[#allocation8 + $0x14d0] sm:$0xff]
        %v6235 = vld [vmem:[#allocation8 + $0x14d8] sm:$0xff]
        %v6236 = vld [vmem:[#allocation8 + $0x14e0] sm:$0xff]
        %v6237 = vld [vmem:[#allocation8 + $0x14e8] sm:$0xff]
        %v6238 = vld [vmem:[#allocation8 + $0x14f0] sm:$0xff]
        %v6239 = vld [vmem:[#allocation8 + $0x14f8] sm:$0xff]
        %v6240 = vld [vmem:[#allocation8 + $0x1500] sm:$0xff]
        %v6241 = vld [vmem:[#allocation8 + $0x1508] sm:$0xff]
        %v6242 = vld [vmem:[#allocation8 + $0x1510] sm:$0xff]
        %v6243 = vld [vmem:[#allocation8 + $0x1518] sm:$0xff]
        %v6244 = vld [vmem:[#allocation8 + $0x1520] sm:$0xff]
        %v6245 = vld [vmem:[#allocation8 + $0x1528] sm:$0xff]
        %v6246 = vld [vmem:[#allocation8 + $0x1530] sm:$0xff]
        %v6247 = vld [vmem:[#allocation8 + $0x1538] sm:$0xff]
        %v6248 = vld [vmem:[#allocation8 + $0x1540] sm:$0xff]
        %v6249 = vld [vmem:[#allocation8 + $0x1548] sm:$0xff]
        %v6250 = vld [vmem:[#allocation8 + $0x1550] sm:$0xff]
        %v6251 = vld [vmem:[#allocation8 + $0x1558] sm:$0xff]
        %v6252 = vld [vmem:[#allocation8 + $0x1560] sm:$0xff]
        %v6253 = vld [vmem:[#allocation8 + $0x1568] sm:$0xff]
        %v6254 = vld [vmem:[#allocation8 + $0x1570] sm:$0xff]
        %v6255 = vld [vmem:[#allocation8 + $0x1578] sm:$0xff]
        %v6256 = vld [vmem:[#allocation8 + $0x1580] sm:$0xff]
        %v6257 = vld [vmem:[#allocation8 + $0x1588] sm:$0xff]
        %v6258 = vld [vmem:[#allocation8 + $0x1590] sm:$0xff]
        %v6259 = vld [vmem:[#allocation8 + $0x1598] sm:$0xff]
        %v6260 = vld [vmem:[#allocation8 + $0x15a0] sm:$0xff]
        %v6261 = vld [vmem:[#allocation8 + $0x15a8] sm:$0xff]
        %v6262 = vld [vmem:[#allocation8 + $0x15b0] sm:$0xff]
        %v6263 = vld [vmem:[#allocation8 + $0x15b8] sm:$0xff]
        %v6264 = vld [vmem:[#allocation8 + $0x15c0] sm:$0xff]
        %v6265 = vld [vmem:[#allocation8 + $0x15c8] sm:$0xff]
        %v6266 = vld [vmem:[#allocation8 + $0x15d0] sm:$0xff]
        %v6267 = vld [vmem:[#allocation8 + $0x15d8] sm:$0xff]
        %v6268 = vld [vmem:[#allocation8 + $0x15e0] sm:$0xff]
        %v6269 = vld [vmem:[#allocation8 + $0x15e8] sm:$0xff]
        %v6270 = vld [vmem:[#allocation8 + $0x15f0] sm:$0xff]
        %v6271 = vld [vmem:[#allocation8 + $0x15f8] sm:$0xff]
        %v6273 = vrot.slane %v5091, 1
        %v6339 = vunpack.c.l.b16 %v6208
        %v6340 = vunpack.c.h.b16 %v6208
        %v6341 = vunpack.c.l.b16 %v6209
        %v6342 = vunpack.c.h.b16 %v6209
        %v6343 = vunpack.c.l.b16 %v6210
        %v6344 = vunpack.c.h.b16 %v6210
        %v6345 = vunpack.c.l.b16 %v6211
        %v6346 = vunpack.c.h.b16 %v6211
        %v6347 = vunpack.c.l.b16 %v6212
        %v6348 = vunpack.c.h.b16 %v6212
        %v6349 = vunpack.c.l.b16 %v6213
        %v6350 = vunpack.c.h.b16 %v6213
        %v6351 = vunpack.c.l.b16 %v6214
        %v6352 = vunpack.c.h.b16 %v6214
        %v6353 = vunpack.c.l.b16 %v6215
        %v6354 = vunpack.c.h.b16 %v6215
        %v6355 = vunpack.c.l.b16 %v6216
        %v6356 = vunpack.c.h.b16 %v6216
        %v6357 = vunpack.c.l.b16 %v6217
        %v6358 = vunpack.c.h.b16 %v6217
        %v6359 = vunpack.c.l.b16 %v6218
        %v6360 = vunpack.c.h.b16 %v6218
        %v6361 = vunpack.c.l.b16 %v6219
        %v6362 = vunpack.c.h.b16 %v6219
        %v6363 = vunpack.c.l.b16 %v6220
        %v6364 = vunpack.c.h.b16 %v6220
        %v6365 = vunpack.c.l.b16 %v6221
        %v6366 = vunpack.c.h.b16 %v6221
        %v6367 = vunpack.c.l.b16 %v6222
        %v6368 = vunpack.c.h.b16 %v6222
        %v6369 = vunpack.c.l.b16 %v6223
        %v6370 = vunpack.c.h.b16 %v6223
        %v6371 = vunpack.c.l.b16 %v6224
        %v6372 = vunpack.c.h.b16 %v6224
        %v6373 = vunpack.c.l.b16 %v6225
        %v6374 = vunpack.c.h.b16 %v6225
        %v6375 = vunpack.c.l.b16 %v6226
        %v6376 = vunpack.c.h.b16 %v6226
        %v6377 = vunpack.c.l.b16 %v6227
        %v6378 = vunpack.c.h.b16 %v6227
        %v6379 = vunpack.c.l.b16 %v6228
        %v6380 = vunpack.c.h.b16 %v6228
        %v6381 = vunpack.c.l.b16 %v6229
        %v6382 = vunpack.c.h.b16 %v6229
        %v6383 = vunpack.c.l.b16 %v6230
        %v6384 = vunpack.c.h.b16 %v6230
        %v6385 = vunpack.c.l.b16 %v6231
        %v6386 = vunpack.c.h.b16 %v6231
        %v6387 = vunpack.c.l.b16 %v6232
        %v6388 = vunpack.c.h.b16 %v6232
        %v6389 = vunpack.c.l.b16 %v6233
        %v6390 = vunpack.c.h.b16 %v6233
        %v6391 = vunpack.c.l.b16 %v6234
        %v6392 = vunpack.c.h.b16 %v6234
        %v6393 = vunpack.c.l.b16 %v6235
        %v6394 = vunpack.c.h.b16 %v6235
        %v6395 = vunpack.c.l.b16 %v6236
        %v6396 = vunpack.c.h.b16 %v6236
        %v6397 = vunpack.c.l.b16 %v6237
        %v6398 = vunpack.c.h.b16 %v6237
        %v6399 = vunpack.c.l.b16 %v6238
        %v6400 = vunpack.c.h.b16 %v6238
        %v6401 = vunpack.c.l.b16 %v6239
        %v6402 = vunpack.c.h.b16 %v6239
        %v6403 = vunpack.c.l.b16 %v6240
        %v6404 = vunpack.c.h.b16 %v6240
        %v6405 = vunpack.c.l.b16 %v6241
        %v6406 = vunpack.c.h.b16 %v6241
        %v6407 = vunpack.c.l.b16 %v6242
        %v6408 = vunpack.c.h.b16 %v6242
        %v6409 = vunpack.c.l.b16 %v6243
        %v6410 = vunpack.c.h.b16 %v6243
        %v6411 = vunpack.c.l.b16 %v6244
        %v6412 = vunpack.c.h.b16 %v6244
        %v6413 = vunpack.c.l.b16 %v6245
        %v6414 = vunpack.c.h.b16 %v6245
        %v6415 = vunpack.c.l.b16 %v6246
        %v6416 = vunpack.c.h.b16 %v6246
        %v6417 = vunpack.c.l.b16 %v6247
        %v6418 = vunpack.c.h.b16 %v6247
        %v6419 = vunpack.c.l.b16 %v6248
        %v6420 = vunpack.c.h.b16 %v6248
        %v6421 = vunpack.c.l.b16 %v6249
        %v6422 = vunpack.c.h.b16 %v6249
        %v6423 = vunpack.c.l.b16 %v6250
        %v6424 = vunpack.c.h.b16 %v6250
        %v6425 = vunpack.c.l.b16 %v6251
        %v6426 = vunpack.c.h.b16 %v6251
        %v6427 = vunpack.c.l.b16 %v6252
        %v6428 = vunpack.c.h.b16 %v6252
        %v6429 = vunpack.c.l.b16 %v6253
        %v6430 = vunpack.c.h.b16 %v6253
        %v6431 = vunpack.c.l.b16 %v6254
        %v6432 = vunpack.c.h.b16 %v6254
        %v6433 = vunpack.c.l.b16 %v6255
        %v6434 = vunpack.c.h.b16 %v6255
        %v6435 = vunpack.c.l.b16 %v6256
        %v6436 = vunpack.c.h.b16 %v6256
        %v6437 = vunpack.c.l.b16 %v6257
        %v6438 = vunpack.c.h.b16 %v6257
        %v6439 = vunpack.c.l.b16 %v6258
        %v6440 = vunpack.c.h.b16 %v6258
        %v6441 = vunpack.c.l.b16 %v6259
        %v6442 = vunpack.c.h.b16 %v6259
        %v6443 = vunpack.c.l.b16 %v6260
        %v6444 = vunpack.c.h.b16 %v6260
        %v6445 = vunpack.c.l.b16 %v6261
        %v6446 = vunpack.c.h.b16 %v6261
        %v6447 = vunpack.c.l.b16 %v6262
        %v6448 = vunpack.c.h.b16 %v6262
        %v6449 = vunpack.c.l.b16 %v6263
        %v6450 = vunpack.c.h.b16 %v6263
        %v6451 = vunpack.c.l.b16 %v6264
        %v6452 = vunpack.c.h.b16 %v6264
        %v6453 = vunpack.c.l.b16 %v6265
        %v6454 = vunpack.c.h.b16 %v6265
        %v6455 = vunpack.c.l.b16 %v6266
        %v6456 = vunpack.c.h.b16 %v6266
        %v6457 = vunpack.c.l.b16 %v6267
        %v6458 = vunpack.c.h.b16 %v6267
        %v6459 = vunpack.c.l.b16 %v6268
        %v6460 = vunpack.c.h.b16 %v6268
        %v6461 = vunpack.c.l.b16 %v6269
        %v6462 = vunpack.c.h.b16 %v6269
        %v6463 = vunpack.c.l.b16 %v6270
        %v6464 = vunpack.c.h.b16 %v6270
        %v6465 = vunpack.c.l.b16 %v6271
        %v6466 = vunpack.c.h.b16 %v6271
        %v6467 = vpack.c.b16 %v6347, %v6339
        %v6468 = vpack.c.b16 %v6348, %v6340
        %v6469 = vpack.c.b16 %v6349, %v6341
        %v6470 = vpack.c.b16 %v6350, %v6342
        %v6471 = vpack.c.b16 %v6351, %v6343
        %v6472 = vpack.c.b16 %v6352, %v6344
        %v6473 = vpack.c.b16 %v6353, %v6345
        %v6474 = vpack.c.b16 %v6354, %v6346
        %v6475 = vpack.c.b16 %v6363, %v6355
        %v6476 = vpack.c.b16 %v6364, %v6356
        %v6477 = vpack.c.b16 %v6365, %v6357
        %v6478 = vpack.c.b16 %v6366, %v6358
        %v6479 = vpack.c.b16 %v6367, %v6359
        %v6480 = vpack.c.b16 %v6368, %v6360
        %v6481 = vpack.c.b16 %v6369, %v6361
        %v6482 = vpack.c.b16 %v6370, %v6362
        %v6483 = vpack.c.b16 %v6379, %v6371
        %v6484 = vpack.c.b16 %v6380, %v6372
        %v6485 = vpack.c.b16 %v6381, %v6373
        %v6486 = vpack.c.b16 %v6382, %v6374
        %v6487 = vpack.c.b16 %v6383, %v6375
        %v6488 = vpack.c.b16 %v6384, %v6376
        %v6489 = vpack.c.b16 %v6385, %v6377
        %v6490 = vpack.c.b16 %v6386, %v6378
        %v6491 = vpack.c.b16 %v6395, %v6387
        %v6492 = vpack.c.b16 %v6396, %v6388
        %v6493 = vpack.c.b16 %v6397, %v6389
        %v6494 = vpack.c.b16 %v6398, %v6390
        %v6495 = vpack.c.b16 %v6399, %v6391
        %v6496 = vpack.c.b16 %v6400, %v6392
        %v6497 = vpack.c.b16 %v6401, %v6393
        %v6498 = vpack.c.b16 %v6402, %v6394
        %v6499 = vpack.c.b16 %v6411, %v6403
        %v6500 = vpack.c.b16 %v6412, %v6404
        %v6501 = vpack.c.b16 %v6413, %v6405
        %v6502 = vpack.c.b16 %v6414, %v6406
        %v6503 = vpack.c.b16 %v6415, %v6407
        %v6504 = vpack.c.b16 %v6416, %v6408
        %v6505 = vpack.c.b16 %v6417, %v6409
        %v6506 = vpack.c.b16 %v6418, %v6410
        %v6507 = vpack.c.b16 %v6427, %v6419
        %v6508 = vpack.c.b16 %v6428, %v6420
        %v6509 = vpack.c.b16 %v6429, %v6421
        %v6510 = vpack.c.b16 %v6430, %v6422
        %v6511 = vpack.c.b16 %v6431, %v6423
        %v6512 = vpack.c.b16 %v6432, %v6424
        %v6513 = vpack.c.b16 %v6433, %v6425
        %v6514 = vpack.c.b16 %v6434, %v6426
        %v6515 = vpack.c.b16 %v6443, %v6435
        %v6516 = vpack.c.b16 %v6444, %v6436
        %v6517 = vpack.c.b16 %v6445, %v6437
        %v6518 = vpack.c.b16 %v6446, %v6438
        %v6519 = vpack.c.b16 %v6447, %v6439
        %v6520 = vpack.c.b16 %v6448, %v6440
        %v6521 = vpack.c.b16 %v6449, %v6441
        %v6522 = vpack.c.b16 %v6450, %v6442
        %v6523 = vpack.c.b16 %v6459, %v6451
        %v6524 = vpack.c.b16 %v6460, %v6452
        %v6525 = vpack.c.b16 %v6461, %v6453
        %v6526 = vpack.c.b16 %v6462, %v6454
        %v6527 = vpack.c.b16 %v6463, %v6455
        %v6528 = vpack.c.b16 %v6464, %v6456
        %v6529 = vpack.c.b16 %v6465, %v6457
        %v6530 = vpack.c.b16 %v6466, %v6458
        %6595 = vmatprep.subr.bf16.mxu0 %v6468
        %6596 = vmatpush1.bf16.msra.mxu0 %v6467
        %6597 = vmatprep.subr.bf16.mxu0 %v6476
        %6598 = vmatpush1.bf16.msra.mxu0 %v6475
        %6599 = vmatprep.subr.bf16.mxu0 %v6484
        %6600 = vmatpush1.bf16.msra.mxu0 %v6483
        %6601 = vmatprep.subr.bf16.mxu0 %v6492
        %6602 = vmatpush1.bf16.msra.mxu0 %v6491
        %6603 = vmatprep.subr.bf16.mxu0 %v6500
        %6604 = vmatpush1.bf16.msra.mxu0 %v6499
        %6605 = vmatprep.subr.bf16.mxu0 %v6508
        %6606 = vmatpush1.bf16.msra.mxu0 %v6507
        %6607 = vmatprep.subr.bf16.mxu0 %v6516
        %6608 = vmatpush1.bf16.msra.mxu0 %v6515
        %6609 = vmatprep.subr.bf16.mxu0 %v6524
        %6610 = vmatpush1.bf16.msra.mxu0 %v6523
        %6611 = vmatprep.subr.bf16.mxu0 0
        %6612 = vmatpush1.bf16.msra.mxu0 0
        %6613 = vmatprep.subr.bf16.mxu0 0
        %6614 = vmatpush1.bf16.msra.mxu0 0
        %6615 = vmatprep.subr.bf16.mxu0 0
        %6616 = vmatpush1.bf16.msra.mxu0 0
        %6617 = vmatprep.subr.bf16.mxu0 0
        %6618 = vmatpush1.bf16.msra.mxu0 0
        %6619 = vmatprep.subr.bf16.mxu0 0
        %6620 = vmatpush1.bf16.msra.mxu0 0
        %6621 = vmatprep.subr.bf16.mxu0 0
        %6622 = vmatpush1.bf16.msra.mxu0 0
        %6623 = vmatprep.subr.bf16.mxu0 0
        %6624 = vmatpush1.bf16.msra.mxu0 0
        %6625 = vmatprep.subr.bf16.mxu0 0
        %6626 = vmatpush1.bf16.msra.mxu0 0
        %6627 = vmatprep.mubr.bf16.mxu0 0
        %6628 = vmatmul.mubr.bf16.gmra.mrb[0].mxu0 %v6273
        %v6629 = vpop.f32.mrb[0].mxu0
        %v6630 = vadd.f32 0.0, %v6629
        %v6631 = vpop.f32.mrb[0].mxu0
        %v6632 = vadd.f32 0.0, %v6631
        %v6633 = vpop.f32.mrb[0].mxu0
        %v6634 = vpop.f32.mrb[0].mxu0
        %6635 = vdwg.mxu0
        %6636 = vmatprep.subr.bf16.mxu0 %v6470
        %6637 = vmatpush1.bf16.msra.mxu0 %v6469
        %6638 = vmatprep.subr.bf16.mxu0 %v6478
        %6639 = vmatpush1.bf16.msra.mxu0 %v6477
        %6640 = vmatprep.subr.bf16.mxu0 %v6486
        %6641 = vmatpush1.bf16.msra.mxu0 %v6485
        %6642 = vmatprep.subr.bf16.mxu0 %v6494
        %6643 = vmatpush1.bf16.msra.mxu0 %v6493
        %6644 = vmatprep.subr.bf16.mxu0 %v6502
        %6645 = vmatpush1.bf16.msra.mxu0 %v6501
        %6646 = vmatprep.subr.bf16.mxu0 %v6510
        %6647 = vmatpush1.bf16.msra.mxu0 %v6509
        %6648 = vmatprep.subr.bf16.mxu0 %v6518
        %6649 = vmatpush1.bf16.msra.mxu0 %v6517
        %6650 = vmatprep.subr.bf16.mxu0 %v6526
        %6651 = vmatpush1.bf16.msra.mxu0 %v6525
        %6652 = vmatprep.subr.bf16.mxu0 0
        %6653 = vmatpush1.bf16.msra.mxu0 0
        %6654 = vmatprep.subr.bf16.mxu0 0
        %6655 = vmatpush1.bf16.msra.mxu0 0
        %6656 = vmatprep.subr.bf16.mxu0 0
        %6657 = vmatpush1.bf16.msra.mxu0 0
        %6658 = vmatprep.subr.bf16.mxu0 0
        %6659 = vmatpush1.bf16.msra.mxu0 0
        %6660 = vmatprep.subr.bf16.mxu0 0
        %6661 = vmatpush1.bf16.msra.mxu0 0
        %6662 = vmatprep.subr.bf16.mxu0 0
        %6663 = vmatpush1.bf16.msra.mxu0 0
        %6664 = vmatprep.subr.bf16.mxu0 0
        %6665 = vmatpush1.bf16.msra.mxu0 0
        %6666 = vmatprep.subr.bf16.mxu0 0
        %6667 = vmatpush1.bf16.msra.mxu0 0
        %6668 = vmatprep.mubr.bf16.mxu0 0
        %6669 = vmatmul.mubr.bf16.gmra.mrb[0].mxu0 %v6273
        %v6670 = vpop.f32.mrb[0].mxu0
        %v6671 = vadd.f32 0.0, %v6670
        %v6672 = vpop.f32.mrb[0].mxu0
        %v6673 = vadd.f32 0.0, %v6672
        %v6674 = vpop.f32.mrb[0].mxu0
        %v6675 = vpop.f32.mrb[0].mxu0
        %6676 = vdwg.mxu0
        %6677 = vmatprep.subr.bf16.mxu0 %v6472
        %6678 = vmatpush1.bf16.msra.mxu0 %v6471
        %6679 = vmatprep.subr.bf16.mxu0 %v6480
        %6680 = vmatpush1.bf16.msra.mxu0 %v6479
        %6681 = vmatprep.subr.bf16.mxu0 %v6488
        %6682 = vmatpush1.bf16.msra.mxu0 %v6487
        %6683 = vmatprep.subr.bf16.mxu0 %v6496
        %6684 = vmatpush1.bf16.msra.mxu0 %v6495
        %6685 = vmatprep.subr.bf16.mxu0 %v6504
        %6686 = vmatpush1.bf16.msra.mxu0 %v6503
        %6687 = vmatprep.subr.bf16.mxu0 %v6512
        %6688 = vmatpush1.bf16.msra.mxu0 %v6511
        %6689 = vmatprep.subr.bf16.mxu0 %v6520
        %6690 = vmatpush1.bf16.msra.mxu0 %v6519
        %6691 = vmatprep.subr.bf16.mxu0 %v6528
        %6692 = vmatpush1.bf16.msra.mxu0 %v6527
        %6693 = vmatprep.subr.bf16.mxu0 0
        %6694 = vmatpush1.bf16.msra.mxu0 0
        %6695 = vmatprep.subr.bf16.mxu0 0
        %6696 = vmatpush1.bf16.msra.mxu0 0
        %6697 = vmatprep.subr.bf16.mxu0 0
        %6698 = vmatpush1.bf16.msra.mxu0 0
        %6699 = vmatprep.subr.bf16.mxu0 0
        %6700 = vmatpush1.bf16.msra.mxu0 0
        %6701 = vmatprep.subr.bf16.mxu0 0
        %6702 = vmatpush1.bf16.msra.mxu0 0
        %6703 = vmatprep.subr.bf16.mxu0 0
        %6704 = vmatpush1.bf16.msra.mxu0 0
        %6705 = vmatprep.subr.bf16.mxu0 0
        %6706 = vmatpush1.bf16.msra.mxu0 0
        %6707 = vmatprep.subr.bf16.mxu0 0
        %6708 = vmatpush1.bf16.msra.mxu0 0
        %6709 = vmatprep.mubr.bf16.mxu0 0
        %6710 = vmatmul.mubr.bf16.gmra.mrb[0].mxu0 %v6273
        %v6711 = vpop.f32.mrb[0].mxu0
        %v6712 = vadd.f32 0.0, %v6711
        %v6713 = vpop.f32.mrb[0].mxu0
        %v6714 = vadd.f32 0.0, %v6713
        %v6715 = vpop.f32.mrb[0].mxu0
        %v6716 = vpop.f32.mrb[0].mxu0
        %6717 = vdwg.mxu0
        %6718 = vmatprep.subr.bf16.mxu0 %v6474
        %6719 = vmatpush1.bf16.msra.mxu0 %v6473
        %6720 = vmatprep.subr.bf16.mxu0 %v6482
        %6721 = vmatpush1.bf16.msra.mxu0 %v6481
        %6722 = vmatprep.subr.bf16.mxu0 %v6490
        %6723 = vmatpush1.bf16.msra.mxu0 %v6489
        %6724 = vmatprep.subr.bf16.mxu0 %v6498
        %6725 = vmatpush1.bf16.msra.mxu0 %v6497
        %6726 = vmatprep.subr.bf16.mxu0 %v6506
        %6727 = vmatpush1.bf16.msra.mxu0 %v6505
        %6728 = vmatprep.subr.bf16.mxu0 %v6514
        %6729 = vmatpush1.bf16.msra.mxu0 %v6513
        %6730 = vmatprep.subr.bf16.mxu0 %v6522
        %6731 = vmatpush1.bf16.msra.mxu0 %v6521
        %6732 = vmatprep.subr.bf16.mxu0 %v6530
        %6733 = vmatpush1.bf16.msra.mxu0 %v6529
        %6734 = vmatprep.subr.bf16.mxu0 0
        %6735 = vmatpush1.bf16.msra.mxu0 0
        %6736 = vmatprep.subr.bf16.mxu0 0
        %6737 = vmatpush1.bf16.msra.mxu0 0
        %6738 = vmatprep.subr.bf16.mxu0 0
        %6739 = vmatpush1.bf16.msra.mxu0 0
        %6740 = vmatprep.subr.bf16.mxu0 0
        %6741 = vmatpush1.bf16.msra.mxu0 0
        %6742 = vmatprep.subr.bf16.mxu0 0
        %6743 = vmatpush1.bf16.msra.mxu0 0
        %6744 = vmatprep.subr.bf16.mxu0 0
        %6745 = vmatpush1.bf16.msra.mxu0 0
        %6746 = vmatprep.subr.bf16.mxu0 0
        %6747 = vmatpush1.bf16.msra.mxu0 0
        %6748 = vmatprep.subr.bf16.mxu0 0
        %6749 = vmatpush1.bf16.msra.mxu0 0
        %6750 = vmatprep.mubr.bf16.mxu0 0
        %6751 = vmatmul.mubr.bf16.gmra.mrb[0].mxu0 %v6273
        %v6752 = vpop.f32.mrb[0].mxu0
        %v6753 = vadd.f32 0.0, %v6752
        %v6754 = vpop.f32.mrb[0].mxu0
        %v6755 = vadd.f32 0.0, %v6754
        %v6756 = vpop.f32.mrb[0].mxu0
        %v6757 = vpop.f32.mrb[0].mxu0
        %6758 = vdwg.mxu0
        %v6759 = vadd.f32 %v6200, %v6630
        %v6760 = vadd.f32 %v6201, %v6632
        %v6761 = vadd.f32 %v6202, %v6671
        %v6762 = vadd.f32 %v6203, %v6673
        %v6763 = vadd.f32 %v6204, %v6712
        %v6764 = vadd.f32 %v6205, %v6714
        %v6765 = vadd.f32 %v6206, %v6753
        %v6766 = vadd.f32 %v6207, %v6755
        %v6767 = vld [vmem:[#allocation8 + $0x1600] sm:$0xff]
        %v6768 = vld [vmem:[#allocation8 + $0x1608] sm:$0xff]
        %v6769 = vld [vmem:[#allocation8 + $0x1610] sm:$0xff]
        %v6770 = vld [vmem:[#allocation8 + $0x1618] sm:$0xff]
        %v6771 = vld [vmem:[#allocation8 + $0x1620] sm:$0xff]
        %v6772 = vld [vmem:[#allocation8 + $0x1628] sm:$0xff]
        %v6773 = vld [vmem:[#allocation8 + $0x1630] sm:$0xff]
        %v6774 = vld [vmem:[#allocation8 + $0x1638] sm:$0xff]
        %v6775 = vld [vmem:[#allocation8 + $0x1640] sm:$0xff]
        %v6776 = vld [vmem:[#allocation8 + $0x1648] sm:$0xff]
        %v6777 = vld [vmem:[#allocation8 + $0x1650] sm:$0xff]
        %v6778 = vld [vmem:[#allocation8 + $0x1658] sm:$0xff]
        %v6779 = vld [vmem:[#allocation8 + $0x1660] sm:$0xff]
        %v6780 = vld [vmem:[#allocation8 + $0x1668] sm:$0xff]
        %v6781 = vld [vmem:[#allocation8 + $0x1670] sm:$0xff]
        %v6782 = vld [vmem:[#allocation8 + $0x1678] sm:$0xff]
        %v6783 = vld [vmem:[#allocation8 + $0x1680] sm:$0xff]
        %v6784 = vld [vmem:[#allocation8 + $0x1688] sm:$0xff]
        %v6785 = vld [vmem:[#allocation8 + $0x1690] sm:$0xff]
        %v6786 = vld [vmem:[#allocation8 + $0x1698] sm:$0xff]
        %v6787 = vld [vmem:[#allocation8 + $0x16a0] sm:$0xff]
        %v6788 = vld [vmem:[#allocation8 + $0x16a8] sm:$0xff]
        %v6789 = vld [vmem:[#allocation8 + $0x16b0] sm:$0xff]
        %v6790 = vld [vmem:[#allocation8 + $0x16b8] sm:$0xff]
        %v6791 = vld [vmem:[#allocation8 + $0x16c0] sm:$0xff]
        %v6792 = vld [vmem:[#allocation8 + $0x16c8] sm:$0xff]
        %v6793 = vld [vmem:[#allocation8 + $0x16d0] sm:$0xff]
        %v6794 = vld [vmem:[#allocation8 + $0x16d8] sm:$0xff]
        %v6795 = vld [vmem:[#allocation8 + $0x16e0] sm:$0xff]
        %v6796 = vld [vmem:[#allocation8 + $0x16e8] sm:$0xff]
        %v6797 = vld [vmem:[#allocation8 + $0x16f0] sm:$0xff]
        %v6798 = vld [vmem:[#allocation8 + $0x16f8] sm:$0xff]
        %v6799 = vld [vmem:[#allocation8 + $0x1700] sm:$0xff]
        %v6800 = vld [vmem:[#allocation8 + $0x1708] sm:$0xff]
        %v6801 = vld [vmem:[#allocation8 + $0x1710] sm:$0xff]
        %v6802 = vld [vmem:[#allocation8 + $0x1718] sm:$0xff]
        %v6803 = vld [vmem:[#allocation8 + $0x1720] sm:$0xff]
        %v6804 = vld [vmem:[#allocation8 + $0x1728] sm:$0xff]
        %v6805 = vld [vmem:[#allocation8 + $0x1730] sm:$0xff]
        %v6806 = vld [vmem:[#allocation8 + $0x1738] sm:$0xff]
        %v6807 = vld [vmem:[#allocation8 + $0x1740] sm:$0xff]
        %v6808 = vld [vmem:[#allocation8 + $0x1748] sm:$0xff]
        %v6809 = vld [vmem:[#allocation8 + $0x1750] sm:$0xff]
        %v6810 = vld [vmem:[#allocation8 + $0x1758] sm:$0xff]
        %v6811 = vld [vmem:[#allocation8 + $0x1760] sm:$0xff]
        %v6812 = vld [vmem:[#allocation8 + $0x1768] sm:$0xff]
        %v6813 = vld [vmem:[#allocation8 + $0x1770] sm:$0xff]
        %v6814 = vld [vmem:[#allocation8 + $0x1778] sm:$0xff]
        %v6815 = vld [vmem:[#allocation8 + $0x1780] sm:$0xff]
        %v6816 = vld [vmem:[#allocation8 + $0x1788] sm:$0xff]
        %v6817 = vld [vmem:[#allocation8 + $0x1790] sm:$0xff]
        %v6818 = vld [vmem:[#allocation8 + $0x1798] sm:$0xff]
        %v6819 = vld [vmem:[#allocation8 + $0x17a0] sm:$0xff]
        %v6820 = vld [vmem:[#allocation8 + $0x17a8] sm:$0xff]
        %v6821 = vld [vmem:[#allocation8 + $0x17b0] sm:$0xff]
        %v6822 = vld [vmem:[#allocation8 + $0x17b8] sm:$0xff]
        %v6823 = vld [vmem:[#allocation8 + $0x17c0] sm:$0xff]
        %v6824 = vld [vmem:[#allocation8 + $0x17c8] sm:$0xff]
        %v6825 = vld [vmem:[#allocation8 + $0x17d0] sm:$0xff]
        %v6826 = vld [vmem:[#allocation8 + $0x17d8] sm:$0xff]
        %v6827 = vld [vmem:[#allocation8 + $0x17e0] sm:$0xff]
        %v6828 = vld [vmem:[#allocation8 + $0x17e8] sm:$0xff]
        %v6829 = vld [vmem:[#allocation8 + $0x17f0] sm:$0xff]
        %v6830 = vld [vmem:[#allocation8 + $0x17f8] sm:$0xff]
        %v6831 = vrot.slane %v5713, 1
        %v6897 = vunpack.c.l.b16 %v6767
        %v6898 = vunpack.c.h.b16 %v6767
        %v6899 = vunpack.c.l.b16 %v6768
        %v6900 = vunpack.c.h.b16 %v6768
        %v6901 = vunpack.c.l.b16 %v6769
        %v6902 = vunpack.c.h.b16 %v6769
        %v6903 = vunpack.c.l.b16 %v6770
        %v6904 = vunpack.c.h.b16 %v6770
        %v6905 = vunpack.c.l.b16 %v6771
        %v6906 = vunpack.c.h.b16 %v6771
        %v6907 = vunpack.c.l.b16 %v6772
        %v6908 = vunpack.c.h.b16 %v6772
        %v6909 = vunpack.c.l.b16 %v6773
        %v6910 = vunpack.c.h.b16 %v6773
        %v6911 = vunpack.c.l.b16 %v6774
        %v6912 = vunpack.c.h.b16 %v6774
        %v6913 = vunpack.c.l.b16 %v6775
        %v6914 = vunpack.c.h.b16 %v6775
        %v6915 = vunpack.c.l.b16 %v6776
        %v6916 = vunpack.c.h.b16 %v6776
        %v6917 = vunpack.c.l.b16 %v6777
        %v6918 = vunpack.c.h.b16 %v6777
        %v6919 = vunpack.c.l.b16 %v6778
        %v6920 = vunpack.c.h.b16 %v6778
        %v6921 = vunpack.c.l.b16 %v6779
        %v6922 = vunpack.c.h.b16 %v6779
        %v6923 = vunpack.c.l.b16 %v6780
        %v6924 = vunpack.c.h.b16 %v6780
        %v6925 = vunpack.c.l.b16 %v6781
        %v6926 = vunpack.c.h.b16 %v6781
        %v6927 = vunpack.c.l.b16 %v6782
        %v6928 = vunpack.c.h.b16 %v6782
        %v6929 = vunpack.c.l.b16 %v6783
        %v6930 = vunpack.c.h.b16 %v6783
        %v6931 = vunpack.c.l.b16 %v6784
        %v6932 = vunpack.c.h.b16 %v6784
        %v6933 = vunpack.c.l.b16 %v6785
        %v6934 = vunpack.c.h.b16 %v6785
        %v6935 = vunpack.c.l.b16 %v6786
        %v6936 = vunpack.c.h.b16 %v6786
        %v6937 = vunpack.c.l.b16 %v6787
        %v6938 = vunpack.c.h.b16 %v6787
        %v6939 = vunpack.c.l.b16 %v6788
        %v6940 = vunpack.c.h.b16 %v6788
        %v6941 = vunpack.c.l.b16 %v6789
        %v6942 = vunpack.c.h.b16 %v6789
        %v6943 = vunpack.c.l.b16 %v6790
        %v6944 = vunpack.c.h.b16 %v6790
        %v6945 = vunpack.c.l.b16 %v6791
        %v6946 = vunpack.c.h.b16 %v6791
        %v6947 = vunpack.c.l.b16 %v6792
        %v6948 = vunpack.c.h.b16 %v6792
        %v6949 = vunpack.c.l.b16 %v6793
        %v6950 = vunpack.c.h.b16 %v6793
        %v6951 = vunpack.c.l.b16 %v6794
        %v6952 = vunpack.c.h.b16 %v6794
        %v6953 = vunpack.c.l.b16 %v6795
        %v6954 = vunpack.c.h.b16 %v6795
        %v6955 = vunpack.c.l.b16 %v6796
        %v6956 = vunpack.c.h.b16 %v6796
        %v6957 = vunpack.c.l.b16 %v6797
        %v6958 = vunpack.c.h.b16 %v6797
        %v6959 = vunpack.c.l.b16 %v6798
        %v6960 = vunpack.c.h.b16 %v6798
        %v6961 = vunpack.c.l.b16 %v6799
        %v6962 = vunpack.c.h.b16 %v6799
        %v6963 = vunpack.c.l.b16 %v6800
        %v6964 = vunpack.c.h.b16 %v6800
        %v6965 = vunpack.c.l.b16 %v6801
        %v6966 = vunpack.c.h.b16 %v6801
        %v6967 = vunpack.c.l.b16 %v6802
        %v6968 = vunpack.c.h.b16 %v6802
        %v6969 = vunpack.c.l.b16 %v6803
        %v6970 = vunpack.c.h.b16 %v6803
        %v6971 = vunpack.c.l.b16 %v6804
        %v6972 = vunpack.c.h.b16 %v6804
        %v6973 = vunpack.c.l.b16 %v6805
        %v6974 = vunpack.c.h.b16 %v6805
        %v6975 = vunpack.c.l.b16 %v6806
        %v6976 = vunpack.c.h.b16 %v6806
        %v6977 = vunpack.c.l.b16 %v6807
        %v6978 = vunpack.c.h.b16 %v6807
        %v6979 = vunpack.c.l.b16 %v6808
        %v6980 = vunpack.c.h.b16 %v6808
        %v6981 = vunpack.c.l.b16 %v6809
        %v6982 = vunpack.c.h.b16 %v6809
        %v6983 = vunpack.c.l.b16 %v6810
        %v6984 = vunpack.c.h.b16 %v6810
        %v6985 = vunpack.c.l.b16 %v6811
        %v6986 = vunpack.c.h.b16 %v6811
        %v6987 = vunpack.c.l.b16 %v6812
        %v6988 = vunpack.c.h.b16 %v6812
        %v6989 = vunpack.c.l.b16 %v6813
        %v6990 = vunpack.c.h.b16 %v6813
        %v6991 = vunpack.c.l.b16 %v6814
        %v6992 = vunpack.c.h.b16 %v6814
        %v6993 = vunpack.c.l.b16 %v6815
        %v6994 = vunpack.c.h.b16 %v6815
        %v6995 = vunpack.c.l.b16 %v6816
        %v6996 = vunpack.c.h.b16 %v6816
        %v6997 = vunpack.c.l.b16 %v6817
        %v6998 = vunpack.c.h.b16 %v6817
        %v6999 = vunpack.c.l.b16 %v6818
        %v7000 = vunpack.c.h.b16 %v6818
        %v7001 = vunpack.c.l.b16 %v6819
        %v7002 = vunpack.c.h.b16 %v6819
        %v7003 = vunpack.c.l.b16 %v6820
        %v7004 = vunpack.c.h.b16 %v6820
        %v7005 = vunpack.c.l.b16 %v6821
        %v7006 = vunpack.c.h.b16 %v6821
        %v7007 = vunpack.c.l.b16 %v6822
        %v7008 = vunpack.c.h.b16 %v6822
        %v7009 = vunpack.c.l.b16 %v6823
        %v7010 = vunpack.c.h.b16 %v6823
        %v7011 = vunpack.c.l.b16 %v6824
        %v7012 = vunpack.c.h.b16 %v6824
        %v7013 = vunpack.c.l.b16 %v6825
        %v7014 = vunpack.c.h.b16 %v6825
        %v7015 = vunpack.c.l.b16 %v6826
        %v7016 = vunpack.c.h.b16 %v6826
        %v7017 = vunpack.c.l.b16 %v6827
        %v7018 = vunpack.c.h.b16 %v6827
        %v7019 = vunpack.c.l.b16 %v6828
        %v7020 = vunpack.c.h.b16 %v6828
        %v7021 = vunpack.c.l.b16 %v6829
        %v7022 = vunpack.c.h.b16 %v6829
        %v7023 = vunpack.c.l.b16 %v6830
        %v7024 = vunpack.c.h.b16 %v6830
        %v7025 = vpack.c.b16 %v6905, %v6897
        %v7026 = vpack.c.b16 %v6906, %v6898
        %v7027 = vpack.c.b16 %v6907, %v6899
        %v7028 = vpack.c.b16 %v6908, %v6900
        %v7029 = vpack.c.b16 %v6909, %v6901
        %v7030 = vpack.c.b16 %v6910, %v6902
        %v7031 = vpack.c.b16 %v6911, %v6903
        %v7032 = vpack.c.b16 %v6912, %v6904
        %v7033 = vpack.c.b16 %v6921, %v6913
        %v7034 = vpack.c.b16 %v6922, %v6914
        %v7035 = vpack.c.b16 %v6923, %v6915
        %v7036 = vpack.c.b16 %v6924, %v6916
        %v7037 = vpack.c.b16 %v6925, %v6917
        %v7038 = vpack.c.b16 %v6926, %v6918
        %v7039 = vpack.c.b16 %v6927, %v6919
        %v7040 = vpack.c.b16 %v6928, %v6920
        %v7041 = vpack.c.b16 %v6937, %v6929
        %v7042 = vpack.c.b16 %v6938, %v6930
        %v7043 = vpack.c.b16 %v6939, %v6931
        %v7044 = vpack.c.b16 %v6940, %v6932
        %v7045 = vpack.c.b16 %v6941, %v6933
        %v7046 = vpack.c.b16 %v6942, %v6934
        %v7047 = vpack.c.b16 %v6943, %v6935
        %v7048 = vpack.c.b16 %v6944, %v6936
        %v7049 = vpack.c.b16 %v6953, %v6945
        %v7050 = vpack.c.b16 %v6954, %v6946
        %v7051 = vpack.c.b16 %v6955, %v6947
        %v7052 = vpack.c.b16 %v6956, %v6948
        %v7053 = vpack.c.b16 %v6957, %v6949
        %v7054 = vpack.c.b16 %v6958, %v6950
        %v7055 = vpack.c.b16 %v6959, %v6951
        %v7056 = vpack.c.b16 %v6960, %v6952
        %v7057 = vpack.c.b16 %v6969, %v6961
        %v7058 = vpack.c.b16 %v6970, %v6962
        %v7059 = vpack.c.b16 %v6971, %v6963
        %v7060 = vpack.c.b16 %v6972, %v6964
        %v7061 = vpack.c.b16 %v6973, %v6965
        %v7062 = vpack.c.b16 %v6974, %v6966
        %v7063 = vpack.c.b16 %v6975, %v6967
        %v7064 = vpack.c.b16 %v6976, %v6968
        %v7065 = vpack.c.b16 %v6985, %v6977
        %v7066 = vpack.c.b16 %v6986, %v6978
        %v7067 = vpack.c.b16 %v6987, %v6979
        %v7068 = vpack.c.b16 %v6988, %v6980
        %v7069 = vpack.c.b16 %v6989, %v6981
        %v7070 = vpack.c.b16 %v6990, %v6982
        %v7071 = vpack.c.b16 %v6991, %v6983
        %v7072 = vpack.c.b16 %v6992, %v6984
        %v7073 = vpack.c.b16 %v7001, %v6993
        %v7074 = vpack.c.b16 %v7002, %v6994
        %v7075 = vpack.c.b16 %v7003, %v6995
        %v7076 = vpack.c.b16 %v7004, %v6996
        %v7077 = vpack.c.b16 %v7005, %v6997
        %v7078 = vpack.c.b16 %v7006, %v6998
        %v7079 = vpack.c.b16 %v7007, %v6999
        %v7080 = vpack.c.b16 %v7008, %v7000
        %v7081 = vpack.c.b16 %v7017, %v7009
        %v7082 = vpack.c.b16 %v7018, %v7010
        %v7083 = vpack.c.b16 %v7019, %v7011
        %v7084 = vpack.c.b16 %v7020, %v7012
        %v7085 = vpack.c.b16 %v7021, %v7013
        %v7086 = vpack.c.b16 %v7022, %v7014
        %v7087 = vpack.c.b16 %v7023, %v7015
        %v7088 = vpack.c.b16 %v7024, %v7016
        %7153 = vmatprep.subr.bf16.mxu0 %v7026
        %7154 = vmatpush1.bf16.msra.mxu0 %v7025
        %7155 = vmatprep.subr.bf16.mxu0 %v7034
        %7156 = vmatpush1.bf16.msra.mxu0 %v7033
        %7157 = vmatprep.subr.bf16.mxu0 %v7042
        %7158 = vmatpush1.bf16.msra.mxu0 %v7041
        %7159 = vmatprep.subr.bf16.mxu0 %v7050
        %7160 = vmatpush1.bf16.msra.mxu0 %v7049
        %7161 = vmatprep.subr.bf16.mxu0 %v7058
        %7162 = vmatpush1.bf16.msra.mxu0 %v7057
        %7163 = vmatprep.subr.bf16.mxu0 %v7066
        %7164 = vmatpush1.bf16.msra.mxu0 %v7065
        %7165 = vmatprep.subr.bf16.mxu0 %v7074
        %7166 = vmatpush1.bf16.msra.mxu0 %v7073
        %7167 = vmatprep.subr.bf16.mxu0 %v7082
        %7168 = vmatpush1.bf16.msra.mxu0 %v7081
        %7169 = vmatprep.subr.bf16.mxu0 0
        %7170 = vmatpush1.bf16.msra.mxu0 0
        %7171 = vmatprep.subr.bf16.mxu0 0
        %7172 = vmatpush1.bf16.msra.mxu0 0
        %7173 = vmatprep.subr.bf16.mxu0 0
        %7174 = vmatpush1.bf16.msra.mxu0 0
        %7175 = vmatprep.subr.bf16.mxu0 0
        %7176 = vmatpush1.bf16.msra.mxu0 0
        %7177 = vmatprep.subr.bf16.mxu0 0
        %7178 = vmatpush1.bf16.msra.mxu0 0
        %7179 = vmatprep.subr.bf16.mxu0 0
        %7180 = vmatpush1.bf16.msra.mxu0 0
        %7181 = vmatprep.subr.bf16.mxu0 0
        %7182 = vmatpush1.bf16.msra.mxu0 0
        %7183 = vmatprep.subr.bf16.mxu0 0
        %7184 = vmatpush1.bf16.msra.mxu0 0
        %7185 = vmatprep.mubr.bf16.mxu0 0
        %7186 = vmatmul.mubr.bf16.gmra.mrb[0].mxu0 %v6831
        %v7187 = vpop.f32.mrb[0].mxu0
        %v7188 = vadd.f32 0.0, %v7187
        %v7189 = vpop.f32.mrb[0].mxu0
        %v7190 = vadd.f32 0.0, %v7189
        %v7191 = vpop.f32.mrb[0].mxu0
        %v7192 = vpop.f32.mrb[0].mxu0
        %7193 = vdwg.mxu0
        %7194 = vmatprep.subr.bf16.mxu0 %v7028
        %7195 = vmatpush1.bf16.msra.mxu0 %v7027
        %7196 = vmatprep.subr.bf16.mxu0 %v7036
        %7197 = vmatpush1.bf16.msra.mxu0 %v7035
        %7198 = vmatprep.subr.bf16.mxu0 %v7044
        %7199 = vmatpush1.bf16.msra.mxu0 %v7043
        %7200 = vmatprep.subr.bf16.mxu0 %v7052
        %7201 = vmatpush1.bf16.msra.mxu0 %v7051
        %7202 = vmatprep.subr.bf16.mxu0 %v7060
        %7203 = vmatpush1.bf16.msra.mxu0 %v7059
        %7204 = vmatprep.subr.bf16.mxu0 %v7068
        %7205 = vmatpush1.bf16.msra.mxu0 %v7067
        %7206 = vmatprep.subr.bf16.mxu0 %v7076
        %7207 = vmatpush1.bf16.msra.mxu0 %v7075
        %7208 = vmatprep.subr.bf16.mxu0 %v7084
        %7209 = vmatpush1.bf16.msra.mxu0 %v7083
        %7210 = vmatprep.subr.bf16.mxu0 0
        %7211 = vmatpush1.bf16.msra.mxu0 0
        %7212 = vmatprep.subr.bf16.mxu0 0
        %7213 = vmatpush1.bf16.msra.mxu0 0
        %7214 = vmatprep.subr.bf16.mxu0 0
        %7215 = vmatpush1.bf16.msra.mxu0 0
        %7216 = vmatprep.subr.bf16.mxu0 0
        %7217 = vmatpush1.bf16.msra.mxu0 0
        %7218 = vmatprep.subr.bf16.mxu0 0
        %7219 = vmatpush1.bf16.msra.mxu0 0
        %7220 = vmatprep.subr.bf16.mxu0 0
        %7221 = vmatpush1.bf16.msra.mxu0 0
        %7222 = vmatprep.subr.bf16.mxu0 0
        %7223 = vmatpush1.bf16.msra.mxu0 0
        %7224 = vmatprep.subr.bf16.mxu0 0
        %7225 = vmatpush1.bf16.msra.mxu0 0
        %7226 = vmatprep.mubr.bf16.mxu0 0
        %7227 = vmatmul.mubr.bf16.gmra.mrb[0].mxu0 %v6831
        %v7228 = vpop.f32.mrb[0].mxu0
        %v7229 = vadd.f32 0.0, %v7228
        %v7230 = vpop.f32.mrb[0].mxu0
        %v7231 = vadd.f32 0.0, %v7230
        %v7232 = vpop.f32.mrb[0].mxu0
        %v7233 = vpop.f32.mrb[0].mxu0
        %7234 = vdwg.mxu0
        %7235 = vmatprep.subr.bf16.mxu0 %v7030
        %7236 = vmatpush1.bf16.msra.mxu0 %v7029
        %7237 = vmatprep.subr.bf16.mxu0 %v7038
        %7238 = vmatpush1.bf16.msra.mxu0 %v7037
        %7239 = vmatprep.subr.bf16.mxu0 %v7046
        %7240 = vmatpush1.bf16.msra.mxu0 %v7045
        %7241 = vmatprep.subr.bf16.mxu0 %v7054
        %7242 = vmatpush1.bf16.msra.mxu0 %v7053
        %7243 = vmatprep.subr.bf16.mxu0 %v7062
        %7244 = vmatpush1.bf16.msra.mxu0 %v7061
        %7245 = vmatprep.subr.bf16.mxu0 %v7070
        %7246 = vmatpush1.bf16.msra.mxu0 %v7069
        %7247 = vmatprep.subr.bf16.mxu0 %v7078
        %7248 = vmatpush1.bf16.msra.mxu0 %v7077
        %7249 = vmatprep.subr.bf16.mxu0 %v7086
        %7250 = vmatpush1.bf16.msra.mxu0 %v7085
        %7251 = vmatprep.subr.bf16.mxu0 0
        %7252 = vmatpush1.bf16.msra.mxu0 0
        %7253 = vmatprep.subr.bf16.mxu0 0
        %7254 = vmatpush1.bf16.msra.mxu0 0
        %7255 = vmatprep.subr.bf16.mxu0 0
        %7256 = vmatpush1.bf16.msra.mxu0 0
        %7257 = vmatprep.subr.bf16.mxu0 0
        %7258 = vmatpush1.bf16.msra.mxu0 0
        %7259 = vmatprep.subr.bf16.mxu0 0
        %7260 = vmatpush1.bf16.msra.mxu0 0
        %7261 = vmatprep.subr.bf16.mxu0 0
        %7262 = vmatpush1.bf16.msra.mxu0 0
        %7263 = vmatprep.subr.bf16.mxu0 0
        %7264 = vmatpush1.bf16.msra.mxu0 0
        %7265 = vmatprep.subr.bf16.mxu0 0
        %7266 = vmatpush1.bf16.msra.mxu0 0
        %7267 = vmatprep.mubr.bf16.mxu0 0
        %7268 = vmatmul.mubr.bf16.gmra.mrb[0].mxu0 %v6831
        %v7269 = vpop.f32.mrb[0].mxu0
        %v7270 = vadd.f32 0.0, %v7269
        %v7271 = vpop.f32.mrb[0].mxu0
        %v7272 = vadd.f32 0.0, %v7271
        %v7273 = vpop.f32.mrb[0].mxu0
        %v7274 = vpop.f32.mrb[0].mxu0
        %7275 = vdwg.mxu0
        %7276 = vmatprep.subr.bf16.mxu0 %v7032
        %7277 = vmatpush1.bf16.msra.mxu0 %v7031
        %7278 = vmatprep.subr.bf16.mxu0 %v7040
        %7279 = vmatpush1.bf16.msra.mxu0 %v7039
        %7280 = vmatprep.subr.bf16.mxu0 %v7048
        %7281 = vmatpush1.bf16.msra.mxu0 %v7047
        %7282 = vmatprep.subr.bf16.mxu0 %v7056
        %7283 = vmatpush1.bf16.msra.mxu0 %v7055
        %7284 = vmatprep.subr.bf16.mxu0 %v7064
        %7285 = vmatpush1.bf16.msra.mxu0 %v7063
        %7286 = vmatprep.subr.bf16.mxu0 %v7072
        %7287 = vmatpush1.bf16.msra.mxu0 %v7071
        %7288 = vmatprep.subr.bf16.mxu0 %v7080
        %7289 = vmatpush1.bf16.msra.mxu0 %v7079
        %7290 = vmatprep.subr.bf16.mxu0 %v7088
        %7291 = vmatpush1.bf16.msra.mxu0 %v7087
        %7292 = vmatprep.subr.bf16.mxu0 0
        %7293 = vmatpush1.bf16.msra.mxu0 0
        %7294 = vmatprep.subr.bf16.mxu0 0
        %7295 = vmatpush1.bf16.msra.mxu0 0
        %7296 = vmatprep.subr.bf16.mxu0 0
        %7297 = vmatpush1.bf16.msra.mxu0 0
        %7298 = vmatprep.subr.bf16.mxu0 0
        %7299 = vmatpush1.bf16.msra.mxu0 0
        %7300 = vmatprep.subr.bf16.mxu0 0
        %7301 = vmatpush1.bf16.msra.mxu0 0
        %7302 = vmatprep.subr.bf16.mxu0 0
        %7303 = vmatpush1.bf16.msra.mxu0 0
        %7304 = vmatprep.subr.bf16.mxu0 0
        %7305 = vmatpush1.bf16.msra.mxu0 0
        %7306 = vmatprep.subr.bf16.mxu0 0
        %7307 = vmatpush1.bf16.msra.mxu0 0
        %7308 = vmatprep.mubr.bf16.mxu0 0
        %7309 = vmatmul.mubr.bf16.gmra.mrb[0].mxu0 %v6831
        %v7310 = vpop.f32.mrb[0].mxu0
        %v7311 = vadd.f32 0.0, %v7310
        %v7312 = vpop.f32.mrb[0].mxu0
        %v7313 = vadd.f32 0.0, %v7312
        %v7314 = vpop.f32.mrb[0].mxu0
        %v7315 = vpop.f32.mrb[0].mxu0
        %7316 = vdwg.mxu0
        %v7317 = vadd.f32 %v6759, %v7188
        %v7318 = vadd.f32 %v6760, %v7190
        %v7319 = vadd.f32 %v6761, %v7229
        %v7320 = vadd.f32 %v6762, %v7231
        %v7321 = vadd.f32 %v6763, %v7270
        %v7322 = vadd.f32 %v6764, %v7272
        %v7323 = vadd.f32 %v6765, %v7311
        %v7324 = vadd.f32 %v6766, %v7313
        %v7325 = vld [vmem:[#allocation8 + $0x1800] sm:$0xff]
        %v7326 = vld [vmem:[#allocation8 + $0x1808] sm:$0xff]
        %v7327 = vld [vmem:[#allocation8 + $0x1810] sm:$0xff]
        %v7328 = vld [vmem:[#allocation8 + $0x1818] sm:$0xff]
        %v7329 = vld [vmem:[#allocation8 + $0x1820] sm:$0xff]
        %v7330 = vld [vmem:[#allocation8 + $0x1828] sm:$0xff]
        %v7331 = vld [vmem:[#allocation8 + $0x1830] sm:$0xff]
        %v7332 = vld [vmem:[#allocation8 + $0x1838] sm:$0xff]
        %v7333 = vld [vmem:[#allocation8 + $0x1840] sm:$0xff]
        %v7334 = vld [vmem:[#allocation8 + $0x1848] sm:$0xff]
        %v7335 = vld [vmem:[#allocation8 + $0x1850] sm:$0xff]
        %v7336 = vld [vmem:[#allocation8 + $0x1858] sm:$0xff]
        %v7337 = vld [vmem:[#allocation8 + $0x1860] sm:$0xff]
        %v7338 = vld [vmem:[#allocation8 + $0x1868] sm:$0xff]
        %v7339 = vld [vmem:[#allocation8 + $0x1870] sm:$0xff]
        %v7340 = vld [vmem:[#allocation8 + $0x1878] sm:$0xff]
        %v7341 = vld [vmem:[#allocation8 + $0x1880] sm:$0xff]
        %v7342 = vld [vmem:[#allocation8 + $0x1888] sm:$0xff]
        %v7343 = vld [vmem:[#allocation8 + $0x1890] sm:$0xff]
        %v7344 = vld [vmem:[#allocation8 + $0x1898] sm:$0xff]
        %v7345 = vld [vmem:[#allocation8 + $0x18a0] sm:$0xff]
        %v7346 = vld [vmem:[#allocation8 + $0x18a8] sm:$0xff]
        %v7347 = vld [vmem:[#allocation8 + $0x18b0] sm:$0xff]
        %v7348 = vld [vmem:[#allocation8 + $0x18b8] sm:$0xff]
        %v7349 = vld [vmem:[#allocation8 + $0x18c0] sm:$0xff]
        %v7350 = vld [vmem:[#allocation8 + $0x18c8] sm:$0xff]
        %v7351 = vld [vmem:[#allocation8 + $0x18d0] sm:$0xff]
        %v7352 = vld [vmem:[#allocation8 + $0x18d8] sm:$0xff]
        %v7353 = vld [vmem:[#allocation8 + $0x18e0] sm:$0xff]
        %v7354 = vld [vmem:[#allocation8 + $0x18e8] sm:$0xff]
        %v7355 = vld [vmem:[#allocation8 + $0x18f0] sm:$0xff]
        %v7356 = vld [vmem:[#allocation8 + $0x18f8] sm:$0xff]
        %v7357 = vld [vmem:[#allocation8 + $0x1900] sm:$0xff]
        %v7358 = vld [vmem:[#allocation8 + $0x1908] sm:$0xff]
        %v7359 = vld [vmem:[#allocation8 + $0x1910] sm:$0xff]
        %v7360 = vld [vmem:[#allocation8 + $0x1918] sm:$0xff]
        %v7361 = vld [vmem:[#allocation8 + $0x1920] sm:$0xff]
        %v7362 = vld [vmem:[#allocation8 + $0x1928] sm:$0xff]
        %v7363 = vld [vmem:[#allocation8 + $0x1930] sm:$0xff]
        %v7364 = vld [vmem:[#allocation8 + $0x1938] sm:$0xff]
        %v7365 = vld [vmem:[#allocation8 + $0x1940] sm:$0xff]
        %v7366 = vld [vmem:[#allocation8 + $0x1948] sm:$0xff]
        %v7367 = vld [vmem:[#allocation8 + $0x1950] sm:$0xff]
        %v7368 = vld [vmem:[#allocation8 + $0x1958] sm:$0xff]
        %v7369 = vld [vmem:[#allocation8 + $0x1960] sm:$0xff]
        %v7370 = vld [vmem:[#allocation8 + $0x1968] sm:$0xff]
        %v7371 = vld [vmem:[#allocation8 + $0x1970] sm:$0xff]
        %v7372 = vld [vmem:[#allocation8 + $0x1978] sm:$0xff]
        %v7373 = vld [vmem:[#allocation8 + $0x1980] sm:$0xff]
        %v7374 = vld [vmem:[#allocation8 + $0x1988] sm:$0xff]
        %v7375 = vld [vmem:[#allocation8 + $0x1990] sm:$0xff]
        %v7376 = vld [vmem:[#allocation8 + $0x1998] sm:$0xff]
        %v7377 = vld [vmem:[#allocation8 + $0x19a0] sm:$0xff]
        %v7378 = vld [vmem:[#allocation8 + $0x19a8] sm:$0xff]
        %v7379 = vld [vmem:[#allocation8 + $0x19b0] sm:$0xff]
        %v7380 = vld [vmem:[#allocation8 + $0x19b8] sm:$0xff]
        %v7381 = vld [vmem:[#allocation8 + $0x19c0] sm:$0xff]
        %v7382 = vld [vmem:[#allocation8 + $0x19c8] sm:$0xff]
        %v7383 = vld [vmem:[#allocation8 + $0x19d0] sm:$0xff]
        %v7384 = vld [vmem:[#allocation8 + $0x19d8] sm:$0xff]
        %v7385 = vld [vmem:[#allocation8 + $0x19e0] sm:$0xff]
        %v7386 = vld [vmem:[#allocation8 + $0x19e8] sm:$0xff]
        %v7387 = vld [vmem:[#allocation8 + $0x19f0] sm:$0xff]
        %v7388 = vld [vmem:[#allocation8 + $0x19f8] sm:$0xff]
        %v7389 = vrot.slane %v5091, 2
        %v7455 = vunpack.c.l.b16 %v7325
        %v7456 = vunpack.c.h.b16 %v7325
        %v7457 = vunpack.c.l.b16 %v7326
        %v7458 = vunpack.c.h.b16 %v7326
        %v7459 = vunpack.c.l.b16 %v7327
        %v7460 = vunpack.c.h.b16 %v7327
        %v7461 = vunpack.c.l.b16 %v7328
        %v7462 = vunpack.c.h.b16 %v7328
        %v7463 = vunpack.c.l.b16 %v7329
        %v7464 = vunpack.c.h.b16 %v7329
        %v7465 = vunpack.c.l.b16 %v7330
        %v7466 = vunpack.c.h.b16 %v7330
        %v7467 = vunpack.c.l.b16 %v7331
        %v7468 = vunpack.c.h.b16 %v7331
        %v7469 = vunpack.c.l.b16 %v7332
        %v7470 = vunpack.c.h.b16 %v7332
        %v7471 = vunpack.c.l.b16 %v7333
        %v7472 = vunpack.c.h.b16 %v7333
        %v7473 = vunpack.c.l.b16 %v7334
        %v7474 = vunpack.c.h.b16 %v7334
        %v7475 = vunpack.c.l.b16 %v7335
        %v7476 = vunpack.c.h.b16 %v7335
        %v7477 = vunpack.c.l.b16 %v7336
        %v7478 = vunpack.c.h.b16 %v7336
        %v7479 = vunpack.c.l.b16 %v7337
        %v7480 = vunpack.c.h.b16 %v7337
        %v7481 = vunpack.c.l.b16 %v7338
        %v7482 = vunpack.c.h.b16 %v7338
        %v7483 = vunpack.c.l.b16 %v7339
        %v7484 = vunpack.c.h.b16 %v7339
        %v7485 = vunpack.c.l.b16 %v7340
        %v7486 = vunpack.c.h.b16 %v7340
        %v7487 = vunpack.c.l.b16 %v7341
        %v7488 = vunpack.c.h.b16 %v7341
        %v7489 = vunpack.c.l.b16 %v7342
        %v7490 = vunpack.c.h.b16 %v7342
        %v7491 = vunpack.c.l.b16 %v7343
        %v7492 = vunpack.c.h.b16 %v7343
        %v7493 = vunpack.c.l.b16 %v7344
        %v7494 = vunpack.c.h.b16 %v7344
        %v7495 = vunpack.c.l.b16 %v7345
        %v7496 = vunpack.c.h.b16 %v7345
        %v7497 = vunpack.c.l.b16 %v7346
        %v7498 = vunpack.c.h.b16 %v7346
        %v7499 = vunpack.c.l.b16 %v7347
        %v7500 = vunpack.c.h.b16 %v7347
        %v7501 = vunpack.c.l.b16 %v7348
        %v7502 = vunpack.c.h.b16 %v7348
        %v7503 = vunpack.c.l.b16 %v7349
        %v7504 = vunpack.c.h.b16 %v7349
        %v7505 = vunpack.c.l.b16 %v7350
        %v7506 = vunpack.c.h.b16 %v7350
        %v7507 = vunpack.c.l.b16 %v7351
        %v7508 = vunpack.c.h.b16 %v7351
        %v7509 = vunpack.c.l.b16 %v7352
        %v7510 = vunpack.c.h.b16 %v7352
        %v7511 = vunpack.c.l.b16 %v7353
        %v7512 = vunpack.c.h.b16 %v7353
        %v7513 = vunpack.c.l.b16 %v7354
        %v7514 = vunpack.c.h.b16 %v7354
        %v7515 = vunpack.c.l.b16 %v7355
        %v7516 = vunpack.c.h.b16 %v7355
        %v7517 = vunpack.c.l.b16 %v7356
        %v7518 = vunpack.c.h.b16 %v7356
        %v7519 = vunpack.c.l.b16 %v7357
        %v7520 = vunpack.c.h.b16 %v7357
        %v7521 = vunpack.c.l.b16 %v7358
        %v7522 = vunpack.c.h.b16 %v7358
        %v7523 = vunpack.c.l.b16 %v7359
        %v7524 = vunpack.c.h.b16 %v7359
        %v7525 = vunpack.c.l.b16 %v7360
        %v7526 = vunpack.c.h.b16 %v7360
        %v7527 = vunpack.c.l.b16 %v7361
        %v7528 = vunpack.c.h.b16 %v7361
        %v7529 = vunpack.c.l.b16 %v7362
        %v7530 = vunpack.c.h.b16 %v7362
        %v7531 = vunpack.c.l.b16 %v7363
        %v7532 = vunpack.c.h.b16 %v7363
        %v7533 = vunpack.c.l.b16 %v7364
        %v7534 = vunpack.c.h.b16 %v7364
        %v7535 = vunpack.c.l.b16 %v7365
        %v7536 = vunpack.c.h.b16 %v7365
        %v7537 = vunpack.c.l.b16 %v7366
        %v7538 = vunpack.c.h.b16 %v7366
        %v7539 = vunpack.c.l.b16 %v7367
        %v7540 = vunpack.c.h.b16 %v7367
        %v7541 = vunpack.c.l.b16 %v7368
        %v7542 = vunpack.c.h.b16 %v7368
        %v7543 = vunpack.c.l.b16 %v7369
        %v7544 = vunpack.c.h.b16 %v7369
        %v7545 = vunpack.c.l.b16 %v7370
        %v7546 = vunpack.c.h.b16 %v7370
        %v7547 = vunpack.c.l.b16 %v7371
        %v7548 = vunpack.c.h.b16 %v7371
        %v7549 = vunpack.c.l.b16 %v7372
        %v7550 = vunpack.c.h.b16 %v7372
        %v7551 = vunpack.c.l.b16 %v7373
        %v7552 = vunpack.c.h.b16 %v7373
        %v7553 = vunpack.c.l.b16 %v7374
        %v7554 = vunpack.c.h.b16 %v7374
        %v7555 = vunpack.c.l.b16 %v7375
        %v7556 = vunpack.c.h.b16 %v7375
        %v7557 = vunpack.c.l.b16 %v7376
        %v7558 = vunpack.c.h.b16 %v7376
        %v7559 = vunpack.c.l.b16 %v7377
        %v7560 = vunpack.c.h.b16 %v7377
        %v7561 = vunpack.c.l.b16 %v7378
        %v7562 = vunpack.c.h.b16 %v7378
        %v7563 = vunpack.c.l.b16 %v7379
        %v7564 = vunpack.c.h.b16 %v7379
        %v7565 = vunpack.c.l.b16 %v7380
        %v7566 = vunpack.c.h.b16 %v7380
        %v7567 = vunpack.c.l.b16 %v7381
        %v7568 = vunpack.c.h.b16 %v7381
        %v7569 = vunpack.c.l.b16 %v7382
        %v7570 = vunpack.c.h.b16 %v7382
        %v7571 = vunpack.c.l.b16 %v7383
        %v7572 = vunpack.c.h.b16 %v7383
        %v7573 = vunpack.c.l.b16 %v7384
        %v7574 = vunpack.c.h.b16 %v7384
        %v7575 = vunpack.c.l.b16 %v7385
        %v7576 = vunpack.c.h.b16 %v7385
        %v7577 = vunpack.c.l.b16 %v7386
        %v7578 = vunpack.c.h.b16 %v7386
        %v7579 = vunpack.c.l.b16 %v7387
        %v7580 = vunpack.c.h.b16 %v7387
        %v7581 = vunpack.c.l.b16 %v7388
        %v7582 = vunpack.c.h.b16 %v7388
        %v7583 = vpack.c.b16 %v7463, %v7455
        %v7584 = vpack.c.b16 %v7464, %v7456
        %v7585 = vpack.c.b16 %v7465, %v7457
        %v7586 = vpack.c.b16 %v7466, %v7458
        %v7587 = vpack.c.b16 %v7467, %v7459
        %v7588 = vpack.c.b16 %v7468, %v7460
        %v7589 = vpack.c.b16 %v7469, %v7461
        %v7590 = vpack.c.b16 %v7470, %v7462
        %v7591 = vpack.c.b16 %v7479, %v7471
        %v7592 = vpack.c.b16 %v7480, %v7472
        %v7593 = vpack.c.b16 %v7481, %v7473
        %v7594 = vpack.c.b16 %v7482, %v7474
        %v7595 = vpack.c.b16 %v7483, %v7475
        %v7596 = vpack.c.b16 %v7484, %v7476
        %v7597 = vpack.c.b16 %v7485, %v7477
        %v7598 = vpack.c.b16 %v7486, %v7478
        %v7599 = vpack.c.b16 %v7495, %v7487
        %v7600 = vpack.c.b16 %v7496, %v7488
        %v7601 = vpack.c.b16 %v7497, %v7489
        %v7602 = vpack.c.b16 %v7498, %v7490
        %v7603 = vpack.c.b16 %v7499, %v7491
        %v7604 = vpack.c.b16 %v7500, %v7492
        %v7605 = vpack.c.b16 %v7501, %v7493
        %v7606 = vpack.c.b16 %v7502, %v7494
        %v7607 = vpack.c.b16 %v7511, %v7503
        %v7608 = vpack.c.b16 %v7512, %v7504
        %v7609 = vpack.c.b16 %v7513, %v7505
        %v7610 = vpack.c.b16 %v7514, %v7506
        %v7611 = vpack.c.b16 %v7515, %v7507
        %v7612 = vpack.c.b16 %v7516, %v7508
        %v7613 = vpack.c.b16 %v7517, %v7509
        %v7614 = vpack.c.b16 %v7518, %v7510
        %v7615 = vpack.c.b16 %v7527, %v7519
        %v7616 = vpack.c.b16 %v7528, %v7520
        %v7617 = vpack.c.b16 %v7529, %v7521
        %v7618 = vpack.c.b16 %v7530, %v7522
        %v7619 = vpack.c.b16 %v7531, %v7523
        %v7620 = vpack.c.b16 %v7532, %v7524
        %v7621 = vpack.c.b16 %v7533, %v7525
        %v7622 = vpack.c.b16 %v7534, %v7526
        %v7623 = vpack.c.b16 %v7543, %v7535
        %v7624 = vpack.c.b16 %v7544, %v7536
        %v7625 = vpack.c.b16 %v7545, %v7537
        %v7626 = vpack.c.b16 %v7546, %v7538
        %v7627 = vpack.c.b16 %v7547, %v7539
        %v7628 = vpack.c.b16 %v7548, %v7540
        %v7629 = vpack.c.b16 %v7549, %v7541
        %v7630 = vpack.c.b16 %v7550, %v7542
        %v7631 = vpack.c.b16 %v7559, %v7551
        %v7632 = vpack.c.b16 %v7560, %v7552
        %v7633 = vpack.c.b16 %v7561, %v7553
        %v7634 = vpack.c.b16 %v7562, %v7554
        %v7635 = vpack.c.b16 %v7563, %v7555
        %v7636 = vpack.c.b16 %v7564, %v7556
        %v7637 = vpack.c.b16 %v7565, %v7557
        %v7638 = vpack.c.b16 %v7566, %v7558
        %v7639 = vpack.c.b16 %v7575, %v7567
        %v7640 = vpack.c.b16 %v7576, %v7568
        %v7641 = vpack.c.b16 %v7577, %v7569
        %v7642 = vpack.c.b16 %v7578, %v7570
        %v7643 = vpack.c.b16 %v7579, %v7571
        %v7644 = vpack.c.b16 %v7580, %v7572
        %v7645 = vpack.c.b16 %v7581, %v7573
        %v7646 = vpack.c.b16 %v7582, %v7574
        %7711 = vmatprep.subr.bf16.mxu0 %v7584
        %7712 = vmatpush1.bf16.msra.mxu0 %v7583
        %7713 = vmatprep.subr.bf16.mxu0 %v7592
        %7714 = vmatpush1.bf16.msra.mxu0 %v7591
        %7715 = vmatprep.subr.bf16.mxu0 %v7600
        %7716 = vmatpush1.bf16.msra.mxu0 %v7599
        %7717 = vmatprep.subr.bf16.mxu0 %v7608
        %7718 = vmatpush1.bf16.msra.mxu0 %v7607
        %7719 = vmatprep.subr.bf16.mxu0 %v7616
        %7720 = vmatpush1.bf16.msra.mxu0 %v7615
        %7721 = vmatprep.subr.bf16.mxu0 %v7624
        %7722 = vmatpush1.bf16.msra.mxu0 %v7623
        %7723 = vmatprep.subr.bf16.mxu0 %v7632
        %7724 = vmatpush1.bf16.msra.mxu0 %v7631
        %7725 = vmatprep.subr.bf16.mxu0 %v7640
        %7726 = vmatpush1.bf16.msra.mxu0 %v7639
        %7727 = vmatprep.subr.bf16.mxu0 0
        %7728 = vmatpush1.bf16.msra.mxu0 0
        %7729 = vmatprep.subr.bf16.mxu0 0
        %7730 = vmatpush1.bf16.msra.mxu0 0
        %7731 = vmatprep.subr.bf16.mxu0 0
        %7732 = vmatpush1.bf16.msra.mxu0 0
        %7733 = vmatprep.subr.bf16.mxu0 0
        %7734 = vmatpush1.bf16.msra.mxu0 0
        %7735 = vmatprep.subr.bf16.mxu0 0
        %7736 = vmatpush1.bf16.msra.mxu0 0
        %7737 = vmatprep.subr.bf16.mxu0 0
        %7738 = vmatpush1.bf16.msra.mxu0 0
        %7739 = vmatprep.subr.bf16.mxu0 0
        %7740 = vmatpush1.bf16.msra.mxu0 0
        %7741 = vmatprep.subr.bf16.mxu0 0
        %7742 = vmatpush1.bf16.msra.mxu0 0
        %7743 = vmatprep.mubr.bf16.mxu0 0
        %7744 = vmatmul.mubr.bf16.gmra.mrb[0].mxu0 %v7389
        %v7745 = vpop.f32.mrb[0].mxu0
        %v7746 = vadd.f32 0.0, %v7745
        %v7747 = vpop.f32.mrb[0].mxu0
        %v7748 = vadd.f32 0.0, %v7747
        %v7749 = vpop.f32.mrb[0].mxu0
        %v7750 = vpop.f32.mrb[0].mxu0
        %7751 = vdwg.mxu0
        %7752 = vmatprep.subr.bf16.mxu0 %v7586
        %7753 = vmatpush1.bf16.msra.mxu0 %v7585
        %7754 = vmatprep.subr.bf16.mxu0 %v7594
        %7755 = vmatpush1.bf16.msra.mxu0 %v7593
        %7756 = vmatprep.subr.bf16.mxu0 %v7602
        %7757 = vmatpush1.bf16.msra.mxu0 %v7601
        %7758 = vmatprep.subr.bf16.mxu0 %v7610
        %7759 = vmatpush1.bf16.msra.mxu0 %v7609
        %7760 = vmatprep.subr.bf16.mxu0 %v7618
        %7761 = vmatpush1.bf16.msra.mxu0 %v7617
        %7762 = vmatprep.subr.bf16.mxu0 %v7626
        %7763 = vmatpush1.bf16.msra.mxu0 %v7625
        %7764 = vmatprep.subr.bf16.mxu0 %v7634
        %7765 = vmatpush1.bf16.msra.mxu0 %v7633
        %7766 = vmatprep.subr.bf16.mxu0 %v7642
        %7767 = vmatpush1.bf16.msra.mxu0 %v7641
        %7768 = vmatprep.subr.bf16.mxu0 0
        %7769 = vmatpush1.bf16.msra.mxu0 0
        %7770 = vmatprep.subr.bf16.mxu0 0
        %7771 = vmatpush1.bf16.msra.mxu0 0
        %7772 = vmatprep.subr.bf16.mxu0 0
        %7773 = vmatpush1.bf16.msra.mxu0 0
        %7774 = vmatprep.subr.bf16.mxu0 0
        %7775 = vmatpush1.bf16.msra.mxu0 0
        %7776 = vmatprep.subr.bf16.mxu0 0
        %7777 = vmatpush1.bf16.msra.mxu0 0
        %7778 = vmatprep.subr.bf16.mxu0 0
        %7779 = vmatpush1.bf16.msra.mxu0 0
        %7780 = vmatprep.subr.bf16.mxu0 0
        %7781 = vmatpush1.bf16.msra.mxu0 0
        %7782 = vmatprep.subr.bf16.mxu0 0
        %7783 = vmatpush1.bf16.msra.mxu0 0
        %7784 = vmatprep.mubr.bf16.mxu0 0
        %7785 = vmatmul.mubr.bf16.gmra.mrb[0].mxu0 %v7389
        %v7786 = vpop.f32.mrb[0].mxu0
        %v7787 = vadd.f32 0.0, %v7786
        %v7788 = vpop.f32.mrb[0].mxu0
        %v7789 = vadd.f32 0.0, %v7788
        %v7790 = vpop.f32.mrb[0].mxu0
        %v7791 = vpop.f32.mrb[0].mxu0
        %7792 = vdwg.mxu0
        %7793 = vmatprep.subr.bf16.mxu0 %v7588
        %7794 = vmatpush1.bf16.msra.mxu0 %v7587
        %7795 = vmatprep.subr.bf16.mxu0 %v7596
        %7796 = vmatpush1.bf16.msra.mxu0 %v7595
        %7797 = vmatprep.subr.bf16.mxu0 %v7604
        %7798 = vmatpush1.bf16.msra.mxu0 %v7603
        %7799 = vmatprep.subr.bf16.mxu0 %v7612
        %7800 = vmatpush1.bf16.msra.mxu0 %v7611
        %7801 = vmatprep.subr.bf16.mxu0 %v7620
        %7802 = vmatpush1.bf16.msra.mxu0 %v7619
        %7803 = vmatprep.subr.bf16.mxu0 %v7628
        %7804 = vmatpush1.bf16.msra.mxu0 %v7627
        %7805 = vmatprep.subr.bf16.mxu0 %v7636
        %7806 = vmatpush1.bf16.msra.mxu0 %v7635
        %7807 = vmatprep.subr.bf16.mxu0 %v7644
        %7808 = vmatpush1.bf16.msra.mxu0 %v7643
        %7809 = vmatprep.subr.bf16.mxu0 0
        %7810 = vmatpush1.bf16.msra.mxu0 0
        %7811 = vmatprep.subr.bf16.mxu0 0
        %7812 = vmatpush1.bf16.msra.mxu0 0
        %7813 = vmatprep.subr.bf16.mxu0 0
        %7814 = vmatpush1.bf16.msra.mxu0 0
        %7815 = vmatprep.subr.bf16.mxu0 0
        %7816 = vmatpush1.bf16.msra.mxu0 0
        %7817 = vmatprep.subr.bf16.mxu0 0
        %7818 = vmatpush1.bf16.msra.mxu0 0
        %7819 = vmatprep.subr.bf16.mxu0 0
        %7820 = vmatpush1.bf16.msra.mxu0 0
        %7821 = vmatprep.subr.bf16.mxu0 0
        %7822 = vmatpush1.bf16.msra.mxu0 0
        %7823 = vmatprep.subr.bf16.mxu0 0
        %7824 = vmatpush1.bf16.msra.mxu0 0
        %7825 = vmatprep.mubr.bf16.mxu0 0
        %7826 = vmatmul.mubr.bf16.gmra.mrb[0].mxu0 %v7389
        %v7827 = vpop.f32.mrb[0].mxu0
        %v7828 = vadd.f32 0.0, %v7827
        %v7829 = vpop.f32.mrb[0].mxu0
        %v7830 = vadd.f32 0.0, %v7829
        %v7831 = vpop.f32.mrb[0].mxu0
        %v7832 = vpop.f32.mrb[0].mxu0
        %7833 = vdwg.mxu0
        %7834 = vmatprep.subr.bf16.mxu0 %v7590
        %7835 = vmatpush1.bf16.msra.mxu0 %v7589
        %7836 = vmatprep.subr.bf16.mxu0 %v7598
        %7837 = vmatpush1.bf16.msra.mxu0 %v7597
        %7838 = vmatprep.subr.bf16.mxu0 %v7606
        %7839 = vmatpush1.bf16.msra.mxu0 %v7605
        %7840 = vmatprep.subr.bf16.mxu0 %v7614
        %7841 = vmatpush1.bf16.msra.mxu0 %v7613
        %7842 = vmatprep.subr.bf16.mxu0 %v7622
        %7843 = vmatpush1.bf16.msra.mxu0 %v7621
        %7844 = vmatprep.subr.bf16.mxu0 %v7630
        %7845 = vmatpush1.bf16.msra.mxu0 %v7629
        %7846 = vmatprep.subr.bf16.mxu0 %v7638
        %7847 = vmatpush1.bf16.msra.mxu0 %v7637
        %7848 = vmatprep.subr.bf16.mxu0 %v7646
        %7849 = vmatpush1.bf16.msra.mxu0 %v7645
        %7850 = vmatprep.subr.bf16.mxu0 0
        %7851 = vmatpush1.bf16.msra.mxu0 0
        %7852 = vmatprep.subr.bf16.mxu0 0
        %7853 = vmatpush1.bf16.msra.mxu0 0
        %7854 = vmatprep.subr.bf16.mxu0 0
        %7855 = vmatpush1.bf16.msra.mxu0 0
        %7856 = vmatprep.subr.bf16.mxu0 0
        %7857 = vmatpush1.bf16.msra.mxu0 0
        %7858 = vmatprep.subr.bf16.mxu0 0
        %7859 = vmatpush1.bf16.msra.mxu0 0
        %7860 = vmatprep.subr.bf16.mxu0 0
        %7861 = vmatpush1.bf16.msra.mxu0 0
        %7862 = vmatprep.subr.bf16.mxu0 0
        %7863 = vmatpush1.bf16.msra.mxu0 0
        %7864 = vmatprep.subr.bf16.mxu0 0
        %7865 = vmatpush1.bf16.msra.mxu0 0
        %7866 = vmatprep.mubr.bf16.mxu0 0
        %7867 = vmatmul.mubr.bf16.gmra.mrb[0].mxu0 %v7389
        %v7868 = vpop.f32.mrb[0].mxu0
        %v7869 = vadd.f32 0.0, %v7868
        %v7870 = vpop.f32.mrb[0].mxu0
        %v7871 = vadd.f32 0.0, %v7870
        %v7872 = vpop.f32.mrb[0].mxu0
        %v7873 = vpop.f32.mrb[0].mxu0
        %7874 = vdwg.mxu0
        %v7875 = vadd.f32 %v7317, %v7746
        %v7876 = vadd.f32 %v7318, %v7748
        %v7877 = vadd.f32 %v7319, %v7787
        %v7878 = vadd.f32 %v7320, %v7789
        %v7879 = vadd.f32 %v7321, %v7828
        %v7880 = vadd.f32 %v7322, %v7830
        %v7881 = vadd.f32 %v7323, %v7869
        %v7882 = vadd.f32 %v7324, %v7871
        %v7883 = vld [vmem:[#allocation8 + $0x1a00] sm:$0xff]
        %v7884 = vld [vmem:[#allocation8 + $0x1a08] sm:$0xff]
        %v7885 = vld [vmem:[#allocation8 + $0x1a10] sm:$0xff]
        %v7886 = vld [vmem:[#allocation8 + $0x1a18] sm:$0xff]
        %v7887 = vld [vmem:[#allocation8 + $0x1a20] sm:$0xff]
        %v7888 = vld [vmem:[#allocation8 + $0x1a28] sm:$0xff]
        %v7889 = vld [vmem:[#allocation8 + $0x1a30] sm:$0xff]
        %v7890 = vld [vmem:[#allocation8 + $0x1a38] sm:$0xff]
        %v7891 = vld [vmem:[#allocation8 + $0x1a40] sm:$0xff]
        %v7892 = vld [vmem:[#allocation8 + $0x1a48] sm:$0xff]
        %v7893 = vld [vmem:[#allocation8 + $0x1a50] sm:$0xff]
        %v7894 = vld [vmem:[#allocation8 + $0x1a58] sm:$0xff]
        %v7895 = vld [vmem:[#allocation8 + $0x1a60] sm:$0xff]
        %v7896 = vld [vmem:[#allocation8 + $0x1a68] sm:$0xff]
        %v7897 = vld [vmem:[#allocation8 + $0x1a70] sm:$0xff]
        %v7898 = vld [vmem:[#allocation8 + $0x1a78] sm:$0xff]
        %v7899 = vld [vmem:[#allocation8 + $0x1a80] sm:$0xff]
        %v7900 = vld [vmem:[#allocation8 + $0x1a88] sm:$0xff]
        %v7901 = vld [vmem:[#allocation8 + $0x1a90] sm:$0xff]
        %v7902 = vld [vmem:[#allocation8 + $0x1a98] sm:$0xff]
        %v7903 = vld [vmem:[#allocation8 + $0x1aa0] sm:$0xff]
        %v7904 = vld [vmem:[#allocation8 + $0x1aa8] sm:$0xff]
        %v7905 = vld [vmem:[#allocation8 + $0x1ab0] sm:$0xff]
        %v7906 = vld [vmem:[#allocation8 + $0x1ab8] sm:$0xff]
        %v7907 = vld [vmem:[#allocation8 + $0x1ac0] sm:$0xff]
        %v7908 = vld [vmem:[#allocation8 + $0x1ac8] sm:$0xff]
        %v7909 = vld [vmem:[#allocation8 + $0x1ad0] sm:$0xff]
        %v7910 = vld [vmem:[#allocation8 + $0x1ad8] sm:$0xff]
        %v7911 = vld [vmem:[#allocation8 + $0x1ae0] sm:$0xff]
        %v7912 = vld [vmem:[#allocation8 + $0x1ae8] sm:$0xff]
        %v7913 = vld [vmem:[#allocation8 + $0x1af0] sm:$0xff]
        %v7914 = vld [vmem:[#allocation8 + $0x1af8] sm:$0xff]
        %v7915 = vld [vmem:[#allocation8 + $0x1b00] sm:$0xff]
        %v7916 = vld [vmem:[#allocation8 + $0x1b08] sm:$0xff]
        %v7917 = vld [vmem:[#allocation8 + $0x1b10] sm:$0xff]
        %v7918 = vld [vmem:[#allocation8 + $0x1b18] sm:$0xff]
        %v7919 = vld [vmem:[#allocation8 + $0x1b20] sm:$0xff]
        %v7920 = vld [vmem:[#allocation8 + $0x1b28] sm:$0xff]
        %v7921 = vld [vmem:[#allocation8 + $0x1b30] sm:$0xff]
        %v7922 = vld [vmem:[#allocation8 + $0x1b38] sm:$0xff]
        %v7923 = vld [vmem:[#allocation8 + $0x1b40] sm:$0xff]
        %v7924 = vld [vmem:[#allocation8 + $0x1b48] sm:$0xff]
        %v7925 = vld [vmem:[#allocation8 + $0x1b50] sm:$0xff]
        %v7926 = vld [vmem:[#allocation8 + $0x1b58] sm:$0xff]
        %v7927 = vld [vmem:[#allocation8 + $0x1b60] sm:$0xff]
        %v7928 = vld [vmem:[#allocation8 + $0x1b68] sm:$0xff]
        %v7929 = vld [vmem:[#allocation8 + $0x1b70] sm:$0xff]
        %v7930 = vld [vmem:[#allocation8 + $0x1b78] sm:$0xff]
        %v7931 = vld [vmem:[#allocation8 + $0x1b80] sm:$0xff]
        %v7932 = vld [vmem:[#allocation8 + $0x1b88] sm:$0xff]
        %v7933 = vld [vmem:[#allocation8 + $0x1b90] sm:$0xff]
        %v7934 = vld [vmem:[#allocation8 + $0x1b98] sm:$0xff]
        %v7935 = vld [vmem:[#allocation8 + $0x1ba0] sm:$0xff]
        %v7936 = vld [vmem:[#allocation8 + $0x1ba8] sm:$0xff]
        %v7937 = vld [vmem:[#allocation8 + $0x1bb0] sm:$0xff]
        %v7938 = vld [vmem:[#allocation8 + $0x1bb8] sm:$0xff]
        %v7939 = vld [vmem:[#allocation8 + $0x1bc0] sm:$0xff]
        %v7940 = vld [vmem:[#allocation8 + $0x1bc8] sm:$0xff]
        %v7941 = vld [vmem:[#allocation8 + $0x1bd0] sm:$0xff]
        %v7942 = vld [vmem:[#allocation8 + $0x1bd8] sm:$0xff]
        %v7943 = vld [vmem:[#allocation8 + $0x1be0] sm:$0xff]
        %v7944 = vld [vmem:[#allocation8 + $0x1be8] sm:$0xff]
        %v7945 = vld [vmem:[#allocation8 + $0x1bf0] sm:$0xff]
        %v7946 = vld [vmem:[#allocation8 + $0x1bf8] sm:$0xff]
        %v7947 = vrot.slane %v5713, 2
        %v8013 = vunpack.c.l.b16 %v7883
        %v8014 = vunpack.c.h.b16 %v7883
        %v8015 = vunpack.c.l.b16 %v7884
        %v8016 = vunpack.c.h.b16 %v7884
        %v8017 = vunpack.c.l.b16 %v7885
        %v8018 = vunpack.c.h.b16 %v7885
        %v8019 = vunpack.c.l.b16 %v7886
        %v8020 = vunpack.c.h.b16 %v7886
        %v8021 = vunpack.c.l.b16 %v7887
        %v8022 = vunpack.c.h.b16 %v7887
        %v8023 = vunpack.c.l.b16 %v7888
        %v8024 = vunpack.c.h.b16 %v7888
        %v8025 = vunpack.c.l.b16 %v7889
        %v8026 = vunpack.c.h.b16 %v7889
        %v8027 = vunpack.c.l.b16 %v7890
        %v8028 = vunpack.c.h.b16 %v7890
        %v8029 = vunpack.c.l.b16 %v7891
        %v8030 = vunpack.c.h.b16 %v7891
        %v8031 = vunpack.c.l.b16 %v7892
        %v8032 = vunpack.c.h.b16 %v7892
        %v8033 = vunpack.c.l.b16 %v7893
        %v8034 = vunpack.c.h.b16 %v7893
        %v8035 = vunpack.c.l.b16 %v7894
        %v8036 = vunpack.c.h.b16 %v7894
        %v8037 = vunpack.c.l.b16 %v7895
        %v8038 = vunpack.c.h.b16 %v7895
        %v8039 = vunpack.c.l.b16 %v7896
        %v8040 = vunpack.c.h.b16 %v7896
        %v8041 = vunpack.c.l.b16 %v7897
        %v8042 = vunpack.c.h.b16 %v7897
        %v8043 = vunpack.c.l.b16 %v7898
        %v8044 = vunpack.c.h.b16 %v7898
        %v8045 = vunpack.c.l.b16 %v7899
        %v8046 = vunpack.c.h.b16 %v7899
        %v8047 = vunpack.c.l.b16 %v7900
        %v8048 = vunpack.c.h.b16 %v7900
        %v8049 = vunpack.c.l.b16 %v7901
        %v8050 = vunpack.c.h.b16 %v7901
        %v8051 = vunpack.c.l.b16 %v7902
        %v8052 = vunpack.c.h.b16 %v7902
        %v8053 = vunpack.c.l.b16 %v7903
        %v8054 = vunpack.c.h.b16 %v7903
        %v8055 = vunpack.c.l.b16 %v7904
        %v8056 = vunpack.c.h.b16 %v7904
        %v8057 = vunpack.c.l.b16 %v7905
        %v8058 = vunpack.c.h.b16 %v7905
        %v8059 = vunpack.c.l.b16 %v7906
        %v8060 = vunpack.c.h.b16 %v7906
        %v8061 = vunpack.c.l.b16 %v7907
        %v8062 = vunpack.c.h.b16 %v7907
        %v8063 = vunpack.c.l.b16 %v7908
        %v8064 = vunpack.c.h.b16 %v7908
        %v8065 = vunpack.c.l.b16 %v7909
        %v8066 = vunpack.c.h.b16 %v7909
        %v8067 = vunpack.c.l.b16 %v7910
        %v8068 = vunpack.c.h.b16 %v7910
        %v8069 = vunpack.c.l.b16 %v7911
        %v8070 = vunpack.c.h.b16 %v7911
        %v8071 = vunpack.c.l.b16 %v7912
        %v8072 = vunpack.c.h.b16 %v7912
        %v8073 = vunpack.c.l.b16 %v7913
        %v8074 = vunpack.c.h.b16 %v7913
        %v8075 = vunpack.c.l.b16 %v7914
        %v8076 = vunpack.c.h.b16 %v7914
        %v8077 = vunpack.c.l.b16 %v7915
        %v8078 = vunpack.c.h.b16 %v7915
        %v8079 = vunpack.c.l.b16 %v7916
        %v8080 = vunpack.c.h.b16 %v7916
        %v8081 = vunpack.c.l.b16 %v7917
        %v8082 = vunpack.c.h.b16 %v7917
        %v8083 = vunpack.c.l.b16 %v7918
        %v8084 = vunpack.c.h.b16 %v7918
        %v8085 = vunpack.c.l.b16 %v7919
        %v8086 = vunpack.c.h.b16 %v7919
        %v8087 = vunpack.c.l.b16 %v7920
        %v8088 = vunpack.c.h.b16 %v7920
        %v8089 = vunpack.c.l.b16 %v7921
        %v8090 = vunpack.c.h.b16 %v7921
        %v8091 = vunpack.c.l.b16 %v7922
        %v8092 = vunpack.c.h.b16 %v7922
        %v8093 = vunpack.c.l.b16 %v7923
        %v8094 = vunpack.c.h.b16 %v7923
        %v8095 = vunpack.c.l.b16 %v7924
        %v8096 = vunpack.c.h.b16 %v7924
        %v8097 = vunpack.c.l.b16 %v7925
        %v8098 = vunpack.c.h.b16 %v7925
        %v8099 = vunpack.c.l.b16 %v7926
        %v8100 = vunpack.c.h.b16 %v7926
        %v8101 = vunpack.c.l.b16 %v7927
        %v8102 = vunpack.c.h.b16 %v7927
        %v8103 = vunpack.c.l.b16 %v7928
        %v8104 = vunpack.c.h.b16 %v7928
        %v8105 = vunpack.c.l.b16 %v7929
        %v8106 = vunpack.c.h.b16 %v7929
        %v8107 = vunpack.c.l.b16 %v7930
        %v8108 = vunpack.c.h.b16 %v7930
        %v8109 = vunpack.c.l.b16 %v7931
        %v8110 = vunpack.c.h.b16 %v7931
        %v8111 = vunpack.c.l.b16 %v7932
        %v8112 = vunpack.c.h.b16 %v7932
        %v8113 = vunpack.c.l.b16 %v7933
        %v8114 = vunpack.c.h.b16 %v7933
        %v8115 = vunpack.c.l.b16 %v7934
        %v8116 = vunpack.c.h.b16 %v7934
        %v8117 = vunpack.c.l.b16 %v7935
        %v8118 = vunpack.c.h.b16 %v7935
        %v8119 = vunpack.c.l.b16 %v7936
        %v8120 = vunpack.c.h.b16 %v7936
        %v8121 = vunpack.c.l.b16 %v7937
        %v8122 = vunpack.c.h.b16 %v7937
        %v8123 = vunpack.c.l.b16 %v7938
        %v8124 = vunpack.c.h.b16 %v7938
        %v8125 = vunpack.c.l.b16 %v7939
        %v8126 = vunpack.c.h.b16 %v7939
        %v8127 = vunpack.c.l.b16 %v7940
        %v8128 = vunpack.c.h.b16 %v7940
        %v8129 = vunpack.c.l.b16 %v7941
        %v8130 = vunpack.c.h.b16 %v7941
        %v8131 = vunpack.c.l.b16 %v7942
        %v8132 = vunpack.c.h.b16 %v7942
        %v8133 = vunpack.c.l.b16 %v7943
        %v8134 = vunpack.c.h.b16 %v7943
        %v8135 = vunpack.c.l.b16 %v7944
        %v8136 = vunpack.c.h.b16 %v7944
        %v8137 = vunpack.c.l.b16 %v7945
        %v8138 = vunpack.c.h.b16 %v7945
        %v8139 = vunpack.c.l.b16 %v7946
        %v8140 = vunpack.c.h.b16 %v7946
        %v8141 = vpack.c.b16 %v8021, %v8013
        %v8142 = vpack.c.b16 %v8022, %v8014
        %v8143 = vpack.c.b16 %v8023, %v8015
        %v8144 = vpack.c.b16 %v8024, %v8016
        %v8145 = vpack.c.b16 %v8025, %v8017
        %v8146 = vpack.c.b16 %v8026, %v8018
        %v8147 = vpack.c.b16 %v8027, %v8019
        %v8148 = vpack.c.b16 %v8028, %v8020
        %v8149 = vpack.c.b16 %v8037, %v8029
        %v8150 = vpack.c.b16 %v8038, %v8030
        %v8151 = vpack.c.b16 %v8039, %v8031
        %v8152 = vpack.c.b16 %v8040, %v8032
        %v8153 = vpack.c.b16 %v8041, %v8033
        %v8154 = vpack.c.b16 %v8042, %v8034
        %v8155 = vpack.c.b16 %v8043, %v8035
        %v8156 = vpack.c.b16 %v8044, %v8036
        %v8157 = vpack.c.b16 %v8053, %v8045
        %v8158 = vpack.c.b16 %v8054, %v8046
        %v8159 = vpack.c.b16 %v8055, %v8047
        %v8160 = vpack.c.b16 %v8056, %v8048
        %v8161 = vpack.c.b16 %v8057, %v8049
        %v8162 = vpack.c.b16 %v8058, %v8050
        %v8163 = vpack.c.b16 %v8059, %v8051
        %v8164 = vpack.c.b16 %v8060, %v8052
        %v8165 = vpack.c.b16 %v8069, %v8061
        %v8166 = vpack.c.b16 %v8070, %v8062
        %v8167 = vpack.c.b16 %v8071, %v8063
        %v8168 = vpack.c.b16 %v8072, %v8064
        %v8169 = vpack.c.b16 %v8073, %v8065
        %v8170 = vpack.c.b16 %v8074, %v8066
        %v8171 = vpack.c.b16 %v8075, %v8067
        %v8172 = vpack.c.b16 %v8076, %v8068
        %v8173 = vpack.c.b16 %v8085, %v8077
        %v8174 = vpack.c.b16 %v8086, %v8078
        %v8175 = vpack.c.b16 %v8087, %v8079
        %v8176 = vpack.c.b16 %v8088, %v8080
        %v8177 = vpack.c.b16 %v8089, %v8081
        %v8178 = vpack.c.b16 %v8090, %v8082
        %v8179 = vpack.c.b16 %v8091, %v8083
        %v8180 = vpack.c.b16 %v8092, %v8084
        %v8181 = vpack.c.b16 %v8101, %v8093
        %v8182 = vpack.c.b16 %v8102, %v8094
        %v8183 = vpack.c.b16 %v8103, %v8095
        %v8184 = vpack.c.b16 %v8104, %v8096
        %v8185 = vpack.c.b16 %v8105, %v8097
        %v8186 = vpack.c.b16 %v8106, %v8098
        %v8187 = vpack.c.b16 %v8107, %v8099
        %v8188 = vpack.c.b16 %v8108, %v8100
        %v8189 = vpack.c.b16 %v8117, %v8109
        %v8190 = vpack.c.b16 %v8118, %v8110
        %v8191 = vpack.c.b16 %v8119, %v8111
        %v8192 = vpack.c.b16 %v8120, %v8112
        %v8193 = vpack.c.b16 %v8121, %v8113
        %v8194 = vpack.c.b16 %v8122, %v8114
        %v8195 = vpack.c.b16 %v8123, %v8115
        %v8196 = vpack.c.b16 %v8124, %v8116
        %v8197 = vpack.c.b16 %v8133, %v8125
        %v8198 = vpack.c.b16 %v8134, %v8126
        %v8199 = vpack.c.b16 %v8135, %v8127
        %v8200 = vpack.c.b16 %v8136, %v8128
        %v8201 = vpack.c.b16 %v8137, %v8129
        %v8202 = vpack.c.b16 %v8138, %v8130
        %v8203 = vpack.c.b16 %v8139, %v8131
        %v8204 = vpack.c.b16 %v8140, %v8132
        %8269 = vmatprep.subr.bf16.mxu0 %v8142
        %8270 = vmatpush1.bf16.msra.mxu0 %v8141
        %8271 = vmatprep.subr.bf16.mxu0 %v8150
        %8272 = vmatpush1.bf16.msra.mxu0 %v8149
        %8273 = vmatprep.subr.bf16.mxu0 %v8158
        %8274 = vmatpush1.bf16.msra.mxu0 %v8157
        %8275 = vmatprep.subr.bf16.mxu0 %v8166
        %8276 = vmatpush1.bf16.msra.mxu0 %v8165
        %8277 = vmatprep.subr.bf16.mxu0 %v8174
        %8278 = vmatpush1.bf16.msra.mxu0 %v8173
        %8279 = vmatprep.subr.bf16.mxu0 %v8182
        %8280 = vmatpush1.bf16.msra.mxu0 %v8181
        %8281 = vmatprep.subr.bf16.mxu0 %v8190
        %8282 = vmatpush1.bf16.msra.mxu0 %v8189
        %8283 = vmatprep.subr.bf16.mxu0 %v8198
        %8284 = vmatpush1.bf16.msra.mxu0 %v8197
        %8285 = vmatprep.subr.bf16.mxu0 0
        %8286 = vmatpush1.bf16.msra.mxu0 0
        %8287 = vmatprep.subr.bf16.mxu0 0
        %8288 = vmatpush1.bf16.msra.mxu0 0
        %8289 = vmatprep.subr.bf16.mxu0 0
        %8290 = vmatpush1.bf16.msra.mxu0 0
        %8291 = vmatprep.subr.bf16.mxu0 0
        %8292 = vmatpush1.bf16.msra.mxu0 0
        %8293 = vmatprep.subr.bf16.mxu0 0
        %8294 = vmatpush1.bf16.msra.mxu0 0
        %8295 = vmatprep.subr.bf16.mxu0 0
        %8296 = vmatpush1.bf16.msra.mxu0 0
        %8297 = vmatprep.subr.bf16.mxu0 0
        %8298 = vmatpush1.bf16.msra.mxu0 0
        %8299 = vmatprep.subr.bf16.mxu0 0
        %8300 = vmatpush1.bf16.msra.mxu0 0
        %8301 = vmatprep.mubr.bf16.mxu0 0
        %8302 = vmatmul.mubr.bf16.gmra.mrb[0].mxu0 %v7947
        %v8303 = vpop.f32.mrb[0].mxu0
        %v8304 = vadd.f32 0.0, %v8303
        %v8305 = vpop.f32.mrb[0].mxu0
        %v8306 = vadd.f32 0.0, %v8305
        %v8307 = vpop.f32.mrb[0].mxu0
        %v8308 = vpop.f32.mrb[0].mxu0
        %8309 = vdwg.mxu0
        %8310 = vmatprep.subr.bf16.mxu0 %v8144
        %8311 = vmatpush1.bf16.msra.mxu0 %v8143
        %8312 = vmatprep.subr.bf16.mxu0 %v8152
        %8313 = vmatpush1.bf16.msra.mxu0 %v8151
        %8314 = vmatprep.subr.bf16.mxu0 %v8160
        %8315 = vmatpush1.bf16.msra.mxu0 %v8159
        %8316 = vmatprep.subr.bf16.mxu0 %v8168
        %8317 = vmatpush1.bf16.msra.mxu0 %v8167
        %8318 = vmatprep.subr.bf16.mxu0 %v8176
        %8319 = vmatpush1.bf16.msra.mxu0 %v8175
        %8320 = vmatprep.subr.bf16.mxu0 %v8184
        %8321 = vmatpush1.bf16.msra.mxu0 %v8183
        %8322 = vmatprep.subr.bf16.mxu0 %v8192
        %8323 = vmatpush1.bf16.msra.mxu0 %v8191
        %8324 = vmatprep.subr.bf16.mxu0 %v8200
        %8325 = vmatpush1.bf16.msra.mxu0 %v8199
        %8326 = vmatprep.subr.bf16.mxu0 0
        %8327 = vmatpush1.bf16.msra.mxu0 0
        %8328 = vmatprep.subr.bf16.mxu0 0
        %8329 = vmatpush1.bf16.msra.mxu0 0
        %8330 = vmatprep.subr.bf16.mxu0 0
        %8331 = vmatpush1.bf16.msra.mxu0 0
        %8332 = vmatprep.subr.bf16.mxu0 0
        %8333 = vmatpush1.bf16.msra.mxu0 0
        %8334 = vmatprep.subr.bf16.mxu0 0
        %8335 = vmatpush1.bf16.msra.mxu0 0
        %8336 = vmatprep.subr.bf16.mxu0 0
        %8337 = vmatpush1.bf16.msra.mxu0 0
        %8338 = vmatprep.subr.bf16.mxu0 0
        %8339 = vmatpush1.bf16.msra.mxu0 0
        %8340 = vmatprep.subr.bf16.mxu0 0
        %8341 = vmatpush1.bf16.msra.mxu0 0
        %8342 = vmatprep.mubr.bf16.mxu0 0
        %8343 = vmatmul.mubr.bf16.gmra.mrb[0].mxu0 %v7947
        %v8344 = vpop.f32.mrb[0].mxu0
        %v8345 = vadd.f32 0.0, %v8344
        %v8346 = vpop.f32.mrb[0].mxu0
        %v8347 = vadd.f32 0.0, %v8346
        %v8348 = vpop.f32.mrb[0].mxu0
        %v8349 = vpop.f32.mrb[0].mxu0
        %8350 = vdwg.mxu0
        %8351 = vmatprep.subr.bf16.mxu0 %v8146
        %8352 = vmatpush1.bf16.msra.mxu0 %v8145
        %8353 = vmatprep.subr.bf16.mxu0 %v8154
        %8354 = vmatpush1.bf16.msra.mxu0 %v8153
        %8355 = vmatprep.subr.bf16.mxu0 %v8162
        %8356 = vmatpush1.bf16.msra.mxu0 %v8161
        %8357 = vmatprep.subr.bf16.mxu0 %v8170
        %8358 = vmatpush1.bf16.msra.mxu0 %v8169
        %8359 = vmatprep.subr.bf16.mxu0 %v8178
        %8360 = vmatpush1.bf16.msra.mxu0 %v8177
        %8361 = vmatprep.subr.bf16.mxu0 %v8186
        %8362 = vmatpush1.bf16.msra.mxu0 %v8185
        %8363 = vmatprep.subr.bf16.mxu0 %v8194
        %8364 = vmatpush1.bf16.msra.mxu0 %v8193
        %8365 = vmatprep.subr.bf16.mxu0 %v8202
        %8366 = vmatpush1.bf16.msra.mxu0 %v8201
        %8367 = vmatprep.subr.bf16.mxu0 0
        %8368 = vmatpush1.bf16.msra.mxu0 0
        %8369 = vmatprep.subr.bf16.mxu0 0
        %8370 = vmatpush1.bf16.msra.mxu0 0
        %8371 = vmatprep.subr.bf16.mxu0 0
        %8372 = vmatpush1.bf16.msra.mxu0 0
        %8373 = vmatprep.subr.bf16.mxu0 0
        %8374 = vmatpush1.bf16.msra.mxu0 0
        %8375 = vmatprep.subr.bf16.mxu0 0
        %8376 = vmatpush1.bf16.msra.mxu0 0
        %8377 = vmatprep.subr.bf16.mxu0 0
        %8378 = vmatpush1.bf16.msra.mxu0 0
        %8379 = vmatprep.subr.bf16.mxu0 0
        %8380 = vmatpush1.bf16.msra.mxu0 0
        %8381 = vmatprep.subr.bf16.mxu0 0
        %8382 = vmatpush1.bf16.msra.mxu0 0
        %8383 = vmatprep.mubr.bf16.mxu0 0
        %8384 = vmatmul.mubr.bf16.gmra.mrb[0].mxu0 %v7947
        %v8385 = vpop.f32.mrb[0].mxu0
        %v8386 = vadd.f32 0.0, %v8385
        %v8387 = vpop.f32.mrb[0].mxu0
        %v8388 = vadd.f32 0.0, %v8387
        %v8389 = vpop.f32.mrb[0].mxu0
        %v8390 = vpop.f32.mrb[0].mxu0
        %8391 = vdwg.mxu0
        %8392 = vmatprep.subr.bf16.mxu0 %v8148
        %8393 = vmatpush1.bf16.msra.mxu0 %v8147
        %8394 = vmatprep.subr.bf16.mxu0 %v8156
        %8395 = vmatpush1.bf16.msra.mxu0 %v8155
        %8396 = vmatprep.subr.bf16.mxu0 %v8164
        %8397 = vmatpush1.bf16.msra.mxu0 %v8163
        %8398 = vmatprep.subr.bf16.mxu0 %v8172
        %8399 = vmatpush1.bf16.msra.mxu0 %v8171
        %8400 = vmatprep.subr.bf16.mxu0 %v8180
        %8401 = vmatpush1.bf16.msra.mxu0 %v8179
        %8402 = vmatprep.subr.bf16.mxu0 %v8188
        %8403 = vmatpush1.bf16.msra.mxu0 %v8187
        %8404 = vmatprep.subr.bf16.mxu0 %v8196
        %8405 = vmatpush1.bf16.msra.mxu0 %v8195
        %8406 = vmatprep.subr.bf16.mxu0 %v8204
        %8407 = vmatpush1.bf16.msra.mxu0 %v8203
        %8408 = vmatprep.subr.bf16.mxu0 0
        %8409 = vmatpush1.bf16.msra.mxu0 0
        %8410 = vmatprep.subr.bf16.mxu0 0
        %8411 = vmatpush1.bf16.msra.mxu0 0
        %8412 = vmatprep.subr.bf16.mxu0 0
        %8413 = vmatpush1.bf16.msra.mxu0 0
        %8414 = vmatprep.subr.bf16.mxu0 0
        %8415 = vmatpush1.bf16.msra.mxu0 0
        %8416 = vmatprep.subr.bf16.mxu0 0
        %8417 = vmatpush1.bf16.msra.mxu0 0
        %8418 = vmatprep.subr.bf16.mxu0 0
        %8419 = vmatpush1.bf16.msra.mxu0 0
        %8420 = vmatprep.subr.bf16.mxu0 0
        %8421 = vmatpush1.bf16.msra.mxu0 0
        %8422 = vmatprep.subr.bf16.mxu0 0
        %8423 = vmatpush1.bf16.msra.mxu0 0
        %8424 = vmatprep.mubr.bf16.mxu0 0
        %8425 = vmatmul.mubr.bf16.gmra.mrb[0].mxu0 %v7947
        %v8426 = vpop.f32.mrb[0].mxu0
        %v8427 = vadd.f32 0.0, %v8426
        %v8428 = vpop.f32.mrb[0].mxu0
        %v8429 = vadd.f32 0.0, %v8428
        %v8430 = vpop.f32.mrb[0].mxu0
        %v8431 = vpop.f32.mrb[0].mxu0
        %8432 = vdwg.mxu0
        %v8433 = vadd.f32 %v7875, %v8304
        %v8434 = vadd.f32 %v7876, %v8306
        %v8435 = vadd.f32 %v7877, %v8345
        %v8436 = vadd.f32 %v7878, %v8347
        %v8437 = vadd.f32 %v7879, %v8386
        %v8438 = vadd.f32 %v7880, %v8388
        %v8439 = vadd.f32 %v7881, %v8427
        %v8440 = vadd.f32 %v7882, %v8429
        %v8441 = vld [vmem:[#allocation8 + $0x1c00] sm:$0xff]
        %v8442 = vld [vmem:[#allocation8 + $0x1c08] sm:$0xff]
        %v8443 = vld [vmem:[#allocation8 + $0x1c10] sm:$0xff]
        %v8444 = vld [vmem:[#allocation8 + $0x1c18] sm:$0xff]
        %v8445 = vld [vmem:[#allocation8 + $0x1c20] sm:$0xff]
        %v8446 = vld [vmem:[#allocation8 + $0x1c28] sm:$0xff]
        %v8447 = vld [vmem:[#allocation8 + $0x1c30] sm:$0xff]
        %v8448 = vld [vmem:[#allocation8 + $0x1c38] sm:$0xff]
        %v8449 = vld [vmem:[#allocation8 + $0x1c40] sm:$0xff]
        %v8450 = vld [vmem:[#allocation8 + $0x1c48] sm:$0xff]
        %v8451 = vld [vmem:[#allocation8 + $0x1c50] sm:$0xff]
        %v8452 = vld [vmem:[#allocation8 + $0x1c58] sm:$0xff]
        %v8453 = vld [vmem:[#allocation8 + $0x1c60] sm:$0xff]
        %v8454 = vld [vmem:[#allocation8 + $0x1c68] sm:$0xff]
        %v8455 = vld [vmem:[#allocation8 + $0x1c70] sm:$0xff]
        %v8456 = vld [vmem:[#allocation8 + $0x1c78] sm:$0xff]
        %v8457 = vld [vmem:[#allocation8 + $0x1c80] sm:$0xff]
        %v8458 = vld [vmem:[#allocation8 + $0x1c88] sm:$0xff]
        %v8459 = vld [vmem:[#allocation8 + $0x1c90] sm:$0xff]
        %v8460 = vld [vmem:[#allocation8 + $0x1c98] sm:$0xff]
        %v8461 = vld [vmem:[#allocation8 + $0x1ca0] sm:$0xff]
        %v8462 = vld [vmem:[#allocation8 + $0x1ca8] sm:$0xff]
        %v8463 = vld [vmem:[#allocation8 + $0x1cb0] sm:$0xff]
        %v8464 = vld [vmem:[#allocation8 + $0x1cb8] sm:$0xff]
        %v8465 = vld [vmem:[#allocation8 + $0x1cc0] sm:$0xff]
        %v8466 = vld [vmem:[#allocation8 + $0x1cc8] sm:$0xff]
        %v8467 = vld [vmem:[#allocation8 + $0x1cd0] sm:$0xff]
        %v8468 = vld [vmem:[#allocation8 + $0x1cd8] sm:$0xff]
        %v8469 = vld [vmem:[#allocation8 + $0x1ce0] sm:$0xff]
        %v8470 = vld [vmem:[#allocation8 + $0x1ce8] sm:$0xff]
        %v8471 = vld [vmem:[#allocation8 + $0x1cf0] sm:$0xff]
        %v8472 = vld [vmem:[#allocation8 + $0x1cf8] sm:$0xff]
        %v8473 = vld [vmem:[#allocation8 + $0x1d00] sm:$0xff]
        %v8474 = vld [vmem:[#allocation8 + $0x1d08] sm:$0xff]
        %v8475 = vld [vmem:[#allocation8 + $0x1d10] sm:$0xff]
        %v8476 = vld [vmem:[#allocation8 + $0x1d18] sm:$0xff]
        %v8477 = vld [vmem:[#allocation8 + $0x1d20] sm:$0xff]
        %v8478 = vld [vmem:[#allocation8 + $0x1d28] sm:$0xff]
        %v8479 = vld [vmem:[#allocation8 + $0x1d30] sm:$0xff]
        %v8480 = vld [vmem:[#allocation8 + $0x1d38] sm:$0xff]
        %v8481 = vld [vmem:[#allocation8 + $0x1d40] sm:$0xff]
        %v8482 = vld [vmem:[#allocation8 + $0x1d48] sm:$0xff]
        %v8483 = vld [vmem:[#allocation8 + $0x1d50] sm:$0xff]
        %v8484 = vld [vmem:[#allocation8 + $0x1d58] sm:$0xff]
        %v8485 = vld [vmem:[#allocation8 + $0x1d60] sm:$0xff]
        %v8486 = vld [vmem:[#allocation8 + $0x1d68] sm:$0xff]
        %v8487 = vld [vmem:[#allocation8 + $0x1d70] sm:$0xff]
        %v8488 = vld [vmem:[#allocation8 + $0x1d78] sm:$0xff]
        %v8489 = vld [vmem:[#allocation8 + $0x1d80] sm:$0xff]
        %v8490 = vld [vmem:[#allocation8 + $0x1d88] sm:$0xff]
        %v8491 = vld [vmem:[#allocation8 + $0x1d90] sm:$0xff]
        %v8492 = vld [vmem:[#allocation8 + $0x1d98] sm:$0xff]
        %v8493 = vld [vmem:[#allocation8 + $0x1da0] sm:$0xff]
        %v8494 = vld [vmem:[#allocation8 + $0x1da8] sm:$0xff]
        %v8495 = vld [vmem:[#allocation8 + $0x1db0] sm:$0xff]
        %v8496 = vld [vmem:[#allocation8 + $0x1db8] sm:$0xff]
        %v8497 = vld [vmem:[#allocation8 + $0x1dc0] sm:$0xff]
        %v8498 = vld [vmem:[#allocation8 + $0x1dc8] sm:$0xff]
        %v8499 = vld [vmem:[#allocation8 + $0x1dd0] sm:$0xff]
        %v8500 = vld [vmem:[#allocation8 + $0x1dd8] sm:$0xff]
        %v8501 = vld [vmem:[#allocation8 + $0x1de0] sm:$0xff]
        %v8502 = vld [vmem:[#allocation8 + $0x1de8] sm:$0xff]
        %v8503 = vld [vmem:[#allocation8 + $0x1df0] sm:$0xff]
        %v8504 = vld [vmem:[#allocation8 + $0x1df8] sm:$0xff]
        %v8505 = vrot.slane %v5091, 3
        %v8571 = vunpack.c.l.b16 %v8441
        %v8572 = vunpack.c.h.b16 %v8441
        %v8573 = vunpack.c.l.b16 %v8442
        %v8574 = vunpack.c.h.b16 %v8442
        %v8575 = vunpack.c.l.b16 %v8443
        %v8576 = vunpack.c.h.b16 %v8443
        %v8577 = vunpack.c.l.b16 %v8444
        %v8578 = vunpack.c.h.b16 %v8444
        %v8579 = vunpack.c.l.b16 %v8445
        %v8580 = vunpack.c.h.b16 %v8445
        %v8581 = vunpack.c.l.b16 %v8446
        %v8582 = vunpack.c.h.b16 %v8446
        %v8583 = vunpack.c.l.b16 %v8447
        %v8584 = vunpack.c.h.b16 %v8447
        %v8585 = vunpack.c.l.b16 %v8448
        %v8586 = vunpack.c.h.b16 %v8448
        %v8587 = vunpack.c.l.b16 %v8449
        %v8588 = vunpack.c.h.b16 %v8449
        %v8589 = vunpack.c.l.b16 %v8450
        %v8590 = vunpack.c.h.b16 %v8450
        %v8591 = vunpack.c.l.b16 %v8451
        %v8592 = vunpack.c.h.b16 %v8451
        %v8593 = vunpack.c.l.b16 %v8452
        %v8594 = vunpack.c.h.b16 %v8452
        %v8595 = vunpack.c.l.b16 %v8453
        %v8596 = vunpack.c.h.b16 %v8453
        %v8597 = vunpack.c.l.b16 %v8454
        %v8598 = vunpack.c.h.b16 %v8454
        %v8599 = vunpack.c.l.b16 %v8455
        %v8600 = vunpack.c.h.b16 %v8455
        %v8601 = vunpack.c.l.b16 %v8456
        %v8602 = vunpack.c.h.b16 %v8456
        %v8603 = vunpack.c.l.b16 %v8457
        %v8604 = vunpack.c.h.b16 %v8457
        %v8605 = vunpack.c.l.b16 %v8458
        %v8606 = vunpack.c.h.b16 %v8458
        %v8607 = vunpack.c.l.b16 %v8459
        %v8608 = vunpack.c.h.b16 %v8459
        %v8609 = vunpack.c.l.b16 %v8460
        %v8610 = vunpack.c.h.b16 %v8460
        %v8611 = vunpack.c.l.b16 %v8461
        %v8612 = vunpack.c.h.b16 %v8461
        %v8613 = vunpack.c.l.b16 %v8462
        %v8614 = vunpack.c.h.b16 %v8462
        %v8615 = vunpack.c.l.b16 %v8463
        %v8616 = vunpack.c.h.b16 %v8463
        %v8617 = vunpack.c.l.b16 %v8464
        %v8618 = vunpack.c.h.b16 %v8464
        %v8619 = vunpack.c.l.b16 %v8465
        %v8620 = vunpack.c.h.b16 %v8465
        %v8621 = vunpack.c.l.b16 %v8466
        %v8622 = vunpack.c.h.b16 %v8466
        %v8623 = vunpack.c.l.b16 %v8467
        %v8624 = vunpack.c.h.b16 %v8467
        %v8625 = vunpack.c.l.b16 %v8468
        %v8626 = vunpack.c.h.b16 %v8468
        %v8627 = vunpack.c.l.b16 %v8469
        %v8628 = vunpack.c.h.b16 %v8469
        %v8629 = vunpack.c.l.b16 %v8470
        %v8630 = vunpack.c.h.b16 %v8470
        %v8631 = vunpack.c.l.b16 %v8471
        %v8632 = vunpack.c.h.b16 %v8471
        %v8633 = vunpack.c.l.b16 %v8472
        %v8634 = vunpack.c.h.b16 %v8472
        %v8635 = vunpack.c.l.b16 %v8473
        %v8636 = vunpack.c.h.b16 %v8473
        %v8637 = vunpack.c.l.b16 %v8474
        %v8638 = vunpack.c.h.b16 %v8474
        %v8639 = vunpack.c.l.b16 %v8475
        %v8640 = vunpack.c.h.b16 %v8475
        %v8641 = vunpack.c.l.b16 %v8476
        %v8642 = vunpack.c.h.b16 %v8476
        %v8643 = vunpack.c.l.b16 %v8477
        %v8644 = vunpack.c.h.b16 %v8477
        %v8645 = vunpack.c.l.b16 %v8478
        %v8646 = vunpack.c.h.b16 %v8478
        %v8647 = vunpack.c.l.b16 %v8479
        %v8648 = vunpack.c.h.b16 %v8479
        %v8649 = vunpack.c.l.b16 %v8480
        %v8650 = vunpack.c.h.b16 %v8480
        %v8651 = vunpack.c.l.b16 %v8481
        %v8652 = vunpack.c.h.b16 %v8481
        %v8653 = vunpack.c.l.b16 %v8482
        %v8654 = vunpack.c.h.b16 %v8482
        %v8655 = vunpack.c.l.b16 %v8483
        %v8656 = vunpack.c.h.b16 %v8483
        %v8657 = vunpack.c.l.b16 %v8484
        %v8658 = vunpack.c.h.b16 %v8484
        %v8659 = vunpack.c.l.b16 %v8485
        %v8660 = vunpack.c.h.b16 %v8485
        %v8661 = vunpack.c.l.b16 %v8486
        %v8662 = vunpack.c.h.b16 %v8486
        %v8663 = vunpack.c.l.b16 %v8487
        %v8664 = vunpack.c.h.b16 %v8487
        %v8665 = vunpack.c.l.b16 %v8488
        %v8666 = vunpack.c.h.b16 %v8488
        %v8667 = vunpack.c.l.b16 %v8489
        %v8668 = vunpack.c.h.b16 %v8489
        %v8669 = vunpack.c.l.b16 %v8490
        %v8670 = vunpack.c.h.b16 %v8490
        %v8671 = vunpack.c.l.b16 %v8491
        %v8672 = vunpack.c.h.b16 %v8491
        %v8673 = vunpack.c.l.b16 %v8492
        %v8674 = vunpack.c.h.b16 %v8492
        %v8675 = vunpack.c.l.b16 %v8493
        %v8676 = vunpack.c.h.b16 %v8493
        %v8677 = vunpack.c.l.b16 %v8494
        %v8678 = vunpack.c.h.b16 %v8494
        %v8679 = vunpack.c.l.b16 %v8495
        %v8680 = vunpack.c.h.b16 %v8495
        %v8681 = vunpack.c.l.b16 %v8496
        %v8682 = vunpack.c.h.b16 %v8496
        %v8683 = vunpack.c.l.b16 %v8497
        %v8684 = vunpack.c.h.b16 %v8497
        %v8685 = vunpack.c.l.b16 %v8498
        %v8686 = vunpack.c.h.b16 %v8498
        %v8687 = vunpack.c.l.b16 %v8499
        %v8688 = vunpack.c.h.b16 %v8499
        %v8689 = vunpack.c.l.b16 %v8500
        %v8690 = vunpack.c.h.b16 %v8500
        %v8691 = vunpack.c.l.b16 %v8501
        %v8692 = vunpack.c.h.b16 %v8501
        %v8693 = vunpack.c.l.b16 %v8502
        %v8694 = vunpack.c.h.b16 %v8502
        %v8695 = vunpack.c.l.b16 %v8503
        %v8696 = vunpack.c.h.b16 %v8503
        %v8697 = vunpack.c.l.b16 %v8504
        %v8698 = vunpack.c.h.b16 %v8504
        %v8699 = vpack.c.b16 %v8579, %v8571
        %v8700 = vpack.c.b16 %v8580, %v8572
        %v8701 = vpack.c.b16 %v8581, %v8573
        %v8702 = vpack.c.b16 %v8582, %v8574
        %v8703 = vpack.c.b16 %v8583, %v8575
        %v8704 = vpack.c.b16 %v8584, %v8576
        %v8705 = vpack.c.b16 %v8585, %v8577
        %v8706 = vpack.c.b16 %v8586, %v8578
        %v8707 = vpack.c.b16 %v8595, %v8587
        %v8708 = vpack.c.b16 %v8596, %v8588
        %v8709 = vpack.c.b16 %v8597, %v8589
        %v8710 = vpack.c.b16 %v8598, %v8590
        %v8711 = vpack.c.b16 %v8599, %v8591
        %v8712 = vpack.c.b16 %v8600, %v8592
        %v8713 = vpack.c.b16 %v8601, %v8593
        %v8714 = vpack.c.b16 %v8602, %v8594
        %v8715 = vpack.c.b16 %v8611, %v8603
        %v8716 = vpack.c.b16 %v8612, %v8604
        %v8717 = vpack.c.b16 %v8613, %v8605
        %v8718 = vpack.c.b16 %v8614, %v8606
        %v8719 = vpack.c.b16 %v8615, %v8607
        %v8720 = vpack.c.b16 %v8616, %v8608
        %v8721 = vpack.c.b16 %v8617, %v8609
        %v8722 = vpack.c.b16 %v8618, %v8610
        %v8723 = vpack.c.b16 %v8627, %v8619
        %v8724 = vpack.c.b16 %v8628, %v8620
        %v8725 = vpack.c.b16 %v8629, %v8621
        %v8726 = vpack.c.b16 %v8630, %v8622
        %v8727 = vpack.c.b16 %v8631, %v8623
        %v8728 = vpack.c.b16 %v8632, %v8624
        %v8729 = vpack.c.b16 %v8633, %v8625
        %v8730 = vpack.c.b16 %v8634, %v8626
        %v8731 = vpack.c.b16 %v8643, %v8635
        %v8732 = vpack.c.b16 %v8644, %v8636
        %v8733 = vpack.c.b16 %v8645, %v8637
        %v8734 = vpack.c.b16 %v8646, %v8638
        %v8735 = vpack.c.b16 %v8647, %v8639
        %v8736 = vpack.c.b16 %v8648, %v8640
        %v8737 = vpack.c.b16 %v8649, %v8641
        %v8738 = vpack.c.b16 %v8650, %v8642
        %v8739 = vpack.c.b16 %v8659, %v8651
        %v8740 = vpack.c.b16 %v8660, %v8652
        %v8741 = vpack.c.b16 %v8661, %v8653
        %v8742 = vpack.c.b16 %v8662, %v8654
        %v8743 = vpack.c.b16 %v8663, %v8655
        %v8744 = vpack.c.b16 %v8664, %v8656
        %v8745 = vpack.c.b16 %v8665, %v8657
        %v8746 = vpack.c.b16 %v8666, %v8658
        %v8747 = vpack.c.b16 %v8675, %v8667
        %v8748 = vpack.c.b16 %v8676, %v8668
        %v8749 = vpack.c.b16 %v8677, %v8669
        %v8750 = vpack.c.b16 %v8678, %v8670
        %v8751 = vpack.c.b16 %v8679, %v8671
        %v8752 = vpack.c.b16 %v8680, %v8672
        %v8753 = vpack.c.b16 %v8681, %v8673
        %v8754 = vpack.c.b16 %v8682, %v8674
        %v8755 = vpack.c.b16 %v8691, %v8683
        %v8756 = vpack.c.b16 %v8692, %v8684
        %v8757 = vpack.c.b16 %v8693, %v8685
        %v8758 = vpack.c.b16 %v8694, %v8686
        %v8759 = vpack.c.b16 %v8695, %v8687
        %v8760 = vpack.c.b16 %v8696, %v8688
        %v8761 = vpack.c.b16 %v8697, %v8689
        %v8762 = vpack.c.b16 %v8698, %v8690
        %8827 = vmatprep.subr.bf16.mxu0 %v8700
        %8828 = vmatpush1.bf16.msra.mxu0 %v8699
        %8829 = vmatprep.subr.bf16.mxu0 %v8708
        %8830 = vmatpush1.bf16.msra.mxu0 %v8707
        %8831 = vmatprep.subr.bf16.mxu0 %v8716
        %8832 = vmatpush1.bf16.msra.mxu0 %v8715
        %8833 = vmatprep.subr.bf16.mxu0 %v8724
        %8834 = vmatpush1.bf16.msra.mxu0 %v8723
        %8835 = vmatprep.subr.bf16.mxu0 %v8732
        %8836 = vmatpush1.bf16.msra.mxu0 %v8731
        %8837 = vmatprep.subr.bf16.mxu0 %v8740
        %8838 = vmatpush1.bf16.msra.mxu0 %v8739
        %8839 = vmatprep.subr.bf16.mxu0 %v8748
        %8840 = vmatpush1.bf16.msra.mxu0 %v8747
        %8841 = vmatprep.subr.bf16.mxu0 %v8756
        %8842 = vmatpush1.bf16.msra.mxu0 %v8755
        %8843 = vmatprep.subr.bf16.mxu0 0
        %8844 = vmatpush1.bf16.msra.mxu0 0
        %8845 = vmatprep.subr.bf16.mxu0 0
        %8846 = vmatpush1.bf16.msra.mxu0 0
        %8847 = vmatprep.subr.bf16.mxu0 0
        %8848 = vmatpush1.bf16.msra.mxu0 0
        %8849 = vmatprep.subr.bf16.mxu0 0
        %8850 = vmatpush1.bf16.msra.mxu0 0
        %8851 = vmatprep.subr.bf16.mxu0 0
        %8852 = vmatpush1.bf16.msra.mxu0 0
        %8853 = vmatprep.subr.bf16.mxu0 0
        %8854 = vmatpush1.bf16.msra.mxu0 0
        %8855 = vmatprep.subr.bf16.mxu0 0
        %8856 = vmatpush1.bf16.msra.mxu0 0
        %8857 = vmatprep.subr.bf16.mxu0 0
        %8858 = vmatpush1.bf16.msra.mxu0 0
        %8859 = vmatprep.mubr.bf16.mxu0 0
        %8860 = vmatmul.mubr.bf16.gmra.mrb[0].mxu0 %v8505
        %v8861 = vpop.f32.mrb[0].mxu0
        %v8862 = vadd.f32 0.0, %v8861
        %v8863 = vpop.f32.mrb[0].mxu0
        %v8864 = vadd.f32 0.0, %v8863
        %v8865 = vpop.f32.mrb[0].mxu0
        %v8866 = vpop.f32.mrb[0].mxu0
        %8867 = vdwg.mxu0
        %8868 = vmatprep.subr.bf16.mxu0 %v8702
        %8869 = vmatpush1.bf16.msra.mxu0 %v8701
        %8870 = vmatprep.subr.bf16.mxu0 %v8710
        %8871 = vmatpush1.bf16.msra.mxu0 %v8709
        %8872 = vmatprep.subr.bf16.mxu0 %v8718
        %8873 = vmatpush1.bf16.msra.mxu0 %v8717
        %8874 = vmatprep.subr.bf16.mxu0 %v8726
        %8875 = vmatpush1.bf16.msra.mxu0 %v8725
        %8876 = vmatprep.subr.bf16.mxu0 %v8734
        %8877 = vmatpush1.bf16.msra.mxu0 %v8733
        %8878 = vmatprep.subr.bf16.mxu0 %v8742
        %8879 = vmatpush1.bf16.msra.mxu0 %v8741
        %8880 = vmatprep.subr.bf16.mxu0 %v8750
        %8881 = vmatpush1.bf16.msra.mxu0 %v8749
        %8882 = vmatprep.subr.bf16.mxu0 %v8758
        %8883 = vmatpush1.bf16.msra.mxu0 %v8757
        %8884 = vmatprep.subr.bf16.mxu0 0
        %8885 = vmatpush1.bf16.msra.mxu0 0
        %8886 = vmatprep.subr.bf16.mxu0 0
        %8887 = vmatpush1.bf16.msra.mxu0 0
        %8888 = vmatprep.subr.bf16.mxu0 0
        %8889 = vmatpush1.bf16.msra.mxu0 0
        %8890 = vmatprep.subr.bf16.mxu0 0
        %8891 = vmatpush1.bf16.msra.mxu0 0
        %8892 = vmatprep.subr.bf16.mxu0 0
        %8893 = vmatpush1.bf16.msra.mxu0 0
        %8894 = vmatprep.subr.bf16.mxu0 0
        %8895 = vmatpush1.bf16.msra.mxu0 0
        %8896 = vmatprep.subr.bf16.mxu0 0
        %8897 = vmatpush1.bf16.msra.mxu0 0
        %8898 = vmatprep.subr.bf16.mxu0 0
        %8899 = vmatpush1.bf16.msra.mxu0 0
        %8900 = vmatprep.mubr.bf16.mxu0 0
        %8901 = vmatmul.mubr.bf16.gmra.mrb[0].mxu0 %v8505
        %v8902 = vpop.f32.mrb[0].mxu0
        %v8903 = vadd.f32 0.0, %v8902
        %v8904 = vpop.f32.mrb[0].mxu0
        %v8905 = vadd.f32 0.0, %v8904
        %v8906 = vpop.f32.mrb[0].mxu0
        %v8907 = vpop.f32.mrb[0].mxu0
        %8908 = vdwg.mxu0
        %8909 = vmatprep.subr.bf16.mxu0 %v8704
        %8910 = vmatpush1.bf16.msra.mxu0 %v8703
        %8911 = vmatprep.subr.bf16.mxu0 %v8712
        %8912 = vmatpush1.bf16.msra.mxu0 %v8711
        %8913 = vmatprep.subr.bf16.mxu0 %v8720
        %8914 = vmatpush1.bf16.msra.mxu0 %v8719
        %8915 = vmatprep.subr.bf16.mxu0 %v8728
        %8916 = vmatpush1.bf16.msra.mxu0 %v8727
        %8917 = vmatprep.subr.bf16.mxu0 %v8736
        %8918 = vmatpush1.bf16.msra.mxu0 %v8735
        %8919 = vmatprep.subr.bf16.mxu0 %v8744
        %8920 = vmatpush1.bf16.msra.mxu0 %v8743
        %8921 = vmatprep.subr.bf16.mxu0 %v8752
        %8922 = vmatpush1.bf16.msra.mxu0 %v8751
        %8923 = vmatprep.subr.bf16.mxu0 %v8760
        %8924 = vmatpush1.bf16.msra.mxu0 %v8759
        %8925 = vmatprep.subr.bf16.mxu0 0
        %8926 = vmatpush1.bf16.msra.mxu0 0
        %8927 = vmatprep.subr.bf16.mxu0 0
        %8928 = vmatpush1.bf16.msra.mxu0 0
        %8929 = vmatprep.subr.bf16.mxu0 0
        %8930 = vmatpush1.bf16.msra.mxu0 0
        %8931 = vmatprep.subr.bf16.mxu0 0
        %8932 = vmatpush1.bf16.msra.mxu0 0
        %8933 = vmatprep.subr.bf16.mxu0 0
        %8934 = vmatpush1.bf16.msra.mxu0 0
        %8935 = vmatprep.subr.bf16.mxu0 0
        %8936 = vmatpush1.bf16.msra.mxu0 0
        %8937 = vmatprep.subr.bf16.mxu0 0
        %8938 = vmatpush1.bf16.msra.mxu0 0
        %8939 = vmatprep.subr.bf16.mxu0 0
        %8940 = vmatpush1.bf16.msra.mxu0 0
        %8941 = vmatprep.mubr.bf16.mxu0 0
        %8942 = vmatmul.mubr.bf16.gmra.mrb[0].mxu0 %v8505
        %v8943 = vpop.f32.mrb[0].mxu0
        %v8944 = vadd.f32 0.0, %v8943
        %v8945 = vpop.f32.mrb[0].mxu0
        %v8946 = vadd.f32 0.0, %v8945
        %v8947 = vpop.f32.mrb[0].mxu0
        %v8948 = vpop.f32.mrb[0].mxu0
        %8949 = vdwg.mxu0
        %8950 = vmatprep.subr.bf16.mxu0 %v8706
        %8951 = vmatpush1.bf16.msra.mxu0 %v8705
        %8952 = vmatprep.subr.bf16.mxu0 %v8714
        %8953 = vmatpush1.bf16.msra.mxu0 %v8713
        %8954 = vmatprep.subr.bf16.mxu0 %v8722
        %8955 = vmatpush1.bf16.msra.mxu0 %v8721
        %8956 = vmatprep.subr.bf16.mxu0 %v8730
        %8957 = vmatpush1.bf16.msra.mxu0 %v8729
        %8958 = vmatprep.subr.bf16.mxu0 %v8738
        %8959 = vmatpush1.bf16.msra.mxu0 %v8737
        %8960 = vmatprep.subr.bf16.mxu0 %v8746
        %8961 = vmatpush1.bf16.msra.mxu0 %v8745
        %8962 = vmatprep.subr.bf16.mxu0 %v8754
        %8963 = vmatpush1.bf16.msra.mxu0 %v8753
        %8964 = vmatprep.subr.bf16.mxu0 %v8762
        %8965 = vmatpush1.bf16.msra.mxu0 %v8761
        %8966 = vmatprep.subr.bf16.mxu0 0
        %8967 = vmatpush1.bf16.msra.mxu0 0
        %8968 = vmatprep.subr.bf16.mxu0 0
        %8969 = vmatpush1.bf16.msra.mxu0 0
        %8970 = vmatprep.subr.bf16.mxu0 0
        %8971 = vmatpush1.bf16.msra.mxu0 0
        %8972 = vmatprep.subr.bf16.mxu0 0
        %8973 = vmatpush1.bf16.msra.mxu0 0
        %8974 = vmatprep.subr.bf16.mxu0 0
        %8975 = vmatpush1.bf16.msra.mxu0 0
        %8976 = vmatprep.subr.bf16.mxu0 0
        %8977 = vmatpush1.bf16.msra.mxu0 0
        %8978 = vmatprep.subr.bf16.mxu0 0
        %8979 = vmatpush1.bf16.msra.mxu0 0
        %8980 = vmatprep.subr.bf16.mxu0 0
        %8981 = vmatpush1.bf16.msra.mxu0 0
        %8982 = vmatprep.mubr.bf16.mxu0 0
        %8983 = vmatmul.mubr.bf16.gmra.mrb[0].mxu0 %v8505
        %v8984 = vpop.f32.mrb[0].mxu0
        %v8985 = vadd.f32 0.0, %v8984
        %v8986 = vpop.f32.mrb[0].mxu0
        %v8987 = vadd.f32 0.0, %v8986
        %v8988 = vpop.f32.mrb[0].mxu0
        %v8989 = vpop.f32.mrb[0].mxu0
        %8990 = vdwg.mxu0
        %v8991 = vadd.f32 %v8433, %v8862
        %v8992 = vadd.f32 %v8434, %v8864
        %v8993 = vadd.f32 %v8435, %v8903
        %v8994 = vadd.f32 %v8436, %v8905
        %v8995 = vadd.f32 %v8437, %v8944
        %v8996 = vadd.f32 %v8438, %v8946
        %v8997 = vadd.f32 %v8439, %v8985
        %v8998 = vadd.f32 %v8440, %v8987
        %v8999 = vld [vmem:[#allocation8 + $0x1e00] sm:$0xff]
        %v9000 = vld [vmem:[#allocation8 + $0x1e08] sm:$0xff]
        %v9001 = vld [vmem:[#allocation8 + $0x1e10] sm:$0xff]
        %v9002 = vld [vmem:[#allocation8 + $0x1e18] sm:$0xff]
        %v9003 = vld [vmem:[#allocation8 + $0x1e20] sm:$0xff]
        %v9004 = vld [vmem:[#allocation8 + $0x1e28] sm:$0xff]
        %v9005 = vld [vmem:[#allocation8 + $0x1e30] sm:$0xff]
        %v9006 = vld [vmem:[#allocation8 + $0x1e38] sm:$0xff]
        %v9007 = vld [vmem:[#allocation8 + $0x1e40] sm:$0xff]
        %v9008 = vld [vmem:[#allocation8 + $0x1e48] sm:$0xff]
        %v9009 = vld [vmem:[#allocation8 + $0x1e50] sm:$0xff]
        %v9010 = vld [vmem:[#allocation8 + $0x1e58] sm:$0xff]
        %v9011 = vld [vmem:[#allocation8 + $0x1e60] sm:$0xff]
        %v9012 = vld [vmem:[#allocation8 + $0x1e68] sm:$0xff]
        %v9013 = vld [vmem:[#allocation8 + $0x1e70] sm:$0xff]
        %v9014 = vld [vmem:[#allocation8 + $0x1e78] sm:$0xff]
        %v9015 = vld [vmem:[#allocation8 + $0x1e80] sm:$0xff]
        %v9016 = vld [vmem:[#allocation8 + $0x1e88] sm:$0xff]
        %v9017 = vld [vmem:[#allocation8 + $0x1e90] sm:$0xff]
        %v9018 = vld [vmem:[#allocation8 + $0x1e98] sm:$0xff]
        %v9019 = vld [vmem:[#allocation8 + $0x1ea0] sm:$0xff]
        %v9020 = vld [vmem:[#allocation8 + $0x1ea8] sm:$0xff]
        %v9021 = vld [vmem:[#allocation8 + $0x1eb0] sm:$0xff]
        %v9022 = vld [vmem:[#allocation8 + $0x1eb8] sm:$0xff]
        %v9023 = vld [vmem:[#allocation8 + $0x1ec0] sm:$0xff]
        %v9024 = vld [vmem:[#allocation8 + $0x1ec8] sm:$0xff]
        %v9025 = vld [vmem:[#allocation8 + $0x1ed0] sm:$0xff]
        %v9026 = vld [vmem:[#allocation8 + $0x1ed8] sm:$0xff]
        %v9027 = vld [vmem:[#allocation8 + $0x1ee0] sm:$0xff]
        %v9028 = vld [vmem:[#allocation8 + $0x1ee8] sm:$0xff]
        %v9029 = vld [vmem:[#allocation8 + $0x1ef0] sm:$0xff]
        %v9030 = vld [vmem:[#allocation8 + $0x1ef8] sm:$0xff]
        %v9031 = vld [vmem:[#allocation8 + $0x1f00] sm:$0xff]
        %v9032 = vld [vmem:[#allocation8 + $0x1f08] sm:$0xff]
        %v9033 = vld [vmem:[#allocation8 + $0x1f10] sm:$0xff]
        %v9034 = vld [vmem:[#allocation8 + $0x1f18] sm:$0xff]
        %v9035 = vld [vmem:[#allocation8 + $0x1f20] sm:$0xff]
        %v9036 = vld [vmem:[#allocation8 + $0x1f28] sm:$0xff]
        %v9037 = vld [vmem:[#allocation8 + $0x1f30] sm:$0xff]
        %v9038 = vld [vmem:[#allocation8 + $0x1f38] sm:$0xff]
        %v9039 = vld [vmem:[#allocation8 + $0x1f40] sm:$0xff]
        %v9040 = vld [vmem:[#allocation8 + $0x1f48] sm:$0xff]
        %v9041 = vld [vmem:[#allocation8 + $0x1f50] sm:$0xff]
        %v9042 = vld [vmem:[#allocation8 + $0x1f58] sm:$0xff]
        %v9043 = vld [vmem:[#allocation8 + $0x1f60] sm:$0xff]
        %v9044 = vld [vmem:[#allocation8 + $0x1f68] sm:$0xff]
        %v9045 = vld [vmem:[#allocation8 + $0x1f70] sm:$0xff]
        %v9046 = vld [vmem:[#allocation8 + $0x1f78] sm:$0xff]
        %v9047 = vld [vmem:[#allocation8 + $0x1f80] sm:$0xff]
        %v9048 = vld [vmem:[#allocation8 + $0x1f88] sm:$0xff]
        %v9049 = vld [vmem:[#allocation8 + $0x1f90] sm:$0xff]
        %v9050 = vld [vmem:[#allocation8 + $0x1f98] sm:$0xff]
        %v9051 = vld [vmem:[#allocation8 + $0x1fa0] sm:$0xff]
        %v9052 = vld [vmem:[#allocation8 + $0x1fa8] sm:$0xff]
        %v9053 = vld [vmem:[#allocation8 + $0x1fb0] sm:$0xff]
        %v9054 = vld [vmem:[#allocation8 + $0x1fb8] sm:$0xff]
        %v9055 = vld [vmem:[#allocation8 + $0x1fc0] sm:$0xff]
        %v9056 = vld [vmem:[#allocation8 + $0x1fc8] sm:$0xff]
        %v9057 = vld [vmem:[#allocation8 + $0x1fd0] sm:$0xff]
        %v9058 = vld [vmem:[#allocation8 + $0x1fd8] sm:$0xff]
        %v9059 = vld [vmem:[#allocation8 + $0x1fe0] sm:$0xff]
        %v9060 = vld [vmem:[#allocation8 + $0x1fe8] sm:$0xff]
        %v9061 = vld [vmem:[#allocation8 + $0x1ff0] sm:$0xff]
        %v9062 = vld [vmem:[#allocation8 + $0x1ff8] sm:$0xff]
        %v9063 = vrot.slane %v5713, 3
        %v9129 = vunpack.c.l.b16 %v8999
        %v9130 = vunpack.c.h.b16 %v8999
        %v9131 = vunpack.c.l.b16 %v9000
        %v9132 = vunpack.c.h.b16 %v9000
        %v9133 = vunpack.c.l.b16 %v9001
        %v9134 = vunpack.c.h.b16 %v9001
        %v9135 = vunpack.c.l.b16 %v9002
        %v9136 = vunpack.c.h.b16 %v9002
        %v9137 = vunpack.c.l.b16 %v9003
        %v9138 = vunpack.c.h.b16 %v9003
        %v9139 = vunpack.c.l.b16 %v9004
        %v9140 = vunpack.c.h.b16 %v9004
        %v9141 = vunpack.c.l.b16 %v9005
        %v9142 = vunpack.c.h.b16 %v9005
        %v9143 = vunpack.c.l.b16 %v9006
        %v9144 = vunpack.c.h.b16 %v9006
        %v9145 = vunpack.c.l.b16 %v9007
        %v9146 = vunpack.c.h.b16 %v9007
        %v9147 = vunpack.c.l.b16 %v9008
        %v9148 = vunpack.c.h.b16 %v9008
        %v9149 = vunpack.c.l.b16 %v9009
        %v9150 = vunpack.c.h.b16 %v9009
        %v9151 = vunpack.c.l.b16 %v9010
        %v9152 = vunpack.c.h.b16 %v9010
        %v9153 = vunpack.c.l.b16 %v9011
        %v9154 = vunpack.c.h.b16 %v9011
        %v9155 = vunpack.c.l.b16 %v9012
        %v9156 = vunpack.c.h.b16 %v9012
        %v9157 = vunpack.c.l.b16 %v9013
        %v9158 = vunpack.c.h.b16 %v9013
        %v9159 = vunpack.c.l.b16 %v9014
        %v9160 = vunpack.c.h.b16 %v9014
        %v9161 = vunpack.c.l.b16 %v9015
        %v9162 = vunpack.c.h.b16 %v9015
        %v9163 = vunpack.c.l.b16 %v9016
        %v9164 = vunpack.c.h.b16 %v9016
        %v9165 = vunpack.c.l.b16 %v9017
        %v9166 = vunpack.c.h.b16 %v9017
        %v9167 = vunpack.c.l.b16 %v9018
        %v9168 = vunpack.c.h.b16 %v9018
        %v9169 = vunpack.c.l.b16 %v9019
        %v9170 = vunpack.c.h.b16 %v9019
        %v9171 = vunpack.c.l.b16 %v9020
        %v9172 = vunpack.c.h.b16 %v9020
        %v9173 = vunpack.c.l.b16 %v9021
        %v9174 = vunpack.c.h.b16 %v9021
        %v9175 = vunpack.c.l.b16 %v9022
        %v9176 = vunpack.c.h.b16 %v9022
        %v9177 = vunpack.c.l.b16 %v9023
        %v9178 = vunpack.c.h.b16 %v9023
        %v9179 = vunpack.c.l.b16 %v9024
        %v9180 = vunpack.c.h.b16 %v9024
        %v9181 = vunpack.c.l.b16 %v9025
        %v9182 = vunpack.c.h.b16 %v9025
        %v9183 = vunpack.c.l.b16 %v9026
        %v9184 = vunpack.c.h.b16 %v9026
        %v9185 = vunpack.c.l.b16 %v9027
        %v9186 = vunpack.c.h.b16 %v9027
        %v9187 = vunpack.c.l.b16 %v9028
        %v9188 = vunpack.c.h.b16 %v9028
        %v9189 = vunpack.c.l.b16 %v9029
        %v9190 = vunpack.c.h.b16 %v9029
        %v9191 = vunpack.c.l.b16 %v9030
        %v9192 = vunpack.c.h.b16 %v9030
        %v9193 = vunpack.c.l.b16 %v9031
        %v9194 = vunpack.c.h.b16 %v9031
        %v9195 = vunpack.c.l.b16 %v9032
        %v9196 = vunpack.c.h.b16 %v9032
        %v9197 = vunpack.c.l.b16 %v9033
        %v9198 = vunpack.c.h.b16 %v9033
        %v9199 = vunpack.c.l.b16 %v9034
        %v9200 = vunpack.c.h.b16 %v9034
        %v9201 = vunpack.c.l.b16 %v9035
        %v9202 = vunpack.c.h.b16 %v9035
        %v9203 = vunpack.c.l.b16 %v9036
        %v9204 = vunpack.c.h.b16 %v9036
        %v9205 = vunpack.c.l.b16 %v9037
        %v9206 = vunpack.c.h.b16 %v9037
        %v9207 = vunpack.c.l.b16 %v9038
        %v9208 = vunpack.c.h.b16 %v9038
        %v9209 = vunpack.c.l.b16 %v9039
        %v9210 = vunpack.c.h.b16 %v9039
        %v9211 = vunpack.c.l.b16 %v9040
        %v9212 = vunpack.c.h.b16 %v9040
        %v9213 = vunpack.c.l.b16 %v9041
        %v9214 = vunpack.c.h.b16 %v9041
        %v9215 = vunpack.c.l.b16 %v9042
        %v9216 = vunpack.c.h.b16 %v9042
        %v9217 = vunpack.c.l.b16 %v9043
        %v9218 = vunpack.c.h.b16 %v9043
        %v9219 = vunpack.c.l.b16 %v9044
        %v9220 = vunpack.c.h.b16 %v9044
        %v9221 = vunpack.c.l.b16 %v9045
        %v9222 = vunpack.c.h.b16 %v9045
        %v9223 = vunpack.c.l.b16 %v9046
        %v9224 = vunpack.c.h.b16 %v9046
        %v9225 = vunpack.c.l.b16 %v9047
        %v9226 = vunpack.c.h.b16 %v9047
        %v9227 = vunpack.c.l.b16 %v9048
        %v9228 = vunpack.c.h.b16 %v9048
        %v9229 = vunpack.c.l.b16 %v9049
        %v9230 = vunpack.c.h.b16 %v9049
        %v9231 = vunpack.c.l.b16 %v9050
        %v9232 = vunpack.c.h.b16 %v9050
        %v9233 = vunpack.c.l.b16 %v9051
        %v9234 = vunpack.c.h.b16 %v9051
        %v9235 = vunpack.c.l.b16 %v9052
        %v9236 = vunpack.c.h.b16 %v9052
        %v9237 = vunpack.c.l.b16 %v9053
        %v9238 = vunpack.c.h.b16 %v9053
        %v9239 = vunpack.c.l.b16 %v9054
        %v9240 = vunpack.c.h.b16 %v9054
        %v9241 = vunpack.c.l.b16 %v9055
        %v9242 = vunpack.c.h.b16 %v9055
        %v9243 = vunpack.c.l.b16 %v9056
        %v9244 = vunpack.c.h.b16 %v9056
        %v9245 = vunpack.c.l.b16 %v9057
        %v9246 = vunpack.c.h.b16 %v9057
        %v9247 = vunpack.c.l.b16 %v9058
        %v9248 = vunpack.c.h.b16 %v9058
        %v9249 = vunpack.c.l.b16 %v9059
        %v9250 = vunpack.c.h.b16 %v9059
        %v9251 = vunpack.c.l.b16 %v9060
        %v9252 = vunpack.c.h.b16 %v9060
        %v9253 = vunpack.c.l.b16 %v9061
        %v9254 = vunpack.c.h.b16 %v9061
        %v9255 = vunpack.c.l.b16 %v9062
        %v9256 = vunpack.c.h.b16 %v9062
        %v9257 = vpack.c.b16 %v9137, %v9129
        %v9258 = vpack.c.b16 %v9138, %v9130
        %v9259 = vpack.c.b16 %v9139, %v9131
        %v9260 = vpack.c.b16 %v9140, %v9132
        %v9261 = vpack.c.b16 %v9141, %v9133
        %v9262 = vpack.c.b16 %v9142, %v9134
        %v9263 = vpack.c.b16 %v9143, %v9135
        %v9264 = vpack.c.b16 %v9144, %v9136
        %v9265 = vpack.c.b16 %v9153, %v9145
        %v9266 = vpack.c.b16 %v9154, %v9146
        %v9267 = vpack.c.b16 %v9155, %v9147
        %v9268 = vpack.c.b16 %v9156, %v9148
        %v9269 = vpack.c.b16 %v9157, %v9149
        %v9270 = vpack.c.b16 %v9158, %v9150
        %v9271 = vpack.c.b16 %v9159, %v9151
        %v9272 = vpack.c.b16 %v9160, %v9152
        %v9273 = vpack.c.b16 %v9169, %v9161
        %v9274 = vpack.c.b16 %v9170, %v9162
        %v9275 = vpack.c.b16 %v9171, %v9163
        %v9276 = vpack.c.b16 %v9172, %v9164
        %v9277 = vpack.c.b16 %v9173, %v9165
        %v9278 = vpack.c.b16 %v9174, %v9166
        %v9279 = vpack.c.b16 %v9175, %v9167
        %v9280 = vpack.c.b16 %v9176, %v9168
        %v9281 = vpack.c.b16 %v9185, %v9177
        %v9282 = vpack.c.b16 %v9186, %v9178
        %v9283 = vpack.c.b16 %v9187, %v9179
        %v9284 = vpack.c.b16 %v9188, %v9180
        %v9285 = vpack.c.b16 %v9189, %v9181
        %v9286 = vpack.c.b16 %v9190, %v9182
        %v9287 = vpack.c.b16 %v9191, %v9183
        %v9288 = vpack.c.b16 %v9192, %v9184
        %v9289 = vpack.c.b16 %v9201, %v9193
        %v9290 = vpack.c.b16 %v9202, %v9194
        %v9291 = vpack.c.b16 %v9203, %v9195
        %v9292 = vpack.c.b16 %v9204, %v9196
        %v9293 = vpack.c.b16 %v9205, %v9197
        %v9294 = vpack.c.b16 %v9206, %v9198
        %v9295 = vpack.c.b16 %v9207, %v9199
        %v9296 = vpack.c.b16 %v9208, %v9200
        %v9297 = vpack.c.b16 %v9217, %v9209
        %v9298 = vpack.c.b16 %v9218, %v9210
        %v9299 = vpack.c.b16 %v9219, %v9211
        %v9300 = vpack.c.b16 %v9220, %v9212
        %v9301 = vpack.c.b16 %v9221, %v9213
        %v9302 = vpack.c.b16 %v9222, %v9214
        %v9303 = vpack.c.b16 %v9223, %v9215
        %v9304 = vpack.c.b16 %v9224, %v9216
        %v9305 = vpack.c.b16 %v9233, %v9225
        %v9306 = vpack.c.b16 %v9234, %v9226
        %v9307 = vpack.c.b16 %v9235, %v9227
        %v9308 = vpack.c.b16 %v9236, %v9228
        %v9309 = vpack.c.b16 %v9237, %v9229
        %v9310 = vpack.c.b16 %v9238, %v9230
        %v9311 = vpack.c.b16 %v9239, %v9231
        %v9312 = vpack.c.b16 %v9240, %v9232
        %v9313 = vpack.c.b16 %v9249, %v9241
        %v9314 = vpack.c.b16 %v9250, %v9242
        %v9315 = vpack.c.b16 %v9251, %v9243
        %v9316 = vpack.c.b16 %v9252, %v9244
        %v9317 = vpack.c.b16 %v9253, %v9245
        %v9318 = vpack.c.b16 %v9254, %v9246
        %v9319 = vpack.c.b16 %v9255, %v9247
        %v9320 = vpack.c.b16 %v9256, %v9248
        %9385 = vmatprep.subr.bf16.mxu0 %v9258
        %9386 = vmatpush1.bf16.msra.mxu0 %v9257
        %9387 = vmatprep.subr.bf16.mxu0 %v9266
        %9388 = vmatpush1.bf16.msra.mxu0 %v9265
        %9389 = vmatprep.subr.bf16.mxu0 %v9274
        %9390 = vmatpush1.bf16.msra.mxu0 %v9273
        %9391 = vmatprep.subr.bf16.mxu0 %v9282
        %9392 = vmatpush1.bf16.msra.mxu0 %v9281
        %9393 = vmatprep.subr.bf16.mxu0 %v9290
        %9394 = vmatpush1.bf16.msra.mxu0 %v9289
        %9395 = vmatprep.subr.bf16.mxu0 %v9298
        %9396 = vmatpush1.bf16.msra.mxu0 %v9297
        %9397 = vmatprep.subr.bf16.mxu0 %v9306
        %9398 = vmatpush1.bf16.msra.mxu0 %v9305
        %9399 = vmatprep.subr.bf16.mxu0 %v9314
        %9400 = vmatpush1.bf16.msra.mxu0 %v9313
        %9401 = vmatprep.subr.bf16.mxu0 0
        %9402 = vmatpush1.bf16.msra.mxu0 0
        %9403 = vmatprep.subr.bf16.mxu0 0
        %9404 = vmatpush1.bf16.msra.mxu0 0
        %9405 = vmatprep.subr.bf16.mxu0 0
        %9406 = vmatpush1.bf16.msra.mxu0 0
        %9407 = vmatprep.subr.bf16.mxu0 0
        %9408 = vmatpush1.bf16.msra.mxu0 0
        %9409 = vmatprep.subr.bf16.mxu0 0
        %9410 = vmatpush1.bf16.msra.mxu0 0
        %9411 = vmatprep.subr.bf16.mxu0 0
        %9412 = vmatpush1.bf16.msra.mxu0 0
        %9413 = vmatprep.subr.bf16.mxu0 0
        %9414 = vmatpush1.bf16.msra.mxu0 0
        %9415 = vmatprep.subr.bf16.mxu0 0
        %9416 = vmatpush1.bf16.msra.mxu0 0
        %9417 = vmatprep.mubr.bf16.mxu0 0
        %9418 = vmatmul.mubr.bf16.gmra.mrb[0].mxu0 %v9063
        %v9419 = vpop.f32.mrb[0].mxu0
        %v9420 = vadd.f32 0.0, %v9419
        %v9421 = vpop.f32.mrb[0].mxu0
        %v9422 = vadd.f32 0.0, %v9421
        %v9423 = vpop.f32.mrb[0].mxu0
        %v9424 = vpop.f32.mrb[0].mxu0
        %9425 = vdwg.mxu0
        %9426 = vmatprep.subr.bf16.mxu0 %v9260
        %9427 = vmatpush1.bf16.msra.mxu0 %v9259
        %9428 = vmatprep.subr.bf16.mxu0 %v9268
        %9429 = vmatpush1.bf16.msra.mxu0 %v9267
        %9430 = vmatprep.subr.bf16.mxu0 %v9276
        %9431 = vmatpush1.bf16.msra.mxu0 %v9275
        %9432 = vmatprep.subr.bf16.mxu0 %v9284
        %9433 = vmatpush1.bf16.msra.mxu0 %v9283
        %9434 = vmatprep.subr.bf16.mxu0 %v9292
        %9435 = vmatpush1.bf16.msra.mxu0 %v9291
        %9436 = vmatprep.subr.bf16.mxu0 %v9300
        %9437 = vmatpush1.bf16.msra.mxu0 %v9299
        %9438 = vmatprep.subr.bf16.mxu0 %v9308
        %9439 = vmatpush1.bf16.msra.mxu0 %v9307
        %9440 = vmatprep.subr.bf16.mxu0 %v9316
        %9441 = vmatpush1.bf16.msra.mxu0 %v9315
        %9442 = vmatprep.subr.bf16.mxu0 0
        %9443 = vmatpush1.bf16.msra.mxu0 0
        %9444 = vmatprep.subr.bf16.mxu0 0
        %9445 = vmatpush1.bf16.msra.mxu0 0
        %9446 = vmatprep.subr.bf16.mxu0 0
        %9447 = vmatpush1.bf16.msra.mxu0 0
        %9448 = vmatprep.subr.bf16.mxu0 0
        %9449 = vmatpush1.bf16.msra.mxu0 0
        %9450 = vmatprep.subr.bf16.mxu0 0
        %9451 = vmatpush1.bf16.msra.mxu0 0
        %9452 = vmatprep.subr.bf16.mxu0 0
        %9453 = vmatpush1.bf16.msra.mxu0 0
        %9454 = vmatprep.subr.bf16.mxu0 0
        %9455 = vmatpush1.bf16.msra.mxu0 0
        %9456 = vmatprep.subr.bf16.mxu0 0
        %9457 = vmatpush1.bf16.msra.mxu0 0
        %9458 = vmatprep.mubr.bf16.mxu0 0
        %9459 = vmatmul.mubr.bf16.gmra.mrb[0].mxu0 %v9063
        %v9460 = vpop.f32.mrb[0].mxu0
        %v9461 = vadd.f32 0.0, %v9460
        %v9462 = vpop.f32.mrb[0].mxu0
        %v9463 = vadd.f32 0.0, %v9462
        %v9464 = vpop.f32.mrb[0].mxu0
        %v9465 = vpop.f32.mrb[0].mxu0
        %9466 = vdwg.mxu0
        %9467 = vmatprep.subr.bf16.mxu0 %v9262
        %9468 = vmatpush1.bf16.msra.mxu0 %v9261
        %9469 = vmatprep.subr.bf16.mxu0 %v9270
        %9470 = vmatpush1.bf16.msra.mxu0 %v9269
        %9471 = vmatprep.subr.bf16.mxu0 %v9278
        %9472 = vmatpush1.bf16.msra.mxu0 %v9277
        %9473 = vmatprep.subr.bf16.mxu0 %v9286
        %9474 = vmatpush1.bf16.msra.mxu0 %v9285
        %9475 = vmatprep.subr.bf16.mxu0 %v9294
        %9476 = vmatpush1.bf16.msra.mxu0 %v9293
        %9477 = vmatprep.subr.bf16.mxu0 %v9302
        %9478 = vmatpush1.bf16.msra.mxu0 %v9301
        %9479 = vmatprep.subr.bf16.mxu0 %v9310
        %9480 = vmatpush1.bf16.msra.mxu0 %v9309
        %9481 = vmatprep.subr.bf16.mxu0 %v9318
        %9482 = vmatpush1.bf16.msra.mxu0 %v9317
        %9483 = vmatprep.subr.bf16.mxu0 0
        %9484 = vmatpush1.bf16.msra.mxu0 0
        %9485 = vmatprep.subr.bf16.mxu0 0
        %9486 = vmatpush1.bf16.msra.mxu0 0
        %9487 = vmatprep.subr.bf16.mxu0 0
        %9488 = vmatpush1.bf16.msra.mxu0 0
        %9489 = vmatprep.subr.bf16.mxu0 0
        %9490 = vmatpush1.bf16.msra.mxu0 0
        %9491 = vmatprep.subr.bf16.mxu0 0
        %9492 = vmatpush1.bf16.msra.mxu0 0
        %9493 = vmatprep.subr.bf16.mxu0 0
        %9494 = vmatpush1.bf16.msra.mxu0 0
        %9495 = vmatprep.subr.bf16.mxu0 0
        %9496 = vmatpush1.bf16.msra.mxu0 0
        %9497 = vmatprep.subr.bf16.mxu0 0
        %9498 = vmatpush1.bf16.msra.mxu0 0
        %9499 = vmatprep.mubr.bf16.mxu0 0
        %9500 = vmatmul.mubr.bf16.gmra.mrb[0].mxu0 %v9063
        %v9501 = vpop.f32.mrb[0].mxu0
        %v9502 = vadd.f32 0.0, %v9501
        %v9503 = vpop.f32.mrb[0].mxu0
        %v9504 = vadd.f32 0.0, %v9503
        %v9505 = vpop.f32.mrb[0].mxu0
        %v9506 = vpop.f32.mrb[0].mxu0
        %9507 = vdwg.mxu0
        %9508 = vmatprep.subr.bf16.mxu0 %v9264
        %9509 = vmatpush1.bf16.msra.mxu0 %v9263
        %9510 = vmatprep.subr.bf16.mxu0 %v9272
        %9511 = vmatpush1.bf16.msra.mxu0 %v9271
        %9512 = vmatprep.subr.bf16.mxu0 %v9280
        %9513 = vmatpush1.bf16.msra.mxu0 %v9279
        %9514 = vmatprep.subr.bf16.mxu0 %v9288
        %9515 = vmatpush1.bf16.msra.mxu0 %v9287
        %9516 = vmatprep.subr.bf16.mxu0 %v9296
        %9517 = vmatpush1.bf16.msra.mxu0 %v9295
        %9518 = vmatprep.subr.bf16.mxu0 %v9304
        %9519 = vmatpush1.bf16.msra.mxu0 %v9303
        %9520 = vmatprep.subr.bf16.mxu0 %v9312
        %9521 = vmatpush1.bf16.msra.mxu0 %v9311
        %9522 = vmatprep.subr.bf16.mxu0 %v9320
        %9523 = vmatpush1.bf16.msra.mxu0 %v9319
        %9524 = vmatprep.subr.bf16.mxu0 0
        %9525 = vmatpush1.bf16.msra.mxu0 0
        %9526 = vmatprep.subr.bf16.mxu0 0
        %9527 = vmatpush1.bf16.msra.mxu0 0
        %9528 = vmatprep.subr.bf16.mxu0 0
        %9529 = vmatpush1.bf16.msra.mxu0 0
        %9530 = vmatprep.subr.bf16.mxu0 0
        %9531 = vmatpush1.bf16.msra.mxu0 0
        %9532 = vmatprep.subr.bf16.mxu0 0
        %9533 = vmatpush1.bf16.msra.mxu0 0
        %9534 = vmatprep.subr.bf16.mxu0 0
        %9535 = vmatpush1.bf16.msra.mxu0 0
        %9536 = vmatprep.subr.bf16.mxu0 0
        %9537 = vmatpush1.bf16.msra.mxu0 0
        %9538 = vmatprep.subr.bf16.mxu0 0
        %9539 = vmatpush1.bf16.msra.mxu0 0
        %9540 = vmatprep.mubr.bf16.mxu0 0
        %9541 = vmatmul.mubr.bf16.gmra.mrb[0].mxu0 %v9063
        %v9542 = vpop.f32.mrb[0].mxu0
        %v9543 = vadd.f32 0.0, %v9542
        %v9544 = vpop.f32.mrb[0].mxu0
        %v9545 = vadd.f32 0.0, %v9544
        %v9546 = vpop.f32.mrb[0].mxu0
        %v9547 = vpop.f32.mrb[0].mxu0
        %9548 = vdwg.mxu0
        %v9549 = vadd.f32 %v8991, %v9420
        %v9550 = vadd.f32 %v8992, %v9422
        %v9551 = vadd.f32 %v8993, %v9461
        %v9552 = vadd.f32 %v8994, %v9463
        %v9553 = vadd.f32 %v8995, %v9502
        %v9554 = vadd.f32 %v8996, %v9504
        %v9555 = vadd.f32 %v8997, %v9543
        %v9556 = vadd.f32 %v8998, %v9545
        %v9557 = vld [vmem:[#allocation10] sm:$0xff]
        %v9559 = vlaneseq
        %v9560 = vshrl.u32 %v9559, 7
        %v9561 = vsub.s32 0, %v9560
        %v9562 = vrot.slane %v9557, %v9561
        %v9563 = vlaneseq
        %v9564 = vshrl.u32 %v9563, 7
        %v9565 = vsub.s32 1, %v9564
        %v9566 = vrot.slane %v9557, %v9565
        %v9567 = vlaneseq
        %v9568 = vshrl.u32 %v9567, 7
        %v9569 = vsub.s32 2, %v9568
        %v9570 = vrot.slane %v9557, %v9569
        %v9571 = vlaneseq
        %v9572 = vshrl.u32 %v9571, 7
        %v9573 = vsub.s32 3, %v9572
        %v9574 = vrot.slane %v9557, %v9573
        %v9575 = vlaneseq
        %v9576 = vshrl.u32 %v9575, 7
        %v9577 = vsub.s32 4, %v9576
        %v9578 = vrot.slane %v9557, %v9577
        %v9579 = vlaneseq
        %v9580 = vshrl.u32 %v9579, 7
        %v9581 = vsub.s32 5, %v9580
        %v9582 = vrot.slane %v9557, %v9581
        %v9583 = vlaneseq
        %v9584 = vshrl.u32 %v9583, 7
        %v9585 = vsub.s32 6, %v9584
        %v9586 = vrot.slane %v9557, %v9585
        %v9587 = vlaneseq
        %v9588 = vshrl.u32 %v9587, 7
        %v9589 = vsub.s32 7, %v9588
        %v9590 = vrot.slane %v9557, %v9589
        %v9599 = vadd.f32 %v9549, %v9562
        %v9600 = vadd.f32 %v9550, %v9566
        %v9601 = vadd.f32 %v9551, %v9570
        %v9602 = vadd.f32 %v9552, %v9574
        %v9603 = vadd.f32 %v9553, %v9578
        %v9604 = vadd.f32 %v9554, %v9582
        %v9605 = vadd.f32 %v9555, %v9586
        %v9606 = vadd.f32 %v9556, %v9590
        %v9607 = vmax.f32 %v9599, 0.0
        %v9608 = vmax.f32 %v9600, 0.0
        %v9609 = vmax.f32 %v9601, 0.0
        %v9610 = vmax.f32 %v9602, 0.0
        %v9611 = vmax.f32 %v9603, 0.0
        %v9612 = vmax.f32 %v9604, 0.0
        %v9613 = vmax.f32 %v9605, 0.0
        %v9614 = vmax.f32 %v9606, 0.0
        %v9615 = vpack.c.bf16 %v9607, %v9607
        %v9616 = vpack.c.bf16 %v9608, %v9608
        %v9617 = vpack.c.bf16 %v9609, %v9609
        %v9618 = vpack.c.bf16 %v9610, %v9610
        %v9619 = vpack.c.bf16 %v9611, %v9611
        %v9620 = vpack.c.bf16 %v9612, %v9612
        %v9621 = vpack.c.bf16 %v9613, %v9613
        %v9622 = vpack.c.bf16 %v9614, %v9614
        %v9623 = vld [vmem:[#allocation11] sm:$0xf]
        %v9624 = vld [vmem:[#allocation11 + $0x4] sm:$0xf]
        %v9625 = vld [vmem:[#allocation11 + $0x8] sm:$0xf]
        %v9626 = vld [vmem:[#allocation11 + $0xc] sm:$0xf]
        %v9627 = vld [vmem:[#allocation11 + $0x10] sm:$0xf]
        %v9628 = vld [vmem:[#allocation11 + $0x14] sm:$0xf]
        %v9629 = vld [vmem:[#allocation11 + $0x18] sm:$0xf]
        %v9630 = vld [vmem:[#allocation11 + $0x1c] sm:$0xf]
        %v9631 = vld [vmem:[#allocation11 + $0x20] sm:$0xf]
        %v9632 = vld [vmem:[#allocation11 + $0x24] sm:$0xf]
        %v9633 = vld [vmem:[#allocation11 + $0x28] sm:$0xf]
        %v9634 = vld [vmem:[#allocation11 + $0x2c] sm:$0xf]
        %v9635 = vld [vmem:[#allocation11 + $0x30] sm:$0xf]
        %v9636 = vld [vmem:[#allocation11 + $0x34] sm:$0xf]
        %v9637 = vld [vmem:[#allocation11 + $0x38] sm:$0xf]
        %v9638 = vld [vmem:[#allocation11 + $0x3c] sm:$0xf]
        %v9639 = vld [vmem:[#allocation11 + $0x40] sm:$0xf]
        %v9640 = vld [vmem:[#allocation11 + $0x44] sm:$0xf]
        %v9641 = vld [vmem:[#allocation11 + $0x48] sm:$0xf]
        %v9642 = vld [vmem:[#allocation11 + $0x4c] sm:$0xf]
        %v9643 = vld [vmem:[#allocation11 + $0x50] sm:$0xf]
        %v9644 = vld [vmem:[#allocation11 + $0x54] sm:$0xf]
        %v9645 = vld [vmem:[#allocation11 + $0x58] sm:$0xf]
        %v9646 = vld [vmem:[#allocation11 + $0x5c] sm:$0xf]
        %v9647 = vld [vmem:[#allocation11 + $0x60] sm:$0xf]
        %v9648 = vld [vmem:[#allocation11 + $0x64] sm:$0xf]
        %v9649 = vld [vmem:[#allocation11 + $0x68] sm:$0xf]
        %v9650 = vld [vmem:[#allocation11 + $0x6c] sm:$0xf]
        %v9651 = vld [vmem:[#allocation11 + $0x70] sm:$0xf]
        %v9652 = vld [vmem:[#allocation11 + $0x74] sm:$0xf]
        %v9653 = vld [vmem:[#allocation11 + $0x78] sm:$0xf]
        %v9654 = vld [vmem:[#allocation11 + $0x7c] sm:$0xf]
        %v9655 = vld [vmem:[#allocation11 + $0x80] sm:$0xf]
        %v9656 = vld [vmem:[#allocation11 + $0x84] sm:$0xf]
        %v9657 = vld [vmem:[#allocation11 + $0x88] sm:$0xf]
        %v9658 = vld [vmem:[#allocation11 + $0x8c] sm:$0xf]
        %v9659 = vld [vmem:[#allocation11 + $0x90] sm:$0xf]
        %v9660 = vld [vmem:[#allocation11 + $0x94] sm:$0xf]
        %v9661 = vld [vmem:[#allocation11 + $0x98] sm:$0xf]
        %v9662 = vld [vmem:[#allocation11 + $0x9c] sm:$0xf]
        %v9663 = vld [vmem:[#allocation11 + $0xa0] sm:$0xf]
        %v9664 = vld [vmem:[#allocation11 + $0xa4] sm:$0xf]
        %v9665 = vld [vmem:[#allocation11 + $0xa8] sm:$0xf]
        %v9666 = vld [vmem:[#allocation11 + $0xac] sm:$0xf]
        %v9667 = vld [vmem:[#allocation11 + $0xb0] sm:$0xf]
        %v9668 = vld [vmem:[#allocation11 + $0xb4] sm:$0xf]
        %v9669 = vld [vmem:[#allocation11 + $0xb8] sm:$0xf]
        %v9670 = vld [vmem:[#allocation11 + $0xbc] sm:$0xf]
        %v9671 = vld [vmem:[#allocation11 + $0xc0] sm:$0xf]
        %v9672 = vld [vmem:[#allocation11 + $0xc4] sm:$0xf]
        %v9673 = vld [vmem:[#allocation11 + $0xc8] sm:$0xf]
        %v9674 = vld [vmem:[#allocation11 + $0xcc] sm:$0xf]
        %v9675 = vld [vmem:[#allocation11 + $0xd0] sm:$0xf]
        %v9676 = vld [vmem:[#allocation11 + $0xd4] sm:$0xf]
        %v9677 = vld [vmem:[#allocation11 + $0xd8] sm:$0xf]
        %v9678 = vld [vmem:[#allocation11 + $0xdc] sm:$0xf]
        %v9679 = vld [vmem:[#allocation11 + $0xe0] sm:$0xf]
        %v9680 = vld [vmem:[#allocation11 + $0xe4] sm:$0xf]
        %v9681 = vld [vmem:[#allocation11 + $0xe8] sm:$0xf]
        %v9682 = vld [vmem:[#allocation11 + $0xec] sm:$0xf]
        %v9683 = vld [vmem:[#allocation11 + $0xf0] sm:$0xf]
        %v9684 = vld [vmem:[#allocation11 + $0xf4] sm:$0xf]
        %v9685 = vld [vmem:[#allocation11 + $0xf8] sm:$0xf]
        %v9686 = vld [vmem:[#allocation11 + $0xfc] sm:$0xf]
        %v9687 = vld [vmem:[#allocation11 + $0x100] sm:$0xf]
        %v9688 = vld [vmem:[#allocation11 + $0x104] sm:$0xf]
        %v9689 = vld [vmem:[#allocation11 + $0x108] sm:$0xf]
        %v9690 = vld [vmem:[#allocation11 + $0x10c] sm:$0xf]
        %v9691 = vld [vmem:[#allocation11 + $0x110] sm:$0xf]
        %v9692 = vld [vmem:[#allocation11 + $0x114] sm:$0xf]
        %v9693 = vld [vmem:[#allocation11 + $0x118] sm:$0xf]
        %v9694 = vld [vmem:[#allocation11 + $0x11c] sm:$0xf]
        %v9695 = vld [vmem:[#allocation11 + $0x120] sm:$0xf]
        %v9696 = vld [vmem:[#allocation11 + $0x124] sm:$0xf]
        %v9697 = vld [vmem:[#allocation11 + $0x128] sm:$0xf]
        %v9698 = vld [vmem:[#allocation11 + $0x12c] sm:$0xf]
        %v9699 = vld [vmem:[#allocation11 + $0x130] sm:$0xf]
        %v9700 = vld [vmem:[#allocation11 + $0x134] sm:$0xf]
        %v9701 = vld [vmem:[#allocation11 + $0x138] sm:$0xf]
        %v9702 = vld [vmem:[#allocation11 + $0x13c] sm:$0xf]
        %v9703 = vld [vmem:[#allocation11 + $0x140] sm:$0xf]
        %v9704 = vld [vmem:[#allocation11 + $0x144] sm:$0xf]
        %v9705 = vld [vmem:[#allocation11 + $0x148] sm:$0xf]
        %v9706 = vld [vmem:[#allocation11 + $0x14c] sm:$0xf]
        %v9707 = vld [vmem:[#allocation11 + $0x150] sm:$0xf]
        %v9708 = vld [vmem:[#allocation11 + $0x154] sm:$0xf]
        %v9709 = vld [vmem:[#allocation11 + $0x158] sm:$0xf]
        %v9710 = vld [vmem:[#allocation11 + $0x15c] sm:$0xf]
        %v9711 = vld [vmem:[#allocation11 + $0x160] sm:$0xf]
        %v9712 = vld [vmem:[#allocation11 + $0x164] sm:$0xf]
        %v9713 = vld [vmem:[#allocation11 + $0x168] sm:$0xf]
        %v9714 = vld [vmem:[#allocation11 + $0x16c] sm:$0xf]
        %v9715 = vld [vmem:[#allocation11 + $0x170] sm:$0xf]
        %v9716 = vld [vmem:[#allocation11 + $0x174] sm:$0xf]
        %v9717 = vld [vmem:[#allocation11 + $0x178] sm:$0xf]
        %v9718 = vld [vmem:[#allocation11 + $0x17c] sm:$0xf]
        %v9719 = vld [vmem:[#allocation11 + $0x180] sm:$0xf]
        %v9720 = vld [vmem:[#allocation11 + $0x184] sm:$0xf]
        %v9721 = vld [vmem:[#allocation11 + $0x188] sm:$0xf]
        %v9722 = vld [vmem:[#allocation11 + $0x18c] sm:$0xf]
        %v9723 = vld [vmem:[#allocation11 + $0x190] sm:$0xf]
        %v9724 = vld [vmem:[#allocation11 + $0x194] sm:$0xf]
        %v9725 = vld [vmem:[#allocation11 + $0x198] sm:$0xf]
        %v9726 = vld [vmem:[#allocation11 + $0x19c] sm:$0xf]
        %v9727 = vld [vmem:[#allocation11 + $0x1a0] sm:$0xf]
        %v9728 = vld [vmem:[#allocation11 + $0x1a4] sm:$0xf]
        %v9729 = vld [vmem:[#allocation11 + $0x1a8] sm:$0xf]
        %v9730 = vld [vmem:[#allocation11 + $0x1ac] sm:$0xf]
        %v9731 = vld [vmem:[#allocation11 + $0x1b0] sm:$0xf]
        %v9732 = vld [vmem:[#allocation11 + $0x1b4] sm:$0xf]
        %v9733 = vld [vmem:[#allocation11 + $0x1b8] sm:$0xf]
        %v9734 = vld [vmem:[#allocation11 + $0x1bc] sm:$0xf]
        %v9735 = vld [vmem:[#allocation11 + $0x1c0] sm:$0xf]
        %v9736 = vld [vmem:[#allocation11 + $0x1c4] sm:$0xf]
        %v9737 = vld [vmem:[#allocation11 + $0x1c8] sm:$0xf]
        %v9738 = vld [vmem:[#allocation11 + $0x1cc] sm:$0xf]
        %v9739 = vld [vmem:[#allocation11 + $0x1d0] sm:$0xf]
        %v9740 = vld [vmem:[#allocation11 + $0x1d4] sm:$0xf]
        %v9741 = vld [vmem:[#allocation11 + $0x1d8] sm:$0xf]
        %v9742 = vld [vmem:[#allocation11 + $0x1dc] sm:$0xf]
        %v9743 = vld [vmem:[#allocation11 + $0x1e0] sm:$0xf]
        %v9744 = vld [vmem:[#allocation11 + $0x1e4] sm:$0xf]
        %v9745 = vld [vmem:[#allocation11 + $0x1e8] sm:$0xf]
        %v9746 = vld [vmem:[#allocation11 + $0x1ec] sm:$0xf]
        %v9747 = vld [vmem:[#allocation11 + $0x1f0] sm:$0xf]
        %v9748 = vld [vmem:[#allocation11 + $0x1f4] sm:$0xf]
        %v9749 = vld [vmem:[#allocation11 + $0x1f8] sm:$0xf]
        %v9750 = vld [vmem:[#allocation11 + $0x1fc] sm:$0xf]
        %v9751 = vld [vmem:[#allocation13] sm:$0x1]
        %v9880 = vunpack.c.l.b16 %v9623
        %v9881 = vunpack.c.l.b16 %v9624
        %v9882 = vunpack.c.l.b16 %v9625
        %v9883 = vunpack.c.l.b16 %v9626
        %v9884 = vunpack.c.l.b16 %v9627
        %v9885 = vunpack.c.l.b16 %v9628
        %v9886 = vunpack.c.l.b16 %v9629
        %v9887 = vunpack.c.l.b16 %v9630
        %v9888 = vunpack.c.l.b16 %v9631
        %v9889 = vunpack.c.l.b16 %v9632
        %v9890 = vunpack.c.l.b16 %v9633
        %v9891 = vunpack.c.l.b16 %v9634
        %v9892 = vunpack.c.l.b16 %v9635
        %v9893 = vunpack.c.l.b16 %v9636
        %v9894 = vunpack.c.l.b16 %v9637
        %v9895 = vunpack.c.l.b16 %v9638
        %v9896 = vunpack.c.l.b16 %v9639
        %v9897 = vunpack.c.l.b16 %v9640
        %v9898 = vunpack.c.l.b16 %v9641
        %v9899 = vunpack.c.l.b16 %v9642
        %v9900 = vunpack.c.l.b16 %v9643
        %v9901 = vunpack.c.l.b16 %v9644
        %v9902 = vunpack.c.l.b16 %v9645
        %v9903 = vunpack.c.l.b16 %v9646
        %v9904 = vunpack.c.l.b16 %v9647
        %v9905 = vunpack.c.l.b16 %v9648
        %v9906 = vunpack.c.l.b16 %v9649
        %v9907 = vunpack.c.l.b16 %v9650
        %v9908 = vunpack.c.l.b16 %v9651
        %v9909 = vunpack.c.l.b16 %v9652
        %v9910 = vunpack.c.l.b16 %v9653
        %v9911 = vunpack.c.l.b16 %v9654
        %v9912 = vunpack.c.l.b16 %v9655
        %v9913 = vunpack.c.l.b16 %v9656
        %v9914 = vunpack.c.l.b16 %v9657
        %v9915 = vunpack.c.l.b16 %v9658
        %v9916 = vunpack.c.l.b16 %v9659
        %v9917 = vunpack.c.l.b16 %v9660
        %v9918 = vunpack.c.l.b16 %v9661
        %v9919 = vunpack.c.l.b16 %v9662
        %v9920 = vunpack.c.l.b16 %v9663
        %v9921 = vunpack.c.l.b16 %v9664
        %v9922 = vunpack.c.l.b16 %v9665
        %v9923 = vunpack.c.l.b16 %v9666
        %v9924 = vunpack.c.l.b16 %v9667
        %v9925 = vunpack.c.l.b16 %v9668
        %v9926 = vunpack.c.l.b16 %v9669
        %v9927 = vunpack.c.l.b16 %v9670
        %v9928 = vunpack.c.l.b16 %v9671
        %v9929 = vunpack.c.l.b16 %v9672
        %v9930 = vunpack.c.l.b16 %v9673
        %v9931 = vunpack.c.l.b16 %v9674
        %v9932 = vunpack.c.l.b16 %v9675
        %v9933 = vunpack.c.l.b16 %v9676
        %v9934 = vunpack.c.l.b16 %v9677
        %v9935 = vunpack.c.l.b16 %v9678
        %v9936 = vunpack.c.l.b16 %v9679
        %v9937 = vunpack.c.l.b16 %v9680
        %v9938 = vunpack.c.l.b16 %v9681
        %v9939 = vunpack.c.l.b16 %v9682
        %v9940 = vunpack.c.l.b16 %v9683
        %v9941 = vunpack.c.l.b16 %v9684
        %v9942 = vunpack.c.l.b16 %v9685
        %v9943 = vunpack.c.l.b16 %v9686
        %v9944 = vunpack.c.l.b16 %v9687
        %v9945 = vunpack.c.l.b16 %v9688
        %v9946 = vunpack.c.l.b16 %v9689
        %v9947 = vunpack.c.l.b16 %v9690
        %v9948 = vunpack.c.l.b16 %v9691
        %v9949 = vunpack.c.l.b16 %v9692
        %v9950 = vunpack.c.l.b16 %v9693
        %v9951 = vunpack.c.l.b16 %v9694
        %v9952 = vunpack.c.l.b16 %v9695
        %v9953 = vunpack.c.l.b16 %v9696
        %v9954 = vunpack.c.l.b16 %v9697
        %v9955 = vunpack.c.l.b16 %v9698
        %v9956 = vunpack.c.l.b16 %v9699
        %v9957 = vunpack.c.l.b16 %v9700
        %v9958 = vunpack.c.l.b16 %v9701
        %v9959 = vunpack.c.l.b16 %v9702
        %v9960 = vunpack.c.l.b16 %v9703
        %v9961 = vunpack.c.l.b16 %v9704
        %v9962 = vunpack.c.l.b16 %v9705
        %v9963 = vunpack.c.l.b16 %v9706
        %v9964 = vunpack.c.l.b16 %v9707
        %v9965 = vunpack.c.l.b16 %v9708
        %v9966 = vunpack.c.l.b16 %v9709
        %v9967 = vunpack.c.l.b16 %v9710
        %v9968 = vunpack.c.l.b16 %v9711
        %v9969 = vunpack.c.l.b16 %v9712
        %v9970 = vunpack.c.l.b16 %v9713
        %v9971 = vunpack.c.l.b16 %v9714
        %v9972 = vunpack.c.l.b16 %v9715
        %v9973 = vunpack.c.l.b16 %v9716
        %v9974 = vunpack.c.l.b16 %v9717
        %v9975 = vunpack.c.l.b16 %v9718
        %v9976 = vunpack.c.l.b16 %v9719
        %v9977 = vunpack.c.l.b16 %v9720
        %v9978 = vunpack.c.l.b16 %v9721
        %v9979 = vunpack.c.l.b16 %v9722
        %v9980 = vunpack.c.l.b16 %v9723
        %v9981 = vunpack.c.l.b16 %v9724
        %v9982 = vunpack.c.l.b16 %v9725
        %v9983 = vunpack.c.l.b16 %v9726
        %v9984 = vunpack.c.l.b16 %v9727
        %v9985 = vunpack.c.l.b16 %v9728
        %v9986 = vunpack.c.l.b16 %v9729
        %v9987 = vunpack.c.l.b16 %v9730
        %v9988 = vunpack.c.l.b16 %v9731
        %v9989 = vunpack.c.l.b16 %v9732
        %v9990 = vunpack.c.l.b16 %v9733
        %v9991 = vunpack.c.l.b16 %v9734
        %v9992 = vunpack.c.l.b16 %v9735
        %v9993 = vunpack.c.l.b16 %v9736
        %v9994 = vunpack.c.l.b16 %v9737
        %v9995 = vunpack.c.l.b16 %v9738
        %v9996 = vunpack.c.l.b16 %v9739
        %v9997 = vunpack.c.l.b16 %v9740
        %v9998 = vunpack.c.l.b16 %v9741
        %v9999 = vunpack.c.l.b16 %v9742
        %v10000 = vunpack.c.l.b16 %v9743
        %v10001 = vunpack.c.l.b16 %v9744
        %v10002 = vunpack.c.l.b16 %v9745
        %v10003 = vunpack.c.l.b16 %v9746
        %v10004 = vunpack.c.l.b16 %v9747
        %v10005 = vunpack.c.l.b16 %v9748
        %v10006 = vunpack.c.l.b16 %v9749
        %v10007 = vunpack.c.l.b16 %v9750
        %v10008 = vpack.c.b16 %v9881, %v9880
        %v10009 = vpack.c.b16 %v9883, %v9882
        %v10010 = vpack.c.b16 %v9885, %v9884
        %v10011 = vpack.c.b16 %v9887, %v9886
        %v10012 = vpack.c.b16 %v9889, %v9888
        %v10013 = vpack.c.b16 %v9891, %v9890
        %v10014 = vpack.c.b16 %v9893, %v9892
        %v10015 = vpack.c.b16 %v9895, %v9894
        %v10016 = vpack.c.b16 %v9897, %v9896
        %v10017 = vpack.c.b16 %v9899, %v9898
        %v10018 = vpack.c.b16 %v9901, %v9900
        %v10019 = vpack.c.b16 %v9903, %v9902
        %v10020 = vpack.c.b16 %v9905, %v9904
        %v10021 = vpack.c.b16 %v9907, %v9906
        %v10022 = vpack.c.b16 %v9909, %v9908
        %v10023 = vpack.c.b16 %v9911, %v9910
        %v10024 = vpack.c.b16 %v9913, %v9912
        %v10025 = vpack.c.b16 %v9915, %v9914
        %v10026 = vpack.c.b16 %v9917, %v9916
        %v10027 = vpack.c.b16 %v9919, %v9918
        %v10028 = vpack.c.b16 %v9921, %v9920
        %v10029 = vpack.c.b16 %v9923, %v9922
        %v10030 = vpack.c.b16 %v9925, %v9924
        %v10031 = vpack.c.b16 %v9927, %v9926
        %v10032 = vpack.c.b16 %v9929, %v9928
        %v10033 = vpack.c.b16 %v9931, %v9930
        %v10034 = vpack.c.b16 %v9933, %v9932
        %v10035 = vpack.c.b16 %v9935, %v9934
        %v10036 = vpack.c.b16 %v9937, %v9936
        %v10037 = vpack.c.b16 %v9939, %v9938
        %v10038 = vpack.c.b16 %v9941, %v9940
        %v10039 = vpack.c.b16 %v9943, %v9942
        %v10040 = vpack.c.b16 %v9945, %v9944
        %v10041 = vpack.c.b16 %v9947, %v9946
        %v10042 = vpack.c.b16 %v9949, %v9948
        %v10043 = vpack.c.b16 %v9951, %v9950
        %v10044 = vpack.c.b16 %v9953, %v9952
        %v10045 = vpack.c.b16 %v9955, %v9954
        %v10046 = vpack.c.b16 %v9957, %v9956
        %v10047 = vpack.c.b16 %v9959, %v9958
        %v10048 = vpack.c.b16 %v9961, %v9960
        %v10049 = vpack.c.b16 %v9963, %v9962
        %v10050 = vpack.c.b16 %v9965, %v9964
        %v10051 = vpack.c.b16 %v9967, %v9966
        %v10052 = vpack.c.b16 %v9969, %v9968
        %v10053 = vpack.c.b16 %v9971, %v9970
        %v10054 = vpack.c.b16 %v9973, %v9972
        %v10055 = vpack.c.b16 %v9975, %v9974
        %v10056 = vpack.c.b16 %v9977, %v9976
        %v10057 = vpack.c.b16 %v9979, %v9978
        %v10058 = vpack.c.b16 %v9981, %v9980
        %v10059 = vpack.c.b16 %v9983, %v9982
        %v10060 = vpack.c.b16 %v9985, %v9984
        %v10061 = vpack.c.b16 %v9987, %v9986
        %v10062 = vpack.c.b16 %v9989, %v9988
        %v10063 = vpack.c.b16 %v9991, %v9990
        %v10064 = vpack.c.b16 %v9993, %v9992
        %v10065 = vpack.c.b16 %v9995, %v9994
        %v10066 = vpack.c.b16 %v9997, %v9996
        %v10067 = vpack.c.b16 %v9999, %v9998
        %v10068 = vpack.c.b16 %v10001, %v10000
        %v10069 = vpack.c.b16 %v10003, %v10002
        %v10070 = vpack.c.b16 %v10005, %v10004
        %v10071 = vpack.c.b16 %v10007, %v10006
        %10136 = vmatprep.subr.bf16.mxu0 0
        %10137 = vmatpush1.bf16.msra.mxu0 %v10008
        %10138 = vmatprep.subr.bf16.mxu0 0
        %10139 = vmatpush1.bf16.msra.mxu0 %v10009
        %10140 = vmatprep.subr.bf16.mxu0 0
        %10141 = vmatpush1.bf16.msra.mxu0 %v10010
        %10142 = vmatprep.subr.bf16.mxu0 0
        %10143 = vmatpush1.bf16.msra.mxu0 %v10011
        %10144 = vmatprep.subr.bf16.mxu0 0
        %10145 = vmatpush1.bf16.msra.mxu0 %v10012
        %10146 = vmatprep.subr.bf16.mxu0 0
        %10147 = vmatpush1.bf16.msra.mxu0 %v10013
        %10148 = vmatprep.subr.bf16.mxu0 0
        %10149 = vmatpush1.bf16.msra.mxu0 %v10014
        %10150 = vmatprep.subr.bf16.mxu0 0
        %10151 = vmatpush1.bf16.msra.mxu0 %v10015
        %10152 = vmatprep.subr.bf16.mxu0 0
        %10153 = vmatpush1.bf16.msra.mxu0 %v10016
        %10154 = vmatprep.subr.bf16.mxu0 0
        %10155 = vmatpush1.bf16.msra.mxu0 %v10017
        %10156 = vmatprep.subr.bf16.mxu0 0
        %10157 = vmatpush1.bf16.msra.mxu0 %v10018
        %10158 = vmatprep.subr.bf16.mxu0 0
        %10159 = vmatpush1.bf16.msra.mxu0 %v10019
        %10160 = vmatprep.subr.bf16.mxu0 0
        %10161 = vmatpush1.bf16.msra.mxu0 %v10020
        %10162 = vmatprep.subr.bf16.mxu0 0
        %10163 = vmatpush1.bf16.msra.mxu0 %v10021
        %10164 = vmatprep.subr.bf16.mxu0 0
        %10165 = vmatpush1.bf16.msra.mxu0 %v10022
        %10166 = vmatprep.subr.bf16.mxu0 0
        %10167 = vmatpush1.bf16.msra.mxu0 %v10023
        %10168 = vmatprep.mubr.bf16.mxu0 %v9616
        %10169 = vmatmul.mubr.bf16.gmra.mrb[0].mxu0 %v9615
        %v10170 = vpop.f32.mrb[0].mxu0
        %v10171 = vadd.f32 %v9751, %v10170
        %v10172 = vpop.f32.mrb[0].mxu0
        %v10173 = vpop.f32.mrb[0].mxu0
        %v10174 = vpop.f32.mrb[0].mxu0
        %10175 = vdwg.mxu0
        %10176 = vmatprep.subr.bf16.mxu0 0
        %10177 = vmatpush1.bf16.msra.mxu0 %v10024
        %10178 = vmatprep.subr.bf16.mxu0 0
        %10179 = vmatpush1.bf16.msra.mxu0 %v10025
        %10180 = vmatprep.subr.bf16.mxu0 0
        %10181 = vmatpush1.bf16.msra.mxu0 %v10026
        %10182 = vmatprep.subr.bf16.mxu0 0
        %10183 = vmatpush1.bf16.msra.mxu0 %v10027
        %10184 = vmatprep.subr.bf16.mxu0 0
        %10185 = vmatpush1.bf16.msra.mxu0 %v10028
        %10186 = vmatprep.subr.bf16.mxu0 0
        %10187 = vmatpush1.bf16.msra.mxu0 %v10029
        %10188 = vmatprep.subr.bf16.mxu0 0
        %10189 = vmatpush1.bf16.msra.mxu0 %v10030
        %10190 = vmatprep.subr.bf16.mxu0 0
        %10191 = vmatpush1.bf16.msra.mxu0 %v10031
        %10192 = vmatprep.subr.bf16.mxu0 0
        %10193 = vmatpush1.bf16.msra.mxu0 %v10032
        %10194 = vmatprep.subr.bf16.mxu0 0
        %10195 = vmatpush1.bf16.msra.mxu0 %v10033
        %10196 = vmatprep.subr.bf16.mxu0 0
        %10197 = vmatpush1.bf16.msra.mxu0 %v10034
        %10198 = vmatprep.subr.bf16.mxu0 0
        %10199 = vmatpush1.bf16.msra.mxu0 %v10035
        %10200 = vmatprep.subr.bf16.mxu0 0
        %10201 = vmatpush1.bf16.msra.mxu0 %v10036
        %10202 = vmatprep.subr.bf16.mxu0 0
        %10203 = vmatpush1.bf16.msra.mxu0 %v10037
        %10204 = vmatprep.subr.bf16.mxu0 0
        %10205 = vmatpush1.bf16.msra.mxu0 %v10038
        %10206 = vmatprep.subr.bf16.mxu0 0
        %10207 = vmatpush1.bf16.msra.mxu0 %v10039
        %10208 = vmatprep.mubr.bf16.mxu0 %v9618
        %10209 = vmatmul.mubr.bf16.gmra.mrb[0].mxu0 %v9617
        %v10210 = vpop.f32.mrb[0].mxu0
        %v10211 = vadd.f32 %v10171, %v10210
        %v10212 = vpop.f32.mrb[0].mxu0
        %v10213 = vpop.f32.mrb[0].mxu0
        %v10214 = vpop.f32.mrb[0].mxu0
        %10215 = vdwg.mxu0
        %10216 = vmatprep.subr.bf16.mxu0 0
        %10217 = vmatpush1.bf16.msra.mxu0 %v10040
        %10218 = vmatprep.subr.bf16.mxu0 0
        %10219 = vmatpush1.bf16.msra.mxu0 %v10041
        %10220 = vmatprep.subr.bf16.mxu0 0
        %10221 = vmatpush1.bf16.msra.mxu0 %v10042
        %10222 = vmatprep.subr.bf16.mxu0 0
        %10223 = vmatpush1.bf16.msra.mxu0 %v10043
        %10224 = vmatprep.subr.bf16.mxu0 0
        %10225 = vmatpush1.bf16.msra.mxu0 %v10044
        %10226 = vmatprep.subr.bf16.mxu0 0
        %10227 = vmatpush1.bf16.msra.mxu0 %v10045
        %10228 = vmatprep.subr.bf16.mxu0 0
        %10229 = vmatpush1.bf16.msra.mxu0 %v10046
        %10230 = vmatprep.subr.bf16.mxu0 0
        %10231 = vmatpush1.bf16.msra.mxu0 %v10047
        %10232 = vmatprep.subr.bf16.mxu0 0
        %10233 = vmatpush1.bf16.msra.mxu0 %v10048
        %10234 = vmatprep.subr.bf16.mxu0 0
        %10235 = vmatpush1.bf16.msra.mxu0 %v10049
        %10236 = vmatprep.subr.bf16.mxu0 0
        %10237 = vmatpush1.bf16.msra.mxu0 %v10050
        %10238 = vmatprep.subr.bf16.mxu0 0
        %10239 = vmatpush1.bf16.msra.mxu0 %v10051
        %10240 = vmatprep.subr.bf16.mxu0 0
        %10241 = vmatpush1.bf16.msra.mxu0 %v10052
        %10242 = vmatprep.subr.bf16.mxu0 0
        %10243 = vmatpush1.bf16.msra.mxu0 %v10053
        %10244 = vmatprep.subr.bf16.mxu0 0
        %10245 = vmatpush1.bf16.msra.mxu0 %v10054
        %10246 = vmatprep.subr.bf16.mxu0 0
        %10247 = vmatpush1.bf16.msra.mxu0 %v10055
        %10248 = vmatprep.mubr.bf16.mxu0 %v9620
        %10249 = vmatmul.mubr.bf16.gmra.mrb[0].mxu0 %v9619
        %v10250 = vpop.f32.mrb[0].mxu0
        %v10251 = vadd.f32 %v10211, %v10250
        %v10252 = vpop.f32.mrb[0].mxu0
        %v10253 = vpop.f32.mrb[0].mxu0
        %v10254 = vpop.f32.mrb[0].mxu0
        %10255 = vdwg.mxu0
        %10256 = vmatprep.subr.bf16.mxu0 0
        %10257 = vmatpush1.bf16.msra.mxu0 %v10056
        %10258 = vmatprep.subr.bf16.mxu0 0
        %10259 = vmatpush1.bf16.msra.mxu0 %v10057
        %10260 = vmatprep.subr.bf16.mxu0 0
        %10261 = vmatpush1.bf16.msra.mxu0 %v10058
        %10262 = vmatprep.subr.bf16.mxu0 0
        %10263 = vmatpush1.bf16.msra.mxu0 %v10059
        %10264 = vmatprep.subr.bf16.mxu0 0
        %10265 = vmatpush1.bf16.msra.mxu0 %v10060
        %10266 = vmatprep.subr.bf16.mxu0 0
        %10267 = vmatpush1.bf16.msra.mxu0 %v10061
        %10268 = vmatprep.subr.bf16.mxu0 0
        %10269 = vmatpush1.bf16.msra.mxu0 %v10062
        %10270 = vmatprep.subr.bf16.mxu0 0
        %10271 = vmatpush1.bf16.msra.mxu0 %v10063
        %10272 = vmatprep.subr.bf16.mxu0 0
        %10273 = vmatpush1.bf16.msra.mxu0 %v10064
        %10274 = vmatprep.subr.bf16.mxu0 0
        %10275 = vmatpush1.bf16.msra.mxu0 %v10065
        %10276 = vmatprep.subr.bf16.mxu0 0
        %10277 = vmatpush1.bf16.msra.mxu0 %v10066
        %10278 = vmatprep.subr.bf16.mxu0 0
        %10279 = vmatpush1.bf16.msra.mxu0 %v10067
        %10280 = vmatprep.subr.bf16.mxu0 0
        %10281 = vmatpush1.bf16.msra.mxu0 %v10068
        %10282 = vmatprep.subr.bf16.mxu0 0
        %10283 = vmatpush1.bf16.msra.mxu0 %v10069
        %10284 = vmatprep.subr.bf16.mxu0 0
        %10285 = vmatpush1.bf16.msra.mxu0 %v10070
        %10286 = vmatprep.subr.bf16.mxu0 0
        %10287 = vmatpush1.bf16.msra.mxu0 %v10071
        %10288 = vmatprep.mubr.bf16.mxu0 %v9622
        %10289 = vmatmul.mubr.bf16.gmra.mrb[0].mxu0 %v9621
        %v10290 = vpop.f32.mrb[0].mxu0
        %v10291 = vadd.f32 %v10251, %v10290
        %v10292 = vpop.f32.mrb[0].mxu0
        %v10293 = vpop.f32.mrb[0].mxu0
        %v10294 = vpop.f32.mrb[0].mxu0
        %10295 = vdwg.mxu0
        %10296 = vst [vmem:[%s391] sm:$0x1] %v10291
        %s10297 = sand.u32 %s207, 1
        %s10298 = scalar_lea.sflag [#allocation4], %s10297
        %s10299 = sand.u32 %s207, 1
        %s10300 = scalar_lea.vmem [#allocation14], %s10299
        // Predicated region
        $region81: #{tpu_custom_call.1} parent=51 // pred_check
          %p10301 = pneg %p217
        $region82: #{tpu_custom_call.1} parent=51 // pred_check_branch
          %10303 = sbr.rel (%p10301) target = $region84
        $region83: #{tpu_custom_call.1} parent=51 // pred_region
          %s10305 = ssub.s32 16, 16
          %10306 = vsyncadd %s10298, %s10305
          %s10307 = smul.addr %s26, 16
          %s10308 = scalar_lea.hbm %s8, %s10307
          %s10310 = sshll.u32 %s10300, 4
          %s10311 = int_to_ptr.vmem [resolvable:$true] %s10310
          %10313 = dma.vmem_to_hbm [thread:$0]  %s10311, 16, %s10308, %s10298
        $region84: #{tpu_custom_call.1} parent=51 // pred_fallthru
          _
      $region52: #{tpu_custom_call.1} parent=5 // pred_fallthru
        _
      %p10314 = scmp.le.s32.totalorder 2, %s21
      // Predicated region
      $region85: #{tpu_custom_call.1} parent=5 // pred_check
        %p10315 = pneg %p10314
      $region86: #{tpu_custom_call.1} parent=5 // pred_check_branch
        %10317 = sbr.rel (%p10315) target = $region88
      $region87: #{tpu_custom_call.1} parent=5 // pred_region
        %s10318 = ssub.s32 %s21, 2
        // Predicated region
        $region89: #{tpu_custom_call.1} parent=87 // pred_check
          %p10319 = pneg %p223
        $region90: #{tpu_custom_call.1} parent=87 // pred_check_branch
          %10321 = sbr.rel (%p10319) target = $region92
        $region91: #{tpu_custom_call.1} parent=87 // pred_region
          %s10322 = sand.u32 %s208, 1
          %s10323 = scalar_lea.sflag [#allocation4], %s10322
          %s10324 = sand.u32 %s208, 1
          %s10325 = scalar_lea.vmem [#allocation14], %s10324
          %10326 = dma.done %s10323, 16
        $region92: #{tpu_custom_call.1} parent=87 // pred_fallthru
          _
      $region88: #{tpu_custom_call.1} parent=5 // pred_fallthru
        _
    $region6: #{tpu_custom_call.1} parent=1 // loop_footer
      %s25 = sadd.s32 1, %s21
    $region7: #{tpu_custom_call.1} parent=1 // loop_footer_branch
      %20 = sbr.rel target = $region3
    $region8: #{tpu_custom_call.1} parent=1 // loop_exit
      _
    %10327 = vsyncpa [#allocation3], 1
    %s10328 = scalar_lea.sflag [#allocation3], 1
    %10329 = vsyncpa %s10328, 1
    %10330 = vsyncpa [#allocation6], 1
    %10331 = vsyncpa [#allocation9], 1
    %10332 = vsyncpa [#allocation12], 1
    %10333 = vsyncpa [#allocation4], 1
    %s10334 = scalar_lea.sflag [#allocation4], 1
    %10335 = vsyncpa %s10334, 1

</llo_original>
